<compile_context>
chip_gen: v6e
topology: v6e:2x2x1
jax: 0.10.0
libtpu: 0.0.40
codegen_flags: <defaults>
</compile_context>

<pallas_src>
import functools
import numpy as np
import jax
import jax.numpy as jnp
from jax import lax
from jax.experimental import pallas as pl
from jax.experimental.pallas import tpu as pltpu

POOL_SIZES = (1, 2, 3, 6)
_BN_EPS = 1e-5


def _round_up(a, b):
    return ((a + b - 1) // b) * b


def _vmem_caps():
    """(physical_vmem_bytes, usable_budget_bytes) for tile selection."""
    cap = 64 * 1024 * 1024                       # conservative default (v7x per-TC)
    try:
        cap = int(pltpu.get_tpu_info().vmem_capacity_bytes)
    except Exception:
        pass
    budget = max(24 * 1024 * 1024, int(cap * 0.72))   # leave compiler-scratch headroom
    return cap, budget


def _tile_candidates(total, cap):
    """Multiples of 128 dividing `total` (itself a multiple of 128), descending, <= cap."""
    out = []
    t = min(total, (cap // 128) * 128)
    while t >= 128:
        if total % t == 0:
            out.append(t)
        t -= 128
    return out or [128]


def _blk_bytes(s_in, tk, tc, mt):
    """True double-buffered VMEM footprint of one grid step (bf16 in/out, f32 acc)."""
    return (2 * s_in * tk * 2          # x block (double-buffered)
            + 2 * 9 * tk * tc * 2      # BN-folded 3x3 weights
            + 2 * 8 * tc * 4           # bias (padded to a sublane tile)
            + 2 * mt * tc * 2          # bf16 output block
            + mt * tc * 4)             # f32 accumulator scratch


# --------------------------------------------------------------------------- #
# Pallas kernel: 3x3 conv (pad=1, stride=1) + folded-BN bias + ReLU, NHWC.
# Grid = (N, row tiles, Cout tiles, Cin tiles); Cin is the innermost reduction
# axis ("arbitrary"), accumulated into a f32 VMEM scratch.
# --------------------------------------------------------------------------- #
def _conv3x3_bn_relu_kernel(x_ref, w_ref, b_ref, o_ref, acc_ref, *, wp, mt, n_rt):
    # x_ref:  (1, S_in, tk) bf16 — whole flattened zero-padded image, one Cin tile
    # w_ref:  (9, tk, tc)   bf16 — BN-folded 3x3 weights, tap index = 3*dh + dw
    # b_ref:  (1, tc)       f32  — BN-folded bias
    # o_ref:  (1, mt, tc)   bf16 — mt = th*Wp_s flat rows of this row tile
    # acc_ref:(mt, tc)      f32 VMEM accumulator, persists over the Cin grid axis
    k = pl.program_id(3)

    @pl.when(k == 0)
    def _():
        acc_ref[...] = jnp.zeros_like(acc_ref)

    # Row-tile start in the flat-spatial axis (static 0 when there is one tile).
    if n_rt == 1:
        base = 0
    else:
        base = pl.multiple_of(pl.program_id(1) * mt, 16)

    acc = acc_ref[...]
    for dh in range(3):
        for dw in range(3):
            # contiguous flat-spatial slice: local row m == output row m + tap offset
            patch = x_ref[0, pl.ds(base + dh * wp + dw, mt), :]          # (mt, tk)
            acc = acc + jnp.dot(patch, w_ref[3 * dh + dw],
                                preferred_element_type=jnp.float32)
    acc_ref[...] = acc

    @pl.when(k == pl.num_programs(3) - 1)
    def _():
        # f32 epilogue (bias + ReLU); cast to bf16 only at the lane-dense store.
        o_ref[0] = jnp.maximum(acc_ref[...] + b_ref[...], 0.0).astype(o_ref.dtype)


def conv3x3_bn_relu_pallas(x_nhwc, w_hwio, bias):
    """x_nhwc: (N,H,W,Cin) (cast to bf16); w_hwio: (3,3,Cin,Cout) BN-folded; bias: (Cout,) f32."""
    N, H, W, Cin = x_nhwc.shape
    Cout = w_hwio.shape[-1]

    # Flat-spatial layout with a 16-aligned row stride (bf16 sublane pack) so the
    # dh*Wp_s tap offsets are pack-aligned; the extra junk columns are sliced off.
    Wp_s = _round_up(W + 2, 16)
    Hp = H + 2
    M = H * Wp_s                               # flat output rows (incl. junk cols)
    S_in = _round_up(Hp * Wp_s + 2, 16)        # tap (dh=2,dw=2) reaches Hp*Wp_s + 1

    Cout_pad = _round_up(max(Cout, 1), 128)
    Cin_pad = _round_up(Cin, 128)

    cap, budget = _vmem_caps()
    tc_cands = _tile_candidates(Cout_pad, Cout_pad)
    tk_cands = _tile_candidates(Cin_pad, 1024)
    th_cands = [d for d in range(H, 0, -1) if H % d == 0]

    # Preference: largest Cout tile (no duplicate x reads across Cout tiles),
    # then largest row tile (no duplicate x reads across row tiles), then the
    # largest Cin tile (fewest reduction steps). First config inside budget wins.
    tc, tk, th = tc_cands[-1], tk_cands[-1], 1
    found = False
    for tc_c in tc_cands:
        for th_c in th_cands:
            for tk_c in tk_cands:
                if _blk_bytes(S_in, tk_c, tc_c, th_c * Wp_s) <= budget:
                    tc, tk, th = tc_c, tk_c, th_c
                    found = True
                    break
            if found:
                break
        if found:
            break

    # v7x has 2 TensorCores: keep >=2 parallel work units when N==1.
    if N == 1 and Cout_pad // tc == 1 and H // th == 1 and H % 2 == 0:
        th = H // 2

    Mt = th * Wp_s
    RT, JT, KT = H // th, Cout_pad // tc, Cin_pad // tk

    # Flattened, zero-padded, bf16 input (N, S_in, Cin_pad); the spatial pad,
    # channel pad, bf16 cast and flatten fuse with the concat producer.
    xp = jnp.pad(x_nhwc.astype(jnp.bfloat16),
                 ((0, 0), (1, 1), (1, Wp_s - W - 1), (0, Cin_pad - Cin)))
    xp = xp.reshape(N, Hp * Wp_s, Cin_pad)
    xp = jnp.pad(xp, ((0, 0), (0, S_in - Hp * Wp_s), (0, 0)))

    w9 = jnp.pad(w_hwio.astype(jnp.bfloat16).reshape(9, Cin, Cout),
                 ((0, 0), (0, Cin_pad - Cin), (0, Cout_pad - Cout)))
    b2 = jnp.pad(bias.astype(jnp.float32).reshape(1, Cout),
                 ((0, 0), (0, Cout_pad - Cout)))

    grid = (N, RT, JT, KT)
    kernel = functools.partial(_conv3x3_bn_relu_kernel, wp=Wp_s, mt=Mt, n_rt=RT)

    blk = _blk_bytes(S_in, tk, tc, Mt)
    vmem_limit = int(min(cap, max(32 * 1024 * 1024, blk + 4 * 1024 * 1024)))

    # Honest traffic: x is re-read per (row tile, Cout tile) sweep when KT > 1;
    # weights are re-read per (batch, row tile) sweep when JT*KT > 1.
    x_reads = N * (RT * JT if KT > 1 else 1)
    w_reads = N * RT if JT * KT > 1 else 1
    cost = pl.CostEstimate(
        flops=2 * N * M * 9 * Cin_pad * Cout_pad,
        transcendentals=0,
        bytes_accessed=(x_reads * S_in * Cin_pad * 2
                        + w_reads * 9 * Cin_pad * Cout_pad * 2
                        + N * RT * JT * Cout_pad * 4
                        + N * M * Cout_pad * 2))

    out = pl.pallas_call(
        kernel,
        out_shape=jax.ShapeDtypeStruct((N, M, Cout_pad), jnp.bfloat16),
        grid=grid,
        in_specs=[
            pl.BlockSpec((1, S_in, tk), lambda n, r, j, k: (n, 0, k)),
            pl.BlockSpec((9, tk, tc), lambda n, r, j, k: (0, k, j)),
            pl.BlockSpec((1, tc), lambda n, r, j, k: (0, j)),
        ],
        out_specs=pl.BlockSpec((1, Mt, tc), lambda n, r, j, k: (n, r, j)),
        scratch_shapes=[pltpu.VMEM((Mt, tc), jnp.float32)],
        compiler_params=pltpu.CompilerParams(
            dimension_semantics=("parallel", "parallel", "parallel", "arbitrary"),
            vmem_limit_bytes=vmem_limit),
        cost_estimate=cost,
    )(xp, w9, b2)

    # Drop junk columns + Cout lane padding (stays bf16 -> half the slice traffic).
    return out.reshape(N, H, Wp_s, Cout_pad)[:, :, :W, :Cout]


def _conv3x3_bn_relu_ref(x_nhwc, w_hwio, bias):
    """Pure-JAX reference (same bf16 operand quantization, f32 math/output)."""
    y = lax.conv_general_dilated(
        x_nhwc.astype(jnp.float32), w_hwio.astype(jnp.float32),
        window_strides=(1, 1), padding="SAME",
        dimension_numbers=("NHWC", "HWIO", "NHWC"),
        precision=lax.Precision.HIGHEST)
    return jax.nn.relu(y + bias)


# --------------------------------------------------------------------------- #
# Plain-JAX glue for the tiny pyramid branches (spatial sizes 1/2/3/6).
# --------------------------------------------------------------------------- #
def _adaptive_pool_matrix(in_size, out_size):
    """Row i averages input[floor(i*in/out) : ceil((i+1)*in/out)] (PyTorch rule)."""
    P = np.zeros((out_size, in_size), np.float32)
    for i in range(out_size):
        start = (i * in_size) // out_size
        end = -((-(i + 1) * in_size) // out_size)
        P[i, start:end] = 1.0 / (end - start)
    return jnp.asarray(P)


def _bilinear_matrix(in_size, out_size):
    """Bilinear interpolation matrix (out_size, in_size), align_corners=True."""
    U = np.zeros((out_size, in_size), np.float32)
    if in_size == 1:
        U[:, 0] = 1.0
    else:
        for i in range(out_size):
            src = i * (in_size - 1) / (out_size - 1) if out_size > 1 else 0.0
            i0 = int(np.floor(src))
            i1 = min(i0 + 1, in_size - 1)
            f = src - i0
            U[i, i0] += 1.0 - f
            U[i, i1] += f
    return jnp.asarray(U)


def init_params(key, in_channels, bottleneck_factor):
    """Deterministic synthetic parameters; BatchNorm folded into conv weights/bias."""
    C = in_channels
    assert C % 4 == 0 and C % bottleneck_factor == 0
    Cm4 = C // 4                 # pyramid branch channels
    cat_c = 2 * C                # == 4096 in the real ICNet (in_channels == 2048)
    Cout = C // bottleneck_factor
    keys = jax.random.split(key, 4 * 5 + 5)
    ki = 0
    branches = []
    for _ in POOL_SIZES:         # conv1x1 + BN per branch
        w = jax.random.normal(keys[ki], (C, Cm4), jnp.float32) / np.sqrt(C); ki += 1
        gamma = jax.random.uniform(keys[ki], (Cm4,), jnp.float32, 0.5, 1.5); ki += 1
        beta = jax.random.normal(keys[ki], (Cm4,), jnp.float32) * 0.1; ki += 1
        mean = jax.random.normal(keys[ki], (Cm4,), jnp.float32) * 0.1; ki += 1
        var = jax.random.uniform(keys[ki], (Cm4,), jnp.float32, 0.5, 1.5); ki += 1
        s = gamma / jnp.sqrt(var + _BN_EPS)
        branches.append((w * s, beta - mean * s))
    w3 = jax.random.normal(keys[ki], (3, 3, cat_c, Cout), jnp.float32) / np.sqrt(9 * cat_c); ki += 1
    gamma = jax.random.uniform(keys[ki], (Cout,), jnp.float32, 0.5, 1.5); ki += 1
    beta = jax.random.normal(keys[ki], (Cout,), jnp.float32) * 0.1; ki += 1
    mean = jax.random.normal(keys[ki], (Cout,), jnp.float32) * 0.1; ki += 1
    var = jax.random.uniform(keys[ki], (Cout,), jnp.float32, 0.5, 1.5); ki += 1
    s = gamma / jnp.sqrt(var + _BN_EPS)
    return {"branches": branches, "w3": w3 * s, "b3": beta - mean * s}


def psp_block_forward(x_nchw, params, use_pallas=True):
    """PSPBlock forward. Input/output NCHW, exactly like the PyTorch module."""
    N, C, H, W = x_nchw.shape
    x = jnp.transpose(x_nchw, (0, 2, 3, 1)).astype(jnp.float32)          # -> NHWC
    feats = [x]                                                           # branch1: Identity
    for k, (w1, b1) in zip(POOL_SIZES, params["branches"]):
        Ph, Pw = _adaptive_pool_matrix(H, k), _adaptive_pool_matrix(W, k)
        p = jnp.einsum("ih,nhwc,jw->nijc", Ph, x, Pw)                     # AdaptiveAvgPool2d(k)
        y = jax.nn.relu(jnp.einsum("nijc,cm->nijm", p, w1) + b1)          # conv1x1 + BN + ReLU
        Uh, Uw = _bilinear_matrix(k, H), _bilinear_matrix(k, W)
        u = jnp.einsum("Hi,nijc,Wj->nHWc", Uh, y, Uw)                     # bilinear, align_corners=True
        feats.append(u)
    # bf16 operands for the MXU; the Pallas kernel accumulates in f32.
    xcat = jnp.concatenate(feats, axis=-1).astype(jnp.bfloat16)           # (N, H, W, 2C)
    w3 = params["w3"].astype(jnp.bfloat16)
    conv = conv3x3_bn_relu_pallas if use_pallas else _conv3x3_bn_relu_ref
    out = conv(xcat, w3, params["b3"])                                    # conv3x3 + BN + ReLU
    # TODO(synk): nn.Dropout(p=0.1) is the identity at inference; training-mode
    # Bernoulli masking/scaling is intentionally omitted.
    return jnp.transpose(out, (0, 3, 1, 2))                               # -> NCHW


if __name__ == "__main__":
    N, C, H, W = 2, 16, 16, 16
    bottleneck_factor = 4                 # mid_channels = C // bottleneck_factor = 4
    key = jax.random.PRNGKey(0)
    kx, kp = jax.random.split(key)
    x = jax.random.normal(kx, (N, C, H, W), jnp.float32)
    params = init_params(kp, C, bottleneck_factor)

    out = psp_block_forward(x, params, use_pallas=True)
    out = jax.block_until_ready(out)

    ref = psp_block_forward(x, params, use_pallas=False)
    assert out.shape == (N, C // bottleneck_factor, H, W), out.shape
    out_f32 = out.astype(jnp.float32)
    err = float(jnp.max(jnp.abs(out_f32 - ref)))
    assert jnp.allclose(out_f32, ref, atol=5e-2, rtol=3e-2), f"max abs err {err}"
    print("KERNEL_OK")
</pallas_src>

<mosaic_0001>
module attributes {stable_mosaic.version = 11 : i64} {
  func.func @_conv3x3_bn_relu_kernel(%arg0: i32, %arg1: i32, %arg2: i32, %arg3: i32, %arg4: memref<1x592x128xbf16, #tpu.memory_space<vmem>>, %arg5: memref<9x128x128xbf16, #tpu.memory_space<vmem>>, %arg6: memref<1x128xf32, #tpu.memory_space<vmem>>, %arg7: memref<1x512x128xbf16, #tpu.memory_space<vmem>>, %arg8: memref<512x128xf32, #tpu.memory_space<vmem>>) attributes {dimension_semantics = [#tpu.dimension_semantics<parallel>, #tpu.dimension_semantics<parallel>, #tpu.dimension_semantics<parallel>, #tpu.dimension_semantics<arbitrary>], iteration_bounds = array<i64: 2, 1, 1, 1>, scalar_prefetch = 0 : i64, scratch_operands = 1 : i64, tpu.core_type = #tpu.core_type<tc>, window_params = [{transform_indices = @transform_0, window_bounds = array<i64: 1, 592, 128>}, {transform_indices = @transform_1, window_bounds = array<i64: 9, 128, 128>}, {transform_indices = @transform_2, window_bounds = array<i64: 1, 128>}, {transform_indices = @transform_3, window_bounds = array<i64: 1, 512, 128>}]} {
    %c0_i32 = arith.constant 0 : i32
    %0 = arith.cmpi eq, %arg3, %c0_i32 : i32
    %1 = arith.extui %0 : i1 to i32
    %c0_i32_0 = arith.constant 0 : i32
    %2 = arith.cmpi ne, %1, %c0_i32_0 : i32
    scf.if %2 {
      %cst_54 = arith.constant 0.000000e+00 : f32
      %62 = vector.broadcast %cst_54 : f32 to vector<512x128xf32>
      %c0_55 = arith.constant 0 : index
      %c0_56 = arith.constant 0 : index
      %63 = vector.load %arg8[%c0_55, %c0_56] : memref<512x128xf32, #tpu.memory_space<vmem>>, vector<512x128xf32>
      tpu.vector_store %arg8[%c0_55, %c0_56], %62 {strides = array<i32>} : memref<512x128xf32, #tpu.memory_space<vmem>>, vector<512x128xf32>,
    } else {
    }
    %c0 = arith.constant 0 : index
    %c0_1 = arith.constant 0 : index
    %3 = vector.load %arg8[%c0, %c0_1] : memref<512x128xf32, #tpu.memory_space<vmem>>, vector<512x128xf32>
    %c0_2 = arith.constant 0 : index
    %c0_3 = arith.constant 0 : index
    %c0_4 = arith.constant 0 : index
    %4 = vector.load %arg4[%c0_2, %c0_3, %c0_4] : memref<1x592x128xbf16, #tpu.memory_space<vmem>>, vector<1x512x128xbf16>
    %5 = vector.shape_cast %4 : vector<1x512x128xbf16> to vector<512x128xbf16>
    %c0_5 = arith.constant 0 : index
    %c0_6 = arith.constant 0 : index
    %c0_7 = arith.constant 0 : index
    %6 = vector.load %arg5[%c0_5, %c0_6, %c0_7] : memref<9x128x128xbf16, #tpu.memory_space<vmem>>, vector<1x128x128xbf16>
    %7 = vector.shape_cast %6 : vector<1x128x128xbf16> to vector<128x128xbf16>
    %cst = arith.constant dense<0.000000e+00> : vector<512x128xf32>
    %8 = tpu.matmul %5, %7, %cst {dimension_numbers = #tpu.dot_dimension_numbers<[1], [0], [0], [1], [0, 0, 1, 1], [], []>} : vector<512x128xbf16>, vector<128x128xbf16>, vector<512x128xf32> -> vector<512x128xf32>
    %9 = arith.addf %3, %8 : vector<512x128xf32>
    %c0_8 = arith.constant 0 : index
    %c1 = arith.constant 1 : index
    %c0_9 = arith.constant 0 : index
    %10 = vector.load %arg4[%c0_8, %c1, %c0_9] : memref<1x592x128xbf16, #tpu.memory_space<vmem>>, vector<1x512x128xbf16>
    %11 = vector.shape_cast %10 : vector<1x512x128xbf16> to vector<512x128xbf16>
    %c1_10 = arith.constant 1 : index
    %c0_11 = arith.constant 0 : index
    %c0_12 = arith.constant 0 : index
    %12 = vector.load %arg5[%c1_10, %c0_11, %c0_12] : memref<9x128x128xbf16, #tpu.memory_space<vmem>>, vector<1x128x128xbf16>
    %13 = vector.shape_cast %12 : vector<1x128x128xbf16> to vector<128x128xbf16>
    %cst_13 = arith.constant dense<0.000000e+00> : vector<512x128xf32>
    %14 = tpu.matmul %11, %13, %cst_13 {dimension_numbers = #tpu.dot_dimension_numbers<[1], [0], [0], [1], [0, 0, 1, 1], [], []>} : vector<512x128xbf16>, vector<128x128xbf16>, vector<512x128xf32> -> vector<512x128xf32>
    %15 = arith.addf %9, %14 : vector<512x128xf32>
    %c0_14 = arith.constant 0 : index
    %c2 = arith.constant 2 : index
    %c0_15 = arith.constant 0 : index
    %16 = vector.load %arg4[%c0_14, %c2, %c0_15] : memref<1x592x128xbf16, #tpu.memory_space<vmem>>, vector<1x512x128xbf16>
    %17 = vector.shape_cast %16 : vector<1x512x128xbf16> to vector<512x128xbf16>
    %c2_16 = arith.constant 2 : index
    %c0_17 = arith.constant 0 : index
    %c0_18 = arith.constant 0 : index
    %18 = vector.load %arg5[%c2_16, %c0_17, %c0_18] : memref<9x128x128xbf16, #tpu.memory_space<vmem>>, vector<1x128x128xbf16>
    %19 = vector.shape_cast %18 : vector<1x128x128xbf16> to vector<128x128xbf16>
    %cst_19 = arith.constant dense<0.000000e+00> : vector<512x128xf32>
    %20 = tpu.matmul %17, %19, %cst_19 {dimension_numbers = #tpu.dot_dimension_numbers<[1], [0], [0], [1], [0, 0, 1, 1], [], []>} : vector<512x128xbf16>, vector<128x128xbf16>, vector<512x128xf32> -> vector<512x128xf32>
    %21 = arith.addf %15, %20 : vector<512x128xf32>
    %c0_20 = arith.constant 0 : index
    %c32 = arith.constant 32 : index
    %c0_21 = arith.constant 0 : index
    %22 = vector.load %arg4[%c0_20, %c32, %c0_21] : memref<1x592x128xbf16, #tpu.memory_space<vmem>>, vector<1x512x128xbf16>
    %23 = vector.shape_cast %22 : vector<1x512x128xbf16> to vector<512x128xbf16>
    %c3 = arith.constant 3 : index
    %c0_22 = arith.constant 0 : index
    %c0_23 = arith.constant 0 : index
    %24 = vector.load %arg5[%c3, %c0_22, %c0_23] : memref<9x128x128xbf16, #tpu.memory_space<vmem>>, vector<1x128x128xbf16>
    %25 = vector.shape_cast %24 : vector<1x128x128xbf16> to vector<128x128xbf16>
    %cst_24 = arith.constant dense<0.000000e+00> : vector<512x128xf32>
    %26 = tpu.matmul %23, %25, %cst_24 {dimension_numbers = #tpu.dot_dimension_numbers<[1], [0], [0], [1], [0, 0, 1, 1], [], []>} : vector<512x128xbf16>, vector<128x128xbf16>, vector<512x128xf32> -> vector<512x128xf32>
    %27 = arith.addf %21, %26 : vector<512x128xf32>
    %c0_25 = arith.constant 0 : index
    %c33 = arith.constant 33 : index
    %c0_26 = arith.constant 0 : index
    %28 = vector.load %arg4[%c0_25, %c33, %c0_26] : memref<1x592x128xbf16, #tpu.memory_space<vmem>>, vector<1x512x128xbf16>
    %29 = vector.shape_cast %28 : vector<1x512x128xbf16> to vector<512x128xbf16>
    %c4 = arith.constant 4 : index
    %c0_27 = arith.constant 0 : index
    %c0_28 = arith.constant 0 : index
    %30 = vector.load %arg5[%c4, %c0_27, %c0_28] : memref<9x128x128xbf16, #tpu.memory_space<vmem>>, vector<1x128x128xbf16>
    %31 = vector.shape_cast %30 : vector<1x128x128xbf16> to vector<128x128xbf16>
    %cst_29 = arith.constant dense<0.000000e+00> : vector<512x128xf32>
    %32 = tpu.matmul %29, %31, %cst_29 {dimension_numbers = #tpu.dot_dimension_numbers<[1], [0], [0], [1], [0, 0, 1, 1], [], []>} : vector<512x128xbf16>, vector<128x128xbf16>, vector<512x128xf32> -> vector<512x128xf32>
    %33 = arith.addf %27, %32 : vector<512x128xf32>
    %c0_30 = arith.constant 0 : index
    %c34 = arith.constant 34 : index
    %c0_31 = arith.constant 0 : index
    %34 = vector.load %arg4[%c0_30, %c34, %c0_31] : memref<1x592x128xbf16, #tpu.memory_space<vmem>>, vector<1x512x128xbf16>
    %35 = vector.shape_cast %34 : vector<1x512x128xbf16> to vector<512x128xbf16>
    %c5 = arith.constant 5 : index
    %c0_32 = arith.constant 0 : index
    %c0_33 = arith.constant 0 : index
    %36 = vector.load %arg5[%c5, %c0_32, %c0_33] : memref<9x128x128xbf16, #tpu.memory_space<vmem>>, vector<1x128x128xbf16>
    %37 = vector.shape_cast %36 : vector<1x128x128xbf16> to vector<128x128xbf16>
    %cst_34 = arith.constant dense<0.000000e+00> : vector<512x128xf32>
    %38 = tpu.matmul %35, %37, %cst_34 {dimension_numbers = #tpu.dot_dimension_numbers<[1], [0], [0], [1], [0, 0, 1, 1], [], []>} : vector<512x128xbf16>, vector<128x128xbf16>, vector<512x128xf32> -> vector<512x128xf32>
    %39 = arith.addf %33, %38 : vector<512x128xf32>
    %c0_35 = arith.constant 0 : index
    %c64 = arith.constant 64 : index
    %c0_36 = arith.constant 0 : index
    %40 = vector.load %arg4[%c0_35, %c64, %c0_36] : memref<1x592x128xbf16, #tpu.memory_space<vmem>>, vector<1x512x128xbf16>
    %41 = vector.shape_cast %40 : vector<1x512x128xbf16> to vector<512x128xbf16>
    %c6 = arith.constant 6 : index
    %c0_37 = arith.constant 0 : index
    %c0_38 = arith.constant 0 : index
    %42 = vector.load %arg5[%c6, %c0_37, %c0_38] : memref<9x128x128xbf16, #tpu.memory_space<vmem>>, vector<1x128x128xbf16>
    %43 = vector.shape_cast %42 : vector<1x128x128xbf16> to vector<128x128xbf16>
    %cst_39 = arith.constant dense<0.000000e+00> : vector<512x128xf32>
    %44 = tpu.matmul %41, %43, %cst_39 {dimension_numbers = #tpu.dot_dimension_numbers<[1], [0], [0], [1], [0, 0, 1, 1], [], []>} : vector<512x128xbf16>, vector<128x128xbf16>, vector<512x128xf32> -> vector<512x128xf32>
    %45 = arith.addf %39, %44 : vector<512x128xf32>
    %c0_40 = arith.constant 0 : index
    %c65 = arith.constant 65 : index
    %c0_41 = arith.constant 0 : index
    %46 = vector.load %arg4[%c0_40, %c65, %c0_41] : memref<1x592x128xbf16, #tpu.memory_space<vmem>>, vector<1x512x128xbf16>
    %47 = vector.shape_cast %46 : vector<1x512x128xbf16> to vector<512x128xbf16>
    %c7 = arith.constant 7 : index
    %c0_42 = arith.constant 0 : index
    %c0_43 = arith.constant 0 : index
    %48 = vector.load %arg5[%c7, %c0_42, %c0_43] : memref<9x128x128xbf16, #tpu.memory_space<vmem>>, vector<1x128x128xbf16>
    %49 = vector.shape_cast %48 : vector<1x128x128xbf16> to vector<128x128xbf16>
    %cst_44 = arith.constant dense<0.000000e+00> : vector<512x128xf32>
    %50 = tpu.matmul %47, %49, %cst_44 {dimension_numbers = #tpu.dot_dimension_numbers<[1], [0], [0], [1], [0, 0, 1, 1], [], []>} : vector<512x128xbf16>, vector<128x128xbf16>, vector<512x128xf32> -> vector<512x128xf32>
    %51 = arith.addf %45, %50 : vector<512x128xf32>
    %c0_45 = arith.constant 0 : index
    %c66 = arith.constant 66 : index
    %c0_46 = arith.constant 0 : index
    %52 = vector.load %arg4[%c0_45, %c66, %c0_46] : memref<1x592x128xbf16, #tpu.memory_space<vmem>>, vector<1x512x128xbf16>
    %53 = vector.shape_cast %52 : vector<1x512x128xbf16> to vector<512x128xbf16>
    %c8 = arith.constant 8 : index
    %c0_47 = arith.constant 0 : index
    %c0_48 = arith.constant 0 : index
    %54 = vector.load %arg5[%c8, %c0_47, %c0_48] : memref<9x128x128xbf16, #tpu.memory_space<vmem>>, vector<1x128x128xbf16>
    %55 = vector.shape_cast %54 : vector<1x128x128xbf16> to vector<128x128xbf16>
    %cst_49 = arith.constant dense<0.000000e+00> : vector<512x128xf32>
    %56 = tpu.matmul %53, %55, %cst_49 {dimension_numbers = #tpu.dot_dimension_numbers<[1], [0], [0], [1], [0, 0, 1, 1], [], []>} : vector<512x128xbf16>, vector<128x128xbf16>, vector<512x128xf32> -> vector<512x128xf32>
    %57 = arith.addf %51, %56 : vector<512x128xf32>
    %c0_50 = arith.constant 0 : index
    %c0_51 = arith.constant 0 : index
    %58 = vector.load %arg8[%c0_50, %c0_51] : memref<512x128xf32, #tpu.memory_space<vmem>>, vector<512x128xf32>
    tpu.vector_store %arg8[%c0_50, %c0_51], %57 {strides = array<i32>} : memref<512x128xf32, #tpu.memory_space<vmem>>, vector<512x128xf32>,
    %c0_i32_52 = arith.constant 0 : i32
    %59 = arith.cmpi eq, %arg3, %c0_i32_52 : i32
    %60 = arith.extui %59 : i1 to i32
    %c0_i32_53 = arith.constant 0 : i32
    %61 = arith.cmpi ne, %60, %c0_i32_53 : i32
    scf.if %61 {
      %c0_54 = arith.constant 0 : index
      %c0_55 = arith.constant 0 : index
      %62 = vector.load %arg8[%c0_54, %c0_55] : memref<512x128xf32, #tpu.memory_space<vmem>>, vector<512x128xf32>
      %c0_56 = arith.constant 0 : index
      %c0_57 = arith.constant 0 : index
      %63 = vector.load %arg6[%c0_56, %c0_57] : memref<1x128xf32, #tpu.memory_space<vmem>>, vector<1x128xf32>
      %64 = vector.broadcast %63 : vector<1x128xf32> to vector<512x128xf32>
      %65 = arith.addf %62, %64 : vector<512x128xf32>
      %cst_58 = arith.constant 0.000000e+00 : f32
      %66 = vector.broadcast %cst_58 : f32 to vector<512x128xf32>
      %67 = arith.maximumf %65, %66 : vector<512x128xf32>
      %68 = arith.truncf %67 : vector<512x128xf32> to vector<512x128xbf16>
      %c0_59 = arith.constant 0 : index
      %c0_60 = arith.constant 0 : index
      %c0_61 = arith.constant 0 : index
      %69 = vector.load %arg7[%c0_59, %c0_60, %c0_61] : memref<1x512x128xbf16, #tpu.memory_space<vmem>>, vector<1x512x128xbf16>
      %70 = vector.shape_cast %69 : vector<1x512x128xbf16> to vector<512x128xbf16>
      %71 = vector.shape_cast %68 : vector<512x128xbf16> to vector<1x512x128xbf16>
      tpu.vector_store %arg7[%c0_59, %c0_60, %c0_61], %71 {strides = array<i32>} : memref<1x512x128xbf16, #tpu.memory_space<vmem>>, vector<1x512x128xbf16>,
    } else {
    }
    return
  }
  func.func @transform_0(%arg0: i32, %arg1: i32, %arg2: i32, %arg3: i32) -> (i32, i32, i32) {
    %c0_i32 = arith.constant 0 : i32
    %c0_i32_0 = arith.constant 0 : i32
    return %arg0, %c0_i32, %arg3 : i32, i32, i32
  }
  func.func @transform_1(%arg0: i32, %arg1: i32, %arg2: i32, %arg3: i32) -> (i32, i32, i32) {
    %c0_i32 = arith.constant 0 : i32
    %c0_i32_0 = arith.constant 0 : i32
    return %c0_i32, %arg3, %arg2 : i32, i32, i32
  }
  func.func @transform_2(%arg0: i32, %arg1: i32, %arg2: i32, %arg3: i32) -> (i32, i32) {
    %c0_i32 = arith.constant 0 : i32
    %c0_i32_0 = arith.constant 0 : i32
    return %c0_i32, %arg2 : i32, i32
  }
  func.func @transform_3(%arg0: i32, %arg1: i32, %arg2: i32, %arg3: i32) -> (i32, i32, i32) {
    %c0_i32 = arith.constant 0 : i32
    return %arg0, %arg1, %arg2 : i32, i32, i32
  }
}

</mosaic_0001>

<llo_original>
// kernel: tpu_custom_call.1
$region0: #{tpu_custom_call.1}
  #allocation0 [shape = 'u32[]', space=smem, size = 0x4, offset = 0x4, fixed_abs, tag = 'smem constant byte address 0x4 - core index']
  #allocation1 [shape = 'u32[144,128]{1,0:T(1,128)}', space=vmem, size = 0x12000, scoped, tag = 'internal scratch']
  #allocation2 [shape = 'f32[512,128]{1,0:T(8,128)}', space=vmem, size = 0x40000, scoped, tag = 'scratch operand']
  %s0 = inlined_call_operand.hbm [shape: bf16[2,592,128], index: 0, kind: input, shape index: {}]
  %s1 = inlined_call_operand.hbm [shape: bf16[9,128,128], index: 1, kind: input, shape index: {}]
  %s2 = inlined_call_operand.vmem [shape: f32[1,128], index: 2, kind: input, shape index: {}]
  %s3 = inlined_call_operand.hbm [shape: bf16[2,512,128], index: 3, kind: output, shape index: {}]
  %s4 = sld [smem:[#allocation0]]
  $region61: #{tpu_custom_call.1} parent=0
    _
  %s6 = ssub.s32 1, %s4
  %s7 = scalar_select 0, %s6, %s4
  $region1: #{tpu_custom_call.1} parent=0
    #allocation3 [shape = 'u8[303104]{0}', space=vmem, size = 0x4a000, scoped, tag = 'input window, operand 0']
    #allocation4 [shape = 's32[2]{0}', space=sflag, size = 0x8, scoped, tag = 'scoped memory for tpu_custom_call.1']
    #allocation5 [shape = 's32[2]{0}', space=sflag, size = 0x8, scoped, tag = 'scoped memory for tpu_custom_call.1']
    #allocation6 [shape = 'u8[294912]{0}', space=vmem, size = 0x48000, scoped, tag = 'input window, operand 1, single buffered']
    #allocation7 [shape = 's32[1]{0}', space=sflag, size = 0x4, scoped, tag = 'scoped memory for tpu_custom_call.1']
    #allocation8 [shape = 'u8[262144]{0}', space=vmem, size = 0x40000, scoped, tag = 'output window, operand 0']
    %8 = vsyncpa [#allocation4], 0
    %s9 = scalar_lea.sflag [#allocation4], 1
    %10 = vsyncpa %s9, 0
    %11 = vsyncpa [#allocation7], 0
    %12 = vsyncpa [#allocation5], 0
    %s13 = scalar_lea.sflag [#allocation5], 1
    %14 = vsyncpa %s13, 0
    loop: start=0, step=1, limit=4
    $region2: #{tpu_custom_call.1} parent=1 // loop_pre_header
      _
    $region3: #{tpu_custom_call.1} parent=1 // loop_header
      %s16 = sphi 0, %s20
      %p17 = scmp.ge.s32.totalorder %s16, 4
      %s23 = sphi 0, %s49
      %s24 = sphi 0, %s45
      %s25 = sphi 0, %s41
      %s26 = sphi 0, %s37
      %s27 = sphi 0, %s23
      %s28 = sphi 0, %s24
      %s29 = sphi 0, %s25
      %s30 = sphi 0, %s26
      %s31 = sphi 0, %s27
      %s32 = sphi 0, %s28
      %s33 = sphi 0, %s29
      %s34 = sphi 0, %s30
      %s54 = sphi 0, %s56
      %s57 = sphi 0, %s54
      %s58 = sphi 0, %s57
      %s74 = sphi 0, %s58
      %s82 = sphi 0, %s84
      %s85 = sphi 0, %s82
      %s86 = sphi 0, %s85
      %s102 = sphi 0, %s86
      %s108 = sphi 0, %s110
      %s111 = sphi 0, %s108
      %s112 = sphi 0, %s111
      %s128 = sphi 0, %s112
      %s138 = sphi 0, %s140
      %s141 = sphi 0, %s138
      %s142 = sphi 0, %s141
      %s158 = sphi 0, %s142
    $region4: #{tpu_custom_call.1} parent=1 // loop_header_branch
      %19 = sbr.rel (%p17) target = $region8
    $region5: #{tpu_custom_call.1} parent=1 // loop_body
      %s21 = ssub.s32 %s16, 1
      %s22 = ssub.s32 %s16, 2
      %s35 = sadd.s32 1, %s26
      %p36 = scmp.ge.s32.totalorder %s35, 1
      %s37 = scalar_select %p36, 0, %s35
      %s38 = sadd.s32 1, %s25
      %s39 = scalar_select %p36, %s38, %s25
      %p40 = scmp.ge.s32.totalorder %s39, 1
      %s41 = scalar_select %p40, 0, %s39
      %s42 = sadd.s32 1, %s24
      %s43 = scalar_select %p40, %s42, %s24
      %p44 = scmp.ge.s32.totalorder %s43, 1
      %s45 = scalar_select %p44, 0, %s43
      %s46 = sadd.s32 1, %s23
      %s47 = scalar_select %p44, %s46, %s23
      %p48 = scmp.ge.s32.totalorder %s47, 2
      %s49 = scalar_select %p48, 0, %s47
      %s50 = ssub.s32 %s23, %s49
      %s51 = ssub.s32 %s26, %s37
      %s52 = sor.u32 %s50, %s51
      %p53 = scmp.eq.s32.totalorder %s52, 0
      %s55 = sadd.s32 %s54, 1
      %s56 = scalar_select %p53, %s54, %s55
      %p59 = pneg %p53
      %p60 = scmp.eq.s32.totalorder %s16, 1
      %p61 = por %p59, %p60
      %p62 = scmp.ne.s32.totalorder %s54, %s57
      %p63 = scmp.eq.s32.totalorder %s16, 0
      %p64 = por %p62, %p63
      %p65 = scmp.ne.s32.totalorder %s54, %s57
      %p66 = scmp.eq.s32.totalorder %s21, 1
      %p67 = por %p65, %p66
      %p68 = scmp.ne.s32.totalorder %s57, %s58
      %p69 = scmp.eq.s32.totalorder %s21, 0
      %p70 = por %p68, %p69
      %p71 = scmp.ne.s32.totalorder %s57, %s58
      %p72 = scmp.eq.s32.totalorder %s22, 1
      %p73 = por %p71, %p72
      %p75 = scmp.ne.s32.totalorder %s58, %s74
      %p76 = scmp.eq.s32.totalorder %s22, 0
      %p77 = por %p75, %p76
      %s78 = ssub.s32 %s26, %s37
      %s79 = ssub.s32 %s25, %s41
      %s80 = sor.u32 %s78, %s79
      %p81 = scmp.eq.s32.totalorder %s80, 0
      %s83 = sadd.s32 %s82, 1
      %s84 = scalar_select %p81, %s82, %s83
      %p87 = pneg %p81
      %p88 = scmp.eq.s32.totalorder %s16, 1
      %p89 = por %p87, %p88
      %p90 = scmp.ne.s32.totalorder %s82, %s85
      %p91 = scmp.eq.s32.totalorder %s16, 0
      %p92 = por %p90, %p91
      %p93 = scmp.ne.s32.totalorder %s82, %s85
      %p94 = scmp.eq.s32.totalorder %s21, 1
      %p95 = por %p93, %p94
      %p96 = scmp.ne.s32.totalorder %s85, %s86
      %p97 = scmp.eq.s32.totalorder %s21, 0
      %p98 = por %p96, %p97
      %p99 = scmp.ne.s32.totalorder %s85, %s86
      %p100 = scmp.eq.s32.totalorder %s22, 1
      %p101 = por %p99, %p100
      %p103 = scmp.ne.s32.totalorder %s86, %s102
      %p104 = scmp.eq.s32.totalorder %s22, 0
      %p105 = por %p103, %p104
      %s106 = ssub.s32 %s25, %s41
      %p107 = scmp.eq.s32.totalorder %s106, 0
      %s109 = sadd.s32 %s108, 1
      %s110 = scalar_select %p107, %s108, %s109
      %p113 = pneg %p107
      %p114 = scmp.eq.s32.totalorder %s16, 1
      %p115 = por %p113, %p114
      %p116 = scmp.ne.s32.totalorder %s108, %s111
      %p117 = scmp.eq.s32.totalorder %s16, 0
      %p118 = por %p116, %p117
      %p119 = scmp.ne.s32.totalorder %s108, %s111
      %p120 = scmp.eq.s32.totalorder %s21, 1
      %p121 = por %p119, %p120
      %p122 = scmp.ne.s32.totalorder %s111, %s112
      %p123 = scmp.eq.s32.totalorder %s21, 0
      %p124 = por %p122, %p123
      %p125 = scmp.ne.s32.totalorder %s111, %s112
      %p126 = scmp.eq.s32.totalorder %s22, 1
      %p127 = por %p125, %p126
      %p129 = scmp.ne.s32.totalorder %s112, %s128
      %p130 = scmp.eq.s32.totalorder %s22, 0
      %p131 = por %p129, %p130
      %s132 = ssub.s32 %s23, %s49
      %s133 = ssub.s32 %s24, %s45
      %s134 = sor.u32 %s132, %s133
      %s135 = ssub.s32 %s25, %s41
      %s136 = sor.u32 %s134, %s135
      %p137 = scmp.eq.s32.totalorder %s136, 0
      %s139 = sadd.s32 %s138, 1
      %s140 = scalar_select %p137, %s138, %s139
      %p143 = pneg %p137
      %p144 = scmp.eq.s32.totalorder %s16, 1
      %p145 = por %p143, %p144
      %p146 = scmp.ne.s32.totalorder %s138, %s141
      %p147 = scmp.eq.s32.totalorder %s16, 0
      %p148 = por %p146, %p147
      %p149 = scmp.ne.s32.totalorder %s138, %s141
      %p150 = scmp.eq.s32.totalorder %s21, 1
      %p151 = por %p149, %p150
      %p152 = scmp.ne.s32.totalorder %s141, %s142
      %p153 = scmp.eq.s32.totalorder %s21, 0
      %p154 = por %p152, %p153
      %p155 = scmp.ne.s32.totalorder %s141, %s142
      %p156 = scmp.eq.s32.totalorder %s22, 1
      %p157 = por %p155, %p156
      %p159 = scmp.ne.s32.totalorder %s142, %s158
      %p160 = scmp.eq.s32.totalorder %s22, 0
      %p161 = por %p159, %p160
      %p162 = scmp.le.s32.totalorder 1, %s16
      %p163 = scmp.lt.s32.totalorder %s16, 3
      %p164 = pnand %p162, %p163
      %p165 = pneg %p164
      // Predicated region
      $region9: #{tpu_custom_call.1} parent=5 // pred_check
        _
      $region10: #{tpu_custom_call.1} parent=5 // pred_check_branch
        %167 = sbr.rel (%p164) target = $region12
      $region11: #{tpu_custom_call.1} parent=5 // pred_region
        %s168 = ssub.s32 %s16, 1
        // Predicated region
        $region13: #{tpu_custom_call.1} parent=11 // pred_check
          %p169 = pneg %p98
        $region14: #{tpu_custom_call.1} parent=11 // pred_check_branch
          %171 = sbr.rel (%p169) target = $region16
        $region15: #{tpu_custom_call.1} parent=11 // pred_region
          %s172 = smul.u32 16, %s30
          %s174 = ssub.s32 9216, 9216
          %175 = vsyncadd [#allocation7], %s174
          %s176 = sadd.s32 %s29, %s172
          %s177 = smul.addr %s176, 64
          %s178 = scalar_lea.hbm %s1, %s177
          %s179 = sshll.u32 [#allocation6], 4
          %s180 = int_to_ptr.vmem [resolvable:$true] %s179
          %185 = dma.hbm_to_vmem [thread:$0]  %s178, 9216, %s180, [#allocation7], 64, 64, 4
        $region16: #{tpu_custom_call.1} parent=11 // pred_fallthru
          _
        // Predicated region
        $region17: #{tpu_custom_call.1} parent=11 // pred_check
          %p186 = pneg %p124
        $region18: #{tpu_custom_call.1} parent=11 // pred_check_branch
          %188 = sbr.rel (%p186) target = $region20
        $region19: #{tpu_custom_call.1} parent=11 // pred_region
          %p189 = scmp.lt.s32.totalorder %s29, 0
          %s190 = scalar_select %p189, %s29, 0
          %s191 = scalar_lea.vmem %s2, %s190
        $region20: #{tpu_custom_call.1} parent=11 // pred_fallthru
          _
      $region12: #{tpu_custom_call.1} parent=5 // pred_fallthru
        _
      %p192 = scmp.lt.s32.totalorder %s16, 2
      // Predicated region
      $region21: #{tpu_custom_call.1} parent=5 // pred_check
        %p193 = pneg %p192
      $region22: #{tpu_custom_call.1} parent=5 // pred_check_branch
        %195 = sbr.rel (%p193) target = $region24
      $region23: #{tpu_custom_call.1} parent=5 // pred_region
        // Predicated region
        $region25: #{tpu_custom_call.1} parent=23 // pred_check
          %p196 = pneg %p64
        $region26: #{tpu_custom_call.1} parent=23 // pred_check_branch
          %198 = sbr.rel (%p196) target = $region28
        $region27: #{tpu_custom_call.1} parent=23 // pred_region
          %s199 = sand.u32 %s54, 1
          %s200 = scalar_lea.sflag [#allocation4], %s199
          %s201 = sand.u32 %s54, 1
          %s202 = smul.addr %s201, 296
          %s203 = scalar_lea.vmem [#allocation3], %s202
          %s205 = ssub.s32 4736, 4736
          %206 = vsyncadd %s200, %s205
          %s207 = smul.addr %s23, 74
          %s208 = sadd.s32 %s26, %s207
          %s209 = smul.addr %s208, 64
          %s210 = scalar_lea.hbm %s0, %s209
          %s211 = sshll.u32 %s203, 4
          %s212 = int_to_ptr.vmem [resolvable:$true] %s211
          %217 = dma.hbm_to_vmem [thread:$0]  %s210, 4736, %s212, %s200, 64, 64, 4
        $region28: #{tpu_custom_call.1} parent=23 // pred_fallthru
          _
      $region24: #{tpu_custom_call.1} parent=5 // pred_fallthru
        _
      %p218 = scmp.le.s32.totalorder 1, %s16
      %p219 = scmp.lt.s32.totalorder %s16, 3
      %p220 = pnand %p218, %p219
      %p221 = pneg %p220
      // Predicated region
      $region29: #{tpu_custom_call.1} parent=5 // pred_check
        _
      $region30: #{tpu_custom_call.1} parent=5 // pred_check_branch
        %223 = sbr.rel (%p220) target = $region32
      $region31: #{tpu_custom_call.1} parent=5 // pred_region
        %s224 = ssub.s32 %s16, 1
        %s225 = sand.u32 %s57, 1
        %s226 = scalar_lea.sflag [#allocation4], %s225
        %s227 = sand.u32 %s57, 1
        %s228 = smul.addr %s227, 296
        %s229 = scalar_lea.vmem [#allocation3], %s228
        // Predicated region
        $region33: #{tpu_custom_call.1} parent=31 // pred_check
          %p230 = pneg %p70
        $region34: #{tpu_custom_call.1} parent=31 // pred_check_branch
          %232 = sbr.rel (%p230) target = $region36
        $region35: #{tpu_custom_call.1} parent=31 // pred_region
          %233 = dma.done %s226, 4736
        $region36: #{tpu_custom_call.1} parent=31 // pred_fallthru
          _
        // Predicated region
        $region37: #{tpu_custom_call.1} parent=31 // pred_check
          %p234 = pneg %p98
        $region38: #{tpu_custom_call.1} parent=31 // pred_check_branch
          %236 = sbr.rel (%p234) target = $region40
        $region39: #{tpu_custom_call.1} parent=31 // pred_region
          %237 = dma.done [#allocation7], 9216
        $region40: #{tpu_custom_call.1} parent=31 // pred_fallthru
          _
        %s238 = sand.u32 %s57, 1
        %s239 = scalar_lea.sflag [#allocation4], %s238
        %s240 = sand.u32 %s57, 1
        %s241 = smul.addr %s240, 296
        %s242 = scalar_lea.vmem [#allocation3], %s241
        %p243 = pneg %p70
        %p244 = pneg %p67
        %p245 = pneg %p98
        %p246 = pneg %p95
        %p247 = scmp.lt.s32.totalorder %s29, 0
        %s248 = scalar_select %p247, %s29, 0
        %s249 = scalar_lea.vmem %s2, %s248
        %p250 = pneg %p124
        %p251 = pneg %p121
        %p252 = pneg %p154
        %p253 = pneg %p151
        %s254 = sand.u32 %s141, 1
        %s255 = scalar_lea.sflag [#allocation5], %s254
        %s256 = sand.u32 %s141, 1
        %s257 = smul.addr %s256, 256
        %s258 = scalar_lea.vmem [#allocation8], %s257
        %s259 = smul.u32 16, %s30
        %p260 = scmp.lt.s32.totalorder %s29, 0
        %s261 = scalar_select %p260, %s29, 0
        %s262 = scalar_lea.vmem %s2, %s261
        %s263 = smul.u32 64, %s28
        %p265 = scmp.eq.s32.totalorder %s30, 0
        // Predicated region
        $region41: #{tpu_custom_call.1} parent=31 // pred_check
          %p266 = pneg %p265
        $region42: #{tpu_custom_call.1} parent=31 // pred_check_branch
          %268 = sbr.rel (%p266) target = $region44
        $region43: #{tpu_custom_call.1} parent=31 // pred_region
          %269 = vst [vmem:[#allocation2] sm:$0xff] 0.0
          %270 = vst [vmem:[#allocation2 + $0x8] sm:$0xff] 0.0
          %271 = vst [vmem:[#allocation2 + $0x10] sm:$0xff] 0.0
          %272 = vst [vmem:[#allocation2 + $0x18] sm:$0xff] 0.0
          %273 = vst [vmem:[#allocation2 + $0x20] sm:$0xff] 0.0
          %274 = vst [vmem:[#allocation2 + $0x28] sm:$0xff] 0.0
          %275 = vst [vmem:[#allocation2 + $0x30] sm:$0xff] 0.0
          %276 = vst [vmem:[#allocation2 + $0x38] sm:$0xff] 0.0
          %277 = vst [vmem:[#allocation2 + $0x40] sm:$0xff] 0.0
          %278 = vst [vmem:[#allocation2 + $0x48] sm:$0xff] 0.0
          %279 = vst [vmem:[#allocation2 + $0x50] sm:$0xff] 0.0
          %280 = vst [vmem:[#allocation2 + $0x58] sm:$0xff] 0.0
          %281 = vst [vmem:[#allocation2 + $0x60] sm:$0xff] 0.0
          %282 = vst [vmem:[#allocation2 + $0x68] sm:$0xff] 0.0
          %283 = vst [vmem:[#allocation2 + $0x70] sm:$0xff] 0.0
          %284 = vst [vmem:[#allocation2 + $0x78] sm:$0xff] 0.0
          %285 = vst [vmem:[#allocation2 + $0x80] sm:$0xff] 0.0
          %286 = vst [vmem:[#allocation2 + $0x88] sm:$0xff] 0.0
          %287 = vst [vmem:[#allocation2 + $0x90] sm:$0xff] 0.0
          %288 = vst [vmem:[#allocation2 + $0x98] sm:$0xff] 0.0
          %289 = vst [vmem:[#allocation2 + $0xa0] sm:$0xff] 0.0
          %290 = vst [vmem:[#allocation2 + $0xa8] sm:$0xff] 0.0
          %291 = vst [vmem:[#allocation2 + $0xb0] sm:$0xff] 0.0
          %292 = vst [vmem:[#allocation2 + $0xb8] sm:$0xff] 0.0
          %293 = vst [vmem:[#allocation2 + $0xc0] sm:$0xff] 0.0
          %294 = vst [vmem:[#allocation2 + $0xc8] sm:$0xff] 0.0
          %295 = vst [vmem:[#allocation2 + $0xd0] sm:$0xff] 0.0
          %296 = vst [vmem:[#allocation2 + $0xd8] sm:$0xff] 0.0
          %297 = vst [vmem:[#allocation2 + $0xe0] sm:$0xff] 0.0
          %298 = vst [vmem:[#allocation2 + $0xe8] sm:$0xff] 0.0
          %299 = vst [vmem:[#allocation2 + $0xf0] sm:$0xff] 0.0
          %300 = vst [vmem:[#allocation2 + $0xf8] sm:$0xff] 0.0
          %301 = vst [vmem:[#allocation2 + $0x100] sm:$0xff] 0.0
          %302 = vst [vmem:[#allocation2 + $0x108] sm:$0xff] 0.0
          %303 = vst [vmem:[#allocation2 + $0x110] sm:$0xff] 0.0
          %304 = vst [vmem:[#allocation2 + $0x118] sm:$0xff] 0.0
          %305 = vst [vmem:[#allocation2 + $0x120] sm:$0xff] 0.0
          %306 = vst [vmem:[#allocation2 + $0x128] sm:$0xff] 0.0
          %307 = vst [vmem:[#allocation2 + $0x130] sm:$0xff] 0.0
          %308 = vst [vmem:[#allocation2 + $0x138] sm:$0xff] 0.0
          %309 = vst [vmem:[#allocation2 + $0x140] sm:$0xff] 0.0
          %310 = vst [vmem:[#allocation2 + $0x148] sm:$0xff] 0.0
          %311 = vst [vmem:[#allocation2 + $0x150] sm:$0xff] 0.0
          %312 = vst [vmem:[#allocation2 + $0x158] sm:$0xff] 0.0
          %313 = vst [vmem:[#allocation2 + $0x160] sm:$0xff] 0.0
          %314 = vst [vmem:[#allocation2 + $0x168] sm:$0xff] 0.0
          %315 = vst [vmem:[#allocation2 + $0x170] sm:$0xff] 0.0
          %316 = vst [vmem:[#allocation2 + $0x178] sm:$0xff] 0.0
          %317 = vst [vmem:[#allocation2 + $0x180] sm:$0xff] 0.0
          %318 = vst [vmem:[#allocation2 + $0x188] sm:$0xff] 0.0
          %319 = vst [vmem:[#allocation2 + $0x190] sm:$0xff] 0.0
          %320 = vst [vmem:[#allocation2 + $0x198] sm:$0xff] 0.0
          %321 = vst [vmem:[#allocation2 + $0x1a0] sm:$0xff] 0.0
          %322 = vst [vmem:[#allocation2 + $0x1a8] sm:$0xff] 0.0
          %323 = vst [vmem:[#allocation2 + $0x1b0] sm:$0xff] 0.0
          %324 = vst [vmem:[#allocation2 + $0x1b8] sm:$0xff] 0.0
          %325 = vst [vmem:[#allocation2 + $0x1c0] sm:$0xff] 0.0
          %326 = vst [vmem:[#allocation2 + $0x1c8] sm:$0xff] 0.0
          %327 = vst [vmem:[#allocation2 + $0x1d0] sm:$0xff] 0.0
          %328 = vst [vmem:[#allocation2 + $0x1d8] sm:$0xff] 0.0
          %329 = vst [vmem:[#allocation2 + $0x1e0] sm:$0xff] 0.0
          %330 = vst [vmem:[#allocation2 + $0x1e8] sm:$0xff] 0.0
          %331 = vst [vmem:[#allocation2 + $0x1f0] sm:$0xff] 0.0
          %332 = vst [vmem:[#allocation2 + $0x1f8] sm:$0xff] 0.0
        $region44: #{tpu_custom_call.1} parent=31 // pred_fallthru
          _
        %v333 = vld [vmem:[#allocation2] sm:$0xff]
        %v334 = vld [vmem:[#allocation2 + $0x8] sm:$0xff]
        %v335 = vld [vmem:[#allocation2 + $0x10] sm:$0xff]
        %v336 = vld [vmem:[#allocation2 + $0x18] sm:$0xff]
        %v337 = vld [vmem:[#allocation2 + $0x20] sm:$0xff]
        %v338 = vld [vmem:[#allocation2 + $0x28] sm:$0xff]
        %v339 = vld [vmem:[#allocation2 + $0x30] sm:$0xff]
        %v340 = vld [vmem:[#allocation2 + $0x38] sm:$0xff]
        %v341 = vld [vmem:[#allocation2 + $0x40] sm:$0xff]
        %v342 = vld [vmem:[#allocation2 + $0x48] sm:$0xff]
        %v343 = vld [vmem:[#allocation2 + $0x50] sm:$0xff]
        %v344 = vld [vmem:[#allocation2 + $0x58] sm:$0xff]
        %v345 = vld [vmem:[#allocation2 + $0x60] sm:$0xff]
        %v346 = vld [vmem:[#allocation2 + $0x68] sm:$0xff]
        %v347 = vld [vmem:[#allocation2 + $0x70] sm:$0xff]
        %v348 = vld [vmem:[#allocation2 + $0x78] sm:$0xff]
        %v349 = vld [vmem:[#allocation2 + $0x80] sm:$0xff]
        %v350 = vld [vmem:[#allocation2 + $0x88] sm:$0xff]
        %v351 = vld [vmem:[#allocation2 + $0x90] sm:$0xff]
        %v352 = vld [vmem:[#allocation2 + $0x98] sm:$0xff]
        %v353 = vld [vmem:[#allocation2 + $0xa0] sm:$0xff]
        %v354 = vld [vmem:[#allocation2 + $0xa8] sm:$0xff]
        %v355 = vld [vmem:[#allocation2 + $0xb0] sm:$0xff]
        %v356 = vld [vmem:[#allocation2 + $0xb8] sm:$0xff]
        %v357 = vld [vmem:[#allocation2 + $0xc0] sm:$0xff]
        %v358 = vld [vmem:[#allocation2 + $0xc8] sm:$0xff]
        %v359 = vld [vmem:[#allocation2 + $0xd0] sm:$0xff]
        %v360 = vld [vmem:[#allocation2 + $0xd8] sm:$0xff]
        %v361 = vld [vmem:[#allocation2 + $0xe0] sm:$0xff]
        %v362 = vld [vmem:[#allocation2 + $0xe8] sm:$0xff]
        %v363 = vld [vmem:[#allocation2 + $0xf0] sm:$0xff]
        %v364 = vld [vmem:[#allocation2 + $0xf8] sm:$0xff]
        %v365 = vld [vmem:[#allocation2 + $0x100] sm:$0xff]
        %v366 = vld [vmem:[#allocation2 + $0x108] sm:$0xff]
        %v367 = vld [vmem:[#allocation2 + $0x110] sm:$0xff]
        %v368 = vld [vmem:[#allocation2 + $0x118] sm:$0xff]
        %v369 = vld [vmem:[#allocation2 + $0x120] sm:$0xff]
        %v370 = vld [vmem:[#allocation2 + $0x128] sm:$0xff]
        %v371 = vld [vmem:[#allocation2 + $0x130] sm:$0xff]
        %v372 = vld [vmem:[#allocation2 + $0x138] sm:$0xff]
        %v373 = vld [vmem:[#allocation2 + $0x140] sm:$0xff]
        %v374 = vld [vmem:[#allocation2 + $0x148] sm:$0xff]
        %v375 = vld [vmem:[#allocation2 + $0x150] sm:$0xff]
        %v376 = vld [vmem:[#allocation2 + $0x158] sm:$0xff]
        %v377 = vld [vmem:[#allocation2 + $0x160] sm:$0xff]
        %v378 = vld [vmem:[#allocation2 + $0x168] sm:$0xff]
        %v379 = vld [vmem:[#allocation2 + $0x170] sm:$0xff]
        %v380 = vld [vmem:[#allocation2 + $0x178] sm:$0xff]
        %v381 = vld [vmem:[#allocation2 + $0x180] sm:$0xff]
        %v382 = vld [vmem:[#allocation2 + $0x188] sm:$0xff]
        %v383 = vld [vmem:[#allocation2 + $0x190] sm:$0xff]
        %v384 = vld [vmem:[#allocation2 + $0x198] sm:$0xff]
        %v385 = vld [vmem:[#allocation2 + $0x1a0] sm:$0xff]
        %v386 = vld [vmem:[#allocation2 + $0x1a8] sm:$0xff]
        %v387 = vld [vmem:[#allocation2 + $0x1b0] sm:$0xff]
        %v388 = vld [vmem:[#allocation2 + $0x1b8] sm:$0xff]
        %v389 = vld [vmem:[#allocation2 + $0x1c0] sm:$0xff]
        %v390 = vld [vmem:[#allocation2 + $0x1c8] sm:$0xff]
        %v391 = vld [vmem:[#allocation2 + $0x1d0] sm:$0xff]
        %v392 = vld [vmem:[#allocation2 + $0x1d8] sm:$0xff]
        %v393 = vld [vmem:[#allocation2 + $0x1e0] sm:$0xff]
        %v394 = vld [vmem:[#allocation2 + $0x1e8] sm:$0xff]
        %v395 = vld [vmem:[#allocation2 + $0x1f0] sm:$0xff]
        %v396 = vld [vmem:[#allocation2 + $0x1f8] sm:$0xff]
        %v397 = vld [vmem:[%s229] sm:$0xf]
        %v398 = vld [vmem:[%s229 + $0x4] sm:$0xf]
        %v399 = vld [vmem:[%s229 + $0x8] sm:$0xf]
        %v400 = vld [vmem:[%s229 + $0xc] sm:$0xf]
        %v401 = vld [vmem:[%s229 + $0x10] sm:$0xf]
        %v402 = vld [vmem:[%s229 + $0x14] sm:$0xf]
        %v403 = vld [vmem:[%s229 + $0x18] sm:$0xf]
        %v404 = vld [vmem:[%s229 + $0x1c] sm:$0xf]
        %v405 = vld [vmem:[%s229 + $0x20] sm:$0xf]
        %v406 = vld [vmem:[%s229 + $0x24] sm:$0xf]
        %v407 = vld [vmem:[%s229 + $0x28] sm:$0xf]
        %v408 = vld [vmem:[%s229 + $0x2c] sm:$0xf]
        %v409 = vld [vmem:[%s229 + $0x30] sm:$0xf]
        %v410 = vld [vmem:[%s229 + $0x34] sm:$0xf]
        %v411 = vld [vmem:[%s229 + $0x38] sm:$0xf]
        %v412 = vld [vmem:[%s229 + $0x3c] sm:$0xf]
        %v413 = vld [vmem:[%s229 + $0x40] sm:$0xf]
        %v414 = vld [vmem:[%s229 + $0x44] sm:$0xf]
        %v415 = vld [vmem:[%s229 + $0x48] sm:$0xf]
        %v416 = vld [vmem:[%s229 + $0x4c] sm:$0xf]
        %v417 = vld [vmem:[%s229 + $0x50] sm:$0xf]
        %v418 = vld [vmem:[%s229 + $0x54] sm:$0xf]
        %v419 = vld [vmem:[%s229 + $0x58] sm:$0xf]
        %v420 = vld [vmem:[%s229 + $0x5c] sm:$0xf]
        %v421 = vld [vmem:[%s229 + $0x60] sm:$0xf]
        %v422 = vld [vmem:[%s229 + $0x64] sm:$0xf]
        %v423 = vld [vmem:[%s229 + $0x68] sm:$0xf]
        %v424 = vld [vmem:[%s229 + $0x6c] sm:$0xf]
        %v425 = vld [vmem:[%s229 + $0x70] sm:$0xf]
        %v426 = vld [vmem:[%s229 + $0x74] sm:$0xf]
        %v427 = vld [vmem:[%s229 + $0x78] sm:$0xf]
        %v428 = vld [vmem:[%s229 + $0x7c] sm:$0xf]
        %v429 = vld [vmem:[%s229 + $0x80] sm:$0xf]
        %v430 = vld [vmem:[%s229 + $0x84] sm:$0xf]
        %v431 = vld [vmem:[%s229 + $0x88] sm:$0xf]
        %v432 = vld [vmem:[%s229 + $0x8c] sm:$0xf]
        %v433 = vld [vmem:[%s229 + $0x90] sm:$0xf]
        %v434 = vld [vmem:[%s229 + $0x94] sm:$0xf]
        %v435 = vld [vmem:[%s229 + $0x98] sm:$0xf]
        %v436 = vld [vmem:[%s229 + $0x9c] sm:$0xf]
        %v437 = vld [vmem:[%s229 + $0xa0] sm:$0xf]
        %v438 = vld [vmem:[%s229 + $0xa4] sm:$0xf]
        %v439 = vld [vmem:[%s229 + $0xa8] sm:$0xf]
        %v440 = vld [vmem:[%s229 + $0xac] sm:$0xf]
        %v441 = vld [vmem:[%s229 + $0xb0] sm:$0xf]
        %v442 = vld [vmem:[%s229 + $0xb4] sm:$0xf]
        %v443 = vld [vmem:[%s229 + $0xb8] sm:$0xf]
        %v444 = vld [vmem:[%s229 + $0xbc] sm:$0xf]
        %v445 = vld [vmem:[%s229 + $0xc0] sm:$0xf]
        %v446 = vld [vmem:[%s229 + $0xc4] sm:$0xf]
        %v447 = vld [vmem:[%s229 + $0xc8] sm:$0xf]
        %v448 = vld [vmem:[%s229 + $0xcc] sm:$0xf]
        %v449 = vld [vmem:[%s229 + $0xd0] sm:$0xf]
        %v450 = vld [vmem:[%s229 + $0xd4] sm:$0xf]
        %v451 = vld [vmem:[%s229 + $0xd8] sm:$0xf]
        %v452 = vld [vmem:[%s229 + $0xdc] sm:$0xf]
        %v453 = vld [vmem:[%s229 + $0xe0] sm:$0xf]
        %v454 = vld [vmem:[%s229 + $0xe4] sm:$0xf]
        %v455 = vld [vmem:[%s229 + $0xe8] sm:$0xf]
        %v456 = vld [vmem:[%s229 + $0xec] sm:$0xf]
        %v457 = vld [vmem:[%s229 + $0xf0] sm:$0xf]
        %v458 = vld [vmem:[%s229 + $0xf4] sm:$0xf]
        %v459 = vld [vmem:[%s229 + $0xf8] sm:$0xf]
        %v460 = vld [vmem:[%s229 + $0xfc] sm:$0xf]
        %v461 = vld [vmem:[#allocation6] sm:$0xf]
        %v462 = vld [vmem:[#allocation6 + $0x4] sm:$0xf]
        %v463 = vld [vmem:[#allocation6 + $0x8] sm:$0xf]
        %v464 = vld [vmem:[#allocation6 + $0xc] sm:$0xf]
        %v465 = vld [vmem:[#allocation6 + $0x10] sm:$0xf]
        %v466 = vld [vmem:[#allocation6 + $0x14] sm:$0xf]
        %v467 = vld [vmem:[#allocation6 + $0x18] sm:$0xf]
        %v468 = vld [vmem:[#allocation6 + $0x1c] sm:$0xf]
        %v469 = vld [vmem:[#allocation6 + $0x20] sm:$0xf]
        %v470 = vld [vmem:[#allocation6 + $0x24] sm:$0xf]
        %v471 = vld [vmem:[#allocation6 + $0x28] sm:$0xf]
        %v472 = vld [vmem:[#allocation6 + $0x2c] sm:$0xf]
        %v473 = vld [vmem:[#allocation6 + $0x30] sm:$0xf]
        %v474 = vld [vmem:[#allocation6 + $0x34] sm:$0xf]
        %v475 = vld [vmem:[#allocation6 + $0x38] sm:$0xf]
        %v476 = vld [vmem:[#allocation6 + $0x3c] sm:$0xf]
        %v541 = vunpack.c.l.b16 %v397
        %v542 = vunpack.c.l.b16 %v398
        %v543 = vunpack.c.l.b16 %v399
        %v544 = vunpack.c.l.b16 %v400
        %v545 = vunpack.c.l.b16 %v401
        %v546 = vunpack.c.l.b16 %v402
        %v547 = vunpack.c.l.b16 %v403
        %v548 = vunpack.c.l.b16 %v404
        %v549 = vunpack.c.l.b16 %v405
        %v550 = vunpack.c.l.b16 %v406
        %v551 = vunpack.c.l.b16 %v407
        %v552 = vunpack.c.l.b16 %v408
        %v553 = vunpack.c.l.b16 %v409
        %v554 = vunpack.c.l.b16 %v410
        %v555 = vunpack.c.l.b16 %v411
        %v556 = vunpack.c.l.b16 %v412
        %v557 = vunpack.c.l.b16 %v413
        %v558 = vunpack.c.l.b16 %v414
        %v559 = vunpack.c.l.b16 %v415
        %v560 = vunpack.c.l.b16 %v416
        %v561 = vunpack.c.l.b16 %v417
        %v562 = vunpack.c.l.b16 %v418
        %v563 = vunpack.c.l.b16 %v419
        %v564 = vunpack.c.l.b16 %v420
        %v565 = vunpack.c.l.b16 %v421
        %v566 = vunpack.c.l.b16 %v422
        %v567 = vunpack.c.l.b16 %v423
        %v568 = vunpack.c.l.b16 %v424
        %v569 = vunpack.c.l.b16 %v425
        %v570 = vunpack.c.l.b16 %v426
        %v571 = vunpack.c.l.b16 %v427
        %v572 = vunpack.c.l.b16 %v428
        %v573 = vunpack.c.l.b16 %v429
        %v574 = vunpack.c.l.b16 %v430
        %v575 = vunpack.c.l.b16 %v431
        %v576 = vunpack.c.l.b16 %v432
        %v577 = vunpack.c.l.b16 %v433
        %v578 = vunpack.c.l.b16 %v434
        %v579 = vunpack.c.l.b16 %v435
        %v580 = vunpack.c.l.b16 %v436
        %v581 = vunpack.c.l.b16 %v437
        %v582 = vunpack.c.l.b16 %v438
        %v583 = vunpack.c.l.b16 %v439
        %v584 = vunpack.c.l.b16 %v440
        %v585 = vunpack.c.l.b16 %v441
        %v586 = vunpack.c.l.b16 %v442
        %v587 = vunpack.c.l.b16 %v443
        %v588 = vunpack.c.l.b16 %v444
        %v589 = vunpack.c.l.b16 %v445
        %v590 = vunpack.c.l.b16 %v446
        %v591 = vunpack.c.l.b16 %v447
        %v592 = vunpack.c.l.b16 %v448
        %v593 = vunpack.c.l.b16 %v449
        %v594 = vunpack.c.l.b16 %v450
        %v595 = vunpack.c.l.b16 %v451
        %v596 = vunpack.c.l.b16 %v452
        %v597 = vunpack.c.l.b16 %v453
        %v598 = vunpack.c.l.b16 %v454
        %v599 = vunpack.c.l.b16 %v455
        %v600 = vunpack.c.l.b16 %v456
        %v601 = vunpack.c.l.b16 %v457
        %v602 = vunpack.c.l.b16 %v458
        %v603 = vunpack.c.l.b16 %v459
        %v604 = vunpack.c.l.b16 %v460
        %v605 = vpack.c.b16 %v542, %v541
        %v606 = vpack.c.b16 %v544, %v543
        %v607 = vpack.c.b16 %v546, %v545
        %v608 = vpack.c.b16 %v548, %v547
        %v609 = vpack.c.b16 %v550, %v549
        %v610 = vpack.c.b16 %v552, %v551
        %v611 = vpack.c.b16 %v554, %v553
        %v612 = vpack.c.b16 %v556, %v555
        %v613 = vpack.c.b16 %v558, %v557
        %v614 = vpack.c.b16 %v560, %v559
        %v615 = vpack.c.b16 %v562, %v561
        %v616 = vpack.c.b16 %v564, %v563
        %v617 = vpack.c.b16 %v566, %v565
        %v618 = vpack.c.b16 %v568, %v567
        %v619 = vpack.c.b16 %v570, %v569
        %v620 = vpack.c.b16 %v572, %v571
        %v621 = vpack.c.b16 %v574, %v573
        %v622 = vpack.c.b16 %v576, %v575
        %v623 = vpack.c.b16 %v578, %v577
        %v624 = vpack.c.b16 %v580, %v579
        %v625 = vpack.c.b16 %v582, %v581
        %v626 = vpack.c.b16 %v584, %v583
        %v627 = vpack.c.b16 %v586, %v585
        %v628 = vpack.c.b16 %v588, %v587
        %v629 = vpack.c.b16 %v590, %v589
        %v630 = vpack.c.b16 %v592, %v591
        %v631 = vpack.c.b16 %v594, %v593
        %v632 = vpack.c.b16 %v596, %v595
        %v633 = vpack.c.b16 %v598, %v597
        %v634 = vpack.c.b16 %v600, %v599
        %v635 = vpack.c.b16 %v602, %v601
        %v636 = vpack.c.b16 %v604, %v603
        %v685 = vunpack.c.l.b16 %v461
        %v686 = vunpack.c.l.b16 %v462
        %v687 = vunpack.c.l.b16 %v463
        %v688 = vunpack.c.l.b16 %v464
        %v689 = vunpack.c.l.b16 %v465
        %v690 = vunpack.c.l.b16 %v466
        %v691 = vunpack.c.l.b16 %v467
        %v692 = vunpack.c.l.b16 %v468
        %v693 = vunpack.c.l.b16 %v469
        %v694 = vunpack.c.l.b16 %v470
        %v695 = vunpack.c.l.b16 %v471
        %v696 = vunpack.c.l.b16 %v472
        %v697 = vunpack.c.l.b16 %v473
        %v698 = vunpack.c.l.b16 %v474
        %v699 = vunpack.c.l.b16 %v475
        %v700 = vunpack.c.l.b16 %v476
        %v701 = vpack.c.b16 %v686, %v685
        %v702 = vpack.c.b16 %v688, %v687
        %v703 = vpack.c.b16 %v690, %v689
        %v704 = vpack.c.b16 %v692, %v691
        %v705 = vpack.c.b16 %v694, %v693
        %v706 = vpack.c.b16 %v696, %v695
        %v707 = vpack.c.b16 %v698, %v697
        %v708 = vpack.c.b16 %v700, %v699
        %717 = vmatprep.subr.bf16.mxu0 0
        %718 = vmatpush1.bf16.msra.mxu0 %v708
        %719 = vmatprep.subr.bf16.mxu0 0
        %720 = vmatpush1.bf16.msra.mxu0 %v707
        %721 = vmatprep.subr.bf16.mxu0 0
        %722 = vmatpush1.bf16.msra.mxu0 %v706
        %723 = vmatprep.subr.bf16.mxu0 0
        %724 = vmatpush1.bf16.msra.mxu0 %v705
        %725 = vmatprep.subr.bf16.mxu0 0
        %726 = vmatpush1.bf16.msra.mxu0 %v704
        %727 = vmatprep.subr.bf16.mxu0 0
        %728 = vmatpush1.bf16.msra.mxu0 %v703
        %729 = vmatprep.subr.bf16.mxu0 0
        %730 = vmatpush1.bf16.msra.mxu0 %v702
        %731 = vmatprep.subr.bf16.mxu0 0
        %732 = vmatpush1.bf16.msra.mxu0 %v701
        %733 = vmatprep.subr.bf16.mxu0 0
        %734 = vmatpush2.bf16.msra.mxu0 0
        %735 = vmatprep.subr.bf16.mxu0 0
        %736 = vmatpush2.bf16.msra.mxu0 0
        %737 = vmatprep.subr.bf16.mxu0 0
        %738 = vmatpush2.bf16.msra.mxu0 0
        %739 = vmatprep.subr.bf16.mxu0 0
        %740 = vmatpush2.bf16.msra.mxu0 0
        %741 = vmatprep.subr.bf16.mxu0 0
        %742 = vmatpush2.bf16.msra.mxu0 0
        %743 = vmatprep.subr.bf16.mxu0 0
        %744 = vmatpush2.bf16.msra.mxu0 0
        %745 = vmatprep.subr.bf16.mxu0 0
        %746 = vmatpush2.bf16.msra.mxu0 0
        %747 = vmatprep.subr.bf16.mxu0 0
        %748 = vmatpush2.bf16.msra.mxu0 0
        %749 = vmatprep.mubr.bf16.mxu0 0
        %750 = vmatmul.mubr.bf16.gmra.mxu0 %v605
        %v751 = vpop.f32.mrf.mxu0
        %v752 = vadd.f32 0.0, %v751
        %v753 = vpop.f32.mrf.mxu0
        %v754 = vpop.f32.mrf.mxu0
        %v755 = vadd.f32 0.0, %v754
        %v756 = vpop.f32.mrf.mxu0
        %757 = vmatprep.mubr.bf16.mxu0 0
        %758 = vmatmul.mubr.bf16.gmra.mxu0 %v606
        %v759 = vpop.f32.mrf.mxu0
        %v760 = vadd.f32 0.0, %v759
        %v761 = vpop.f32.mrf.mxu0
        %v762 = vpop.f32.mrf.mxu0
        %v763 = vadd.f32 0.0, %v762
        %v764 = vpop.f32.mrf.mxu0
        %765 = vmatprep.mubr.bf16.mxu0 0
        %766 = vmatmul.mubr.bf16.gmra.mxu0 %v607
        %v767 = vpop.f32.mrf.mxu0
        %v768 = vadd.f32 0.0, %v767
        %v769 = vpop.f32.mrf.mxu0
        %v770 = vpop.f32.mrf.mxu0
        %v771 = vadd.f32 0.0, %v770
        %v772 = vpop.f32.mrf.mxu0
        %773 = vmatprep.mubr.bf16.mxu0 0
        %774 = vmatmul.mubr.bf16.gmra.mxu0 %v608
        %v775 = vpop.f32.mrf.mxu0
        %v776 = vadd.f32 0.0, %v775
        %v777 = vpop.f32.mrf.mxu0
        %v778 = vpop.f32.mrf.mxu0
        %v779 = vadd.f32 0.0, %v778
        %v780 = vpop.f32.mrf.mxu0
        %781 = vmatprep.mubr.bf16.mxu0 0
        %782 = vmatmul.mubr.bf16.gmra.mxu0 %v609
        %v783 = vpop.f32.mrf.mxu0
        %v784 = vadd.f32 0.0, %v783
        %v785 = vpop.f32.mrf.mxu0
        %v786 = vpop.f32.mrf.mxu0
        %v787 = vadd.f32 0.0, %v786
        %v788 = vpop.f32.mrf.mxu0
        %789 = vmatprep.mubr.bf16.mxu0 0
        %790 = vmatmul.mubr.bf16.gmra.mxu0 %v610
        %v791 = vpop.f32.mrf.mxu0
        %v792 = vadd.f32 0.0, %v791
        %v793 = vpop.f32.mrf.mxu0
        %v794 = vpop.f32.mrf.mxu0
        %v795 = vadd.f32 0.0, %v794
        %v796 = vpop.f32.mrf.mxu0
        %797 = vmatprep.mubr.bf16.mxu0 0
        %798 = vmatmul.mubr.bf16.gmra.mxu0 %v611
        %v799 = vpop.f32.mrf.mxu0
        %v800 = vadd.f32 0.0, %v799
        %v801 = vpop.f32.mrf.mxu0
        %v802 = vpop.f32.mrf.mxu0
        %v803 = vadd.f32 0.0, %v802
        %v804 = vpop.f32.mrf.mxu0
        %805 = vmatprep.mubr.bf16.mxu0 0
        %806 = vmatmul.mubr.bf16.gmra.mxu0 %v612
        %v807 = vpop.f32.mrf.mxu0
        %v808 = vadd.f32 0.0, %v807
        %v809 = vpop.f32.mrf.mxu0
        %v810 = vpop.f32.mrf.mxu0
        %v811 = vadd.f32 0.0, %v810
        %v812 = vpop.f32.mrf.mxu0
        %813 = vmatprep.mubr.bf16.mxu0 0
        %814 = vmatmul.mubr.bf16.gmra.mxu0 %v613
        %v815 = vpop.f32.mrf.mxu0
        %v816 = vadd.f32 0.0, %v815
        %v817 = vpop.f32.mrf.mxu0
        %v818 = vpop.f32.mrf.mxu0
        %v819 = vadd.f32 0.0, %v818
        %v820 = vpop.f32.mrf.mxu0
        %821 = vmatprep.mubr.bf16.mxu0 0
        %822 = vmatmul.mubr.bf16.gmra.mxu0 %v614
        %v823 = vpop.f32.mrf.mxu0
        %v824 = vadd.f32 0.0, %v823
        %v825 = vpop.f32.mrf.mxu0
        %v826 = vpop.f32.mrf.mxu0
        %v827 = vadd.f32 0.0, %v826
        %v828 = vpop.f32.mrf.mxu0
        %829 = vmatprep.mubr.bf16.mxu0 0
        %830 = vmatmul.mubr.bf16.gmra.mxu0 %v615
        %v831 = vpop.f32.mrf.mxu0
        %v832 = vadd.f32 0.0, %v831
        %v833 = vpop.f32.mrf.mxu0
        %v834 = vpop.f32.mrf.mxu0
        %v835 = vadd.f32 0.0, %v834
        %v836 = vpop.f32.mrf.mxu0
        %837 = vmatprep.mubr.bf16.mxu0 0
        %838 = vmatmul.mubr.bf16.gmra.mxu0 %v616
        %v839 = vpop.f32.mrf.mxu0
        %v840 = vadd.f32 0.0, %v839
        %v841 = vpop.f32.mrf.mxu0
        %v842 = vpop.f32.mrf.mxu0
        %v843 = vadd.f32 0.0, %v842
        %v844 = vpop.f32.mrf.mxu0
        %845 = vmatprep.mubr.bf16.mxu0 0
        %846 = vmatmul.mubr.bf16.gmra.mxu0 %v617
        %v847 = vpop.f32.mrf.mxu0
        %v848 = vadd.f32 0.0, %v847
        %v849 = vpop.f32.mrf.mxu0
        %v850 = vpop.f32.mrf.mxu0
        %v851 = vadd.f32 0.0, %v850
        %v852 = vpop.f32.mrf.mxu0
        %853 = vmatprep.mubr.bf16.mxu0 0
        %854 = vmatmul.mubr.bf16.gmra.mxu0 %v618
        %v855 = vpop.f32.mrf.mxu0
        %v856 = vadd.f32 0.0, %v855
        %v857 = vpop.f32.mrf.mxu0
        %v858 = vpop.f32.mrf.mxu0
        %v859 = vadd.f32 0.0, %v858
        %v860 = vpop.f32.mrf.mxu0
        %861 = vmatprep.mubr.bf16.mxu0 0
        %862 = vmatmul.mubr.bf16.gmra.mxu0 %v619
        %v863 = vpop.f32.mrf.mxu0
        %v864 = vadd.f32 0.0, %v863
        %v865 = vpop.f32.mrf.mxu0
        %v866 = vpop.f32.mrf.mxu0
        %v867 = vadd.f32 0.0, %v866
        %v868 = vpop.f32.mrf.mxu0
        %869 = vmatprep.mubr.bf16.mxu0 0
        %870 = vmatmul.mubr.bf16.gmra.mxu0 %v620
        %v871 = vpop.f32.mrf.mxu0
        %v872 = vadd.f32 0.0, %v871
        %v873 = vpop.f32.mrf.mxu0
        %v874 = vpop.f32.mrf.mxu0
        %v875 = vadd.f32 0.0, %v874
        %v876 = vpop.f32.mrf.mxu0
        %877 = vmatprep.mubr.bf16.mxu0 0
        %878 = vmatmul.mubr.bf16.gmra.mxu0 %v621
        %v879 = vpop.f32.mrf.mxu0
        %v880 = vadd.f32 0.0, %v879
        %v881 = vpop.f32.mrf.mxu0
        %v882 = vpop.f32.mrf.mxu0
        %v883 = vadd.f32 0.0, %v882
        %v884 = vpop.f32.mrf.mxu0
        %885 = vmatprep.mubr.bf16.mxu0 0
        %886 = vmatmul.mubr.bf16.gmra.mxu0 %v622
        %v887 = vpop.f32.mrf.mxu0
        %v888 = vadd.f32 0.0, %v887
        %v889 = vpop.f32.mrf.mxu0
        %v890 = vpop.f32.mrf.mxu0
        %v891 = vadd.f32 0.0, %v890
        %v892 = vpop.f32.mrf.mxu0
        %893 = vmatprep.mubr.bf16.mxu0 0
        %894 = vmatmul.mubr.bf16.gmra.mxu0 %v623
        %v895 = vpop.f32.mrf.mxu0
        %v896 = vadd.f32 0.0, %v895
        %v897 = vpop.f32.mrf.mxu0
        %v898 = vpop.f32.mrf.mxu0
        %v899 = vadd.f32 0.0, %v898
        %v900 = vpop.f32.mrf.mxu0
        %901 = vmatprep.mubr.bf16.mxu0 0
        %902 = vmatmul.mubr.bf16.gmra.mxu0 %v624
        %v903 = vpop.f32.mrf.mxu0
        %v904 = vadd.f32 0.0, %v903
        %v905 = vpop.f32.mrf.mxu0
        %v906 = vpop.f32.mrf.mxu0
        %v907 = vadd.f32 0.0, %v906
        %v908 = vpop.f32.mrf.mxu0
        %909 = vmatprep.mubr.bf16.mxu0 0
        %910 = vmatmul.mubr.bf16.gmra.mxu0 %v625
        %v911 = vpop.f32.mrf.mxu0
        %v912 = vadd.f32 0.0, %v911
        %v913 = vpop.f32.mrf.mxu0
        %v914 = vpop.f32.mrf.mxu0
        %v915 = vadd.f32 0.0, %v914
        %v916 = vpop.f32.mrf.mxu0
        %917 = vmatprep.mubr.bf16.mxu0 0
        %918 = vmatmul.mubr.bf16.gmra.mxu0 %v626
        %v919 = vpop.f32.mrf.mxu0
        %v920 = vadd.f32 0.0, %v919
        %v921 = vpop.f32.mrf.mxu0
        %v922 = vpop.f32.mrf.mxu0
        %v923 = vadd.f32 0.0, %v922
        %v924 = vpop.f32.mrf.mxu0
        %925 = vmatprep.mubr.bf16.mxu0 0
        %926 = vmatmul.mubr.bf16.gmra.mxu0 %v627
        %v927 = vpop.f32.mrf.mxu0
        %v928 = vadd.f32 0.0, %v927
        %v929 = vpop.f32.mrf.mxu0
        %v930 = vpop.f32.mrf.mxu0
        %v931 = vadd.f32 0.0, %v930
        %v932 = vpop.f32.mrf.mxu0
        %933 = vmatprep.mubr.bf16.mxu0 0
        %934 = vmatmul.mubr.bf16.gmra.mxu0 %v628
        %v935 = vpop.f32.mrf.mxu0
        %v936 = vadd.f32 0.0, %v935
        %v937 = vpop.f32.mrf.mxu0
        %v938 = vpop.f32.mrf.mxu0
        %v939 = vadd.f32 0.0, %v938
        %v940 = vpop.f32.mrf.mxu0
        %941 = vmatprep.mubr.bf16.mxu0 0
        %942 = vmatmul.mubr.bf16.gmra.mxu0 %v629
        %v943 = vpop.f32.mrf.mxu0
        %v944 = vadd.f32 0.0, %v943
        %v945 = vpop.f32.mrf.mxu0
        %v946 = vpop.f32.mrf.mxu0
        %v947 = vadd.f32 0.0, %v946
        %v948 = vpop.f32.mrf.mxu0
        %949 = vmatprep.mubr.bf16.mxu0 0
        %950 = vmatmul.mubr.bf16.gmra.mxu0 %v630
        %v951 = vpop.f32.mrf.mxu0
        %v952 = vadd.f32 0.0, %v951
        %v953 = vpop.f32.mrf.mxu0
        %v954 = vpop.f32.mrf.mxu0
        %v955 = vadd.f32 0.0, %v954
        %v956 = vpop.f32.mrf.mxu0
        %957 = vmatprep.mubr.bf16.mxu0 0
        %958 = vmatmul.mubr.bf16.gmra.mxu0 %v631
        %v959 = vpop.f32.mrf.mxu0
        %v960 = vadd.f32 0.0, %v959
        %v961 = vpop.f32.mrf.mxu0
        %v962 = vpop.f32.mrf.mxu0
        %v963 = vadd.f32 0.0, %v962
        %v964 = vpop.f32.mrf.mxu0
        %965 = vmatprep.mubr.bf16.mxu0 0
        %966 = vmatmul.mubr.bf16.gmra.mxu0 %v632
        %v967 = vpop.f32.mrf.mxu0
        %v968 = vadd.f32 0.0, %v967
        %v969 = vpop.f32.mrf.mxu0
        %v970 = vpop.f32.mrf.mxu0
        %v971 = vadd.f32 0.0, %v970
        %v972 = vpop.f32.mrf.mxu0
        %973 = vmatprep.mubr.bf16.mxu0 0
        %974 = vmatmul.mubr.bf16.gmra.mxu0 %v633
        %v975 = vpop.f32.mrf.mxu0
        %v976 = vadd.f32 0.0, %v975
        %v977 = vpop.f32.mrf.mxu0
        %v978 = vpop.f32.mrf.mxu0
        %v979 = vadd.f32 0.0, %v978
        %v980 = vpop.f32.mrf.mxu0
        %981 = vmatprep.mubr.bf16.mxu0 0
        %982 = vmatmul.mubr.bf16.gmra.mxu0 %v634
        %v983 = vpop.f32.mrf.mxu0
        %v984 = vadd.f32 0.0, %v983
        %v985 = vpop.f32.mrf.mxu0
        %v986 = vpop.f32.mrf.mxu0
        %v987 = vadd.f32 0.0, %v986
        %v988 = vpop.f32.mrf.mxu0
        %989 = vmatprep.mubr.bf16.mxu0 0
        %990 = vmatmul.mubr.bf16.gmra.mxu0 %v635
        %v991 = vpop.f32.mrf.mxu0
        %v992 = vadd.f32 0.0, %v991
        %v993 = vpop.f32.mrf.mxu0
        %v994 = vpop.f32.mrf.mxu0
        %v995 = vadd.f32 0.0, %v994
        %v996 = vpop.f32.mrf.mxu0
        %997 = vmatprep.mubr.bf16.mxu0 0
        %998 = vmatmul.mubr.bf16.gmra.mxu0 %v636
        %v999 = vpop.f32.mrf.mxu0
        %v1000 = vadd.f32 0.0, %v999
        %v1001 = vpop.f32.mrf.mxu0
        %v1002 = vpop.f32.mrf.mxu0
        %v1003 = vadd.f32 0.0, %v1002
        %v1004 = vpop.f32.mrf.mxu0
        %1005 = vdwg.mxu0
        %v1006 = vadd.f32 %v333, %v752
        %v1007 = vadd.f32 %v334, %v755
        %v1008 = vadd.f32 %v335, %v760
        %v1009 = vadd.f32 %v336, %v763
        %v1010 = vadd.f32 %v337, %v768
        %v1011 = vadd.f32 %v338, %v771
        %v1012 = vadd.f32 %v339, %v776
        %v1013 = vadd.f32 %v340, %v779
        %v1014 = vadd.f32 %v341, %v784
        %v1015 = vadd.f32 %v342, %v787
        %v1016 = vadd.f32 %v343, %v792
        %v1017 = vadd.f32 %v344, %v795
        %v1018 = vadd.f32 %v345, %v800
        %v1019 = vadd.f32 %v346, %v803
        %v1020 = vadd.f32 %v347, %v808
        %v1021 = vadd.f32 %v348, %v811
        %v1022 = vadd.f32 %v349, %v816
        %v1023 = vadd.f32 %v350, %v819
        %v1024 = vadd.f32 %v351, %v824
        %v1025 = vadd.f32 %v352, %v827
        %v1026 = vadd.f32 %v353, %v832
        %v1027 = vadd.f32 %v354, %v835
        %v1028 = vadd.f32 %v355, %v840
        %v1029 = vadd.f32 %v356, %v843
        %v1030 = vadd.f32 %v357, %v848
        %v1031 = vadd.f32 %v358, %v851
        %v1032 = vadd.f32 %v359, %v856
        %v1033 = vadd.f32 %v360, %v859
        %v1034 = vadd.f32 %v361, %v864
        %v1035 = vadd.f32 %v362, %v867
        %v1036 = vadd.f32 %v363, %v872
        %v1037 = vadd.f32 %v364, %v875
        %v1038 = vadd.f32 %v365, %v880
        %v1039 = vadd.f32 %v366, %v883
        %v1040 = vadd.f32 %v367, %v888
        %v1041 = vadd.f32 %v368, %v891
        %v1042 = vadd.f32 %v369, %v896
        %v1043 = vadd.f32 %v370, %v899
        %v1044 = vadd.f32 %v371, %v904
        %v1045 = vadd.f32 %v372, %v907
        %v1046 = vadd.f32 %v373, %v912
        %v1047 = vadd.f32 %v374, %v915
        %v1048 = vadd.f32 %v375, %v920
        %v1049 = vadd.f32 %v376, %v923
        %v1050 = vadd.f32 %v377, %v928
        %v1051 = vadd.f32 %v378, %v931
        %v1052 = vadd.f32 %v379, %v936
        %v1053 = vadd.f32 %v380, %v939
        %v1054 = vadd.f32 %v381, %v944
        %v1055 = vadd.f32 %v382, %v947
        %v1056 = vadd.f32 %v383, %v952
        %v1057 = vadd.f32 %v384, %v955
        %v1058 = vadd.f32 %v385, %v960
        %v1059 = vadd.f32 %v386, %v963
        %v1060 = vadd.f32 %v387, %v968
        %v1061 = vadd.f32 %v388, %v971
        %v1062 = vadd.f32 %v389, %v976
        %v1063 = vadd.f32 %v390, %v979
        %v1064 = vadd.f32 %v391, %v984
        %v1065 = vadd.f32 %v392, %v987
        %v1066 = vadd.f32 %v393, %v992
        %v1067 = vadd.f32 %v394, %v995
        %v1068 = vadd.f32 %v395, %v1000
        %v1069 = vadd.f32 %v396, %v1003
        %v1070 = vld [vmem:[%s229] sm:$0xf]
        %v1071 = vld [vmem:[%s229 + $0x4] sm:$0xf]
        %v1072 = vld [vmem:[%s229 + $0x8] sm:$0xf]
        %v1073 = vld [vmem:[%s229 + $0xc] sm:$0xf]
        %v1074 = vld [vmem:[%s229 + $0x10] sm:$0xf]
        %v1075 = vld [vmem:[%s229 + $0x14] sm:$0xf]
        %v1076 = vld [vmem:[%s229 + $0x18] sm:$0xf]
        %v1077 = vld [vmem:[%s229 + $0x1c] sm:$0xf]
        %v1078 = vld [vmem:[%s229 + $0x20] sm:$0xf]
        %v1079 = vld [vmem:[%s229 + $0x24] sm:$0xf]
        %v1080 = vld [vmem:[%s229 + $0x28] sm:$0xf]
        %v1081 = vld [vmem:[%s229 + $0x2c] sm:$0xf]
        %v1082 = vld [vmem:[%s229 + $0x30] sm:$0xf]
        %v1083 = vld [vmem:[%s229 + $0x34] sm:$0xf]
        %v1084 = vld [vmem:[%s229 + $0x38] sm:$0xf]
        %v1085 = vld [vmem:[%s229 + $0x3c] sm:$0xf]
        %v1086 = vld [vmem:[%s229 + $0x40] sm:$0xf]
        %v1087 = vld [vmem:[%s229 + $0x44] sm:$0xf]
        %v1088 = vld [vmem:[%s229 + $0x48] sm:$0xf]
        %v1089 = vld [vmem:[%s229 + $0x4c] sm:$0xf]
        %v1090 = vld [vmem:[%s229 + $0x50] sm:$0xf]
        %v1091 = vld [vmem:[%s229 + $0x54] sm:$0xf]
        %v1092 = vld [vmem:[%s229 + $0x58] sm:$0xf]
        %v1093 = vld [vmem:[%s229 + $0x5c] sm:$0xf]
        %v1094 = vld [vmem:[%s229 + $0x60] sm:$0xf]
        %v1095 = vld [vmem:[%s229 + $0x64] sm:$0xf]
        %v1096 = vld [vmem:[%s229 + $0x68] sm:$0xf]
        %v1097 = vld [vmem:[%s229 + $0x6c] sm:$0xf]
        %v1098 = vld [vmem:[%s229 + $0x70] sm:$0xf]
        %v1099 = vld [vmem:[%s229 + $0x74] sm:$0xf]
        %v1100 = vld [vmem:[%s229 + $0x78] sm:$0xf]
        %v1101 = vld [vmem:[%s229 + $0x7c] sm:$0xf]
        %v1102 = vld [vmem:[%s229 + $0x80] sm:$0xf]
        %v1103 = vld [vmem:[%s229 + $0x84] sm:$0xf]
        %v1104 = vld [vmem:[%s229 + $0x88] sm:$0xf]
        %v1105 = vld [vmem:[%s229 + $0x8c] sm:$0xf]
        %v1106 = vld [vmem:[%s229 + $0x90] sm:$0xf]
        %v1107 = vld [vmem:[%s229 + $0x94] sm:$0xf]
        %v1108 = vld [vmem:[%s229 + $0x98] sm:$0xf]
        %v1109 = vld [vmem:[%s229 + $0x9c] sm:$0xf]
        %v1110 = vld [vmem:[%s229 + $0xa0] sm:$0xf]
        %v1111 = vld [vmem:[%s229 + $0xa4] sm:$0xf]
        %v1112 = vld [vmem:[%s229 + $0xa8] sm:$0xf]
        %v1113 = vld [vmem:[%s229 + $0xac] sm:$0xf]
        %v1114 = vld [vmem:[%s229 + $0xb0] sm:$0xf]
        %v1115 = vld [vmem:[%s229 + $0xb4] sm:$0xf]
        %v1116 = vld [vmem:[%s229 + $0xb8] sm:$0xf]
        %v1117 = vld [vmem:[%s229 + $0xbc] sm:$0xf]
        %v1118 = vld [vmem:[%s229 + $0xc0] sm:$0xf]
        %v1119 = vld [vmem:[%s229 + $0xc4] sm:$0xf]
        %v1120 = vld [vmem:[%s229 + $0xc8] sm:$0xf]
        %v1121 = vld [vmem:[%s229 + $0xcc] sm:$0xf]
        %v1122 = vld [vmem:[%s229 + $0xd0] sm:$0xf]
        %v1123 = vld [vmem:[%s229 + $0xd4] sm:$0xf]
        %v1124 = vld [vmem:[%s229 + $0xd8] sm:$0xf]
        %v1125 = vld [vmem:[%s229 + $0xdc] sm:$0xf]
        %v1126 = vld [vmem:[%s229 + $0xe0] sm:$0xf]
        %v1127 = vld [vmem:[%s229 + $0xe4] sm:$0xf]
        %v1128 = vld [vmem:[%s229 + $0xe8] sm:$0xf]
        %v1129 = vld [vmem:[%s229 + $0xec] sm:$0xf]
        %v1130 = vld [vmem:[%s229 + $0xf0] sm:$0xf]
        %v1131 = vld [vmem:[%s229 + $0xf4] sm:$0xf]
        %v1132 = vld [vmem:[%s229 + $0xf8] sm:$0xf]
        %v1133 = vld [vmem:[%s229 + $0xfc] sm:$0xf]
        %v1134 = vld [vmem:[%s229 + $0x100] sm:$0x1]
        %s1135 = scalar_lea.vmem [#allocation6], 64
        %v1136 = vld [vmem:[%s1135] sm:$0xf]
        %v1137 = vld [vmem:[%s1135 + $0x4] sm:$0xf]
        %v1138 = vld [vmem:[%s1135 + $0x8] sm:$0xf]
        %v1139 = vld [vmem:[%s1135 + $0xc] sm:$0xf]
        %v1140 = vld [vmem:[%s1135 + $0x10] sm:$0xf]
        %v1141 = vld [vmem:[%s1135 + $0x14] sm:$0xf]
        %v1142 = vld [vmem:[%s1135 + $0x18] sm:$0xf]
        %v1143 = vld [vmem:[%s1135 + $0x1c] sm:$0xf]
        %v1144 = vld [vmem:[%s1135 + $0x20] sm:$0xf]
        %v1145 = vld [vmem:[%s1135 + $0x24] sm:$0xf]
        %v1146 = vld [vmem:[%s1135 + $0x28] sm:$0xf]
        %v1147 = vld [vmem:[%s1135 + $0x2c] sm:$0xf]
        %v1148 = vld [vmem:[%s1135 + $0x30] sm:$0xf]
        %v1149 = vld [vmem:[%s1135 + $0x34] sm:$0xf]
        %v1150 = vld [vmem:[%s1135 + $0x38] sm:$0xf]
        %v1151 = vld [vmem:[%s1135 + $0x3c] sm:$0xf]
        %v1217 = vunpack.c.l.b16 %v1070
        %v1218 = vunpack.c.l.b16 %v1071
        %v1219 = vunpack.c.l.b16 %v1072
        %v1220 = vunpack.c.l.b16 %v1073
        %v1221 = vunpack.c.l.b16 %v1074
        %v1222 = vunpack.c.l.b16 %v1075
        %v1223 = vunpack.c.l.b16 %v1076
        %v1224 = vunpack.c.l.b16 %v1077
        %v1225 = vunpack.c.l.b16 %v1078
        %v1226 = vunpack.c.l.b16 %v1079
        %v1227 = vunpack.c.l.b16 %v1080
        %v1228 = vunpack.c.l.b16 %v1081
        %v1229 = vunpack.c.l.b16 %v1082
        %v1230 = vunpack.c.l.b16 %v1083
        %v1231 = vunpack.c.l.b16 %v1084
        %v1232 = vunpack.c.l.b16 %v1085
        %v1233 = vunpack.c.l.b16 %v1086
        %v1234 = vunpack.c.l.b16 %v1087
        %v1235 = vunpack.c.l.b16 %v1088
        %v1236 = vunpack.c.l.b16 %v1089
        %v1237 = vunpack.c.l.b16 %v1090
        %v1238 = vunpack.c.l.b16 %v1091
        %v1239 = vunpack.c.l.b16 %v1092
        %v1240 = vunpack.c.l.b16 %v1093
        %v1241 = vunpack.c.l.b16 %v1094
        %v1242 = vunpack.c.l.b16 %v1095
        %v1243 = vunpack.c.l.b16 %v1096
        %v1244 = vunpack.c.l.b16 %v1097
        %v1245 = vunpack.c.l.b16 %v1098
        %v1246 = vunpack.c.l.b16 %v1099
        %v1247 = vunpack.c.l.b16 %v1100
        %v1248 = vunpack.c.l.b16 %v1101
        %v1249 = vunpack.c.l.b16 %v1102
        %v1250 = vunpack.c.l.b16 %v1103
        %v1251 = vunpack.c.l.b16 %v1104
        %v1252 = vunpack.c.l.b16 %v1105
        %v1253 = vunpack.c.l.b16 %v1106
        %v1254 = vunpack.c.l.b16 %v1107
        %v1255 = vunpack.c.l.b16 %v1108
        %v1256 = vunpack.c.l.b16 %v1109
        %v1257 = vunpack.c.l.b16 %v1110
        %v1258 = vunpack.c.l.b16 %v1111
        %v1259 = vunpack.c.l.b16 %v1112
        %v1260 = vunpack.c.l.b16 %v1113
        %v1261 = vunpack.c.l.b16 %v1114
        %v1262 = vunpack.c.l.b16 %v1115
        %v1263 = vunpack.c.l.b16 %v1116
        %v1264 = vunpack.c.l.b16 %v1117
        %v1265 = vunpack.c.l.b16 %v1118
        %v1266 = vunpack.c.l.b16 %v1119
        %v1267 = vunpack.c.l.b16 %v1120
        %v1268 = vunpack.c.l.b16 %v1121
        %v1269 = vunpack.c.l.b16 %v1122
        %v1270 = vunpack.c.l.b16 %v1123
        %v1271 = vunpack.c.l.b16 %v1124
        %v1272 = vunpack.c.l.b16 %v1125
        %v1273 = vunpack.c.l.b16 %v1126
        %v1274 = vunpack.c.l.b16 %v1127
        %v1275 = vunpack.c.l.b16 %v1128
        %v1276 = vunpack.c.l.b16 %v1129
        %v1277 = vunpack.c.l.b16 %v1130
        %v1278 = vunpack.c.l.b16 %v1131
        %v1279 = vunpack.c.l.b16 %v1132
        %v1280 = vunpack.c.l.b16 %v1133
        %v1281 = vunpack.c.l.b16 %v1134
        %v1282 = vpack.c.b16 %v1218, %v1217
        %v1283 = vpack.c.b16 %v1220, %v1219
        %v1284 = vpack.c.b16 %v1222, %v1221
        %v1285 = vpack.c.b16 %v1224, %v1223
        %v1286 = vpack.c.b16 %v1226, %v1225
        %v1287 = vpack.c.b16 %v1228, %v1227
        %v1288 = vpack.c.b16 %v1230, %v1229
        %v1289 = vpack.c.b16 %v1232, %v1231
        %v1290 = vpack.c.b16 %v1234, %v1233
        %v1291 = vpack.c.b16 %v1236, %v1235
        %v1292 = vpack.c.b16 %v1238, %v1237
        %v1293 = vpack.c.b16 %v1240, %v1239
        %v1294 = vpack.c.b16 %v1242, %v1241
        %v1295 = vpack.c.b16 %v1244, %v1243
        %v1296 = vpack.c.b16 %v1246, %v1245
        %v1297 = vpack.c.b16 %v1248, %v1247
        %v1298 = vpack.c.b16 %v1250, %v1249
        %v1299 = vpack.c.b16 %v1252, %v1251
        %v1300 = vpack.c.b16 %v1254, %v1253
        %v1301 = vpack.c.b16 %v1256, %v1255
        %v1302 = vpack.c.b16 %v1258, %v1257
        %v1303 = vpack.c.b16 %v1260, %v1259
        %v1304 = vpack.c.b16 %v1262, %v1261
        %v1305 = vpack.c.b16 %v1264, %v1263
        %v1306 = vpack.c.b16 %v1266, %v1265
        %v1307 = vpack.c.b16 %v1268, %v1267
        %v1308 = vpack.c.b16 %v1270, %v1269
        %v1309 = vpack.c.b16 %v1272, %v1271
        %v1310 = vpack.c.b16 %v1274, %v1273
        %v1311 = vpack.c.b16 %v1276, %v1275
        %v1312 = vpack.c.b16 %v1278, %v1277
        %v1313 = vpack.c.b16 %v1280, %v1279
        %v1314 = vpack.c.b16 %v1281, %v1281
        %vm1315 = vsmask.f32 7424
        %v1317 = vshrl.u32 %v1282, 16
        %v1319 = vshll.u32 %v1282, 16
        %v1321 = vrot.slane %v1319, 1
        %v1322 = vor.u32 %v1317, %v1321
        %v1324 = vshll.u32 %v1283, 16
        %v1326 = vrot.slane %v1324, 1
        %v1327 = vsel %vm1315, %v1322, %v1326
        %v1328 = vshrl.u32 %v1283, 16
        %v1330 = vor.u32 %v1328, %v1326
        %v1332 = vshll.u32 %v1284, 16
        %v1334 = vrot.slane %v1332, 1
        %v1335 = vsel %vm1315, %v1330, %v1334
        %v1336 = vshrl.u32 %v1284, 16
        %v1338 = vor.u32 %v1336, %v1334
        %v1340 = vshll.u32 %v1285, 16
        %v1342 = vrot.slane %v1340, 1
        %v1343 = vsel %vm1315, %v1338, %v1342
        %v1344 = vshrl.u32 %v1285, 16
        %v1346 = vor.u32 %v1344, %v1342
        %v1348 = vshll.u32 %v1286, 16
        %v1350 = vrot.slane %v1348, 1
        %v1351 = vsel %vm1315, %v1346, %v1350
        %v1352 = vshrl.u32 %v1286, 16
        %v1354 = vor.u32 %v1352, %v1350
        %v1356 = vshll.u32 %v1287, 16
        %v1358 = vrot.slane %v1356, 1
        %v1359 = vsel %vm1315, %v1354, %v1358
        %v1360 = vshrl.u32 %v1287, 16
        %v1362 = vor.u32 %v1360, %v1358
        %v1364 = vshll.u32 %v1288, 16
        %v1366 = vrot.slane %v1364, 1
        %v1367 = vsel %vm1315, %v1362, %v1366
        %v1368 = vshrl.u32 %v1288, 16
        %v1370 = vor.u32 %v1368, %v1366
        %v1372 = vshll.u32 %v1289, 16
        %v1374 = vrot.slane %v1372, 1
        %v1375 = vsel %vm1315, %v1370, %v1374
        %v1376 = vshrl.u32 %v1289, 16
        %v1378 = vor.u32 %v1376, %v1374
        %v1380 = vshll.u32 %v1290, 16
        %v1382 = vrot.slane %v1380, 1
        %v1383 = vsel %vm1315, %v1378, %v1382
        %v1384 = vshrl.u32 %v1290, 16
        %v1386 = vor.u32 %v1384, %v1382
        %v1388 = vshll.u32 %v1291, 16
        %v1390 = vrot.slane %v1388, 1
        %v1391 = vsel %vm1315, %v1386, %v1390
        %v1392 = vshrl.u32 %v1291, 16
        %v1394 = vor.u32 %v1392, %v1390
        %v1396 = vshll.u32 %v1292, 16
        %v1398 = vrot.slane %v1396, 1
        %v1399 = vsel %vm1315, %v1394, %v1398
        %v1400 = vshrl.u32 %v1292, 16
        %v1402 = vor.u32 %v1400, %v1398
        %v1404 = vshll.u32 %v1293, 16
        %v1406 = vrot.slane %v1404, 1
        %v1407 = vsel %vm1315, %v1402, %v1406
        %v1408 = vshrl.u32 %v1293, 16
        %v1410 = vor.u32 %v1408, %v1406
        %v1412 = vshll.u32 %v1294, 16
        %v1414 = vrot.slane %v1412, 1
        %v1415 = vsel %vm1315, %v1410, %v1414
        %v1416 = vshrl.u32 %v1294, 16
        %v1418 = vor.u32 %v1416, %v1414
        %v1420 = vshll.u32 %v1295, 16
        %v1422 = vrot.slane %v1420, 1
        %v1423 = vsel %vm1315, %v1418, %v1422
        %v1424 = vshrl.u32 %v1295, 16
        %v1426 = vor.u32 %v1424, %v1422
        %v1428 = vshll.u32 %v1296, 16
        %v1430 = vrot.slane %v1428, 1
        %v1431 = vsel %vm1315, %v1426, %v1430
        %v1432 = vshrl.u32 %v1296, 16
        %v1434 = vor.u32 %v1432, %v1430
        %v1436 = vshll.u32 %v1297, 16
        %v1438 = vrot.slane %v1436, 1
        %v1439 = vsel %vm1315, %v1434, %v1438
        %v1440 = vshrl.u32 %v1297, 16
        %v1442 = vor.u32 %v1440, %v1438
        %v1444 = vshll.u32 %v1298, 16
        %v1446 = vrot.slane %v1444, 1
        %v1447 = vsel %vm1315, %v1442, %v1446
        %v1448 = vshrl.u32 %v1298, 16
        %v1450 = vor.u32 %v1448, %v1446
        %v1452 = vshll.u32 %v1299, 16
        %v1454 = vrot.slane %v1452, 1
        %v1455 = vsel %vm1315, %v1450, %v1454
        %v1456 = vshrl.u32 %v1299, 16
        %v1458 = vor.u32 %v1456, %v1454
        %v1460 = vshll.u32 %v1300, 16
        %v1462 = vrot.slane %v1460, 1
        %v1463 = vsel %vm1315, %v1458, %v1462
        %v1464 = vshrl.u32 %v1300, 16
        %v1466 = vor.u32 %v1464, %v1462
        %v1468 = vshll.u32 %v1301, 16
        %v1470 = vrot.slane %v1468, 1
        %v1471 = vsel %vm1315, %v1466, %v1470
        %v1472 = vshrl.u32 %v1301, 16
        %v1474 = vor.u32 %v1472, %v1470
        %v1476 = vshll.u32 %v1302, 16
        %v1478 = vrot.slane %v1476, 1
        %v1479 = vsel %vm1315, %v1474, %v1478
        %v1480 = vshrl.u32 %v1302, 16
        %v1482 = vor.u32 %v1480, %v1478
        %v1484 = vshll.u32 %v1303, 16
        %v1486 = vrot.slane %v1484, 1
        %v1487 = vsel %vm1315, %v1482, %v1486
        %v1488 = vshrl.u32 %v1303, 16
        %v1490 = vor.u32 %v1488, %v1486
        %v1492 = vshll.u32 %v1304, 16
        %v1494 = vrot.slane %v1492, 1
        %v1495 = vsel %vm1315, %v1490, %v1494
        %v1496 = vshrl.u32 %v1304, 16
        %v1498 = vor.u32 %v1496, %v1494
        %v1500 = vshll.u32 %v1305, 16
        %v1502 = vrot.slane %v1500, 1
        %v1503 = vsel %vm1315, %v1498, %v1502
        %v1504 = vshrl.u32 %v1305, 16
        %v1506 = vor.u32 %v1504, %v1502
        %v1508 = vshll.u32 %v1306, 16
        %v1510 = vrot.slane %v1508, 1
        %v1511 = vsel %vm1315, %v1506, %v1510
        %v1512 = vshrl.u32 %v1306, 16
        %v1514 = vor.u32 %v1512, %v1510
        %v1516 = vshll.u32 %v1307, 16
        %v1518 = vrot.slane %v1516, 1
        %v1519 = vsel %vm1315, %v1514, %v1518
        %v1520 = vshrl.u32 %v1307, 16
        %v1522 = vor.u32 %v1520, %v1518
        %v1524 = vshll.u32 %v1308, 16
        %v1526 = vrot.slane %v1524, 1
        %v1527 = vsel %vm1315, %v1522, %v1526
        %v1528 = vshrl.u32 %v1308, 16
        %v1530 = vor.u32 %v1528, %v1526
        %v1532 = vshll.u32 %v1309, 16
        %v1534 = vrot.slane %v1532, 1
        %v1535 = vsel %vm1315, %v1530, %v1534
        %v1536 = vshrl.u32 %v1309, 16
        %v1538 = vor.u32 %v1536, %v1534
        %v1540 = vshll.u32 %v1310, 16
        %v1542 = vrot.slane %v1540, 1
        %v1543 = vsel %vm1315, %v1538, %v1542
        %v1544 = vshrl.u32 %v1310, 16
        %v1546 = vor.u32 %v1544, %v1542
        %v1548 = vshll.u32 %v1311, 16
        %v1550 = vrot.slane %v1548, 1
        %v1551 = vsel %vm1315, %v1546, %v1550
        %v1552 = vshrl.u32 %v1311, 16
        %v1554 = vor.u32 %v1552, %v1550
        %v1556 = vshll.u32 %v1312, 16
        %v1558 = vrot.slane %v1556, 1
        %v1559 = vsel %vm1315, %v1554, %v1558
        %v1560 = vshrl.u32 %v1312, 16
        %v1562 = vor.u32 %v1560, %v1558
        %v1564 = vshll.u32 %v1313, 16
        %v1566 = vrot.slane %v1564, 1
        %v1567 = vsel %vm1315, %v1562, %v1566
        %v1568 = vshrl.u32 %v1313, 16
        %v1570 = vor.u32 %v1568, %v1566
        %v1572 = vshll.u32 %v1314, 16
        %v1574 = vrot.slane %v1572, 1
        %v1575 = vsel %vm1315, %v1570, %v1574
        %v1624 = vunpack.c.l.b16 %v1136
        %v1625 = vunpack.c.l.b16 %v1137
        %v1626 = vunpack.c.l.b16 %v1138
        %v1627 = vunpack.c.l.b16 %v1139
        %v1628 = vunpack.c.l.b16 %v1140
        %v1629 = vunpack.c.l.b16 %v1141
        %v1630 = vunpack.c.l.b16 %v1142
        %v1631 = vunpack.c.l.b16 %v1143
        %v1632 = vunpack.c.l.b16 %v1144
        %v1633 = vunpack.c.l.b16 %v1145
        %v1634 = vunpack.c.l.b16 %v1146
        %v1635 = vunpack.c.l.b16 %v1147
        %v1636 = vunpack.c.l.b16 %v1148
        %v1637 = vunpack.c.l.b16 %v1149
        %v1638 = vunpack.c.l.b16 %v1150
        %v1639 = vunpack.c.l.b16 %v1151
        %v1640 = vpack.c.b16 %v1625, %v1624
        %v1641 = vpack.c.b16 %v1627, %v1626
        %v1642 = vpack.c.b16 %v1629, %v1628
        %v1643 = vpack.c.b16 %v1631, %v1630
        %v1644 = vpack.c.b16 %v1633, %v1632
        %v1645 = vpack.c.b16 %v1635, %v1634
        %v1646 = vpack.c.b16 %v1637, %v1636
        %v1647 = vpack.c.b16 %v1639, %v1638
        %1656 = vmatprep.subr.bf16.mxu0 0
        %1657 = vmatpush1.bf16.msra.mxu0 %v1647
        %1658 = vmatprep.subr.bf16.mxu0 0
        %1659 = vmatpush1.bf16.msra.mxu0 %v1646
        %1660 = vmatprep.subr.bf16.mxu0 0
        %1661 = vmatpush1.bf16.msra.mxu0 %v1645
        %1662 = vmatprep.subr.bf16.mxu0 0
        %1663 = vmatpush1.bf16.msra.mxu0 %v1644
        %1664 = vmatprep.subr.bf16.mxu0 0
        %1665 = vmatpush1.bf16.msra.mxu0 %v1643
        %1666 = vmatprep.subr.bf16.mxu0 0
        %1667 = vmatpush1.bf16.msra.mxu0 %v1642
        %1668 = vmatprep.subr.bf16.mxu0 0
        %1669 = vmatpush1.bf16.msra.mxu0 %v1641
        %1670 = vmatprep.subr.bf16.mxu0 0
        %1671 = vmatpush1.bf16.msra.mxu0 %v1640
        %1672 = vmatprep.subr.bf16.mxu0 0
        %1673 = vmatpush2.bf16.msra.mxu0 0
        %1674 = vmatprep.subr.bf16.mxu0 0
        %1675 = vmatpush2.bf16.msra.mxu0 0
        %1676 = vmatprep.subr.bf16.mxu0 0
        %1677 = vmatpush2.bf16.msra.mxu0 0
        %1678 = vmatprep.subr.bf16.mxu0 0
        %1679 = vmatpush2.bf16.msra.mxu0 0
        %1680 = vmatprep.subr.bf16.mxu0 0
        %1681 = vmatpush2.bf16.msra.mxu0 0
        %1682 = vmatprep.subr.bf16.mxu0 0
        %1683 = vmatpush2.bf16.msra.mxu0 0
        %1684 = vmatprep.subr.bf16.mxu0 0
        %1685 = vmatpush2.bf16.msra.mxu0 0
        %1686 = vmatprep.subr.bf16.mxu0 0
        %1687 = vmatpush2.bf16.msra.mxu0 0
        %1688 = vmatprep.mubr.bf16.mxu0 0
        %1689 = vmatmul.mubr.bf16.gmra.mxu0 %v1327
        %v1690 = vpop.f32.mrf.mxu0
        %v1691 = vadd.f32 0.0, %v1690
        %v1692 = vpop.f32.mrf.mxu0
        %v1693 = vpop.f32.mrf.mxu0
        %v1694 = vadd.f32 0.0, %v1693
        %v1695 = vpop.f32.mrf.mxu0
        %1696 = vmatprep.mubr.bf16.mxu0 0
        %1697 = vmatmul.mubr.bf16.gmra.mxu0 %v1335
        %v1698 = vpop.f32.mrf.mxu0
        %v1699 = vadd.f32 0.0, %v1698
        %v1700 = vpop.f32.mrf.mxu0
        %v1701 = vpop.f32.mrf.mxu0
        %v1702 = vadd.f32 0.0, %v1701
        %v1703 = vpop.f32.mrf.mxu0
        %1704 = vmatprep.mubr.bf16.mxu0 0
        %1705 = vmatmul.mubr.bf16.gmra.mxu0 %v1343
        %v1706 = vpop.f32.mrf.mxu0
        %v1707 = vadd.f32 0.0, %v1706
        %v1708 = vpop.f32.mrf.mxu0
        %v1709 = vpop.f32.mrf.mxu0
        %v1710 = vadd.f32 0.0, %v1709
        %v1711 = vpop.f32.mrf.mxu0
        %1712 = vmatprep.mubr.bf16.mxu0 0
        %1713 = vmatmul.mubr.bf16.gmra.mxu0 %v1351
        %v1714 = vpop.f32.mrf.mxu0
        %v1715 = vadd.f32 0.0, %v1714
        %v1716 = vpop.f32.mrf.mxu0
        %v1717 = vpop.f32.mrf.mxu0
        %v1718 = vadd.f32 0.0, %v1717
        %v1719 = vpop.f32.mrf.mxu0
        %1720 = vmatprep.mubr.bf16.mxu0 0
        %1721 = vmatmul.mubr.bf16.gmra.mxu0 %v1359
        %v1722 = vpop.f32.mrf.mxu0
        %v1723 = vadd.f32 0.0, %v1722
        %v1724 = vpop.f32.mrf.mxu0
        %v1725 = vpop.f32.mrf.mxu0
        %v1726 = vadd.f32 0.0, %v1725
        %v1727 = vpop.f32.mrf.mxu0
        %1728 = vmatprep.mubr.bf16.mxu0 0
        %1729 = vmatmul.mubr.bf16.gmra.mxu0 %v1367
        %v1730 = vpop.f32.mrf.mxu0
        %v1731 = vadd.f32 0.0, %v1730
        %v1732 = vpop.f32.mrf.mxu0
        %v1733 = vpop.f32.mrf.mxu0
        %v1734 = vadd.f32 0.0, %v1733
        %v1735 = vpop.f32.mrf.mxu0
        %1736 = vmatprep.mubr.bf16.mxu0 0
        %1737 = vmatmul.mubr.bf16.gmra.mxu0 %v1375
        %v1738 = vpop.f32.mrf.mxu0
        %v1739 = vadd.f32 0.0, %v1738
        %v1740 = vpop.f32.mrf.mxu0
        %v1741 = vpop.f32.mrf.mxu0
        %v1742 = vadd.f32 0.0, %v1741
        %v1743 = vpop.f32.mrf.mxu0
        %1744 = vmatprep.mubr.bf16.mxu0 0
        %1745 = vmatmul.mubr.bf16.gmra.mxu0 %v1383
        %v1746 = vpop.f32.mrf.mxu0
        %v1747 = vadd.f32 0.0, %v1746
        %v1748 = vpop.f32.mrf.mxu0
        %v1749 = vpop.f32.mrf.mxu0
        %v1750 = vadd.f32 0.0, %v1749
        %v1751 = vpop.f32.mrf.mxu0
        %1752 = vmatprep.mubr.bf16.mxu0 0
        %1753 = vmatmul.mubr.bf16.gmra.mxu0 %v1391
        %v1754 = vpop.f32.mrf.mxu0
        %v1755 = vadd.f32 0.0, %v1754
        %v1756 = vpop.f32.mrf.mxu0
        %v1757 = vpop.f32.mrf.mxu0
        %v1758 = vadd.f32 0.0, %v1757
        %v1759 = vpop.f32.mrf.mxu0
        %1760 = vmatprep.mubr.bf16.mxu0 0
        %1761 = vmatmul.mubr.bf16.gmra.mxu0 %v1399
        %v1762 = vpop.f32.mrf.mxu0
        %v1763 = vadd.f32 0.0, %v1762
        %v1764 = vpop.f32.mrf.mxu0
        %v1765 = vpop.f32.mrf.mxu0
        %v1766 = vadd.f32 0.0, %v1765
        %v1767 = vpop.f32.mrf.mxu0
        %1768 = vmatprep.mubr.bf16.mxu0 0
        %1769 = vmatmul.mubr.bf16.gmra.mxu0 %v1407
        %v1770 = vpop.f32.mrf.mxu0
        %v1771 = vadd.f32 0.0, %v1770
        %v1772 = vpop.f32.mrf.mxu0
        %v1773 = vpop.f32.mrf.mxu0
        %v1774 = vadd.f32 0.0, %v1773
        %v1775 = vpop.f32.mrf.mxu0
        %1776 = vmatprep.mubr.bf16.mxu0 0
        %1777 = vmatmul.mubr.bf16.gmra.mxu0 %v1415
        %v1778 = vpop.f32.mrf.mxu0
        %v1779 = vadd.f32 0.0, %v1778
        %v1780 = vpop.f32.mrf.mxu0
        %v1781 = vpop.f32.mrf.mxu0
        %v1782 = vadd.f32 0.0, %v1781
        %v1783 = vpop.f32.mrf.mxu0
        %1784 = vmatprep.mubr.bf16.mxu0 0
        %1785 = vmatmul.mubr.bf16.gmra.mxu0 %v1423
        %v1786 = vpop.f32.mrf.mxu0
        %v1787 = vadd.f32 0.0, %v1786
        %v1788 = vpop.f32.mrf.mxu0
        %v1789 = vpop.f32.mrf.mxu0
        %v1790 = vadd.f32 0.0, %v1789
        %v1791 = vpop.f32.mrf.mxu0
        %1792 = vmatprep.mubr.bf16.mxu0 0
        %1793 = vmatmul.mubr.bf16.gmra.mxu0 %v1431
        %v1794 = vpop.f32.mrf.mxu0
        %v1795 = vadd.f32 0.0, %v1794
        %v1796 = vpop.f32.mrf.mxu0
        %v1797 = vpop.f32.mrf.mxu0
        %v1798 = vadd.f32 0.0, %v1797
        %v1799 = vpop.f32.mrf.mxu0
        %1800 = vmatprep.mubr.bf16.mxu0 0
        %1801 = vmatmul.mubr.bf16.gmra.mxu0 %v1439
        %v1802 = vpop.f32.mrf.mxu0
        %v1803 = vadd.f32 0.0, %v1802
        %v1804 = vpop.f32.mrf.mxu0
        %v1805 = vpop.f32.mrf.mxu0
        %v1806 = vadd.f32 0.0, %v1805
        %v1807 = vpop.f32.mrf.mxu0
        %1808 = vmatprep.mubr.bf16.mxu0 0
        %1809 = vmatmul.mubr.bf16.gmra.mxu0 %v1447
        %v1810 = vpop.f32.mrf.mxu0
        %v1811 = vadd.f32 0.0, %v1810
        %v1812 = vpop.f32.mrf.mxu0
        %v1813 = vpop.f32.mrf.mxu0
        %v1814 = vadd.f32 0.0, %v1813
        %v1815 = vpop.f32.mrf.mxu0
        %1816 = vmatprep.mubr.bf16.mxu0 0
        %1817 = vmatmul.mubr.bf16.gmra.mxu0 %v1455
        %v1818 = vpop.f32.mrf.mxu0
        %v1819 = vadd.f32 0.0, %v1818
        %v1820 = vpop.f32.mrf.mxu0
        %v1821 = vpop.f32.mrf.mxu0
        %v1822 = vadd.f32 0.0, %v1821
        %v1823 = vpop.f32.mrf.mxu0
        %1824 = vmatprep.mubr.bf16.mxu0 0
        %1825 = vmatmul.mubr.bf16.gmra.mxu0 %v1463
        %v1826 = vpop.f32.mrf.mxu0
        %v1827 = vadd.f32 0.0, %v1826
        %v1828 = vpop.f32.mrf.mxu0
        %v1829 = vpop.f32.mrf.mxu0
        %v1830 = vadd.f32 0.0, %v1829
        %v1831 = vpop.f32.mrf.mxu0
        %1832 = vmatprep.mubr.bf16.mxu0 0
        %1833 = vmatmul.mubr.bf16.gmra.mxu0 %v1471
        %v1834 = vpop.f32.mrf.mxu0
        %v1835 = vadd.f32 0.0, %v1834
        %v1836 = vpop.f32.mrf.mxu0
        %v1837 = vpop.f32.mrf.mxu0
        %v1838 = vadd.f32 0.0, %v1837
        %v1839 = vpop.f32.mrf.mxu0
        %1840 = vmatprep.mubr.bf16.mxu0 0
        %1841 = vmatmul.mubr.bf16.gmra.mxu0 %v1479
        %v1842 = vpop.f32.mrf.mxu0
        %v1843 = vadd.f32 0.0, %v1842
        %v1844 = vpop.f32.mrf.mxu0
        %v1845 = vpop.f32.mrf.mxu0
        %v1846 = vadd.f32 0.0, %v1845
        %v1847 = vpop.f32.mrf.mxu0
        %1848 = vmatprep.mubr.bf16.mxu0 0
        %1849 = vmatmul.mubr.bf16.gmra.mxu0 %v1487
        %v1850 = vpop.f32.mrf.mxu0
        %v1851 = vadd.f32 0.0, %v1850
        %v1852 = vpop.f32.mrf.mxu0
        %v1853 = vpop.f32.mrf.mxu0
        %v1854 = vadd.f32 0.0, %v1853
        %v1855 = vpop.f32.mrf.mxu0
        %1856 = vmatprep.mubr.bf16.mxu0 0
        %1857 = vmatmul.mubr.bf16.gmra.mxu0 %v1495
        %v1858 = vpop.f32.mrf.mxu0
        %v1859 = vadd.f32 0.0, %v1858
        %v1860 = vpop.f32.mrf.mxu0
        %v1861 = vpop.f32.mrf.mxu0
        %v1862 = vadd.f32 0.0, %v1861
        %v1863 = vpop.f32.mrf.mxu0
        %1864 = vmatprep.mubr.bf16.mxu0 0
        %1865 = vmatmul.mubr.bf16.gmra.mxu0 %v1503
        %v1866 = vpop.f32.mrf.mxu0
        %v1867 = vadd.f32 0.0, %v1866
        %v1868 = vpop.f32.mrf.mxu0
        %v1869 = vpop.f32.mrf.mxu0
        %v1870 = vadd.f32 0.0, %v1869
        %v1871 = vpop.f32.mrf.mxu0
        %1872 = vmatprep.mubr.bf16.mxu0 0
        %1873 = vmatmul.mubr.bf16.gmra.mxu0 %v1511
        %v1874 = vpop.f32.mrf.mxu0
        %v1875 = vadd.f32 0.0, %v1874
        %v1876 = vpop.f32.mrf.mxu0
        %v1877 = vpop.f32.mrf.mxu0
        %v1878 = vadd.f32 0.0, %v1877
        %v1879 = vpop.f32.mrf.mxu0
        %1880 = vmatprep.mubr.bf16.mxu0 0
        %1881 = vmatmul.mubr.bf16.gmra.mxu0 %v1519
        %v1882 = vpop.f32.mrf.mxu0
        %v1883 = vadd.f32 0.0, %v1882
        %v1884 = vpop.f32.mrf.mxu0
        %v1885 = vpop.f32.mrf.mxu0
        %v1886 = vadd.f32 0.0, %v1885
        %v1887 = vpop.f32.mrf.mxu0
        %1888 = vmatprep.mubr.bf16.mxu0 0
        %1889 = vmatmul.mubr.bf16.gmra.mxu0 %v1527
        %v1890 = vpop.f32.mrf.mxu0
        %v1891 = vadd.f32 0.0, %v1890
        %v1892 = vpop.f32.mrf.mxu0
        %v1893 = vpop.f32.mrf.mxu0
        %v1894 = vadd.f32 0.0, %v1893
        %v1895 = vpop.f32.mrf.mxu0
        %1896 = vmatprep.mubr.bf16.mxu0 0
        %1897 = vmatmul.mubr.bf16.gmra.mxu0 %v1535
        %v1898 = vpop.f32.mrf.mxu0
        %v1899 = vadd.f32 0.0, %v1898
        %v1900 = vpop.f32.mrf.mxu0
        %v1901 = vpop.f32.mrf.mxu0
        %v1902 = vadd.f32 0.0, %v1901
        %v1903 = vpop.f32.mrf.mxu0
        %1904 = vmatprep.mubr.bf16.mxu0 0
        %1905 = vmatmul.mubr.bf16.gmra.mxu0 %v1543
        %v1906 = vpop.f32.mrf.mxu0
        %v1907 = vadd.f32 0.0, %v1906
        %v1908 = vpop.f32.mrf.mxu0
        %v1909 = vpop.f32.mrf.mxu0
        %v1910 = vadd.f32 0.0, %v1909
        %v1911 = vpop.f32.mrf.mxu0
        %1912 = vmatprep.mubr.bf16.mxu0 0
        %1913 = vmatmul.mubr.bf16.gmra.mxu0 %v1551
        %v1914 = vpop.f32.mrf.mxu0
        %v1915 = vadd.f32 0.0, %v1914
        %v1916 = vpop.f32.mrf.mxu0
        %v1917 = vpop.f32.mrf.mxu0
        %v1918 = vadd.f32 0.0, %v1917
        %v1919 = vpop.f32.mrf.mxu0
        %1920 = vmatprep.mubr.bf16.mxu0 0
        %1921 = vmatmul.mubr.bf16.gmra.mxu0 %v1559
        %v1922 = vpop.f32.mrf.mxu0
        %v1923 = vadd.f32 0.0, %v1922
        %v1924 = vpop.f32.mrf.mxu0
        %v1925 = vpop.f32.mrf.mxu0
        %v1926 = vadd.f32 0.0, %v1925
        %v1927 = vpop.f32.mrf.mxu0
        %1928 = vmatprep.mubr.bf16.mxu0 0
        %1929 = vmatmul.mubr.bf16.gmra.mxu0 %v1567
        %v1930 = vpop.f32.mrf.mxu0
        %v1931 = vadd.f32 0.0, %v1930
        %v1932 = vpop.f32.mrf.mxu0
        %v1933 = vpop.f32.mrf.mxu0
        %v1934 = vadd.f32 0.0, %v1933
        %v1935 = vpop.f32.mrf.mxu0
        %1936 = vmatprep.mubr.bf16.mxu0 0
        %1937 = vmatmul.mubr.bf16.gmra.mxu0 %v1575
        %v1938 = vpop.f32.mrf.mxu0
        %v1939 = vadd.f32 0.0, %v1938
        %v1940 = vpop.f32.mrf.mxu0
        %v1941 = vpop.f32.mrf.mxu0
        %v1942 = vadd.f32 0.0, %v1941
        %v1943 = vpop.f32.mrf.mxu0
        %1944 = vdwg.mxu0
        %v1945 = vadd.f32 %v1006, %v1691
        %v1946 = vadd.f32 %v1007, %v1694
        %v1947 = vadd.f32 %v1008, %v1699
        %v1948 = vadd.f32 %v1009, %v1702
        %v1949 = vadd.f32 %v1010, %v1707
        %v1950 = vadd.f32 %v1011, %v1710
        %v1951 = vadd.f32 %v1012, %v1715
        %v1952 = vadd.f32 %v1013, %v1718
        %v1953 = vadd.f32 %v1014, %v1723
        %v1954 = vadd.f32 %v1015, %v1726
        %v1955 = vadd.f32 %v1016, %v1731
        %v1956 = vadd.f32 %v1017, %v1734
        %v1957 = vadd.f32 %v1018, %v1739
        %v1958 = vadd.f32 %v1019, %v1742
        %v1959 = vadd.f32 %v1020, %v1747
        %v1960 = vadd.f32 %v1021, %v1750
        %v1961 = vadd.f32 %v1022, %v1755
        %v1962 = vadd.f32 %v1023, %v1758
        %v1963 = vadd.f32 %v1024, %v1763
        %v1964 = vadd.f32 %v1025, %v1766
        %v1965 = vadd.f32 %v1026, %v1771
        %v1966 = vadd.f32 %v1027, %v1774
        %v1967 = vadd.f32 %v1028, %v1779
        %v1968 = vadd.f32 %v1029, %v1782
        %v1969 = vadd.f32 %v1030, %v1787
        %v1970 = vadd.f32 %v1031, %v1790
        %v1971 = vadd.f32 %v1032, %v1795
        %v1972 = vadd.f32 %v1033, %v1798
        %v1973 = vadd.f32 %v1034, %v1803
        %v1974 = vadd.f32 %v1035, %v1806
        %v1975 = vadd.f32 %v1036, %v1811
        %v1976 = vadd.f32 %v1037, %v1814
        %v1977 = vadd.f32 %v1038, %v1819
        %v1978 = vadd.f32 %v1039, %v1822
        %v1979 = vadd.f32 %v1040, %v1827
        %v1980 = vadd.f32 %v1041, %v1830
        %v1981 = vadd.f32 %v1042, %v1835
        %v1982 = vadd.f32 %v1043, %v1838
        %v1983 = vadd.f32 %v1044, %v1843
        %v1984 = vadd.f32 %v1045, %v1846
        %v1985 = vadd.f32 %v1046, %v1851
        %v1986 = vadd.f32 %v1047, %v1854
        %v1987 = vadd.f32 %v1048, %v1859
        %v1988 = vadd.f32 %v1049, %v1862
        %v1989 = vadd.f32 %v1050, %v1867
        %v1990 = vadd.f32 %v1051, %v1870
        %v1991 = vadd.f32 %v1052, %v1875
        %v1992 = vadd.f32 %v1053, %v1878
        %v1993 = vadd.f32 %v1054, %v1883
        %v1994 = vadd.f32 %v1055, %v1886
        %v1995 = vadd.f32 %v1056, %v1891
        %v1996 = vadd.f32 %v1057, %v1894
        %v1997 = vadd.f32 %v1058, %v1899
        %v1998 = vadd.f32 %v1059, %v1902
        %v1999 = vadd.f32 %v1060, %v1907
        %v2000 = vadd.f32 %v1061, %v1910
        %v2001 = vadd.f32 %v1062, %v1915
        %v2002 = vadd.f32 %v1063, %v1918
        %v2003 = vadd.f32 %v1064, %v1923
        %v2004 = vadd.f32 %v1065, %v1926
        %v2005 = vadd.f32 %v1066, %v1931
        %v2006 = vadd.f32 %v1067, %v1934
        %v2007 = vadd.f32 %v1068, %v1939
        %v2008 = vadd.f32 %v1069, %v1942
        %v2009 = vld [vmem:[%s229] sm:$0xe]
        %s2010 = scalar_lea.vmem [#allocation6], 128
        %v2011 = vld [vmem:[%s2010] sm:$0xf]
        %v2012 = vld [vmem:[%s2010 + $0x4] sm:$0xf]
        %v2013 = vld [vmem:[%s2010 + $0x8] sm:$0xf]
        %v2014 = vld [vmem:[%s2010 + $0xc] sm:$0xf]
        %v2015 = vld [vmem:[%s2010 + $0x10] sm:$0xf]
        %v2016 = vld [vmem:[%s2010 + $0x14] sm:$0xf]
        %v2017 = vld [vmem:[%s2010 + $0x18] sm:$0xf]
        %v2018 = vld [vmem:[%s2010 + $0x1c] sm:$0xf]
        %v2019 = vld [vmem:[%s2010 + $0x20] sm:$0xf]
        %v2020 = vld [vmem:[%s2010 + $0x24] sm:$0xf]
        %v2021 = vld [vmem:[%s2010 + $0x28] sm:$0xf]
        %v2022 = vld [vmem:[%s2010 + $0x2c] sm:$0xf]
        %v2023 = vld [vmem:[%s2010 + $0x30] sm:$0xf]
        %v2024 = vld [vmem:[%s2010 + $0x34] sm:$0xf]
        %v2025 = vld [vmem:[%s2010 + $0x38] sm:$0xf]
        %v2026 = vld [vmem:[%s2010 + $0x3c] sm:$0xf]
        %v2028 = vunpack.c.l.b16 %v2009
        %v2029 = vpack.c.b16 %v1218, %v2028
        %vm2030 = vcmask 1046528
        %v2031 = vrot.slane %v2029, 1
        %v2032 = vrot.slane %v1283, 1
        %v2033 = vsel %vm2030, %v2031, %v2032
        %v2034 = vrot.slane %v1284, 1
        %v2035 = vsel %vm2030, %v2032, %v2034
        %v2036 = vrot.slane %v1285, 1
        %v2037 = vsel %vm2030, %v2034, %v2036
        %v2038 = vrot.slane %v1286, 1
        %v2039 = vsel %vm2030, %v2036, %v2038
        %v2040 = vrot.slane %v1287, 1
        %v2041 = vsel %vm2030, %v2038, %v2040
        %v2042 = vrot.slane %v1288, 1
        %v2043 = vsel %vm2030, %v2040, %v2042
        %v2044 = vrot.slane %v1289, 1
        %v2045 = vsel %vm2030, %v2042, %v2044
        %v2046 = vrot.slane %v1290, 1
        %v2047 = vsel %vm2030, %v2044, %v2046
        %v2048 = vrot.slane %v1291, 1
        %v2049 = vsel %vm2030, %v2046, %v2048
        %v2050 = vrot.slane %v1292, 1
        %v2051 = vsel %vm2030, %v2048, %v2050
        %v2052 = vrot.slane %v1293, 1
        %v2053 = vsel %vm2030, %v2050, %v2052
        %v2054 = vrot.slane %v1294, 1
        %v2055 = vsel %vm2030, %v2052, %v2054
        %v2056 = vrot.slane %v1295, 1
        %v2057 = vsel %vm2030, %v2054, %v2056
        %v2058 = vrot.slane %v1296, 1
        %v2059 = vsel %vm2030, %v2056, %v2058
        %v2060 = vrot.slane %v1297, 1
        %v2061 = vsel %vm2030, %v2058, %v2060
        %v2062 = vrot.slane %v1298, 1
        %v2063 = vsel %vm2030, %v2060, %v2062
        %v2064 = vrot.slane %v1299, 1
        %v2065 = vsel %vm2030, %v2062, %v2064
        %v2066 = vrot.slane %v1300, 1
        %v2067 = vsel %vm2030, %v2064, %v2066
        %v2068 = vrot.slane %v1301, 1
        %v2069 = vsel %vm2030, %v2066, %v2068
        %v2070 = vrot.slane %v1302, 1
        %v2071 = vsel %vm2030, %v2068, %v2070
        %v2072 = vrot.slane %v1303, 1
        %v2073 = vsel %vm2030, %v2070, %v2072
        %v2074 = vrot.slane %v1304, 1
        %v2075 = vsel %vm2030, %v2072, %v2074
        %v2076 = vrot.slane %v1305, 1
        %v2077 = vsel %vm2030, %v2074, %v2076
        %v2078 = vrot.slane %v1306, 1
        %v2079 = vsel %vm2030, %v2076, %v2078
        %v2080 = vrot.slane %v1307, 1
        %v2081 = vsel %vm2030, %v2078, %v2080
        %v2082 = vrot.slane %v1308, 1
        %v2083 = vsel %vm2030, %v2080, %v2082
        %v2084 = vrot.slane %v1309, 1
        %v2085 = vsel %vm2030, %v2082, %v2084
        %v2086 = vrot.slane %v1310, 1
        %v2087 = vsel %vm2030, %v2084, %v2086
        %v2088 = vrot.slane %v1311, 1
        %v2089 = vsel %vm2030, %v2086, %v2088
        %v2090 = vrot.slane %v1312, 1
        %v2091 = vsel %vm2030, %v2088, %v2090
        %v2092 = vrot.slane %v1313, 1
        %v2093 = vsel %vm2030, %v2090, %v2092
        %v2094 = vrot.slane %v1314, 1
        %v2095 = vsel %vm2030, %v2092, %v2094
        %v2144 = vunpack.c.l.b16 %v2011
        %v2145 = vunpack.c.l.b16 %v2012
        %v2146 = vunpack.c.l.b16 %v2013
        %v2147 = vunpack.c.l.b16 %v2014
        %v2148 = vunpack.c.l.b16 %v2015
        %v2149 = vunpack.c.l.b16 %v2016
        %v2150 = vunpack.c.l.b16 %v2017
        %v2151 = vunpack.c.l.b16 %v2018
        %v2152 = vunpack.c.l.b16 %v2019
        %v2153 = vunpack.c.l.b16 %v2020
        %v2154 = vunpack.c.l.b16 %v2021
        %v2155 = vunpack.c.l.b16 %v2022
        %v2156 = vunpack.c.l.b16 %v2023
        %v2157 = vunpack.c.l.b16 %v2024
        %v2158 = vunpack.c.l.b16 %v2025
        %v2159 = vunpack.c.l.b16 %v2026
        %v2160 = vpack.c.b16 %v2145, %v2144
        %v2161 = vpack.c.b16 %v2147, %v2146
        %v2162 = vpack.c.b16 %v2149, %v2148
        %v2163 = vpack.c.b16 %v2151, %v2150
        %v2164 = vpack.c.b16 %v2153, %v2152
        %v2165 = vpack.c.b16 %v2155, %v2154
        %v2166 = vpack.c.b16 %v2157, %v2156
        %v2167 = vpack.c.b16 %v2159, %v2158
        %2176 = vmatprep.subr.bf16.mxu0 0
        %2177 = vmatpush1.bf16.msra.mxu0 %v2167
        %2178 = vmatprep.subr.bf16.mxu0 0
        %2179 = vmatpush1.bf16.msra.mxu0 %v2166
        %2180 = vmatprep.subr.bf16.mxu0 0
        %2181 = vmatpush1.bf16.msra.mxu0 %v2165
        %2182 = vmatprep.subr.bf16.mxu0 0
        %2183 = vmatpush1.bf16.msra.mxu0 %v2164
        %2184 = vmatprep.subr.bf16.mxu0 0
        %2185 = vmatpush1.bf16.msra.mxu0 %v2163
        %2186 = vmatprep.subr.bf16.mxu0 0
        %2187 = vmatpush1.bf16.msra.mxu0 %v2162
        %2188 = vmatprep.subr.bf16.mxu0 0
        %2189 = vmatpush1.bf16.msra.mxu0 %v2161
        %2190 = vmatprep.subr.bf16.mxu0 0
        %2191 = vmatpush1.bf16.msra.mxu0 %v2160
        %2192 = vmatprep.subr.bf16.mxu0 0
        %2193 = vmatpush2.bf16.msra.mxu0 0
        %2194 = vmatprep.subr.bf16.mxu0 0
        %2195 = vmatpush2.bf16.msra.mxu0 0
        %2196 = vmatprep.subr.bf16.mxu0 0
        %2197 = vmatpush2.bf16.msra.mxu0 0
        %2198 = vmatprep.subr.bf16.mxu0 0
        %2199 = vmatpush2.bf16.msra.mxu0 0
        %2200 = vmatprep.subr.bf16.mxu0 0
        %2201 = vmatpush2.bf16.msra.mxu0 0
        %2202 = vmatprep.subr.bf16.mxu0 0
        %2203 = vmatpush2.bf16.msra.mxu0 0
        %2204 = vmatprep.subr.bf16.mxu0 0
        %2205 = vmatpush2.bf16.msra.mxu0 0
        %2206 = vmatprep.subr.bf16.mxu0 0
        %2207 = vmatpush2.bf16.msra.mxu0 0
        %2208 = vmatprep.mubr.bf16.mxu0 0
        %2209 = vmatmul.mubr.bf16.gmra.mxu0 %v2033
        %v2210 = vpop.f32.mrf.mxu0
        %v2211 = vadd.f32 0.0, %v2210
        %v2212 = vpop.f32.mrf.mxu0
        %v2213 = vpop.f32.mrf.mxu0
        %v2214 = vadd.f32 0.0, %v2213
        %v2215 = vpop.f32.mrf.mxu0
        %2216 = vmatprep.mubr.bf16.mxu0 0
        %2217 = vmatmul.mubr.bf16.gmra.mxu0 %v2035
        %v2218 = vpop.f32.mrf.mxu0
        %v2219 = vadd.f32 0.0, %v2218
        %v2220 = vpop.f32.mrf.mxu0
        %v2221 = vpop.f32.mrf.mxu0
        %v2222 = vadd.f32 0.0, %v2221
        %v2223 = vpop.f32.mrf.mxu0
        %2224 = vmatprep.mubr.bf16.mxu0 0
        %2225 = vmatmul.mubr.bf16.gmra.mxu0 %v2037
        %v2226 = vpop.f32.mrf.mxu0
        %v2227 = vadd.f32 0.0, %v2226
        %v2228 = vpop.f32.mrf.mxu0
        %v2229 = vpop.f32.mrf.mxu0
        %v2230 = vadd.f32 0.0, %v2229
        %v2231 = vpop.f32.mrf.mxu0
        %2232 = vmatprep.mubr.bf16.mxu0 0
        %2233 = vmatmul.mubr.bf16.gmra.mxu0 %v2039
        %v2234 = vpop.f32.mrf.mxu0
        %v2235 = vadd.f32 0.0, %v2234
        %v2236 = vpop.f32.mrf.mxu0
        %v2237 = vpop.f32.mrf.mxu0
        %v2238 = vadd.f32 0.0, %v2237
        %v2239 = vpop.f32.mrf.mxu0
        %2240 = vmatprep.mubr.bf16.mxu0 0
        %2241 = vmatmul.mubr.bf16.gmra.mxu0 %v2041
        %v2242 = vpop.f32.mrf.mxu0
        %v2243 = vadd.f32 0.0, %v2242
        %v2244 = vpop.f32.mrf.mxu0
        %v2245 = vpop.f32.mrf.mxu0
        %v2246 = vadd.f32 0.0, %v2245
        %v2247 = vpop.f32.mrf.mxu0
        %2248 = vmatprep.mubr.bf16.mxu0 0
        %2249 = vmatmul.mubr.bf16.gmra.mxu0 %v2043
        %v2250 = vpop.f32.mrf.mxu0
        %v2251 = vadd.f32 0.0, %v2250
        %v2252 = vpop.f32.mrf.mxu0
        %v2253 = vpop.f32.mrf.mxu0
        %v2254 = vadd.f32 0.0, %v2253
        %v2255 = vpop.f32.mrf.mxu0
        %2256 = vmatprep.mubr.bf16.mxu0 0
        %2257 = vmatmul.mubr.bf16.gmra.mxu0 %v2045
        %v2258 = vpop.f32.mrf.mxu0
        %v2259 = vadd.f32 0.0, %v2258
        %v2260 = vpop.f32.mrf.mxu0
        %v2261 = vpop.f32.mrf.mxu0
        %v2262 = vadd.f32 0.0, %v2261
        %v2263 = vpop.f32.mrf.mxu0
        %2264 = vmatprep.mubr.bf16.mxu0 0
        %2265 = vmatmul.mubr.bf16.gmra.mxu0 %v2047
        %v2266 = vpop.f32.mrf.mxu0
        %v2267 = vadd.f32 0.0, %v2266
        %v2268 = vpop.f32.mrf.mxu0
        %v2269 = vpop.f32.mrf.mxu0
        %v2270 = vadd.f32 0.0, %v2269
        %v2271 = vpop.f32.mrf.mxu0
        %2272 = vmatprep.mubr.bf16.mxu0 0
        %2273 = vmatmul.mubr.bf16.gmra.mxu0 %v2049
        %v2274 = vpop.f32.mrf.mxu0
        %v2275 = vadd.f32 0.0, %v2274
        %v2276 = vpop.f32.mrf.mxu0
        %v2277 = vpop.f32.mrf.mxu0
        %v2278 = vadd.f32 0.0, %v2277
        %v2279 = vpop.f32.mrf.mxu0
        %2280 = vmatprep.mubr.bf16.mxu0 0
        %2281 = vmatmul.mubr.bf16.gmra.mxu0 %v2051
        %v2282 = vpop.f32.mrf.mxu0
        %v2283 = vadd.f32 0.0, %v2282
        %v2284 = vpop.f32.mrf.mxu0
        %v2285 = vpop.f32.mrf.mxu0
        %v2286 = vadd.f32 0.0, %v2285
        %v2287 = vpop.f32.mrf.mxu0
        %2288 = vmatprep.mubr.bf16.mxu0 0
        %2289 = vmatmul.mubr.bf16.gmra.mxu0 %v2053
        %v2290 = vpop.f32.mrf.mxu0
        %v2291 = vadd.f32 0.0, %v2290
        %v2292 = vpop.f32.mrf.mxu0
        %v2293 = vpop.f32.mrf.mxu0
        %v2294 = vadd.f32 0.0, %v2293
        %v2295 = vpop.f32.mrf.mxu0
        %2296 = vmatprep.mubr.bf16.mxu0 0
        %2297 = vmatmul.mubr.bf16.gmra.mxu0 %v2055
        %v2298 = vpop.f32.mrf.mxu0
        %v2299 = vadd.f32 0.0, %v2298
        %v2300 = vpop.f32.mrf.mxu0
        %v2301 = vpop.f32.mrf.mxu0
        %v2302 = vadd.f32 0.0, %v2301
        %v2303 = vpop.f32.mrf.mxu0
        %2304 = vmatprep.mubr.bf16.mxu0 0
        %2305 = vmatmul.mubr.bf16.gmra.mxu0 %v2057
        %v2306 = vpop.f32.mrf.mxu0
        %v2307 = vadd.f32 0.0, %v2306
        %v2308 = vpop.f32.mrf.mxu0
        %v2309 = vpop.f32.mrf.mxu0
        %v2310 = vadd.f32 0.0, %v2309
        %v2311 = vpop.f32.mrf.mxu0
        %2312 = vmatprep.mubr.bf16.mxu0 0
        %2313 = vmatmul.mubr.bf16.gmra.mxu0 %v2059
        %v2314 = vpop.f32.mrf.mxu0
        %v2315 = vadd.f32 0.0, %v2314
        %v2316 = vpop.f32.mrf.mxu0
        %v2317 = vpop.f32.mrf.mxu0
        %v2318 = vadd.f32 0.0, %v2317
        %v2319 = vpop.f32.mrf.mxu0
        %2320 = vmatprep.mubr.bf16.mxu0 0
        %2321 = vmatmul.mubr.bf16.gmra.mxu0 %v2061
        %v2322 = vpop.f32.mrf.mxu0
        %v2323 = vadd.f32 0.0, %v2322
        %v2324 = vpop.f32.mrf.mxu0
        %v2325 = vpop.f32.mrf.mxu0
        %v2326 = vadd.f32 0.0, %v2325
        %v2327 = vpop.f32.mrf.mxu0
        %2328 = vmatprep.mubr.bf16.mxu0 0
        %2329 = vmatmul.mubr.bf16.gmra.mxu0 %v2063
        %v2330 = vpop.f32.mrf.mxu0
        %v2331 = vadd.f32 0.0, %v2330
        %v2332 = vpop.f32.mrf.mxu0
        %v2333 = vpop.f32.mrf.mxu0
        %v2334 = vadd.f32 0.0, %v2333
        %v2335 = vpop.f32.mrf.mxu0
        %2336 = vmatprep.mubr.bf16.mxu0 0
        %2337 = vmatmul.mubr.bf16.gmra.mxu0 %v2065
        %v2338 = vpop.f32.mrf.mxu0
        %v2339 = vadd.f32 0.0, %v2338
        %v2340 = vpop.f32.mrf.mxu0
        %v2341 = vpop.f32.mrf.mxu0
        %v2342 = vadd.f32 0.0, %v2341
        %v2343 = vpop.f32.mrf.mxu0
        %2344 = vmatprep.mubr.bf16.mxu0 0
        %2345 = vmatmul.mubr.bf16.gmra.mxu0 %v2067
        %v2346 = vpop.f32.mrf.mxu0
        %v2347 = vadd.f32 0.0, %v2346
        %v2348 = vpop.f32.mrf.mxu0
        %v2349 = vpop.f32.mrf.mxu0
        %v2350 = vadd.f32 0.0, %v2349
        %v2351 = vpop.f32.mrf.mxu0
        %2352 = vmatprep.mubr.bf16.mxu0 0
        %2353 = vmatmul.mubr.bf16.gmra.mxu0 %v2069
        %v2354 = vpop.f32.mrf.mxu0
        %v2355 = vadd.f32 0.0, %v2354
        %v2356 = vpop.f32.mrf.mxu0
        %v2357 = vpop.f32.mrf.mxu0
        %v2358 = vadd.f32 0.0, %v2357
        %v2359 = vpop.f32.mrf.mxu0
        %2360 = vmatprep.mubr.bf16.mxu0 0
        %2361 = vmatmul.mubr.bf16.gmra.mxu0 %v2071
        %v2362 = vpop.f32.mrf.mxu0
        %v2363 = vadd.f32 0.0, %v2362
        %v2364 = vpop.f32.mrf.mxu0
        %v2365 = vpop.f32.mrf.mxu0
        %v2366 = vadd.f32 0.0, %v2365
        %v2367 = vpop.f32.mrf.mxu0
        %2368 = vmatprep.mubr.bf16.mxu0 0
        %2369 = vmatmul.mubr.bf16.gmra.mxu0 %v2073
        %v2370 = vpop.f32.mrf.mxu0
        %v2371 = vadd.f32 0.0, %v2370
        %v2372 = vpop.f32.mrf.mxu0
        %v2373 = vpop.f32.mrf.mxu0
        %v2374 = vadd.f32 0.0, %v2373
        %v2375 = vpop.f32.mrf.mxu0
        %2376 = vmatprep.mubr.bf16.mxu0 0
        %2377 = vmatmul.mubr.bf16.gmra.mxu0 %v2075
        %v2378 = vpop.f32.mrf.mxu0
        %v2379 = vadd.f32 0.0, %v2378
        %v2380 = vpop.f32.mrf.mxu0
        %v2381 = vpop.f32.mrf.mxu0
        %v2382 = vadd.f32 0.0, %v2381
        %v2383 = vpop.f32.mrf.mxu0
        %2384 = vmatprep.mubr.bf16.mxu0 0
        %2385 = vmatmul.mubr.bf16.gmra.mxu0 %v2077
        %v2386 = vpop.f32.mrf.mxu0
        %v2387 = vadd.f32 0.0, %v2386
        %v2388 = vpop.f32.mrf.mxu0
        %v2389 = vpop.f32.mrf.mxu0
        %v2390 = vadd.f32 0.0, %v2389
        %v2391 = vpop.f32.mrf.mxu0
        %2392 = vmatprep.mubr.bf16.mxu0 0
        %2393 = vmatmul.mubr.bf16.gmra.mxu0 %v2079
        %v2394 = vpop.f32.mrf.mxu0
        %v2395 = vadd.f32 0.0, %v2394
        %v2396 = vpop.f32.mrf.mxu0
        %v2397 = vpop.f32.mrf.mxu0
        %v2398 = vadd.f32 0.0, %v2397
        %v2399 = vpop.f32.mrf.mxu0
        %2400 = vmatprep.mubr.bf16.mxu0 0
        %2401 = vmatmul.mubr.bf16.gmra.mxu0 %v2081
        %v2402 = vpop.f32.mrf.mxu0
        %v2403 = vadd.f32 0.0, %v2402
        %v2404 = vpop.f32.mrf.mxu0
        %v2405 = vpop.f32.mrf.mxu0
        %v2406 = vadd.f32 0.0, %v2405
        %v2407 = vpop.f32.mrf.mxu0
        %2408 = vmatprep.mubr.bf16.mxu0 0
        %2409 = vmatmul.mubr.bf16.gmra.mxu0 %v2083
        %v2410 = vpop.f32.mrf.mxu0
        %v2411 = vadd.f32 0.0, %v2410
        %v2412 = vpop.f32.mrf.mxu0
        %v2413 = vpop.f32.mrf.mxu0
        %v2414 = vadd.f32 0.0, %v2413
        %v2415 = vpop.f32.mrf.mxu0
        %2416 = vmatprep.mubr.bf16.mxu0 0
        %2417 = vmatmul.mubr.bf16.gmra.mxu0 %v2085
        %v2418 = vpop.f32.mrf.mxu0
        %v2419 = vadd.f32 0.0, %v2418
        %v2420 = vpop.f32.mrf.mxu0
        %v2421 = vpop.f32.mrf.mxu0
        %v2422 = vadd.f32 0.0, %v2421
        %v2423 = vpop.f32.mrf.mxu0
        %2424 = vmatprep.mubr.bf16.mxu0 0
        %2425 = vmatmul.mubr.bf16.gmra.mxu0 %v2087
        %v2426 = vpop.f32.mrf.mxu0
        %v2427 = vadd.f32 0.0, %v2426
        %v2428 = vpop.f32.mrf.mxu0
        %v2429 = vpop.f32.mrf.mxu0
        %v2430 = vadd.f32 0.0, %v2429
        %v2431 = vpop.f32.mrf.mxu0
        %2432 = vmatprep.mubr.bf16.mxu0 0
        %2433 = vmatmul.mubr.bf16.gmra.mxu0 %v2089
        %v2434 = vpop.f32.mrf.mxu0
        %v2435 = vadd.f32 0.0, %v2434
        %v2436 = vpop.f32.mrf.mxu0
        %v2437 = vpop.f32.mrf.mxu0
        %v2438 = vadd.f32 0.0, %v2437
        %v2439 = vpop.f32.mrf.mxu0
        %2440 = vmatprep.mubr.bf16.mxu0 0
        %2441 = vmatmul.mubr.bf16.gmra.mxu0 %v2091
        %v2442 = vpop.f32.mrf.mxu0
        %v2443 = vadd.f32 0.0, %v2442
        %v2444 = vpop.f32.mrf.mxu0
        %v2445 = vpop.f32.mrf.mxu0
        %v2446 = vadd.f32 0.0, %v2445
        %v2447 = vpop.f32.mrf.mxu0
        %2448 = vmatprep.mubr.bf16.mxu0 0
        %2449 = vmatmul.mubr.bf16.gmra.mxu0 %v2093
        %v2450 = vpop.f32.mrf.mxu0
        %v2451 = vadd.f32 0.0, %v2450
        %v2452 = vpop.f32.mrf.mxu0
        %v2453 = vpop.f32.mrf.mxu0
        %v2454 = vadd.f32 0.0, %v2453
        %v2455 = vpop.f32.mrf.mxu0
        %2456 = vmatprep.mubr.bf16.mxu0 0
        %2457 = vmatmul.mubr.bf16.gmra.mxu0 %v2095
        %v2458 = vpop.f32.mrf.mxu0
        %v2459 = vadd.f32 0.0, %v2458
        %v2460 = vpop.f32.mrf.mxu0
        %v2461 = vpop.f32.mrf.mxu0
        %v2462 = vadd.f32 0.0, %v2461
        %v2463 = vpop.f32.mrf.mxu0
        %2464 = vdwg.mxu0
        %v2465 = vadd.f32 %v1945, %v2211
        %v2466 = vadd.f32 %v1946, %v2214
        %v2467 = vadd.f32 %v1947, %v2219
        %v2468 = vadd.f32 %v1948, %v2222
        %v2469 = vadd.f32 %v1949, %v2227
        %v2470 = vadd.f32 %v1950, %v2230
        %v2471 = vadd.f32 %v1951, %v2235
        %v2472 = vadd.f32 %v1952, %v2238
        %v2473 = vadd.f32 %v1953, %v2243
        %v2474 = vadd.f32 %v1954, %v2246
        %v2475 = vadd.f32 %v1955, %v2251
        %v2476 = vadd.f32 %v1956, %v2254
        %v2477 = vadd.f32 %v1957, %v2259
        %v2478 = vadd.f32 %v1958, %v2262
        %v2479 = vadd.f32 %v1959, %v2267
        %v2480 = vadd.f32 %v1960, %v2270
        %v2481 = vadd.f32 %v1961, %v2275
        %v2482 = vadd.f32 %v1962, %v2278
        %v2483 = vadd.f32 %v1963, %v2283
        %v2484 = vadd.f32 %v1964, %v2286
        %v2485 = vadd.f32 %v1965, %v2291
        %v2486 = vadd.f32 %v1966, %v2294
        %v2487 = vadd.f32 %v1967, %v2299
        %v2488 = vadd.f32 %v1968, %v2302
        %v2489 = vadd.f32 %v1969, %v2307
        %v2490 = vadd.f32 %v1970, %v2310
        %v2491 = vadd.f32 %v1971, %v2315
        %v2492 = vadd.f32 %v1972, %v2318
        %v2493 = vadd.f32 %v1973, %v2323
        %v2494 = vadd.f32 %v1974, %v2326
        %v2495 = vadd.f32 %v1975, %v2331
        %v2496 = vadd.f32 %v1976, %v2334
        %v2497 = vadd.f32 %v1977, %v2339
        %v2498 = vadd.f32 %v1978, %v2342
        %v2499 = vadd.f32 %v1979, %v2347
        %v2500 = vadd.f32 %v1980, %v2350
        %v2501 = vadd.f32 %v1981, %v2355
        %v2502 = vadd.f32 %v1982, %v2358
        %v2503 = vadd.f32 %v1983, %v2363
        %v2504 = vadd.f32 %v1984, %v2366
        %v2505 = vadd.f32 %v1985, %v2371
        %v2506 = vadd.f32 %v1986, %v2374
        %v2507 = vadd.f32 %v1987, %v2379
        %v2508 = vadd.f32 %v1988, %v2382
        %v2509 = vadd.f32 %v1989, %v2387
        %v2510 = vadd.f32 %v1990, %v2390
        %v2511 = vadd.f32 %v1991, %v2395
        %v2512 = vadd.f32 %v1992, %v2398
        %v2513 = vadd.f32 %v1993, %v2403
        %v2514 = vadd.f32 %v1994, %v2406
        %v2515 = vadd.f32 %v1995, %v2411
        %v2516 = vadd.f32 %v1996, %v2414
        %v2517 = vadd.f32 %v1997, %v2419
        %v2518 = vadd.f32 %v1998, %v2422
        %v2519 = vadd.f32 %v1999, %v2427
        %v2520 = vadd.f32 %v2000, %v2430
        %v2521 = vadd.f32 %v2001, %v2435
        %v2522 = vadd.f32 %v2002, %v2438
        %v2523 = vadd.f32 %v2003, %v2443
        %v2524 = vadd.f32 %v2004, %v2446
        %v2525 = vadd.f32 %v2005, %v2451
        %v2526 = vadd.f32 %v2006, %v2454
        %v2527 = vadd.f32 %v2007, %v2459
        %v2528 = vadd.f32 %v2008, %v2462
        %v2529 = vld [vmem:[%s229 + $0x10] sm:$0xf]
        %v2530 = vld [vmem:[%s229 + $0x14] sm:$0xf]
        %v2531 = vld [vmem:[%s229 + $0x18] sm:$0xf]
        %v2532 = vld [vmem:[%s229 + $0x1c] sm:$0xf]
        %v2533 = vld [vmem:[%s229 + $0x20] sm:$0xf]
        %v2534 = vld [vmem:[%s229 + $0x24] sm:$0xf]
        %v2535 = vld [vmem:[%s229 + $0x28] sm:$0xf]
        %v2536 = vld [vmem:[%s229 + $0x2c] sm:$0xf]
        %v2537 = vld [vmem:[%s229 + $0x30] sm:$0xf]
        %v2538 = vld [vmem:[%s229 + $0x34] sm:$0xf]
        %v2539 = vld [vmem:[%s229 + $0x38] sm:$0xf]
        %v2540 = vld [vmem:[%s229 + $0x3c] sm:$0xf]
        %v2541 = vld [vmem:[%s229 + $0x40] sm:$0xf]
        %v2542 = vld [vmem:[%s229 + $0x44] sm:$0xf]
        %v2543 = vld [vmem:[%s229 + $0x48] sm:$0xf]
        %v2544 = vld [vmem:[%s229 + $0x4c] sm:$0xf]
        %v2545 = vld [vmem:[%s229 + $0x50] sm:$0xf]
        %v2546 = vld [vmem:[%s229 + $0x54] sm:$0xf]
        %v2547 = vld [vmem:[%s229 + $0x58] sm:$0xf]
        %v2548 = vld [vmem:[%s229 + $0x5c] sm:$0xf]
        %v2549 = vld [vmem:[%s229 + $0x60] sm:$0xf]
        %v2550 = vld [vmem:[%s229 + $0x64] sm:$0xf]
        %v2551 = vld [vmem:[%s229 + $0x68] sm:$0xf]
        %v2552 = vld [vmem:[%s229 + $0x6c] sm:$0xf]
        %v2553 = vld [vmem:[%s229 + $0x70] sm:$0xf]
        %v2554 = vld [vmem:[%s229 + $0x74] sm:$0xf]
        %v2555 = vld [vmem:[%s229 + $0x78] sm:$0xf]
        %v2556 = vld [vmem:[%s229 + $0x7c] sm:$0xf]
        %v2557 = vld [vmem:[%s229 + $0x80] sm:$0xf]
        %v2558 = vld [vmem:[%s229 + $0x84] sm:$0xf]
        %v2559 = vld [vmem:[%s229 + $0x88] sm:$0xf]
        %v2560 = vld [vmem:[%s229 + $0x8c] sm:$0xf]
        %v2561 = vld [vmem:[%s229 + $0x90] sm:$0xf]
        %v2562 = vld [vmem:[%s229 + $0x94] sm:$0xf]
        %v2563 = vld [vmem:[%s229 + $0x98] sm:$0xf]
        %v2564 = vld [vmem:[%s229 + $0x9c] sm:$0xf]
        %v2565 = vld [vmem:[%s229 + $0xa0] sm:$0xf]
        %v2566 = vld [vmem:[%s229 + $0xa4] sm:$0xf]
        %v2567 = vld [vmem:[%s229 + $0xa8] sm:$0xf]
        %v2568 = vld [vmem:[%s229 + $0xac] sm:$0xf]
        %v2569 = vld [vmem:[%s229 + $0xb0] sm:$0xf]
        %v2570 = vld [vmem:[%s229 + $0xb4] sm:$0xf]
        %v2571 = vld [vmem:[%s229 + $0xb8] sm:$0xf]
        %v2572 = vld [vmem:[%s229 + $0xbc] sm:$0xf]
        %v2573 = vld [vmem:[%s229 + $0xc0] sm:$0xf]
        %v2574 = vld [vmem:[%s229 + $0xc4] sm:$0xf]
        %v2575 = vld [vmem:[%s229 + $0xc8] sm:$0xf]
        %v2576 = vld [vmem:[%s229 + $0xcc] sm:$0xf]
        %v2577 = vld [vmem:[%s229 + $0xd0] sm:$0xf]
        %v2578 = vld [vmem:[%s229 + $0xd4] sm:$0xf]
        %v2579 = vld [vmem:[%s229 + $0xd8] sm:$0xf]
        %v2580 = vld [vmem:[%s229 + $0xdc] sm:$0xf]
        %v2581 = vld [vmem:[%s229 + $0xe0] sm:$0xf]
        %v2582 = vld [vmem:[%s229 + $0xe4] sm:$0xf]
        %v2583 = vld [vmem:[%s229 + $0xe8] sm:$0xf]
        %v2584 = vld [vmem:[%s229 + $0xec] sm:$0xf]
        %v2585 = vld [vmem:[%s229 + $0xf0] sm:$0xf]
        %v2586 = vld [vmem:[%s229 + $0xf4] sm:$0xf]
        %v2587 = vld [vmem:[%s229 + $0xf8] sm:$0xf]
        %v2588 = vld [vmem:[%s229 + $0xfc] sm:$0xf]
        %v2589 = vld [vmem:[%s229 + $0x100] sm:$0xf]
        %v2590 = vld [vmem:[%s229 + $0x104] sm:$0xf]
        %v2591 = vld [vmem:[%s229 + $0x108] sm:$0xf]
        %v2592 = vld [vmem:[%s229 + $0x10c] sm:$0xf]
        %s2593 = scalar_lea.vmem [#allocation6], 192
        %v2594 = vld [vmem:[%s2593] sm:$0xf]
        %v2595 = vld [vmem:[%s2593 + $0x4] sm:$0xf]
        %v2596 = vld [vmem:[%s2593 + $0x8] sm:$0xf]
        %v2597 = vld [vmem:[%s2593 + $0xc] sm:$0xf]
        %v2598 = vld [vmem:[%s2593 + $0x10] sm:$0xf]
        %v2599 = vld [vmem:[%s2593 + $0x14] sm:$0xf]
        %v2600 = vld [vmem:[%s2593 + $0x18] sm:$0xf]
        %v2601 = vld [vmem:[%s2593 + $0x1c] sm:$0xf]
        %v2602 = vld [vmem:[%s2593 + $0x20] sm:$0xf]
        %v2603 = vld [vmem:[%s2593 + $0x24] sm:$0xf]
        %v2604 = vld [vmem:[%s2593 + $0x28] sm:$0xf]
        %v2605 = vld [vmem:[%s2593 + $0x2c] sm:$0xf]
        %v2606 = vld [vmem:[%s2593 + $0x30] sm:$0xf]
        %v2607 = vld [vmem:[%s2593 + $0x34] sm:$0xf]
        %v2608 = vld [vmem:[%s2593 + $0x38] sm:$0xf]
        %v2609 = vld [vmem:[%s2593 + $0x3c] sm:$0xf]
        %v2674 = vunpack.c.l.b16 %v2529
        %v2675 = vunpack.c.l.b16 %v2530
        %v2676 = vunpack.c.l.b16 %v2531
        %v2677 = vunpack.c.l.b16 %v2532
        %v2678 = vunpack.c.l.b16 %v2533
        %v2679 = vunpack.c.l.b16 %v2534
        %v2680 = vunpack.c.l.b16 %v2535
        %v2681 = vunpack.c.l.b16 %v2536
        %v2682 = vunpack.c.l.b16 %v2537
        %v2683 = vunpack.c.l.b16 %v2538
        %v2684 = vunpack.c.l.b16 %v2539
        %v2685 = vunpack.c.l.b16 %v2540
        %v2686 = vunpack.c.l.b16 %v2541
        %v2687 = vunpack.c.l.b16 %v2542
        %v2688 = vunpack.c.l.b16 %v2543
        %v2689 = vunpack.c.l.b16 %v2544
        %v2690 = vunpack.c.l.b16 %v2545
        %v2691 = vunpack.c.l.b16 %v2546
        %v2692 = vunpack.c.l.b16 %v2547
        %v2693 = vunpack.c.l.b16 %v2548
        %v2694 = vunpack.c.l.b16 %v2549
        %v2695 = vunpack.c.l.b16 %v2550
        %v2696 = vunpack.c.l.b16 %v2551
        %v2697 = vunpack.c.l.b16 %v2552
        %v2698 = vunpack.c.l.b16 %v2553
        %v2699 = vunpack.c.l.b16 %v2554
        %v2700 = vunpack.c.l.b16 %v2555
        %v2701 = vunpack.c.l.b16 %v2556
        %v2702 = vunpack.c.l.b16 %v2557
        %v2703 = vunpack.c.l.b16 %v2558
        %v2704 = vunpack.c.l.b16 %v2559
        %v2705 = vunpack.c.l.b16 %v2560
        %v2706 = vunpack.c.l.b16 %v2561
        %v2707 = vunpack.c.l.b16 %v2562
        %v2708 = vunpack.c.l.b16 %v2563
        %v2709 = vunpack.c.l.b16 %v2564
        %v2710 = vunpack.c.l.b16 %v2565
        %v2711 = vunpack.c.l.b16 %v2566
        %v2712 = vunpack.c.l.b16 %v2567
        %v2713 = vunpack.c.l.b16 %v2568
        %v2714 = vunpack.c.l.b16 %v2569
        %v2715 = vunpack.c.l.b16 %v2570
        %v2716 = vunpack.c.l.b16 %v2571
        %v2717 = vunpack.c.l.b16 %v2572
        %v2718 = vunpack.c.l.b16 %v2573
        %v2719 = vunpack.c.l.b16 %v2574
        %v2720 = vunpack.c.l.b16 %v2575
        %v2721 = vunpack.c.l.b16 %v2576
        %v2722 = vunpack.c.l.b16 %v2577
        %v2723 = vunpack.c.l.b16 %v2578
        %v2724 = vunpack.c.l.b16 %v2579
        %v2725 = vunpack.c.l.b16 %v2580
        %v2726 = vunpack.c.l.b16 %v2581
        %v2727 = vunpack.c.l.b16 %v2582
        %v2728 = vunpack.c.l.b16 %v2583
        %v2729 = vunpack.c.l.b16 %v2584
        %v2730 = vunpack.c.l.b16 %v2585
        %v2731 = vunpack.c.l.b16 %v2586
        %v2732 = vunpack.c.l.b16 %v2587
        %v2733 = vunpack.c.l.b16 %v2588
        %v2734 = vunpack.c.l.b16 %v2589
        %v2735 = vunpack.c.l.b16 %v2590
        %v2736 = vunpack.c.l.b16 %v2591
        %v2737 = vunpack.c.l.b16 %v2592
        %v2738 = vpack.c.b16 %v2675, %v2674
        %v2739 = vpack.c.b16 %v2677, %v2676
        %v2740 = vpack.c.b16 %v2679, %v2678
        %v2741 = vpack.c.b16 %v2681, %v2680
        %v2742 = vpack.c.b16 %v2683, %v2682
        %v2743 = vpack.c.b16 %v2685, %v2684
        %v2744 = vpack.c.b16 %v2687, %v2686
        %v2745 = vpack.c.b16 %v2689, %v2688
        %v2746 = vpack.c.b16 %v2691, %v2690
        %v2747 = vpack.c.b16 %v2693, %v2692
        %v2748 = vpack.c.b16 %v2695, %v2694
        %v2749 = vpack.c.b16 %v2697, %v2696
        %v2750 = vpack.c.b16 %v2699, %v2698
        %v2751 = vpack.c.b16 %v2701, %v2700
        %v2752 = vpack.c.b16 %v2703, %v2702
        %v2753 = vpack.c.b16 %v2705, %v2704
        %v2754 = vpack.c.b16 %v2707, %v2706
        %v2755 = vpack.c.b16 %v2709, %v2708
        %v2756 = vpack.c.b16 %v2711, %v2710
        %v2757 = vpack.c.b16 %v2713, %v2712
        %v2758 = vpack.c.b16 %v2715, %v2714
        %v2759 = vpack.c.b16 %v2717, %v2716
        %v2760 = vpack.c.b16 %v2719, %v2718
        %v2761 = vpack.c.b16 %v2721, %v2720
        %v2762 = vpack.c.b16 %v2723, %v2722
        %v2763 = vpack.c.b16 %v2725, %v2724
        %v2764 = vpack.c.b16 %v2727, %v2726
        %v2765 = vpack.c.b16 %v2729, %v2728
        %v2766 = vpack.c.b16 %v2731, %v2730
        %v2767 = vpack.c.b16 %v2733, %v2732
        %v2768 = vpack.c.b16 %v2735, %v2734
        %v2769 = vpack.c.b16 %v2737, %v2736
        %v2818 = vunpack.c.l.b16 %v2594
        %v2819 = vunpack.c.l.b16 %v2595
        %v2820 = vunpack.c.l.b16 %v2596
        %v2821 = vunpack.c.l.b16 %v2597
        %v2822 = vunpack.c.l.b16 %v2598
        %v2823 = vunpack.c.l.b16 %v2599
        %v2824 = vunpack.c.l.b16 %v2600
        %v2825 = vunpack.c.l.b16 %v2601
        %v2826 = vunpack.c.l.b16 %v2602
        %v2827 = vunpack.c.l.b16 %v2603
        %v2828 = vunpack.c.l.b16 %v2604
        %v2829 = vunpack.c.l.b16 %v2605
        %v2830 = vunpack.c.l.b16 %v2606
        %v2831 = vunpack.c.l.b16 %v2607
        %v2832 = vunpack.c.l.b16 %v2608
        %v2833 = vunpack.c.l.b16 %v2609
        %v2834 = vpack.c.b16 %v2819, %v2818
        %v2835 = vpack.c.b16 %v2821, %v2820
        %v2836 = vpack.c.b16 %v2823, %v2822
        %v2837 = vpack.c.b16 %v2825, %v2824
        %v2838 = vpack.c.b16 %v2827, %v2826
        %v2839 = vpack.c.b16 %v2829, %v2828
        %v2840 = vpack.c.b16 %v2831, %v2830
        %v2841 = vpack.c.b16 %v2833, %v2832
        %2850 = vmatprep.subr.bf16.mxu0 0
        %2851 = vmatpush1.bf16.msra.mxu0 %v2841
        %2852 = vmatprep.subr.bf16.mxu0 0
        %2853 = vmatpush1.bf16.msra.mxu0 %v2840
        %2854 = vmatprep.subr.bf16.mxu0 0
        %2855 = vmatpush1.bf16.msra.mxu0 %v2839
        %2856 = vmatprep.subr.bf16.mxu0 0
        %2857 = vmatpush1.bf16.msra.mxu0 %v2838
        %2858 = vmatprep.subr.bf16.mxu0 0
        %2859 = vmatpush1.bf16.msra.mxu0 %v2837
        %2860 = vmatprep.subr.bf16.mxu0 0
        %2861 = vmatpush1.bf16.msra.mxu0 %v2836
        %2862 = vmatprep.subr.bf16.mxu0 0
        %2863 = vmatpush1.bf16.msra.mxu0 %v2835
        %2864 = vmatprep.subr.bf16.mxu0 0
        %2865 = vmatpush1.bf16.msra.mxu0 %v2834
        %2866 = vmatprep.subr.bf16.mxu0 0
        %2867 = vmatpush2.bf16.msra.mxu0 0
        %2868 = vmatprep.subr.bf16.mxu0 0
        %2869 = vmatpush2.bf16.msra.mxu0 0
        %2870 = vmatprep.subr.bf16.mxu0 0
        %2871 = vmatpush2.bf16.msra.mxu0 0
        %2872 = vmatprep.subr.bf16.mxu0 0
        %2873 = vmatpush2.bf16.msra.mxu0 0
        %2874 = vmatprep.subr.bf16.mxu0 0
        %2875 = vmatpush2.bf16.msra.mxu0 0
        %2876 = vmatprep.subr.bf16.mxu0 0
        %2877 = vmatpush2.bf16.msra.mxu0 0
        %2878 = vmatprep.subr.bf16.mxu0 0
        %2879 = vmatpush2.bf16.msra.mxu0 0
        %2880 = vmatprep.subr.bf16.mxu0 0
        %2881 = vmatpush2.bf16.msra.mxu0 0
        %2882 = vmatprep.mubr.bf16.mxu0 0
        %2883 = vmatmul.mubr.bf16.gmra.mxu0 %v2738
        %v2884 = vpop.f32.mrf.mxu0
        %v2885 = vadd.f32 0.0, %v2884
        %v2886 = vpop.f32.mrf.mxu0
        %v2887 = vpop.f32.mrf.mxu0
        %v2888 = vadd.f32 0.0, %v2887
        %v2889 = vpop.f32.mrf.mxu0
        %2890 = vmatprep.mubr.bf16.mxu0 0
        %2891 = vmatmul.mubr.bf16.gmra.mxu0 %v2739
        %v2892 = vpop.f32.mrf.mxu0
        %v2893 = vadd.f32 0.0, %v2892
        %v2894 = vpop.f32.mrf.mxu0
        %v2895 = vpop.f32.mrf.mxu0
        %v2896 = vadd.f32 0.0, %v2895
        %v2897 = vpop.f32.mrf.mxu0
        %2898 = vmatprep.mubr.bf16.mxu0 0
        %2899 = vmatmul.mubr.bf16.gmra.mxu0 %v2740
        %v2900 = vpop.f32.mrf.mxu0
        %v2901 = vadd.f32 0.0, %v2900
        %v2902 = vpop.f32.mrf.mxu0
        %v2903 = vpop.f32.mrf.mxu0
        %v2904 = vadd.f32 0.0, %v2903
        %v2905 = vpop.f32.mrf.mxu0
        %2906 = vmatprep.mubr.bf16.mxu0 0
        %2907 = vmatmul.mubr.bf16.gmra.mxu0 %v2741
        %v2908 = vpop.f32.mrf.mxu0
        %v2909 = vadd.f32 0.0, %v2908
        %v2910 = vpop.f32.mrf.mxu0
        %v2911 = vpop.f32.mrf.mxu0
        %v2912 = vadd.f32 0.0, %v2911
        %v2913 = vpop.f32.mrf.mxu0
        %2914 = vmatprep.mubr.bf16.mxu0 0
        %2915 = vmatmul.mubr.bf16.gmra.mxu0 %v2742
        %v2916 = vpop.f32.mrf.mxu0
        %v2917 = vadd.f32 0.0, %v2916
        %v2918 = vpop.f32.mrf.mxu0
        %v2919 = vpop.f32.mrf.mxu0
        %v2920 = vadd.f32 0.0, %v2919
        %v2921 = vpop.f32.mrf.mxu0
        %2922 = vmatprep.mubr.bf16.mxu0 0
        %2923 = vmatmul.mubr.bf16.gmra.mxu0 %v2743
        %v2924 = vpop.f32.mrf.mxu0
        %v2925 = vadd.f32 0.0, %v2924
        %v2926 = vpop.f32.mrf.mxu0
        %v2927 = vpop.f32.mrf.mxu0
        %v2928 = vadd.f32 0.0, %v2927
        %v2929 = vpop.f32.mrf.mxu0
        %2930 = vmatprep.mubr.bf16.mxu0 0
        %2931 = vmatmul.mubr.bf16.gmra.mxu0 %v2744
        %v2932 = vpop.f32.mrf.mxu0
        %v2933 = vadd.f32 0.0, %v2932
        %v2934 = vpop.f32.mrf.mxu0
        %v2935 = vpop.f32.mrf.mxu0
        %v2936 = vadd.f32 0.0, %v2935
        %v2937 = vpop.f32.mrf.mxu0
        %2938 = vmatprep.mubr.bf16.mxu0 0
        %2939 = vmatmul.mubr.bf16.gmra.mxu0 %v2745
        %v2940 = vpop.f32.mrf.mxu0
        %v2941 = vadd.f32 0.0, %v2940
        %v2942 = vpop.f32.mrf.mxu0
        %v2943 = vpop.f32.mrf.mxu0
        %v2944 = vadd.f32 0.0, %v2943
        %v2945 = vpop.f32.mrf.mxu0
        %2946 = vmatprep.mubr.bf16.mxu0 0
        %2947 = vmatmul.mubr.bf16.gmra.mxu0 %v2746
        %v2948 = vpop.f32.mrf.mxu0
        %v2949 = vadd.f32 0.0, %v2948
        %v2950 = vpop.f32.mrf.mxu0
        %v2951 = vpop.f32.mrf.mxu0
        %v2952 = vadd.f32 0.0, %v2951
        %v2953 = vpop.f32.mrf.mxu0
        %2954 = vmatprep.mubr.bf16.mxu0 0
        %2955 = vmatmul.mubr.bf16.gmra.mxu0 %v2747
        %v2956 = vpop.f32.mrf.mxu0
        %v2957 = vadd.f32 0.0, %v2956
        %v2958 = vpop.f32.mrf.mxu0
        %v2959 = vpop.f32.mrf.mxu0
        %v2960 = vadd.f32 0.0, %v2959
        %v2961 = vpop.f32.mrf.mxu0
        %2962 = vmatprep.mubr.bf16.mxu0 0
        %2963 = vmatmul.mubr.bf16.gmra.mxu0 %v2748
        %v2964 = vpop.f32.mrf.mxu0
        %v2965 = vadd.f32 0.0, %v2964
        %v2966 = vpop.f32.mrf.mxu0
        %v2967 = vpop.f32.mrf.mxu0
        %v2968 = vadd.f32 0.0, %v2967
        %v2969 = vpop.f32.mrf.mxu0
        %2970 = vmatprep.mubr.bf16.mxu0 0
        %2971 = vmatmul.mubr.bf16.gmra.mxu0 %v2749
        %v2972 = vpop.f32.mrf.mxu0
        %v2973 = vadd.f32 0.0, %v2972
        %v2974 = vpop.f32.mrf.mxu0
        %v2975 = vpop.f32.mrf.mxu0
        %v2976 = vadd.f32 0.0, %v2975
        %v2977 = vpop.f32.mrf.mxu0
        %2978 = vmatprep.mubr.bf16.mxu0 0
        %2979 = vmatmul.mubr.bf16.gmra.mxu0 %v2750
        %v2980 = vpop.f32.mrf.mxu0
        %v2981 = vadd.f32 0.0, %v2980
        %v2982 = vpop.f32.mrf.mxu0
        %v2983 = vpop.f32.mrf.mxu0
        %v2984 = vadd.f32 0.0, %v2983
        %v2985 = vpop.f32.mrf.mxu0
        %2986 = vmatprep.mubr.bf16.mxu0 0
        %2987 = vmatmul.mubr.bf16.gmra.mxu0 %v2751
        %v2988 = vpop.f32.mrf.mxu0
        %v2989 = vadd.f32 0.0, %v2988
        %v2990 = vpop.f32.mrf.mxu0
        %v2991 = vpop.f32.mrf.mxu0
        %v2992 = vadd.f32 0.0, %v2991
        %v2993 = vpop.f32.mrf.mxu0
        %2994 = vmatprep.mubr.bf16.mxu0 0
        %2995 = vmatmul.mubr.bf16.gmra.mxu0 %v2752
        %v2996 = vpop.f32.mrf.mxu0
        %v2997 = vadd.f32 0.0, %v2996
        %v2998 = vpop.f32.mrf.mxu0
        %v2999 = vpop.f32.mrf.mxu0
        %v3000 = vadd.f32 0.0, %v2999
        %v3001 = vpop.f32.mrf.mxu0
        %3002 = vmatprep.mubr.bf16.mxu0 0
        %3003 = vmatmul.mubr.bf16.gmra.mxu0 %v2753
        %v3004 = vpop.f32.mrf.mxu0
        %v3005 = vadd.f32 0.0, %v3004
        %v3006 = vpop.f32.mrf.mxu0
        %v3007 = vpop.f32.mrf.mxu0
        %v3008 = vadd.f32 0.0, %v3007
        %v3009 = vpop.f32.mrf.mxu0
        %3010 = vmatprep.mubr.bf16.mxu0 0
        %3011 = vmatmul.mubr.bf16.gmra.mxu0 %v2754
        %v3012 = vpop.f32.mrf.mxu0
        %v3013 = vadd.f32 0.0, %v3012
        %v3014 = vpop.f32.mrf.mxu0
        %v3015 = vpop.f32.mrf.mxu0
        %v3016 = vadd.f32 0.0, %v3015
        %v3017 = vpop.f32.mrf.mxu0
        %3018 = vmatprep.mubr.bf16.mxu0 0
        %3019 = vmatmul.mubr.bf16.gmra.mxu0 %v2755
        %v3020 = vpop.f32.mrf.mxu0
        %v3021 = vadd.f32 0.0, %v3020
        %v3022 = vpop.f32.mrf.mxu0
        %v3023 = vpop.f32.mrf.mxu0
        %v3024 = vadd.f32 0.0, %v3023
        %v3025 = vpop.f32.mrf.mxu0
        %3026 = vmatprep.mubr.bf16.mxu0 0
        %3027 = vmatmul.mubr.bf16.gmra.mxu0 %v2756
        %v3028 = vpop.f32.mrf.mxu0
        %v3029 = vadd.f32 0.0, %v3028
        %v3030 = vpop.f32.mrf.mxu0
        %v3031 = vpop.f32.mrf.mxu0
        %v3032 = vadd.f32 0.0, %v3031
        %v3033 = vpop.f32.mrf.mxu0
        %3034 = vmatprep.mubr.bf16.mxu0 0
        %3035 = vmatmul.mubr.bf16.gmra.mxu0 %v2757
        %v3036 = vpop.f32.mrf.mxu0
        %v3037 = vadd.f32 0.0, %v3036
        %v3038 = vpop.f32.mrf.mxu0
        %v3039 = vpop.f32.mrf.mxu0
        %v3040 = vadd.f32 0.0, %v3039
        %v3041 = vpop.f32.mrf.mxu0
        %3042 = vmatprep.mubr.bf16.mxu0 0
        %3043 = vmatmul.mubr.bf16.gmra.mxu0 %v2758
        %v3044 = vpop.f32.mrf.mxu0
        %v3045 = vadd.f32 0.0, %v3044
        %v3046 = vpop.f32.mrf.mxu0
        %v3047 = vpop.f32.mrf.mxu0
        %v3048 = vadd.f32 0.0, %v3047
        %v3049 = vpop.f32.mrf.mxu0
        %3050 = vmatprep.mubr.bf16.mxu0 0
        %3051 = vmatmul.mubr.bf16.gmra.mxu0 %v2759
        %v3052 = vpop.f32.mrf.mxu0
        %v3053 = vadd.f32 0.0, %v3052
        %v3054 = vpop.f32.mrf.mxu0
        %v3055 = vpop.f32.mrf.mxu0
        %v3056 = vadd.f32 0.0, %v3055
        %v3057 = vpop.f32.mrf.mxu0
        %3058 = vmatprep.mubr.bf16.mxu0 0
        %3059 = vmatmul.mubr.bf16.gmra.mxu0 %v2760
        %v3060 = vpop.f32.mrf.mxu0
        %v3061 = vadd.f32 0.0, %v3060
        %v3062 = vpop.f32.mrf.mxu0
        %v3063 = vpop.f32.mrf.mxu0
        %v3064 = vadd.f32 0.0, %v3063
        %v3065 = vpop.f32.mrf.mxu0
        %3066 = vmatprep.mubr.bf16.mxu0 0
        %3067 = vmatmul.mubr.bf16.gmra.mxu0 %v2761
        %v3068 = vpop.f32.mrf.mxu0
        %v3069 = vadd.f32 0.0, %v3068
        %v3070 = vpop.f32.mrf.mxu0
        %v3071 = vpop.f32.mrf.mxu0
        %v3072 = vadd.f32 0.0, %v3071
        %v3073 = vpop.f32.mrf.mxu0
        %3074 = vmatprep.mubr.bf16.mxu0 0
        %3075 = vmatmul.mubr.bf16.gmra.mxu0 %v2762
        %v3076 = vpop.f32.mrf.mxu0
        %v3077 = vadd.f32 0.0, %v3076
        %v3078 = vpop.f32.mrf.mxu0
        %v3079 = vpop.f32.mrf.mxu0
        %v3080 = vadd.f32 0.0, %v3079
        %v3081 = vpop.f32.mrf.mxu0
        %3082 = vmatprep.mubr.bf16.mxu0 0
        %3083 = vmatmul.mubr.bf16.gmra.mxu0 %v2763
        %v3084 = vpop.f32.mrf.mxu0
        %v3085 = vadd.f32 0.0, %v3084
        %v3086 = vpop.f32.mrf.mxu0
        %v3087 = vpop.f32.mrf.mxu0
        %v3088 = vadd.f32 0.0, %v3087
        %v3089 = vpop.f32.mrf.mxu0
        %3090 = vmatprep.mubr.bf16.mxu0 0
        %3091 = vmatmul.mubr.bf16.gmra.mxu0 %v2764
        %v3092 = vpop.f32.mrf.mxu0
        %v3093 = vadd.f32 0.0, %v3092
        %v3094 = vpop.f32.mrf.mxu0
        %v3095 = vpop.f32.mrf.mxu0
        %v3096 = vadd.f32 0.0, %v3095
        %v3097 = vpop.f32.mrf.mxu0
        %3098 = vmatprep.mubr.bf16.mxu0 0
        %3099 = vmatmul.mubr.bf16.gmra.mxu0 %v2765
        %v3100 = vpop.f32.mrf.mxu0
        %v3101 = vadd.f32 0.0, %v3100
        %v3102 = vpop.f32.mrf.mxu0
        %v3103 = vpop.f32.mrf.mxu0
        %v3104 = vadd.f32 0.0, %v3103
        %v3105 = vpop.f32.mrf.mxu0
        %3106 = vmatprep.mubr.bf16.mxu0 0
        %3107 = vmatmul.mubr.bf16.gmra.mxu0 %v2766
        %v3108 = vpop.f32.mrf.mxu0
        %v3109 = vadd.f32 0.0, %v3108
        %v3110 = vpop.f32.mrf.mxu0
        %v3111 = vpop.f32.mrf.mxu0
        %v3112 = vadd.f32 0.0, %v3111
        %v3113 = vpop.f32.mrf.mxu0
        %3114 = vmatprep.mubr.bf16.mxu0 0
        %3115 = vmatmul.mubr.bf16.gmra.mxu0 %v2767
        %v3116 = vpop.f32.mrf.mxu0
        %v3117 = vadd.f32 0.0, %v3116
        %v3118 = vpop.f32.mrf.mxu0
        %v3119 = vpop.f32.mrf.mxu0
        %v3120 = vadd.f32 0.0, %v3119
        %v3121 = vpop.f32.mrf.mxu0
        %3122 = vmatprep.mubr.bf16.mxu0 0
        %3123 = vmatmul.mubr.bf16.gmra.mxu0 %v2768
        %v3124 = vpop.f32.mrf.mxu0
        %v3125 = vadd.f32 0.0, %v3124
        %v3126 = vpop.f32.mrf.mxu0
        %v3127 = vpop.f32.mrf.mxu0
        %v3128 = vadd.f32 0.0, %v3127
        %v3129 = vpop.f32.mrf.mxu0
        %3130 = vmatprep.mubr.bf16.mxu0 0
        %3131 = vmatmul.mubr.bf16.gmra.mxu0 %v2769
        %v3132 = vpop.f32.mrf.mxu0
        %v3133 = vadd.f32 0.0, %v3132
        %v3134 = vpop.f32.mrf.mxu0
        %v3135 = vpop.f32.mrf.mxu0
        %v3136 = vadd.f32 0.0, %v3135
        %v3137 = vpop.f32.mrf.mxu0
        %3138 = vdwg.mxu0
        %v3139 = vadd.f32 %v2465, %v2885
        %v3140 = vadd.f32 %v2466, %v2888
        %v3141 = vadd.f32 %v2467, %v2893
        %v3142 = vadd.f32 %v2468, %v2896
        %v3143 = vadd.f32 %v2469, %v2901
        %v3144 = vadd.f32 %v2470, %v2904
        %v3145 = vadd.f32 %v2471, %v2909
        %v3146 = vadd.f32 %v2472, %v2912
        %v3147 = vadd.f32 %v2473, %v2917
        %v3148 = vadd.f32 %v2474, %v2920
        %v3149 = vadd.f32 %v2475, %v2925
        %v3150 = vadd.f32 %v2476, %v2928
        %v3151 = vadd.f32 %v2477, %v2933
        %v3152 = vadd.f32 %v2478, %v2936
        %v3153 = vadd.f32 %v2479, %v2941
        %v3154 = vadd.f32 %v2480, %v2944
        %v3155 = vadd.f32 %v2481, %v2949
        %v3156 = vadd.f32 %v2482, %v2952
        %v3157 = vadd.f32 %v2483, %v2957
        %v3158 = vadd.f32 %v2484, %v2960
        %v3159 = vadd.f32 %v2485, %v2965
        %v3160 = vadd.f32 %v2486, %v2968
        %v3161 = vadd.f32 %v2487, %v2973
        %v3162 = vadd.f32 %v2488, %v2976
        %v3163 = vadd.f32 %v2489, %v2981
        %v3164 = vadd.f32 %v2490, %v2984
        %v3165 = vadd.f32 %v2491, %v2989
        %v3166 = vadd.f32 %v2492, %v2992
        %v3167 = vadd.f32 %v2493, %v2997
        %v3168 = vadd.f32 %v2494, %v3000
        %v3169 = vadd.f32 %v2495, %v3005
        %v3170 = vadd.f32 %v2496, %v3008
        %v3171 = vadd.f32 %v2497, %v3013
        %v3172 = vadd.f32 %v2498, %v3016
        %v3173 = vadd.f32 %v2499, %v3021
        %v3174 = vadd.f32 %v2500, %v3024
        %v3175 = vadd.f32 %v2501, %v3029
        %v3176 = vadd.f32 %v2502, %v3032
        %v3177 = vadd.f32 %v2503, %v3037
        %v3178 = vadd.f32 %v2504, %v3040
        %v3179 = vadd.f32 %v2505, %v3045
        %v3180 = vadd.f32 %v2506, %v3048
        %v3181 = vadd.f32 %v2507, %v3053
        %v3182 = vadd.f32 %v2508, %v3056
        %v3183 = vadd.f32 %v2509, %v3061
        %v3184 = vadd.f32 %v2510, %v3064
        %v3185 = vadd.f32 %v2511, %v3069
        %v3186 = vadd.f32 %v2512, %v3072
        %v3187 = vadd.f32 %v2513, %v3077
        %v3188 = vadd.f32 %v2514, %v3080
        %v3189 = vadd.f32 %v2515, %v3085
        %v3190 = vadd.f32 %v2516, %v3088
        %v3191 = vadd.f32 %v2517, %v3093
        %v3192 = vadd.f32 %v2518, %v3096
        %v3193 = vadd.f32 %v2519, %v3101
        %v3194 = vadd.f32 %v2520, %v3104
        %v3195 = vadd.f32 %v2521, %v3109
        %v3196 = vadd.f32 %v2522, %v3112
        %v3197 = vadd.f32 %v2523, %v3117
        %v3198 = vadd.f32 %v2524, %v3120
        %v3199 = vadd.f32 %v2525, %v3125
        %v3200 = vadd.f32 %v2526, %v3128
        %v3201 = vadd.f32 %v2527, %v3133
        %v3202 = vadd.f32 %v2528, %v3136
        %v3203 = vld [vmem:[%s229 + $0x10] sm:$0xf]
        %v3204 = vld [vmem:[%s229 + $0x14] sm:$0xf]
        %v3205 = vld [vmem:[%s229 + $0x18] sm:$0xf]
        %v3206 = vld [vmem:[%s229 + $0x1c] sm:$0xf]
        %v3207 = vld [vmem:[%s229 + $0x20] sm:$0xf]
        %v3208 = vld [vmem:[%s229 + $0x24] sm:$0xf]
        %v3209 = vld [vmem:[%s229 + $0x28] sm:$0xf]
        %v3210 = vld [vmem:[%s229 + $0x2c] sm:$0xf]
        %v3211 = vld [vmem:[%s229 + $0x30] sm:$0xf]
        %v3212 = vld [vmem:[%s229 + $0x34] sm:$0xf]
        %v3213 = vld [vmem:[%s229 + $0x38] sm:$0xf]
        %v3214 = vld [vmem:[%s229 + $0x3c] sm:$0xf]
        %v3215 = vld [vmem:[%s229 + $0x40] sm:$0xf]
        %v3216 = vld [vmem:[%s229 + $0x44] sm:$0xf]
        %v3217 = vld [vmem:[%s229 + $0x48] sm:$0xf]
        %v3218 = vld [vmem:[%s229 + $0x4c] sm:$0xf]
        %v3219 = vld [vmem:[%s229 + $0x50] sm:$0xf]
        %v3220 = vld [vmem:[%s229 + $0x54] sm:$0xf]
        %v3221 = vld [vmem:[%s229 + $0x58] sm:$0xf]
        %v3222 = vld [vmem:[%s229 + $0x5c] sm:$0xf]
        %v3223 = vld [vmem:[%s229 + $0x60] sm:$0xf]
        %v3224 = vld [vmem:[%s229 + $0x64] sm:$0xf]
        %v3225 = vld [vmem:[%s229 + $0x68] sm:$0xf]
        %v3226 = vld [vmem:[%s229 + $0x6c] sm:$0xf]
        %v3227 = vld [vmem:[%s229 + $0x70] sm:$0xf]
        %v3228 = vld [vmem:[%s229 + $0x74] sm:$0xf]
        %v3229 = vld [vmem:[%s229 + $0x78] sm:$0xf]
        %v3230 = vld [vmem:[%s229 + $0x7c] sm:$0xf]
        %v3231 = vld [vmem:[%s229 + $0x80] sm:$0xf]
        %v3232 = vld [vmem:[%s229 + $0x84] sm:$0xf]
        %v3233 = vld [vmem:[%s229 + $0x88] sm:$0xf]
        %v3234 = vld [vmem:[%s229 + $0x8c] sm:$0xf]
        %v3235 = vld [vmem:[%s229 + $0x90] sm:$0xf]
        %v3236 = vld [vmem:[%s229 + $0x94] sm:$0xf]
        %v3237 = vld [vmem:[%s229 + $0x98] sm:$0xf]
        %v3238 = vld [vmem:[%s229 + $0x9c] sm:$0xf]
        %v3239 = vld [vmem:[%s229 + $0xa0] sm:$0xf]
        %v3240 = vld [vmem:[%s229 + $0xa4] sm:$0xf]
        %v3241 = vld [vmem:[%s229 + $0xa8] sm:$0xf]
        %v3242 = vld [vmem:[%s229 + $0xac] sm:$0xf]
        %v3243 = vld [vmem:[%s229 + $0xb0] sm:$0xf]
        %v3244 = vld [vmem:[%s229 + $0xb4] sm:$0xf]
        %v3245 = vld [vmem:[%s229 + $0xb8] sm:$0xf]
        %v3246 = vld [vmem:[%s229 + $0xbc] sm:$0xf]
        %v3247 = vld [vmem:[%s229 + $0xc0] sm:$0xf]
        %v3248 = vld [vmem:[%s229 + $0xc4] sm:$0xf]
        %v3249 = vld [vmem:[%s229 + $0xc8] sm:$0xf]
        %v3250 = vld [vmem:[%s229 + $0xcc] sm:$0xf]
        %v3251 = vld [vmem:[%s229 + $0xd0] sm:$0xf]
        %v3252 = vld [vmem:[%s229 + $0xd4] sm:$0xf]
        %v3253 = vld [vmem:[%s229 + $0xd8] sm:$0xf]
        %v3254 = vld [vmem:[%s229 + $0xdc] sm:$0xf]
        %v3255 = vld [vmem:[%s229 + $0xe0] sm:$0xf]
        %v3256 = vld [vmem:[%s229 + $0xe4] sm:$0xf]
        %v3257 = vld [vmem:[%s229 + $0xe8] sm:$0xf]
        %v3258 = vld [vmem:[%s229 + $0xec] sm:$0xf]
        %v3259 = vld [vmem:[%s229 + $0xf0] sm:$0xf]
        %v3260 = vld [vmem:[%s229 + $0xf4] sm:$0xf]
        %v3261 = vld [vmem:[%s229 + $0xf8] sm:$0xf]
        %v3262 = vld [vmem:[%s229 + $0xfc] sm:$0xf]
        %v3263 = vld [vmem:[%s229 + $0x100] sm:$0xf]
        %v3264 = vld [vmem:[%s229 + $0x104] sm:$0xf]
        %v3265 = vld [vmem:[%s229 + $0x108] sm:$0xf]
        %v3266 = vld [vmem:[%s229 + $0x10c] sm:$0xf]
        %v3267 = vld [vmem:[%s229 + $0x110] sm:$0x1]
        %s3268 = scalar_lea.vmem [#allocation6], 256
        %v3269 = vld [vmem:[%s3268] sm:$0xf]
        %v3270 = vld [vmem:[%s3268 + $0x4] sm:$0xf]
        %v3271 = vld [vmem:[%s3268 + $0x8] sm:$0xf]
        %v3272 = vld [vmem:[%s3268 + $0xc] sm:$0xf]
        %v3273 = vld [vmem:[%s3268 + $0x10] sm:$0xf]
        %v3274 = vld [vmem:[%s3268 + $0x14] sm:$0xf]
        %v3275 = vld [vmem:[%s3268 + $0x18] sm:$0xf]
        %v3276 = vld [vmem:[%s3268 + $0x1c] sm:$0xf]
        %v3277 = vld [vmem:[%s3268 + $0x20] sm:$0xf]
        %v3278 = vld [vmem:[%s3268 + $0x24] sm:$0xf]
        %v3279 = vld [vmem:[%s3268 + $0x28] sm:$0xf]
        %v3280 = vld [vmem:[%s3268 + $0x2c] sm:$0xf]
        %v3281 = vld [vmem:[%s3268 + $0x30] sm:$0xf]
        %v3282 = vld [vmem:[%s3268 + $0x34] sm:$0xf]
        %v3283 = vld [vmem:[%s3268 + $0x38] sm:$0xf]
        %v3284 = vld [vmem:[%s3268 + $0x3c] sm:$0xf]
        %v3350 = vunpack.c.l.b16 %v3203
        %v3351 = vunpack.c.l.b16 %v3204
        %v3352 = vunpack.c.l.b16 %v3205
        %v3353 = vunpack.c.l.b16 %v3206
        %v3354 = vunpack.c.l.b16 %v3207
        %v3355 = vunpack.c.l.b16 %v3208
        %v3356 = vunpack.c.l.b16 %v3209
        %v3357 = vunpack.c.l.b16 %v3210
        %v3358 = vunpack.c.l.b16 %v3211
        %v3359 = vunpack.c.l.b16 %v3212
        %v3360 = vunpack.c.l.b16 %v3213
        %v3361 = vunpack.c.l.b16 %v3214
        %v3362 = vunpack.c.l.b16 %v3215
        %v3363 = vunpack.c.l.b16 %v3216
        %v3364 = vunpack.c.l.b16 %v3217
        %v3365 = vunpack.c.l.b16 %v3218
        %v3366 = vunpack.c.l.b16 %v3219
        %v3367 = vunpack.c.l.b16 %v3220
        %v3368 = vunpack.c.l.b16 %v3221
        %v3369 = vunpack.c.l.b16 %v3222
        %v3370 = vunpack.c.l.b16 %v3223
        %v3371 = vunpack.c.l.b16 %v3224
        %v3372 = vunpack.c.l.b16 %v3225
        %v3373 = vunpack.c.l.b16 %v3226
        %v3374 = vunpack.c.l.b16 %v3227
        %v3375 = vunpack.c.l.b16 %v3228
        %v3376 = vunpack.c.l.b16 %v3229
        %v3377 = vunpack.c.l.b16 %v3230
        %v3378 = vunpack.c.l.b16 %v3231
        %v3379 = vunpack.c.l.b16 %v3232
        %v3380 = vunpack.c.l.b16 %v3233
        %v3381 = vunpack.c.l.b16 %v3234
        %v3382 = vunpack.c.l.b16 %v3235
        %v3383 = vunpack.c.l.b16 %v3236
        %v3384 = vunpack.c.l.b16 %v3237
        %v3385 = vunpack.c.l.b16 %v3238
        %v3386 = vunpack.c.l.b16 %v3239
        %v3387 = vunpack.c.l.b16 %v3240
        %v3388 = vunpack.c.l.b16 %v3241
        %v3389 = vunpack.c.l.b16 %v3242
        %v3390 = vunpack.c.l.b16 %v3243
        %v3391 = vunpack.c.l.b16 %v3244
        %v3392 = vunpack.c.l.b16 %v3245
        %v3393 = vunpack.c.l.b16 %v3246
        %v3394 = vunpack.c.l.b16 %v3247
        %v3395 = vunpack.c.l.b16 %v3248
        %v3396 = vunpack.c.l.b16 %v3249
        %v3397 = vunpack.c.l.b16 %v3250
        %v3398 = vunpack.c.l.b16 %v3251
        %v3399 = vunpack.c.l.b16 %v3252
        %v3400 = vunpack.c.l.b16 %v3253
        %v3401 = vunpack.c.l.b16 %v3254
        %v3402 = vunpack.c.l.b16 %v3255
        %v3403 = vunpack.c.l.b16 %v3256
        %v3404 = vunpack.c.l.b16 %v3257
        %v3405 = vunpack.c.l.b16 %v3258
        %v3406 = vunpack.c.l.b16 %v3259
        %v3407 = vunpack.c.l.b16 %v3260
        %v3408 = vunpack.c.l.b16 %v3261
        %v3409 = vunpack.c.l.b16 %v3262
        %v3410 = vunpack.c.l.b16 %v3263
        %v3411 = vunpack.c.l.b16 %v3264
        %v3412 = vunpack.c.l.b16 %v3265
        %v3413 = vunpack.c.l.b16 %v3266
        %v3414 = vunpack.c.l.b16 %v3267
        %v3415 = vpack.c.b16 %v3351, %v3350
        %v3416 = vpack.c.b16 %v3353, %v3352
        %v3417 = vpack.c.b16 %v3355, %v3354
        %v3418 = vpack.c.b16 %v3357, %v3356
        %v3419 = vpack.c.b16 %v3359, %v3358
        %v3420 = vpack.c.b16 %v3361, %v3360
        %v3421 = vpack.c.b16 %v3363, %v3362
        %v3422 = vpack.c.b16 %v3365, %v3364
        %v3423 = vpack.c.b16 %v3367, %v3366
        %v3424 = vpack.c.b16 %v3369, %v3368
        %v3425 = vpack.c.b16 %v3371, %v3370
        %v3426 = vpack.c.b16 %v3373, %v3372
        %v3427 = vpack.c.b16 %v3375, %v3374
        %v3428 = vpack.c.b16 %v3377, %v3376
        %v3429 = vpack.c.b16 %v3379, %v3378
        %v3430 = vpack.c.b16 %v3381, %v3380
        %v3431 = vpack.c.b16 %v3383, %v3382
        %v3432 = vpack.c.b16 %v3385, %v3384
        %v3433 = vpack.c.b16 %v3387, %v3386
        %v3434 = vpack.c.b16 %v3389, %v3388
        %v3435 = vpack.c.b16 %v3391, %v3390
        %v3436 = vpack.c.b16 %v3393, %v3392
        %v3437 = vpack.c.b16 %v3395, %v3394
        %v3438 = vpack.c.b16 %v3397, %v3396
        %v3439 = vpack.c.b16 %v3399, %v3398
        %v3440 = vpack.c.b16 %v3401, %v3400
        %v3441 = vpack.c.b16 %v3403, %v3402
        %v3442 = vpack.c.b16 %v3405, %v3404
        %v3443 = vpack.c.b16 %v3407, %v3406
        %v3444 = vpack.c.b16 %v3409, %v3408
        %v3445 = vpack.c.b16 %v3411, %v3410
        %v3446 = vpack.c.b16 %v3413, %v3412
        %v3447 = vpack.c.b16 %v3414, %v3414
        %v3449 = vshrl.u32 %v3415, 16
        %v3451 = vshll.u32 %v3415, 16
        %v3453 = vrot.slane %v3451, 1
        %v3454 = vor.u32 %v3449, %v3453
        %v3456 = vshll.u32 %v3416, 16
        %v3458 = vrot.slane %v3456, 1
        %v3459 = vsel %vm1315, %v3454, %v3458
        %v3460 = vshrl.u32 %v3416, 16
        %v3462 = vor.u32 %v3460, %v3458
        %v3464 = vshll.u32 %v3417, 16
        %v3466 = vrot.slane %v3464, 1
        %v3467 = vsel %vm1315, %v3462, %v3466
        %v3468 = vshrl.u32 %v3417, 16
        %v3470 = vor.u32 %v3468, %v3466
        %v3472 = vshll.u32 %v3418, 16
        %v3474 = vrot.slane %v3472, 1
        %v3475 = vsel %vm1315, %v3470, %v3474
        %v3476 = vshrl.u32 %v3418, 16
        %v3478 = vor.u32 %v3476, %v3474
        %v3480 = vshll.u32 %v3419, 16
        %v3482 = vrot.slane %v3480, 1
        %v3483 = vsel %vm1315, %v3478, %v3482
        %v3484 = vshrl.u32 %v3419, 16
        %v3486 = vor.u32 %v3484, %v3482
        %v3488 = vshll.u32 %v3420, 16
        %v3490 = vrot.slane %v3488, 1
        %v3491 = vsel %vm1315, %v3486, %v3490
        %v3492 = vshrl.u32 %v3420, 16
        %v3494 = vor.u32 %v3492, %v3490
        %v3496 = vshll.u32 %v3421, 16
        %v3498 = vrot.slane %v3496, 1
        %v3499 = vsel %vm1315, %v3494, %v3498
        %v3500 = vshrl.u32 %v3421, 16
        %v3502 = vor.u32 %v3500, %v3498
        %v3504 = vshll.u32 %v3422, 16
        %v3506 = vrot.slane %v3504, 1
        %v3507 = vsel %vm1315, %v3502, %v3506
        %v3508 = vshrl.u32 %v3422, 16
        %v3510 = vor.u32 %v3508, %v3506
        %v3512 = vshll.u32 %v3423, 16
        %v3514 = vrot.slane %v3512, 1
        %v3515 = vsel %vm1315, %v3510, %v3514
        %v3516 = vshrl.u32 %v3423, 16
        %v3518 = vor.u32 %v3516, %v3514
        %v3520 = vshll.u32 %v3424, 16
        %v3522 = vrot.slane %v3520, 1
        %v3523 = vsel %vm1315, %v3518, %v3522
        %v3524 = vshrl.u32 %v3424, 16
        %v3526 = vor.u32 %v3524, %v3522
        %v3528 = vshll.u32 %v3425, 16
        %v3530 = vrot.slane %v3528, 1
        %v3531 = vsel %vm1315, %v3526, %v3530
        %v3532 = vshrl.u32 %v3425, 16
        %v3534 = vor.u32 %v3532, %v3530
        %v3536 = vshll.u32 %v3426, 16
        %v3538 = vrot.slane %v3536, 1
        %v3539 = vsel %vm1315, %v3534, %v3538
        %v3540 = vshrl.u32 %v3426, 16
        %v3542 = vor.u32 %v3540, %v3538
        %v3544 = vshll.u32 %v3427, 16
        %v3546 = vrot.slane %v3544, 1
        %v3547 = vsel %vm1315, %v3542, %v3546
        %v3548 = vshrl.u32 %v3427, 16
        %v3550 = vor.u32 %v3548, %v3546
        %v3552 = vshll.u32 %v3428, 16
        %v3554 = vrot.slane %v3552, 1
        %v3555 = vsel %vm1315, %v3550, %v3554
        %v3556 = vshrl.u32 %v3428, 16
        %v3558 = vor.u32 %v3556, %v3554
        %v3560 = vshll.u32 %v3429, 16
        %v3562 = vrot.slane %v3560, 1
        %v3563 = vsel %vm1315, %v3558, %v3562
        %v3564 = vshrl.u32 %v3429, 16
        %v3566 = vor.u32 %v3564, %v3562
        %v3568 = vshll.u32 %v3430, 16
        %v3570 = vrot.slane %v3568, 1
        %v3571 = vsel %vm1315, %v3566, %v3570
        %v3572 = vshrl.u32 %v3430, 16
        %v3574 = vor.u32 %v3572, %v3570
        %v3576 = vshll.u32 %v3431, 16
        %v3578 = vrot.slane %v3576, 1
        %v3579 = vsel %vm1315, %v3574, %v3578
        %v3580 = vshrl.u32 %v3431, 16
        %v3582 = vor.u32 %v3580, %v3578
        %v3584 = vshll.u32 %v3432, 16
        %v3586 = vrot.slane %v3584, 1
        %v3587 = vsel %vm1315, %v3582, %v3586
        %v3588 = vshrl.u32 %v3432, 16
        %v3590 = vor.u32 %v3588, %v3586
        %v3592 = vshll.u32 %v3433, 16
        %v3594 = vrot.slane %v3592, 1
        %v3595 = vsel %vm1315, %v3590, %v3594
        %v3596 = vshrl.u32 %v3433, 16
        %v3598 = vor.u32 %v3596, %v3594
        %v3600 = vshll.u32 %v3434, 16
        %v3602 = vrot.slane %v3600, 1
        %v3603 = vsel %vm1315, %v3598, %v3602
        %v3604 = vshrl.u32 %v3434, 16
        %v3606 = vor.u32 %v3604, %v3602
        %v3608 = vshll.u32 %v3435, 16
        %v3610 = vrot.slane %v3608, 1
        %v3611 = vsel %vm1315, %v3606, %v3610
        %v3612 = vshrl.u32 %v3435, 16
        %v3614 = vor.u32 %v3612, %v3610
        %v3616 = vshll.u32 %v3436, 16
        %v3618 = vrot.slane %v3616, 1
        %v3619 = vsel %vm1315, %v3614, %v3618
        %v3620 = vshrl.u32 %v3436, 16
        %v3622 = vor.u32 %v3620, %v3618
        %v3624 = vshll.u32 %v3437, 16
        %v3626 = vrot.slane %v3624, 1
        %v3627 = vsel %vm1315, %v3622, %v3626
        %v3628 = vshrl.u32 %v3437, 16
        %v3630 = vor.u32 %v3628, %v3626
        %v3632 = vshll.u32 %v3438, 16
        %v3634 = vrot.slane %v3632, 1
        %v3635 = vsel %vm1315, %v3630, %v3634
        %v3636 = vshrl.u32 %v3438, 16
        %v3638 = vor.u32 %v3636, %v3634
        %v3640 = vshll.u32 %v3439, 16
        %v3642 = vrot.slane %v3640, 1
        %v3643 = vsel %vm1315, %v3638, %v3642
        %v3644 = vshrl.u32 %v3439, 16
        %v3646 = vor.u32 %v3644, %v3642
        %v3648 = vshll.u32 %v3440, 16
        %v3650 = vrot.slane %v3648, 1
        %v3651 = vsel %vm1315, %v3646, %v3650
        %v3652 = vshrl.u32 %v3440, 16
        %v3654 = vor.u32 %v3652, %v3650
        %v3656 = vshll.u32 %v3441, 16
        %v3658 = vrot.slane %v3656, 1
        %v3659 = vsel %vm1315, %v3654, %v3658
        %v3660 = vshrl.u32 %v3441, 16
        %v3662 = vor.u32 %v3660, %v3658
        %v3664 = vshll.u32 %v3442, 16
        %v3666 = vrot.slane %v3664, 1
        %v3667 = vsel %vm1315, %v3662, %v3666
        %v3668 = vshrl.u32 %v3442, 16
        %v3670 = vor.u32 %v3668, %v3666
        %v3672 = vshll.u32 %v3443, 16
        %v3674 = vrot.slane %v3672, 1
        %v3675 = vsel %vm1315, %v3670, %v3674
        %v3676 = vshrl.u32 %v3443, 16
        %v3678 = vor.u32 %v3676, %v3674
        %v3680 = vshll.u32 %v3444, 16
        %v3682 = vrot.slane %v3680, 1
        %v3683 = vsel %vm1315, %v3678, %v3682
        %v3684 = vshrl.u32 %v3444, 16
        %v3686 = vor.u32 %v3684, %v3682
        %v3688 = vshll.u32 %v3445, 16
        %v3690 = vrot.slane %v3688, 1
        %v3691 = vsel %vm1315, %v3686, %v3690
        %v3692 = vshrl.u32 %v3445, 16
        %v3694 = vor.u32 %v3692, %v3690
        %v3696 = vshll.u32 %v3446, 16
        %v3698 = vrot.slane %v3696, 1
        %v3699 = vsel %vm1315, %v3694, %v3698
        %v3700 = vshrl.u32 %v3446, 16
        %v3702 = vor.u32 %v3700, %v3698
        %v3704 = vshll.u32 %v3447, 16
        %v3706 = vrot.slane %v3704, 1
        %v3707 = vsel %vm1315, %v3702, %v3706
        %v3756 = vunpack.c.l.b16 %v3269
        %v3757 = vunpack.c.l.b16 %v3270
        %v3758 = vunpack.c.l.b16 %v3271
        %v3759 = vunpack.c.l.b16 %v3272
        %v3760 = vunpack.c.l.b16 %v3273
        %v3761 = vunpack.c.l.b16 %v3274
        %v3762 = vunpack.c.l.b16 %v3275
        %v3763 = vunpack.c.l.b16 %v3276
        %v3764 = vunpack.c.l.b16 %v3277
        %v3765 = vunpack.c.l.b16 %v3278
        %v3766 = vunpack.c.l.b16 %v3279
        %v3767 = vunpack.c.l.b16 %v3280
        %v3768 = vunpack.c.l.b16 %v3281
        %v3769 = vunpack.c.l.b16 %v3282
        %v3770 = vunpack.c.l.b16 %v3283
        %v3771 = vunpack.c.l.b16 %v3284
        %v3772 = vpack.c.b16 %v3757, %v3756
        %v3773 = vpack.c.b16 %v3759, %v3758
        %v3774 = vpack.c.b16 %v3761, %v3760
        %v3775 = vpack.c.b16 %v3763, %v3762
        %v3776 = vpack.c.b16 %v3765, %v3764
        %v3777 = vpack.c.b16 %v3767, %v3766
        %v3778 = vpack.c.b16 %v3769, %v3768
        %v3779 = vpack.c.b16 %v3771, %v3770
        %3788 = vmatprep.subr.bf16.mxu0 0
        %3789 = vmatpush1.bf16.msra.mxu0 %v3779
        %3790 = vmatprep.subr.bf16.mxu0 0
        %3791 = vmatpush1.bf16.msra.mxu0 %v3778
        %3792 = vmatprep.subr.bf16.mxu0 0
        %3793 = vmatpush1.bf16.msra.mxu0 %v3777
        %3794 = vmatprep.subr.bf16.mxu0 0
        %3795 = vmatpush1.bf16.msra.mxu0 %v3776
        %3796 = vmatprep.subr.bf16.mxu0 0
        %3797 = vmatpush1.bf16.msra.mxu0 %v3775
        %3798 = vmatprep.subr.bf16.mxu0 0
        %3799 = vmatpush1.bf16.msra.mxu0 %v3774
        %3800 = vmatprep.subr.bf16.mxu0 0
        %3801 = vmatpush1.bf16.msra.mxu0 %v3773
        %3802 = vmatprep.subr.bf16.mxu0 0
        %3803 = vmatpush1.bf16.msra.mxu0 %v3772
        %3804 = vmatprep.subr.bf16.mxu0 0
        %3805 = vmatpush2.bf16.msra.mxu0 0
        %3806 = vmatprep.subr.bf16.mxu0 0
        %3807 = vmatpush2.bf16.msra.mxu0 0
        %3808 = vmatprep.subr.bf16.mxu0 0
        %3809 = vmatpush2.bf16.msra.mxu0 0
        %3810 = vmatprep.subr.bf16.mxu0 0
        %3811 = vmatpush2.bf16.msra.mxu0 0
        %3812 = vmatprep.subr.bf16.mxu0 0
        %3813 = vmatpush2.bf16.msra.mxu0 0
        %3814 = vmatprep.subr.bf16.mxu0 0
        %3815 = vmatpush2.bf16.msra.mxu0 0
        %3816 = vmatprep.subr.bf16.mxu0 0
        %3817 = vmatpush2.bf16.msra.mxu0 0
        %3818 = vmatprep.subr.bf16.mxu0 0
        %3819 = vmatpush2.bf16.msra.mxu0 0
        %3820 = vmatprep.mubr.bf16.mxu0 0
        %3821 = vmatmul.mubr.bf16.gmra.mxu0 %v3459
        %v3822 = vpop.f32.mrf.mxu0
        %v3823 = vadd.f32 0.0, %v3822
        %v3824 = vpop.f32.mrf.mxu0
        %v3825 = vpop.f32.mrf.mxu0
        %v3826 = vadd.f32 0.0, %v3825
        %v3827 = vpop.f32.mrf.mxu0
        %3828 = vmatprep.mubr.bf16.mxu0 0
        %3829 = vmatmul.mubr.bf16.gmra.mxu0 %v3467
        %v3830 = vpop.f32.mrf.mxu0
        %v3831 = vadd.f32 0.0, %v3830
        %v3832 = vpop.f32.mrf.mxu0
        %v3833 = vpop.f32.mrf.mxu0
        %v3834 = vadd.f32 0.0, %v3833
        %v3835 = vpop.f32.mrf.mxu0
        %3836 = vmatprep.mubr.bf16.mxu0 0
        %3837 = vmatmul.mubr.bf16.gmra.mxu0 %v3475
        %v3838 = vpop.f32.mrf.mxu0
        %v3839 = vadd.f32 0.0, %v3838
        %v3840 = vpop.f32.mrf.mxu0
        %v3841 = vpop.f32.mrf.mxu0
        %v3842 = vadd.f32 0.0, %v3841
        %v3843 = vpop.f32.mrf.mxu0
        %3844 = vmatprep.mubr.bf16.mxu0 0
        %3845 = vmatmul.mubr.bf16.gmra.mxu0 %v3483
        %v3846 = vpop.f32.mrf.mxu0
        %v3847 = vadd.f32 0.0, %v3846
        %v3848 = vpop.f32.mrf.mxu0
        %v3849 = vpop.f32.mrf.mxu0
        %v3850 = vadd.f32 0.0, %v3849
        %v3851 = vpop.f32.mrf.mxu0
        %3852 = vmatprep.mubr.bf16.mxu0 0
        %3853 = vmatmul.mubr.bf16.gmra.mxu0 %v3491
        %v3854 = vpop.f32.mrf.mxu0
        %v3855 = vadd.f32 0.0, %v3854
        %v3856 = vpop.f32.mrf.mxu0
        %v3857 = vpop.f32.mrf.mxu0
        %v3858 = vadd.f32 0.0, %v3857
        %v3859 = vpop.f32.mrf.mxu0
        %3860 = vmatprep.mubr.bf16.mxu0 0
        %3861 = vmatmul.mubr.bf16.gmra.mxu0 %v3499
        %v3862 = vpop.f32.mrf.mxu0
        %v3863 = vadd.f32 0.0, %v3862
        %v3864 = vpop.f32.mrf.mxu0
        %v3865 = vpop.f32.mrf.mxu0
        %v3866 = vadd.f32 0.0, %v3865
        %v3867 = vpop.f32.mrf.mxu0
        %3868 = vmatprep.mubr.bf16.mxu0 0
        %3869 = vmatmul.mubr.bf16.gmra.mxu0 %v3507
        %v3870 = vpop.f32.mrf.mxu0
        %v3871 = vadd.f32 0.0, %v3870
        %v3872 = vpop.f32.mrf.mxu0
        %v3873 = vpop.f32.mrf.mxu0
        %v3874 = vadd.f32 0.0, %v3873
        %v3875 = vpop.f32.mrf.mxu0
        %3876 = vmatprep.mubr.bf16.mxu0 0
        %3877 = vmatmul.mubr.bf16.gmra.mxu0 %v3515
        %v3878 = vpop.f32.mrf.mxu0
        %v3879 = vadd.f32 0.0, %v3878
        %v3880 = vpop.f32.mrf.mxu0
        %v3881 = vpop.f32.mrf.mxu0
        %v3882 = vadd.f32 0.0, %v3881
        %v3883 = vpop.f32.mrf.mxu0
        %3884 = vmatprep.mubr.bf16.mxu0 0
        %3885 = vmatmul.mubr.bf16.gmra.mxu0 %v3523
        %v3886 = vpop.f32.mrf.mxu0
        %v3887 = vadd.f32 0.0, %v3886
        %v3888 = vpop.f32.mrf.mxu0
        %v3889 = vpop.f32.mrf.mxu0
        %v3890 = vadd.f32 0.0, %v3889
        %v3891 = vpop.f32.mrf.mxu0
        %3892 = vmatprep.mubr.bf16.mxu0 0
        %3893 = vmatmul.mubr.bf16.gmra.mxu0 %v3531
        %v3894 = vpop.f32.mrf.mxu0
        %v3895 = vadd.f32 0.0, %v3894
        %v3896 = vpop.f32.mrf.mxu0
        %v3897 = vpop.f32.mrf.mxu0
        %v3898 = vadd.f32 0.0, %v3897
        %v3899 = vpop.f32.mrf.mxu0
        %3900 = vmatprep.mubr.bf16.mxu0 0
        %3901 = vmatmul.mubr.bf16.gmra.mxu0 %v3539
        %v3902 = vpop.f32.mrf.mxu0
        %v3903 = vadd.f32 0.0, %v3902
        %v3904 = vpop.f32.mrf.mxu0
        %v3905 = vpop.f32.mrf.mxu0
        %v3906 = vadd.f32 0.0, %v3905
        %v3907 = vpop.f32.mrf.mxu0
        %3908 = vmatprep.mubr.bf16.mxu0 0
        %3909 = vmatmul.mubr.bf16.gmra.mxu0 %v3547
        %v3910 = vpop.f32.mrf.mxu0
        %v3911 = vadd.f32 0.0, %v3910
        %v3912 = vpop.f32.mrf.mxu0
        %v3913 = vpop.f32.mrf.mxu0
        %v3914 = vadd.f32 0.0, %v3913
        %v3915 = vpop.f32.mrf.mxu0
        %3916 = vmatprep.mubr.bf16.mxu0 0
        %3917 = vmatmul.mubr.bf16.gmra.mxu0 %v3555
        %v3918 = vpop.f32.mrf.mxu0
        %v3919 = vadd.f32 0.0, %v3918
        %v3920 = vpop.f32.mrf.mxu0
        %v3921 = vpop.f32.mrf.mxu0
        %v3922 = vadd.f32 0.0, %v3921
        %v3923 = vpop.f32.mrf.mxu0
        %3924 = vmatprep.mubr.bf16.mxu0 0
        %3925 = vmatmul.mubr.bf16.gmra.mxu0 %v3563
        %v3926 = vpop.f32.mrf.mxu0
        %v3927 = vadd.f32 0.0, %v3926
        %v3928 = vpop.f32.mrf.mxu0
        %v3929 = vpop.f32.mrf.mxu0
        %v3930 = vadd.f32 0.0, %v3929
        %v3931 = vpop.f32.mrf.mxu0
        %3932 = vmatprep.mubr.bf16.mxu0 0
        %3933 = vmatmul.mubr.bf16.gmra.mxu0 %v3571
        %v3934 = vpop.f32.mrf.mxu0
        %v3935 = vadd.f32 0.0, %v3934
        %v3936 = vpop.f32.mrf.mxu0
        %v3937 = vpop.f32.mrf.mxu0
        %v3938 = vadd.f32 0.0, %v3937
        %v3939 = vpop.f32.mrf.mxu0
        %3940 = vmatprep.mubr.bf16.mxu0 0
        %3941 = vmatmul.mubr.bf16.gmra.mxu0 %v3579
        %v3942 = vpop.f32.mrf.mxu0
        %v3943 = vadd.f32 0.0, %v3942
        %v3944 = vpop.f32.mrf.mxu0
        %v3945 = vpop.f32.mrf.mxu0
        %v3946 = vadd.f32 0.0, %v3945
        %v3947 = vpop.f32.mrf.mxu0
        %3948 = vmatprep.mubr.bf16.mxu0 0
        %3949 = vmatmul.mubr.bf16.gmra.mxu0 %v3587
        %v3950 = vpop.f32.mrf.mxu0
        %v3951 = vadd.f32 0.0, %v3950
        %v3952 = vpop.f32.mrf.mxu0
        %v3953 = vpop.f32.mrf.mxu0
        %v3954 = vadd.f32 0.0, %v3953
        %v3955 = vpop.f32.mrf.mxu0
        %3956 = vmatprep.mubr.bf16.mxu0 0
        %3957 = vmatmul.mubr.bf16.gmra.mxu0 %v3595
        %v3958 = vpop.f32.mrf.mxu0
        %v3959 = vadd.f32 0.0, %v3958
        %v3960 = vpop.f32.mrf.mxu0
        %v3961 = vpop.f32.mrf.mxu0
        %v3962 = vadd.f32 0.0, %v3961
        %v3963 = vpop.f32.mrf.mxu0
        %3964 = vmatprep.mubr.bf16.mxu0 0
        %3965 = vmatmul.mubr.bf16.gmra.mxu0 %v3603
        %v3966 = vpop.f32.mrf.mxu0
        %v3967 = vadd.f32 0.0, %v3966
        %v3968 = vpop.f32.mrf.mxu0
        %v3969 = vpop.f32.mrf.mxu0
        %v3970 = vadd.f32 0.0, %v3969
        %v3971 = vpop.f32.mrf.mxu0
        %3972 = vmatprep.mubr.bf16.mxu0 0
        %3973 = vmatmul.mubr.bf16.gmra.mxu0 %v3611
        %v3974 = vpop.f32.mrf.mxu0
        %v3975 = vadd.f32 0.0, %v3974
        %v3976 = vpop.f32.mrf.mxu0
        %v3977 = vpop.f32.mrf.mxu0
        %v3978 = vadd.f32 0.0, %v3977
        %v3979 = vpop.f32.mrf.mxu0
        %3980 = vmatprep.mubr.bf16.mxu0 0
        %3981 = vmatmul.mubr.bf16.gmra.mxu0 %v3619
        %v3982 = vpop.f32.mrf.mxu0
        %v3983 = vadd.f32 0.0, %v3982
        %v3984 = vpop.f32.mrf.mxu0
        %v3985 = vpop.f32.mrf.mxu0
        %v3986 = vadd.f32 0.0, %v3985
        %v3987 = vpop.f32.mrf.mxu0
        %3988 = vmatprep.mubr.bf16.mxu0 0
        %3989 = vmatmul.mubr.bf16.gmra.mxu0 %v3627
        %v3990 = vpop.f32.mrf.mxu0
        %v3991 = vadd.f32 0.0, %v3990
        %v3992 = vpop.f32.mrf.mxu0
        %v3993 = vpop.f32.mrf.mxu0
        %v3994 = vadd.f32 0.0, %v3993
        %v3995 = vpop.f32.mrf.mxu0
        %3996 = vmatprep.mubr.bf16.mxu0 0
        %3997 = vmatmul.mubr.bf16.gmra.mxu0 %v3635
        %v3998 = vpop.f32.mrf.mxu0
        %v3999 = vadd.f32 0.0, %v3998
        %v4000 = vpop.f32.mrf.mxu0
        %v4001 = vpop.f32.mrf.mxu0
        %v4002 = vadd.f32 0.0, %v4001
        %v4003 = vpop.f32.mrf.mxu0
        %4004 = vmatprep.mubr.bf16.mxu0 0
        %4005 = vmatmul.mubr.bf16.gmra.mxu0 %v3643
        %v4006 = vpop.f32.mrf.mxu0
        %v4007 = vadd.f32 0.0, %v4006
        %v4008 = vpop.f32.mrf.mxu0
        %v4009 = vpop.f32.mrf.mxu0
        %v4010 = vadd.f32 0.0, %v4009
        %v4011 = vpop.f32.mrf.mxu0
        %4012 = vmatprep.mubr.bf16.mxu0 0
        %4013 = vmatmul.mubr.bf16.gmra.mxu0 %v3651
        %v4014 = vpop.f32.mrf.mxu0
        %v4015 = vadd.f32 0.0, %v4014
        %v4016 = vpop.f32.mrf.mxu0
        %v4017 = vpop.f32.mrf.mxu0
        %v4018 = vadd.f32 0.0, %v4017
        %v4019 = vpop.f32.mrf.mxu0
        %4020 = vmatprep.mubr.bf16.mxu0 0
        %4021 = vmatmul.mubr.bf16.gmra.mxu0 %v3659
        %v4022 = vpop.f32.mrf.mxu0
        %v4023 = vadd.f32 0.0, %v4022
        %v4024 = vpop.f32.mrf.mxu0
        %v4025 = vpop.f32.mrf.mxu0
        %v4026 = vadd.f32 0.0, %v4025
        %v4027 = vpop.f32.mrf.mxu0
        %4028 = vmatprep.mubr.bf16.mxu0 0
        %4029 = vmatmul.mubr.bf16.gmra.mxu0 %v3667
        %v4030 = vpop.f32.mrf.mxu0
        %v4031 = vadd.f32 0.0, %v4030
        %v4032 = vpop.f32.mrf.mxu0
        %v4033 = vpop.f32.mrf.mxu0
        %v4034 = vadd.f32 0.0, %v4033
        %v4035 = vpop.f32.mrf.mxu0
        %4036 = vmatprep.mubr.bf16.mxu0 0
        %4037 = vmatmul.mubr.bf16.gmra.mxu0 %v3675
        %v4038 = vpop.f32.mrf.mxu0
        %v4039 = vadd.f32 0.0, %v4038
        %v4040 = vpop.f32.mrf.mxu0
        %v4041 = vpop.f32.mrf.mxu0
        %v4042 = vadd.f32 0.0, %v4041
        %v4043 = vpop.f32.mrf.mxu0
        %4044 = vmatprep.mubr.bf16.mxu0 0
        %4045 = vmatmul.mubr.bf16.gmra.mxu0 %v3683
        %v4046 = vpop.f32.mrf.mxu0
        %v4047 = vadd.f32 0.0, %v4046
        %v4048 = vpop.f32.mrf.mxu0
        %v4049 = vpop.f32.mrf.mxu0
        %v4050 = vadd.f32 0.0, %v4049
        %v4051 = vpop.f32.mrf.mxu0
        %4052 = vmatprep.mubr.bf16.mxu0 0
        %4053 = vmatmul.mubr.bf16.gmra.mxu0 %v3691
        %v4054 = vpop.f32.mrf.mxu0
        %v4055 = vadd.f32 0.0, %v4054
        %v4056 = vpop.f32.mrf.mxu0
        %v4057 = vpop.f32.mrf.mxu0
        %v4058 = vadd.f32 0.0, %v4057
        %v4059 = vpop.f32.mrf.mxu0
        %4060 = vmatprep.mubr.bf16.mxu0 0
        %4061 = vmatmul.mubr.bf16.gmra.mxu0 %v3699
        %v4062 = vpop.f32.mrf.mxu0
        %v4063 = vadd.f32 0.0, %v4062
        %v4064 = vpop.f32.mrf.mxu0
        %v4065 = vpop.f32.mrf.mxu0
        %v4066 = vadd.f32 0.0, %v4065
        %v4067 = vpop.f32.mrf.mxu0
        %4068 = vmatprep.mubr.bf16.mxu0 0
        %4069 = vmatmul.mubr.bf16.gmra.mxu0 %v3707
        %v4070 = vpop.f32.mrf.mxu0
        %v4071 = vadd.f32 0.0, %v4070
        %v4072 = vpop.f32.mrf.mxu0
        %v4073 = vpop.f32.mrf.mxu0
        %v4074 = vadd.f32 0.0, %v4073
        %v4075 = vpop.f32.mrf.mxu0
        %4076 = vdwg.mxu0
        %v4077 = vadd.f32 %v3139, %v3823
        %v4078 = vadd.f32 %v3140, %v3826
        %v4079 = vadd.f32 %v3141, %v3831
        %v4080 = vadd.f32 %v3142, %v3834
        %v4081 = vadd.f32 %v3143, %v3839
        %v4082 = vadd.f32 %v3144, %v3842
        %v4083 = vadd.f32 %v3145, %v3847
        %v4084 = vadd.f32 %v3146, %v3850
        %v4085 = vadd.f32 %v3147, %v3855
        %v4086 = vadd.f32 %v3148, %v3858
        %v4087 = vadd.f32 %v3149, %v3863
        %v4088 = vadd.f32 %v3150, %v3866
        %v4089 = vadd.f32 %v3151, %v3871
        %v4090 = vadd.f32 %v3152, %v3874
        %v4091 = vadd.f32 %v3153, %v3879
        %v4092 = vadd.f32 %v3154, %v3882
        %v4093 = vadd.f32 %v3155, %v3887
        %v4094 = vadd.f32 %v3156, %v3890
        %v4095 = vadd.f32 %v3157, %v3895
        %v4096 = vadd.f32 %v3158, %v3898
        %v4097 = vadd.f32 %v3159, %v3903
        %v4098 = vadd.f32 %v3160, %v3906
        %v4099 = vadd.f32 %v3161, %v3911
        %v4100 = vadd.f32 %v3162, %v3914
        %v4101 = vadd.f32 %v3163, %v3919
        %v4102 = vadd.f32 %v3164, %v3922
        %v4103 = vadd.f32 %v3165, %v3927
        %v4104 = vadd.f32 %v3166, %v3930
        %v4105 = vadd.f32 %v3167, %v3935
        %v4106 = vadd.f32 %v3168, %v3938
        %v4107 = vadd.f32 %v3169, %v3943
        %v4108 = vadd.f32 %v3170, %v3946
        %v4109 = vadd.f32 %v3171, %v3951
        %v4110 = vadd.f32 %v3172, %v3954
        %v4111 = vadd.f32 %v3173, %v3959
        %v4112 = vadd.f32 %v3174, %v3962
        %v4113 = vadd.f32 %v3175, %v3967
        %v4114 = vadd.f32 %v3176, %v3970
        %v4115 = vadd.f32 %v3177, %v3975
        %v4116 = vadd.f32 %v3178, %v3978
        %v4117 = vadd.f32 %v3179, %v3983
        %v4118 = vadd.f32 %v3180, %v3986
        %v4119 = vadd.f32 %v3181, %v3991
        %v4120 = vadd.f32 %v3182, %v3994
        %v4121 = vadd.f32 %v3183, %v3999
        %v4122 = vadd.f32 %v3184, %v4002
        %v4123 = vadd.f32 %v3185, %v4007
        %v4124 = vadd.f32 %v3186, %v4010
        %v4125 = vadd.f32 %v3187, %v4015
        %v4126 = vadd.f32 %v3188, %v4018
        %v4127 = vadd.f32 %v3189, %v4023
        %v4128 = vadd.f32 %v3190, %v4026
        %v4129 = vadd.f32 %v3191, %v4031
        %v4130 = vadd.f32 %v3192, %v4034
        %v4131 = vadd.f32 %v3193, %v4039
        %v4132 = vadd.f32 %v3194, %v4042
        %v4133 = vadd.f32 %v3195, %v4047
        %v4134 = vadd.f32 %v3196, %v4050
        %v4135 = vadd.f32 %v3197, %v4055
        %v4136 = vadd.f32 %v3198, %v4058
        %v4137 = vadd.f32 %v3199, %v4063
        %v4138 = vadd.f32 %v3200, %v4066
        %v4139 = vadd.f32 %v3201, %v4071
        %v4140 = vadd.f32 %v3202, %v4074
        %v4141 = vld [vmem:[%s229 + $0x10] sm:$0xe]
        %s4142 = scalar_lea.vmem [#allocation6], 320
        %v4143 = vld [vmem:[%s4142] sm:$0xf]
        %v4144 = vld [vmem:[%s4142 + $0x4] sm:$0xf]
        %v4145 = vld [vmem:[%s4142 + $0x8] sm:$0xf]
        %v4146 = vld [vmem:[%s4142 + $0xc] sm:$0xf]
        %v4147 = vld [vmem:[%s4142 + $0x10] sm:$0xf]
        %v4148 = vld [vmem:[%s4142 + $0x14] sm:$0xf]
        %v4149 = vld [vmem:[%s4142 + $0x18] sm:$0xf]
        %v4150 = vld [vmem:[%s4142 + $0x1c] sm:$0xf]
        %v4151 = vld [vmem:[%s4142 + $0x20] sm:$0xf]
        %v4152 = vld [vmem:[%s4142 + $0x24] sm:$0xf]
        %v4153 = vld [vmem:[%s4142 + $0x28] sm:$0xf]
        %v4154 = vld [vmem:[%s4142 + $0x2c] sm:$0xf]
        %v4155 = vld [vmem:[%s4142 + $0x30] sm:$0xf]
        %v4156 = vld [vmem:[%s4142 + $0x34] sm:$0xf]
        %v4157 = vld [vmem:[%s4142 + $0x38] sm:$0xf]
        %v4158 = vld [vmem:[%s4142 + $0x3c] sm:$0xf]
        %v4160 = vunpack.c.l.b16 %v4141
        %v4161 = vpack.c.b16 %v3351, %v4160
        %v4162 = vrot.slane %v4161, 1
        %v4163 = vrot.slane %v3416, 1
        %v4164 = vsel %vm2030, %v4162, %v4163
        %v4165 = vrot.slane %v3417, 1
        %v4166 = vsel %vm2030, %v4163, %v4165
        %v4167 = vrot.slane %v3418, 1
        %v4168 = vsel %vm2030, %v4165, %v4167
        %v4169 = vrot.slane %v3419, 1
        %v4170 = vsel %vm2030, %v4167, %v4169
        %v4171 = vrot.slane %v3420, 1
        %v4172 = vsel %vm2030, %v4169, %v4171
        %v4173 = vrot.slane %v3421, 1
        %v4174 = vsel %vm2030, %v4171, %v4173
        %v4175 = vrot.slane %v3422, 1
        %v4176 = vsel %vm2030, %v4173, %v4175
        %v4177 = vrot.slane %v3423, 1
        %v4178 = vsel %vm2030, %v4175, %v4177
        %v4179 = vrot.slane %v3424, 1
        %v4180 = vsel %vm2030, %v4177, %v4179
        %v4181 = vrot.slane %v3425, 1
        %v4182 = vsel %vm2030, %v4179, %v4181
        %v4183 = vrot.slane %v3426, 1
        %v4184 = vsel %vm2030, %v4181, %v4183
        %v4185 = vrot.slane %v3427, 1
        %v4186 = vsel %vm2030, %v4183, %v4185
        %v4187 = vrot.slane %v3428, 1
        %v4188 = vsel %vm2030, %v4185, %v4187
        %v4189 = vrot.slane %v3429, 1
        %v4190 = vsel %vm2030, %v4187, %v4189
        %v4191 = vrot.slane %v3430, 1
        %v4192 = vsel %vm2030, %v4189, %v4191
        %v4193 = vrot.slane %v3431, 1
        %v4194 = vsel %vm2030, %v4191, %v4193
        %v4195 = vrot.slane %v3432, 1
        %v4196 = vsel %vm2030, %v4193, %v4195
        %v4197 = vrot.slane %v3433, 1
        %v4198 = vsel %vm2030, %v4195, %v4197
        %v4199 = vrot.slane %v3434, 1
        %v4200 = vsel %vm2030, %v4197, %v4199
        %v4201 = vrot.slane %v3435, 1
        %v4202 = vsel %vm2030, %v4199, %v4201
        %v4203 = vrot.slane %v3436, 1
        %v4204 = vsel %vm2030, %v4201, %v4203
        %v4205 = vrot.slane %v3437, 1
        %v4206 = vsel %vm2030, %v4203, %v4205
        %v4207 = vrot.slane %v3438, 1
        %v4208 = vsel %vm2030, %v4205, %v4207
        %v4209 = vrot.slane %v3439, 1
        %v4210 = vsel %vm2030, %v4207, %v4209
        %v4211 = vrot.slane %v3440, 1
        %v4212 = vsel %vm2030, %v4209, %v4211
        %v4213 = vrot.slane %v3441, 1
        %v4214 = vsel %vm2030, %v4211, %v4213
        %v4215 = vrot.slane %v3442, 1
        %v4216 = vsel %vm2030, %v4213, %v4215
        %v4217 = vrot.slane %v3443, 1
        %v4218 = vsel %vm2030, %v4215, %v4217
        %v4219 = vrot.slane %v3444, 1
        %v4220 = vsel %vm2030, %v4217, %v4219
        %v4221 = vrot.slane %v3445, 1
        %v4222 = vsel %vm2030, %v4219, %v4221
        %v4223 = vrot.slane %v3446, 1
        %v4224 = vsel %vm2030, %v4221, %v4223
        %v4225 = vrot.slane %v3447, 1
        %v4226 = vsel %vm2030, %v4223, %v4225
        %v4275 = vunpack.c.l.b16 %v4143
        %v4276 = vunpack.c.l.b16 %v4144
        %v4277 = vunpack.c.l.b16 %v4145
        %v4278 = vunpack.c.l.b16 %v4146
        %v4279 = vunpack.c.l.b16 %v4147
        %v4280 = vunpack.c.l.b16 %v4148
        %v4281 = vunpack.c.l.b16 %v4149
        %v4282 = vunpack.c.l.b16 %v4150
        %v4283 = vunpack.c.l.b16 %v4151
        %v4284 = vunpack.c.l.b16 %v4152
        %v4285 = vunpack.c.l.b16 %v4153
        %v4286 = vunpack.c.l.b16 %v4154
        %v4287 = vunpack.c.l.b16 %v4155
        %v4288 = vunpack.c.l.b16 %v4156
        %v4289 = vunpack.c.l.b16 %v4157
        %v4290 = vunpack.c.l.b16 %v4158
        %v4291 = vpack.c.b16 %v4276, %v4275
        %v4292 = vpack.c.b16 %v4278, %v4277
        %v4293 = vpack.c.b16 %v4280, %v4279
        %v4294 = vpack.c.b16 %v4282, %v4281
        %v4295 = vpack.c.b16 %v4284, %v4283
        %v4296 = vpack.c.b16 %v4286, %v4285
        %v4297 = vpack.c.b16 %v4288, %v4287
        %v4298 = vpack.c.b16 %v4290, %v4289
        %4307 = vmatprep.subr.bf16.mxu0 0
        %4308 = vmatpush1.bf16.msra.mxu0 %v4298
        %4309 = vmatprep.subr.bf16.mxu0 0
        %4310 = vmatpush1.bf16.msra.mxu0 %v4297
        %4311 = vmatprep.subr.bf16.mxu0 0
        %4312 = vmatpush1.bf16.msra.mxu0 %v4296
        %4313 = vmatprep.subr.bf16.mxu0 0
        %4314 = vmatpush1.bf16.msra.mxu0 %v4295
        %4315 = vmatprep.subr.bf16.mxu0 0
        %4316 = vmatpush1.bf16.msra.mxu0 %v4294
        %4317 = vmatprep.subr.bf16.mxu0 0
        %4318 = vmatpush1.bf16.msra.mxu0 %v4293
        %4319 = vmatprep.subr.bf16.mxu0 0
        %4320 = vmatpush1.bf16.msra.mxu0 %v4292
        %4321 = vmatprep.subr.bf16.mxu0 0
        %4322 = vmatpush1.bf16.msra.mxu0 %v4291
        %4323 = vmatprep.subr.bf16.mxu0 0
        %4324 = vmatpush2.bf16.msra.mxu0 0
        %4325 = vmatprep.subr.bf16.mxu0 0
        %4326 = vmatpush2.bf16.msra.mxu0 0
        %4327 = vmatprep.subr.bf16.mxu0 0
        %4328 = vmatpush2.bf16.msra.mxu0 0
        %4329 = vmatprep.subr.bf16.mxu0 0
        %4330 = vmatpush2.bf16.msra.mxu0 0
        %4331 = vmatprep.subr.bf16.mxu0 0
        %4332 = vmatpush2.bf16.msra.mxu0 0
        %4333 = vmatprep.subr.bf16.mxu0 0
        %4334 = vmatpush2.bf16.msra.mxu0 0
        %4335 = vmatprep.subr.bf16.mxu0 0
        %4336 = vmatpush2.bf16.msra.mxu0 0
        %4337 = vmatprep.subr.bf16.mxu0 0
        %4338 = vmatpush2.bf16.msra.mxu0 0
        %4339 = vmatprep.mubr.bf16.mxu0 0
        %4340 = vmatmul.mubr.bf16.gmra.mxu0 %v4164
        %v4341 = vpop.f32.mrf.mxu0
        %v4342 = vadd.f32 0.0, %v4341
        %v4343 = vpop.f32.mrf.mxu0
        %v4344 = vpop.f32.mrf.mxu0
        %v4345 = vadd.f32 0.0, %v4344
        %v4346 = vpop.f32.mrf.mxu0
        %4347 = vmatprep.mubr.bf16.mxu0 0
        %4348 = vmatmul.mubr.bf16.gmra.mxu0 %v4166
        %v4349 = vpop.f32.mrf.mxu0
        %v4350 = vadd.f32 0.0, %v4349
        %v4351 = vpop.f32.mrf.mxu0
        %v4352 = vpop.f32.mrf.mxu0
        %v4353 = vadd.f32 0.0, %v4352
        %v4354 = vpop.f32.mrf.mxu0
        %4355 = vmatprep.mubr.bf16.mxu0 0
        %4356 = vmatmul.mubr.bf16.gmra.mxu0 %v4168
        %v4357 = vpop.f32.mrf.mxu0
        %v4358 = vadd.f32 0.0, %v4357
        %v4359 = vpop.f32.mrf.mxu0
        %v4360 = vpop.f32.mrf.mxu0
        %v4361 = vadd.f32 0.0, %v4360
        %v4362 = vpop.f32.mrf.mxu0
        %4363 = vmatprep.mubr.bf16.mxu0 0
        %4364 = vmatmul.mubr.bf16.gmra.mxu0 %v4170
        %v4365 = vpop.f32.mrf.mxu0
        %v4366 = vadd.f32 0.0, %v4365
        %v4367 = vpop.f32.mrf.mxu0
        %v4368 = vpop.f32.mrf.mxu0
        %v4369 = vadd.f32 0.0, %v4368
        %v4370 = vpop.f32.mrf.mxu0
        %4371 = vmatprep.mubr.bf16.mxu0 0
        %4372 = vmatmul.mubr.bf16.gmra.mxu0 %v4172
        %v4373 = vpop.f32.mrf.mxu0
        %v4374 = vadd.f32 0.0, %v4373
        %v4375 = vpop.f32.mrf.mxu0
        %v4376 = vpop.f32.mrf.mxu0
        %v4377 = vadd.f32 0.0, %v4376
        %v4378 = vpop.f32.mrf.mxu0
        %4379 = vmatprep.mubr.bf16.mxu0 0
        %4380 = vmatmul.mubr.bf16.gmra.mxu0 %v4174
        %v4381 = vpop.f32.mrf.mxu0
        %v4382 = vadd.f32 0.0, %v4381
        %v4383 = vpop.f32.mrf.mxu0
        %v4384 = vpop.f32.mrf.mxu0
        %v4385 = vadd.f32 0.0, %v4384
        %v4386 = vpop.f32.mrf.mxu0
        %4387 = vmatprep.mubr.bf16.mxu0 0
        %4388 = vmatmul.mubr.bf16.gmra.mxu0 %v4176
        %v4389 = vpop.f32.mrf.mxu0
        %v4390 = vadd.f32 0.0, %v4389
        %v4391 = vpop.f32.mrf.mxu0
        %v4392 = vpop.f32.mrf.mxu0
        %v4393 = vadd.f32 0.0, %v4392
        %v4394 = vpop.f32.mrf.mxu0
        %4395 = vmatprep.mubr.bf16.mxu0 0
        %4396 = vmatmul.mubr.bf16.gmra.mxu0 %v4178
        %v4397 = vpop.f32.mrf.mxu0
        %v4398 = vadd.f32 0.0, %v4397
        %v4399 = vpop.f32.mrf.mxu0
        %v4400 = vpop.f32.mrf.mxu0
        %v4401 = vadd.f32 0.0, %v4400
        %v4402 = vpop.f32.mrf.mxu0
        %4403 = vmatprep.mubr.bf16.mxu0 0
        %4404 = vmatmul.mubr.bf16.gmra.mxu0 %v4180
        %v4405 = vpop.f32.mrf.mxu0
        %v4406 = vadd.f32 0.0, %v4405
        %v4407 = vpop.f32.mrf.mxu0
        %v4408 = vpop.f32.mrf.mxu0
        %v4409 = vadd.f32 0.0, %v4408
        %v4410 = vpop.f32.mrf.mxu0
        %4411 = vmatprep.mubr.bf16.mxu0 0
        %4412 = vmatmul.mubr.bf16.gmra.mxu0 %v4182
        %v4413 = vpop.f32.mrf.mxu0
        %v4414 = vadd.f32 0.0, %v4413
        %v4415 = vpop.f32.mrf.mxu0
        %v4416 = vpop.f32.mrf.mxu0
        %v4417 = vadd.f32 0.0, %v4416
        %v4418 = vpop.f32.mrf.mxu0
        %4419 = vmatprep.mubr.bf16.mxu0 0
        %4420 = vmatmul.mubr.bf16.gmra.mxu0 %v4184
        %v4421 = vpop.f32.mrf.mxu0
        %v4422 = vadd.f32 0.0, %v4421
        %v4423 = vpop.f32.mrf.mxu0
        %v4424 = vpop.f32.mrf.mxu0
        %v4425 = vadd.f32 0.0, %v4424
        %v4426 = vpop.f32.mrf.mxu0
        %4427 = vmatprep.mubr.bf16.mxu0 0
        %4428 = vmatmul.mubr.bf16.gmra.mxu0 %v4186
        %v4429 = vpop.f32.mrf.mxu0
        %v4430 = vadd.f32 0.0, %v4429
        %v4431 = vpop.f32.mrf.mxu0
        %v4432 = vpop.f32.mrf.mxu0
        %v4433 = vadd.f32 0.0, %v4432
        %v4434 = vpop.f32.mrf.mxu0
        %4435 = vmatprep.mubr.bf16.mxu0 0
        %4436 = vmatmul.mubr.bf16.gmra.mxu0 %v4188
        %v4437 = vpop.f32.mrf.mxu0
        %v4438 = vadd.f32 0.0, %v4437
        %v4439 = vpop.f32.mrf.mxu0
        %v4440 = vpop.f32.mrf.mxu0
        %v4441 = vadd.f32 0.0, %v4440
        %v4442 = vpop.f32.mrf.mxu0
        %4443 = vmatprep.mubr.bf16.mxu0 0
        %4444 = vmatmul.mubr.bf16.gmra.mxu0 %v4190
        %v4445 = vpop.f32.mrf.mxu0
        %v4446 = vadd.f32 0.0, %v4445
        %v4447 = vpop.f32.mrf.mxu0
        %v4448 = vpop.f32.mrf.mxu0
        %v4449 = vadd.f32 0.0, %v4448
        %v4450 = vpop.f32.mrf.mxu0
        %4451 = vmatprep.mubr.bf16.mxu0 0
        %4452 = vmatmul.mubr.bf16.gmra.mxu0 %v4192
        %v4453 = vpop.f32.mrf.mxu0
        %v4454 = vadd.f32 0.0, %v4453
        %v4455 = vpop.f32.mrf.mxu0
        %v4456 = vpop.f32.mrf.mxu0
        %v4457 = vadd.f32 0.0, %v4456
        %v4458 = vpop.f32.mrf.mxu0
        %4459 = vmatprep.mubr.bf16.mxu0 0
        %4460 = vmatmul.mubr.bf16.gmra.mxu0 %v4194
        %v4461 = vpop.f32.mrf.mxu0
        %v4462 = vadd.f32 0.0, %v4461
        %v4463 = vpop.f32.mrf.mxu0
        %v4464 = vpop.f32.mrf.mxu0
        %v4465 = vadd.f32 0.0, %v4464
        %v4466 = vpop.f32.mrf.mxu0
        %4467 = vmatprep.mubr.bf16.mxu0 0
        %4468 = vmatmul.mubr.bf16.gmra.mxu0 %v4196
        %v4469 = vpop.f32.mrf.mxu0
        %v4470 = vadd.f32 0.0, %v4469
        %v4471 = vpop.f32.mrf.mxu0
        %v4472 = vpop.f32.mrf.mxu0
        %v4473 = vadd.f32 0.0, %v4472
        %v4474 = vpop.f32.mrf.mxu0
        %4475 = vmatprep.mubr.bf16.mxu0 0
        %4476 = vmatmul.mubr.bf16.gmra.mxu0 %v4198
        %v4477 = vpop.f32.mrf.mxu0
        %v4478 = vadd.f32 0.0, %v4477
        %v4479 = vpop.f32.mrf.mxu0
        %v4480 = vpop.f32.mrf.mxu0
        %v4481 = vadd.f32 0.0, %v4480
        %v4482 = vpop.f32.mrf.mxu0
        %4483 = vmatprep.mubr.bf16.mxu0 0
        %4484 = vmatmul.mubr.bf16.gmra.mxu0 %v4200
        %v4485 = vpop.f32.mrf.mxu0
        %v4486 = vadd.f32 0.0, %v4485
        %v4487 = vpop.f32.mrf.mxu0
        %v4488 = vpop.f32.mrf.mxu0
        %v4489 = vadd.f32 0.0, %v4488
        %v4490 = vpop.f32.mrf.mxu0
        %4491 = vmatprep.mubr.bf16.mxu0 0
        %4492 = vmatmul.mubr.bf16.gmra.mxu0 %v4202
        %v4493 = vpop.f32.mrf.mxu0
        %v4494 = vadd.f32 0.0, %v4493
        %v4495 = vpop.f32.mrf.mxu0
        %v4496 = vpop.f32.mrf.mxu0
        %v4497 = vadd.f32 0.0, %v4496
        %v4498 = vpop.f32.mrf.mxu0
        %4499 = vmatprep.mubr.bf16.mxu0 0
        %4500 = vmatmul.mubr.bf16.gmra.mxu0 %v4204
        %v4501 = vpop.f32.mrf.mxu0
        %v4502 = vadd.f32 0.0, %v4501
        %v4503 = vpop.f32.mrf.mxu0
        %v4504 = vpop.f32.mrf.mxu0
        %v4505 = vadd.f32 0.0, %v4504
        %v4506 = vpop.f32.mrf.mxu0
        %4507 = vmatprep.mubr.bf16.mxu0 0
        %4508 = vmatmul.mubr.bf16.gmra.mxu0 %v4206
        %v4509 = vpop.f32.mrf.mxu0
        %v4510 = vadd.f32 0.0, %v4509
        %v4511 = vpop.f32.mrf.mxu0
        %v4512 = vpop.f32.mrf.mxu0
        %v4513 = vadd.f32 0.0, %v4512
        %v4514 = vpop.f32.mrf.mxu0
        %4515 = vmatprep.mubr.bf16.mxu0 0
        %4516 = vmatmul.mubr.bf16.gmra.mxu0 %v4208
        %v4517 = vpop.f32.mrf.mxu0
        %v4518 = vadd.f32 0.0, %v4517
        %v4519 = vpop.f32.mrf.mxu0
        %v4520 = vpop.f32.mrf.mxu0
        %v4521 = vadd.f32 0.0, %v4520
        %v4522 = vpop.f32.mrf.mxu0
        %4523 = vmatprep.mubr.bf16.mxu0 0
        %4524 = vmatmul.mubr.bf16.gmra.mxu0 %v4210
        %v4525 = vpop.f32.mrf.mxu0
        %v4526 = vadd.f32 0.0, %v4525
        %v4527 = vpop.f32.mrf.mxu0
        %v4528 = vpop.f32.mrf.mxu0
        %v4529 = vadd.f32 0.0, %v4528
        %v4530 = vpop.f32.mrf.mxu0
        %4531 = vmatprep.mubr.bf16.mxu0 0
        %4532 = vmatmul.mubr.bf16.gmra.mxu0 %v4212
        %v4533 = vpop.f32.mrf.mxu0
        %v4534 = vadd.f32 0.0, %v4533
        %v4535 = vpop.f32.mrf.mxu0
        %v4536 = vpop.f32.mrf.mxu0
        %v4537 = vadd.f32 0.0, %v4536
        %v4538 = vpop.f32.mrf.mxu0
        %4539 = vmatprep.mubr.bf16.mxu0 0
        %4540 = vmatmul.mubr.bf16.gmra.mxu0 %v4214
        %v4541 = vpop.f32.mrf.mxu0
        %v4542 = vadd.f32 0.0, %v4541
        %v4543 = vpop.f32.mrf.mxu0
        %v4544 = vpop.f32.mrf.mxu0
        %v4545 = vadd.f32 0.0, %v4544
        %v4546 = vpop.f32.mrf.mxu0
        %4547 = vmatprep.mubr.bf16.mxu0 0
        %4548 = vmatmul.mubr.bf16.gmra.mxu0 %v4216
        %v4549 = vpop.f32.mrf.mxu0
        %v4550 = vadd.f32 0.0, %v4549
        %v4551 = vpop.f32.mrf.mxu0
        %v4552 = vpop.f32.mrf.mxu0
        %v4553 = vadd.f32 0.0, %v4552
        %v4554 = vpop.f32.mrf.mxu0
        %4555 = vmatprep.mubr.bf16.mxu0 0
        %4556 = vmatmul.mubr.bf16.gmra.mxu0 %v4218
        %v4557 = vpop.f32.mrf.mxu0
        %v4558 = vadd.f32 0.0, %v4557
        %v4559 = vpop.f32.mrf.mxu0
        %v4560 = vpop.f32.mrf.mxu0
        %v4561 = vadd.f32 0.0, %v4560
        %v4562 = vpop.f32.mrf.mxu0
        %4563 = vmatprep.mubr.bf16.mxu0 0
        %4564 = vmatmul.mubr.bf16.gmra.mxu0 %v4220
        %v4565 = vpop.f32.mrf.mxu0
        %v4566 = vadd.f32 0.0, %v4565
        %v4567 = vpop.f32.mrf.mxu0
        %v4568 = vpop.f32.mrf.mxu0
        %v4569 = vadd.f32 0.0, %v4568
        %v4570 = vpop.f32.mrf.mxu0
        %4571 = vmatprep.mubr.bf16.mxu0 0
        %4572 = vmatmul.mubr.bf16.gmra.mxu0 %v4222
        %v4573 = vpop.f32.mrf.mxu0
        %v4574 = vadd.f32 0.0, %v4573
        %v4575 = vpop.f32.mrf.mxu0
        %v4576 = vpop.f32.mrf.mxu0
        %v4577 = vadd.f32 0.0, %v4576
        %v4578 = vpop.f32.mrf.mxu0
        %4579 = vmatprep.mubr.bf16.mxu0 0
        %4580 = vmatmul.mubr.bf16.gmra.mxu0 %v4224
        %v4581 = vpop.f32.mrf.mxu0
        %v4582 = vadd.f32 0.0, %v4581
        %v4583 = vpop.f32.mrf.mxu0
        %v4584 = vpop.f32.mrf.mxu0
        %v4585 = vadd.f32 0.0, %v4584
        %v4586 = vpop.f32.mrf.mxu0
        %4587 = vmatprep.mubr.bf16.mxu0 0
        %4588 = vmatmul.mubr.bf16.gmra.mxu0 %v4226
        %v4589 = vpop.f32.mrf.mxu0
        %v4590 = vadd.f32 0.0, %v4589
        %v4591 = vpop.f32.mrf.mxu0
        %v4592 = vpop.f32.mrf.mxu0
        %v4593 = vadd.f32 0.0, %v4592
        %v4594 = vpop.f32.mrf.mxu0
        %4595 = vdwg.mxu0
        %v4596 = vadd.f32 %v4077, %v4342
        %v4597 = vadd.f32 %v4078, %v4345
        %v4598 = vadd.f32 %v4079, %v4350
        %v4599 = vadd.f32 %v4080, %v4353
        %v4600 = vadd.f32 %v4081, %v4358
        %v4601 = vadd.f32 %v4082, %v4361
        %v4602 = vadd.f32 %v4083, %v4366
        %v4603 = vadd.f32 %v4084, %v4369
        %v4604 = vadd.f32 %v4085, %v4374
        %v4605 = vadd.f32 %v4086, %v4377
        %v4606 = vadd.f32 %v4087, %v4382
        %v4607 = vadd.f32 %v4088, %v4385
        %v4608 = vadd.f32 %v4089, %v4390
        %v4609 = vadd.f32 %v4090, %v4393
        %v4610 = vadd.f32 %v4091, %v4398
        %v4611 = vadd.f32 %v4092, %v4401
        %v4612 = vadd.f32 %v4093, %v4406
        %v4613 = vadd.f32 %v4094, %v4409
        %v4614 = vadd.f32 %v4095, %v4414
        %v4615 = vadd.f32 %v4096, %v4417
        %v4616 = vadd.f32 %v4097, %v4422
        %v4617 = vadd.f32 %v4098, %v4425
        %v4618 = vadd.f32 %v4099, %v4430
        %v4619 = vadd.f32 %v4100, %v4433
        %v4620 = vadd.f32 %v4101, %v4438
        %v4621 = vadd.f32 %v4102, %v4441
        %v4622 = vadd.f32 %v4103, %v4446
        %v4623 = vadd.f32 %v4104, %v4449
        %v4624 = vadd.f32 %v4105, %v4454
        %v4625 = vadd.f32 %v4106, %v4457
        %v4626 = vadd.f32 %v4107, %v4462
        %v4627 = vadd.f32 %v4108, %v4465
        %v4628 = vadd.f32 %v4109, %v4470
        %v4629 = vadd.f32 %v4110, %v4473
        %v4630 = vadd.f32 %v4111, %v4478
        %v4631 = vadd.f32 %v4112, %v4481
        %v4632 = vadd.f32 %v4113, %v4486
        %v4633 = vadd.f32 %v4114, %v4489
        %v4634 = vadd.f32 %v4115, %v4494
        %v4635 = vadd.f32 %v4116, %v4497
        %v4636 = vadd.f32 %v4117, %v4502
        %v4637 = vadd.f32 %v4118, %v4505
        %v4638 = vadd.f32 %v4119, %v4510
        %v4639 = vadd.f32 %v4120, %v4513
        %v4640 = vadd.f32 %v4121, %v4518
        %v4641 = vadd.f32 %v4122, %v4521
        %v4642 = vadd.f32 %v4123, %v4526
        %v4643 = vadd.f32 %v4124, %v4529
        %v4644 = vadd.f32 %v4125, %v4534
        %v4645 = vadd.f32 %v4126, %v4537
        %v4646 = vadd.f32 %v4127, %v4542
        %v4647 = vadd.f32 %v4128, %v4545
        %v4648 = vadd.f32 %v4129, %v4550
        %v4649 = vadd.f32 %v4130, %v4553
        %v4650 = vadd.f32 %v4131, %v4558
        %v4651 = vadd.f32 %v4132, %v4561
        %v4652 = vadd.f32 %v4133, %v4566
        %v4653 = vadd.f32 %v4134, %v4569
        %v4654 = vadd.f32 %v4135, %v4574
        %v4655 = vadd.f32 %v4136, %v4577
        %v4656 = vadd.f32 %v4137, %v4582
        %v4657 = vadd.f32 %v4138, %v4585
        %v4658 = vadd.f32 %v4139, %v4590
        %v4659 = vadd.f32 %v4140, %v4593
        %v4660 = vld [vmem:[%s229 + $0x20] sm:$0xf]
        %v4661 = vld [vmem:[%s229 + $0x24] sm:$0xf]
        %v4662 = vld [vmem:[%s229 + $0x28] sm:$0xf]
        %v4663 = vld [vmem:[%s229 + $0x2c] sm:$0xf]
        %v4664 = vld [vmem:[%s229 + $0x30] sm:$0xf]
        %v4665 = vld [vmem:[%s229 + $0x34] sm:$0xf]
        %v4666 = vld [vmem:[%s229 + $0x38] sm:$0xf]
        %v4667 = vld [vmem:[%s229 + $0x3c] sm:$0xf]
        %v4668 = vld [vmem:[%s229 + $0x40] sm:$0xf]
        %v4669 = vld [vmem:[%s229 + $0x44] sm:$0xf]
        %v4670 = vld [vmem:[%s229 + $0x48] sm:$0xf]
        %v4671 = vld [vmem:[%s229 + $0x4c] sm:$0xf]
        %v4672 = vld [vmem:[%s229 + $0x50] sm:$0xf]
        %v4673 = vld [vmem:[%s229 + $0x54] sm:$0xf]
        %v4674 = vld [vmem:[%s229 + $0x58] sm:$0xf]
        %v4675 = vld [vmem:[%s229 + $0x5c] sm:$0xf]
        %v4676 = vld [vmem:[%s229 + $0x60] sm:$0xf]
        %v4677 = vld [vmem:[%s229 + $0x64] sm:$0xf]
        %v4678 = vld [vmem:[%s229 + $0x68] sm:$0xf]
        %v4679 = vld [vmem:[%s229 + $0x6c] sm:$0xf]
        %v4680 = vld [vmem:[%s229 + $0x70] sm:$0xf]
        %v4681 = vld [vmem:[%s229 + $0x74] sm:$0xf]
        %v4682 = vld [vmem:[%s229 + $0x78] sm:$0xf]
        %v4683 = vld [vmem:[%s229 + $0x7c] sm:$0xf]
        %v4684 = vld [vmem:[%s229 + $0x80] sm:$0xf]
        %v4685 = vld [vmem:[%s229 + $0x84] sm:$0xf]
        %v4686 = vld [vmem:[%s229 + $0x88] sm:$0xf]
        %v4687 = vld [vmem:[%s229 + $0x8c] sm:$0xf]
        %v4688 = vld [vmem:[%s229 + $0x90] sm:$0xf]
        %v4689 = vld [vmem:[%s229 + $0x94] sm:$0xf]
        %v4690 = vld [vmem:[%s229 + $0x98] sm:$0xf]
        %v4691 = vld [vmem:[%s229 + $0x9c] sm:$0xf]
        %v4692 = vld [vmem:[%s229 + $0xa0] sm:$0xf]
        %v4693 = vld [vmem:[%s229 + $0xa4] sm:$0xf]
        %v4694 = vld [vmem:[%s229 + $0xa8] sm:$0xf]
        %v4695 = vld [vmem:[%s229 + $0xac] sm:$0xf]
        %v4696 = vld [vmem:[%s229 + $0xb0] sm:$0xf]
        %v4697 = vld [vmem:[%s229 + $0xb4] sm:$0xf]
        %v4698 = vld [vmem:[%s229 + $0xb8] sm:$0xf]
        %v4699 = vld [vmem:[%s229 + $0xbc] sm:$0xf]
        %v4700 = vld [vmem:[%s229 + $0xc0] sm:$0xf]
        %v4701 = vld [vmem:[%s229 + $0xc4] sm:$0xf]
        %v4702 = vld [vmem:[%s229 + $0xc8] sm:$0xf]
        %v4703 = vld [vmem:[%s229 + $0xcc] sm:$0xf]
        %v4704 = vld [vmem:[%s229 + $0xd0] sm:$0xf]
        %v4705 = vld [vmem:[%s229 + $0xd4] sm:$0xf]
        %v4706 = vld [vmem:[%s229 + $0xd8] sm:$0xf]
        %v4707 = vld [vmem:[%s229 + $0xdc] sm:$0xf]
        %v4708 = vld [vmem:[%s229 + $0xe0] sm:$0xf]
        %v4709 = vld [vmem:[%s229 + $0xe4] sm:$0xf]
        %v4710 = vld [vmem:[%s229 + $0xe8] sm:$0xf]
        %v4711 = vld [vmem:[%s229 + $0xec] sm:$0xf]
        %v4712 = vld [vmem:[%s229 + $0xf0] sm:$0xf]
        %v4713 = vld [vmem:[%s229 + $0xf4] sm:$0xf]
        %v4714 = vld [vmem:[%s229 + $0xf8] sm:$0xf]
        %v4715 = vld [vmem:[%s229 + $0xfc] sm:$0xf]
        %v4716 = vld [vmem:[%s229 + $0x100] sm:$0xf]
        %v4717 = vld [vmem:[%s229 + $0x104] sm:$0xf]
        %v4718 = vld [vmem:[%s229 + $0x108] sm:$0xf]
        %v4719 = vld [vmem:[%s229 + $0x10c] sm:$0xf]
        %v4720 = vld [vmem:[%s229 + $0x110] sm:$0xf]
        %v4721 = vld [vmem:[%s229 + $0x114] sm:$0xf]
        %v4722 = vld [vmem:[%s229 + $0x118] sm:$0xf]
        %v4723 = vld [vmem:[%s229 + $0x11c] sm:$0xf]
        %s4724 = scalar_lea.vmem [#allocation6], 384
        %v4725 = vld [vmem:[%s4724] sm:$0xf]
        %v4726 = vld [vmem:[%s4724 + $0x4] sm:$0xf]
        %v4727 = vld [vmem:[%s4724 + $0x8] sm:$0xf]
        %v4728 = vld [vmem:[%s4724 + $0xc] sm:$0xf]
        %v4729 = vld [vmem:[%s4724 + $0x10] sm:$0xf]
        %v4730 = vld [vmem:[%s4724 + $0x14] sm:$0xf]
        %v4731 = vld [vmem:[%s4724 + $0x18] sm:$0xf]
        %v4732 = vld [vmem:[%s4724 + $0x1c] sm:$0xf]
        %v4733 = vld [vmem:[%s4724 + $0x20] sm:$0xf]
        %v4734 = vld [vmem:[%s4724 + $0x24] sm:$0xf]
        %v4735 = vld [vmem:[%s4724 + $0x28] sm:$0xf]
        %v4736 = vld [vmem:[%s4724 + $0x2c] sm:$0xf]
        %v4737 = vld [vmem:[%s4724 + $0x30] sm:$0xf]
        %v4738 = vld [vmem:[%s4724 + $0x34] sm:$0xf]
        %v4739 = vld [vmem:[%s4724 + $0x38] sm:$0xf]
        %v4740 = vld [vmem:[%s4724 + $0x3c] sm:$0xf]
        %v4805 = vunpack.c.l.b16 %v4660
        %v4806 = vunpack.c.l.b16 %v4661
        %v4807 = vunpack.c.l.b16 %v4662
        %v4808 = vunpack.c.l.b16 %v4663
        %v4809 = vunpack.c.l.b16 %v4664
        %v4810 = vunpack.c.l.b16 %v4665
        %v4811 = vunpack.c.l.b16 %v4666
        %v4812 = vunpack.c.l.b16 %v4667
        %v4813 = vunpack.c.l.b16 %v4668
        %v4814 = vunpack.c.l.b16 %v4669
        %v4815 = vunpack.c.l.b16 %v4670
        %v4816 = vunpack.c.l.b16 %v4671
        %v4817 = vunpack.c.l.b16 %v4672
        %v4818 = vunpack.c.l.b16 %v4673
        %v4819 = vunpack.c.l.b16 %v4674
        %v4820 = vunpack.c.l.b16 %v4675
        %v4821 = vunpack.c.l.b16 %v4676
        %v4822 = vunpack.c.l.b16 %v4677
        %v4823 = vunpack.c.l.b16 %v4678
        %v4824 = vunpack.c.l.b16 %v4679
        %v4825 = vunpack.c.l.b16 %v4680
        %v4826 = vunpack.c.l.b16 %v4681
        %v4827 = vunpack.c.l.b16 %v4682
        %v4828 = vunpack.c.l.b16 %v4683
        %v4829 = vunpack.c.l.b16 %v4684
        %v4830 = vunpack.c.l.b16 %v4685
        %v4831 = vunpack.c.l.b16 %v4686
        %v4832 = vunpack.c.l.b16 %v4687
        %v4833 = vunpack.c.l.b16 %v4688
        %v4834 = vunpack.c.l.b16 %v4689
        %v4835 = vunpack.c.l.b16 %v4690
        %v4836 = vunpack.c.l.b16 %v4691
        %v4837 = vunpack.c.l.b16 %v4692
        %v4838 = vunpack.c.l.b16 %v4693
        %v4839 = vunpack.c.l.b16 %v4694
        %v4840 = vunpack.c.l.b16 %v4695
        %v4841 = vunpack.c.l.b16 %v4696
        %v4842 = vunpack.c.l.b16 %v4697
        %v4843 = vunpack.c.l.b16 %v4698
        %v4844 = vunpack.c.l.b16 %v4699
        %v4845 = vunpack.c.l.b16 %v4700
        %v4846 = vunpack.c.l.b16 %v4701
        %v4847 = vunpack.c.l.b16 %v4702
        %v4848 = vunpack.c.l.b16 %v4703
        %v4849 = vunpack.c.l.b16 %v4704
        %v4850 = vunpack.c.l.b16 %v4705
        %v4851 = vunpack.c.l.b16 %v4706
        %v4852 = vunpack.c.l.b16 %v4707
        %v4853 = vunpack.c.l.b16 %v4708
        %v4854 = vunpack.c.l.b16 %v4709
        %v4855 = vunpack.c.l.b16 %v4710
        %v4856 = vunpack.c.l.b16 %v4711
        %v4857 = vunpack.c.l.b16 %v4712
        %v4858 = vunpack.c.l.b16 %v4713
        %v4859 = vunpack.c.l.b16 %v4714
        %v4860 = vunpack.c.l.b16 %v4715
        %v4861 = vunpack.c.l.b16 %v4716
        %v4862 = vunpack.c.l.b16 %v4717
        %v4863 = vunpack.c.l.b16 %v4718
        %v4864 = vunpack.c.l.b16 %v4719
        %v4865 = vunpack.c.l.b16 %v4720
        %v4866 = vunpack.c.l.b16 %v4721
        %v4867 = vunpack.c.l.b16 %v4722
        %v4868 = vunpack.c.l.b16 %v4723
        %v4869 = vpack.c.b16 %v4806, %v4805
        %v4870 = vpack.c.b16 %v4808, %v4807
        %v4871 = vpack.c.b16 %v4810, %v4809
        %v4872 = vpack.c.b16 %v4812, %v4811
        %v4873 = vpack.c.b16 %v4814, %v4813
        %v4874 = vpack.c.b16 %v4816, %v4815
        %v4875 = vpack.c.b16 %v4818, %v4817
        %v4876 = vpack.c.b16 %v4820, %v4819
        %v4877 = vpack.c.b16 %v4822, %v4821
        %v4878 = vpack.c.b16 %v4824, %v4823
        %v4879 = vpack.c.b16 %v4826, %v4825
        %v4880 = vpack.c.b16 %v4828, %v4827
        %v4881 = vpack.c.b16 %v4830, %v4829
        %v4882 = vpack.c.b16 %v4832, %v4831
        %v4883 = vpack.c.b16 %v4834, %v4833
        %v4884 = vpack.c.b16 %v4836, %v4835
        %v4885 = vpack.c.b16 %v4838, %v4837
        %v4886 = vpack.c.b16 %v4840, %v4839
        %v4887 = vpack.c.b16 %v4842, %v4841
        %v4888 = vpack.c.b16 %v4844, %v4843
        %v4889 = vpack.c.b16 %v4846, %v4845
        %v4890 = vpack.c.b16 %v4848, %v4847
        %v4891 = vpack.c.b16 %v4850, %v4849
        %v4892 = vpack.c.b16 %v4852, %v4851
        %v4893 = vpack.c.b16 %v4854, %v4853
        %v4894 = vpack.c.b16 %v4856, %v4855
        %v4895 = vpack.c.b16 %v4858, %v4857
        %v4896 = vpack.c.b16 %v4860, %v4859
        %v4897 = vpack.c.b16 %v4862, %v4861
        %v4898 = vpack.c.b16 %v4864, %v4863
        %v4899 = vpack.c.b16 %v4866, %v4865
        %v4900 = vpack.c.b16 %v4868, %v4867
        %v4949 = vunpack.c.l.b16 %v4725
        %v4950 = vunpack.c.l.b16 %v4726
        %v4951 = vunpack.c.l.b16 %v4727
        %v4952 = vunpack.c.l.b16 %v4728
        %v4953 = vunpack.c.l.b16 %v4729
        %v4954 = vunpack.c.l.b16 %v4730
        %v4955 = vunpack.c.l.b16 %v4731
        %v4956 = vunpack.c.l.b16 %v4732
        %v4957 = vunpack.c.l.b16 %v4733
        %v4958 = vunpack.c.l.b16 %v4734
        %v4959 = vunpack.c.l.b16 %v4735
        %v4960 = vunpack.c.l.b16 %v4736
        %v4961 = vunpack.c.l.b16 %v4737
        %v4962 = vunpack.c.l.b16 %v4738
        %v4963 = vunpack.c.l.b16 %v4739
        %v4964 = vunpack.c.l.b16 %v4740
        %v4965 = vpack.c.b16 %v4950, %v4949
        %v4966 = vpack.c.b16 %v4952, %v4951
        %v4967 = vpack.c.b16 %v4954, %v4953
        %v4968 = vpack.c.b16 %v4956, %v4955
        %v4969 = vpack.c.b16 %v4958, %v4957
        %v4970 = vpack.c.b16 %v4960, %v4959
        %v4971 = vpack.c.b16 %v4962, %v4961
        %v4972 = vpack.c.b16 %v4964, %v4963
        %4981 = vmatprep.subr.bf16.mxu0 0
        %4982 = vmatpush1.bf16.msra.mxu0 %v4972
        %4983 = vmatprep.subr.bf16.mxu0 0
        %4984 = vmatpush1.bf16.msra.mxu0 %v4971
        %4985 = vmatprep.subr.bf16.mxu0 0
        %4986 = vmatpush1.bf16.msra.mxu0 %v4970
        %4987 = vmatprep.subr.bf16.mxu0 0
        %4988 = vmatpush1.bf16.msra.mxu0 %v4969
        %4989 = vmatprep.subr.bf16.mxu0 0
        %4990 = vmatpush1.bf16.msra.mxu0 %v4968
        %4991 = vmatprep.subr.bf16.mxu0 0
        %4992 = vmatpush1.bf16.msra.mxu0 %v4967
        %4993 = vmatprep.subr.bf16.mxu0 0
        %4994 = vmatpush1.bf16.msra.mxu0 %v4966
        %4995 = vmatprep.subr.bf16.mxu0 0
        %4996 = vmatpush1.bf16.msra.mxu0 %v4965
        %4997 = vmatprep.subr.bf16.mxu0 0
        %4998 = vmatpush2.bf16.msra.mxu0 0
        %4999 = vmatprep.subr.bf16.mxu0 0
        %5000 = vmatpush2.bf16.msra.mxu0 0
        %5001 = vmatprep.subr.bf16.mxu0 0
        %5002 = vmatpush2.bf16.msra.mxu0 0
        %5003 = vmatprep.subr.bf16.mxu0 0
        %5004 = vmatpush2.bf16.msra.mxu0 0
        %5005 = vmatprep.subr.bf16.mxu0 0
        %5006 = vmatpush2.bf16.msra.mxu0 0
        %5007 = vmatprep.subr.bf16.mxu0 0
        %5008 = vmatpush2.bf16.msra.mxu0 0
        %5009 = vmatprep.subr.bf16.mxu0 0
        %5010 = vmatpush2.bf16.msra.mxu0 0
        %5011 = vmatprep.subr.bf16.mxu0 0
        %5012 = vmatpush2.bf16.msra.mxu0 0
        %5013 = vmatprep.mubr.bf16.mxu0 0
        %5014 = vmatmul.mubr.bf16.gmra.mxu0 %v4869
        %v5015 = vpop.f32.mrf.mxu0
        %v5016 = vadd.f32 0.0, %v5015
        %v5017 = vpop.f32.mrf.mxu0
        %v5018 = vpop.f32.mrf.mxu0
        %v5019 = vadd.f32 0.0, %v5018
        %v5020 = vpop.f32.mrf.mxu0
        %5021 = vmatprep.mubr.bf16.mxu0 0
        %5022 = vmatmul.mubr.bf16.gmra.mxu0 %v4870
        %v5023 = vpop.f32.mrf.mxu0
        %v5024 = vadd.f32 0.0, %v5023
        %v5025 = vpop.f32.mrf.mxu0
        %v5026 = vpop.f32.mrf.mxu0
        %v5027 = vadd.f32 0.0, %v5026
        %v5028 = vpop.f32.mrf.mxu0
        %5029 = vmatprep.mubr.bf16.mxu0 0
        %5030 = vmatmul.mubr.bf16.gmra.mxu0 %v4871
        %v5031 = vpop.f32.mrf.mxu0
        %v5032 = vadd.f32 0.0, %v5031
        %v5033 = vpop.f32.mrf.mxu0
        %v5034 = vpop.f32.mrf.mxu0
        %v5035 = vadd.f32 0.0, %v5034
        %v5036 = vpop.f32.mrf.mxu0
        %5037 = vmatprep.mubr.bf16.mxu0 0
        %5038 = vmatmul.mubr.bf16.gmra.mxu0 %v4872
        %v5039 = vpop.f32.mrf.mxu0
        %v5040 = vadd.f32 0.0, %v5039
        %v5041 = vpop.f32.mrf.mxu0
        %v5042 = vpop.f32.mrf.mxu0
        %v5043 = vadd.f32 0.0, %v5042
        %v5044 = vpop.f32.mrf.mxu0
        %5045 = vmatprep.mubr.bf16.mxu0 0
        %5046 = vmatmul.mubr.bf16.gmra.mxu0 %v4873
        %v5047 = vpop.f32.mrf.mxu0
        %v5048 = vadd.f32 0.0, %v5047
        %v5049 = vpop.f32.mrf.mxu0
        %v5050 = vpop.f32.mrf.mxu0
        %v5051 = vadd.f32 0.0, %v5050
        %v5052 = vpop.f32.mrf.mxu0
        %5053 = vmatprep.mubr.bf16.mxu0 0
        %5054 = vmatmul.mubr.bf16.gmra.mxu0 %v4874
        %v5055 = vpop.f32.mrf.mxu0
        %v5056 = vadd.f32 0.0, %v5055
        %v5057 = vpop.f32.mrf.mxu0
        %v5058 = vpop.f32.mrf.mxu0
        %v5059 = vadd.f32 0.0, %v5058
        %v5060 = vpop.f32.mrf.mxu0
        %5061 = vmatprep.mubr.bf16.mxu0 0
        %5062 = vmatmul.mubr.bf16.gmra.mxu0 %v4875
        %v5063 = vpop.f32.mrf.mxu0
        %v5064 = vadd.f32 0.0, %v5063
        %v5065 = vpop.f32.mrf.mxu0
        %v5066 = vpop.f32.mrf.mxu0
        %v5067 = vadd.f32 0.0, %v5066
        %v5068 = vpop.f32.mrf.mxu0
        %5069 = vmatprep.mubr.bf16.mxu0 0
        %5070 = vmatmul.mubr.bf16.gmra.mxu0 %v4876
        %v5071 = vpop.f32.mrf.mxu0
        %v5072 = vadd.f32 0.0, %v5071
        %v5073 = vpop.f32.mrf.mxu0
        %v5074 = vpop.f32.mrf.mxu0
        %v5075 = vadd.f32 0.0, %v5074
        %v5076 = vpop.f32.mrf.mxu0
        %5077 = vmatprep.mubr.bf16.mxu0 0
        %5078 = vmatmul.mubr.bf16.gmra.mxu0 %v4877
        %v5079 = vpop.f32.mrf.mxu0
        %v5080 = vadd.f32 0.0, %v5079
        %v5081 = vpop.f32.mrf.mxu0
        %v5082 = vpop.f32.mrf.mxu0
        %v5083 = vadd.f32 0.0, %v5082
        %v5084 = vpop.f32.mrf.mxu0
        %5085 = vmatprep.mubr.bf16.mxu0 0
        %5086 = vmatmul.mubr.bf16.gmra.mxu0 %v4878
        %v5087 = vpop.f32.mrf.mxu0
        %v5088 = vadd.f32 0.0, %v5087
        %v5089 = vpop.f32.mrf.mxu0
        %v5090 = vpop.f32.mrf.mxu0
        %v5091 = vadd.f32 0.0, %v5090
        %v5092 = vpop.f32.mrf.mxu0
        %5093 = vmatprep.mubr.bf16.mxu0 0
        %5094 = vmatmul.mubr.bf16.gmra.mxu0 %v4879
        %v5095 = vpop.f32.mrf.mxu0
        %v5096 = vadd.f32 0.0, %v5095
        %v5097 = vpop.f32.mrf.mxu0
        %v5098 = vpop.f32.mrf.mxu0
        %v5099 = vadd.f32 0.0, %v5098
        %v5100 = vpop.f32.mrf.mxu0
        %5101 = vmatprep.mubr.bf16.mxu0 0
        %5102 = vmatmul.mubr.bf16.gmra.mxu0 %v4880
        %v5103 = vpop.f32.mrf.mxu0
        %v5104 = vadd.f32 0.0, %v5103
        %v5105 = vpop.f32.mrf.mxu0
        %v5106 = vpop.f32.mrf.mxu0
        %v5107 = vadd.f32 0.0, %v5106
        %v5108 = vpop.f32.mrf.mxu0
        %5109 = vmatprep.mubr.bf16.mxu0 0
        %5110 = vmatmul.mubr.bf16.gmra.mxu0 %v4881
        %v5111 = vpop.f32.mrf.mxu0
        %v5112 = vadd.f32 0.0, %v5111
        %v5113 = vpop.f32.mrf.mxu0
        %v5114 = vpop.f32.mrf.mxu0
        %v5115 = vadd.f32 0.0, %v5114
        %v5116 = vpop.f32.mrf.mxu0
        %5117 = vmatprep.mubr.bf16.mxu0 0
        %5118 = vmatmul.mubr.bf16.gmra.mxu0 %v4882
        %v5119 = vpop.f32.mrf.mxu0
        %v5120 = vadd.f32 0.0, %v5119
        %v5121 = vpop.f32.mrf.mxu0
        %v5122 = vpop.f32.mrf.mxu0
        %v5123 = vadd.f32 0.0, %v5122
        %v5124 = vpop.f32.mrf.mxu0
        %5125 = vmatprep.mubr.bf16.mxu0 0
        %5126 = vmatmul.mubr.bf16.gmra.mxu0 %v4883
        %v5127 = vpop.f32.mrf.mxu0
        %v5128 = vadd.f32 0.0, %v5127
        %v5129 = vpop.f32.mrf.mxu0
        %v5130 = vpop.f32.mrf.mxu0
        %v5131 = vadd.f32 0.0, %v5130
        %v5132 = vpop.f32.mrf.mxu0
        %5133 = vmatprep.mubr.bf16.mxu0 0
        %5134 = vmatmul.mubr.bf16.gmra.mxu0 %v4884
        %v5135 = vpop.f32.mrf.mxu0
        %v5136 = vadd.f32 0.0, %v5135
        %v5137 = vpop.f32.mrf.mxu0
        %v5138 = vpop.f32.mrf.mxu0
        %v5139 = vadd.f32 0.0, %v5138
        %v5140 = vpop.f32.mrf.mxu0
        %5141 = vmatprep.mubr.bf16.mxu0 0
        %5142 = vmatmul.mubr.bf16.gmra.mxu0 %v4885
        %v5143 = vpop.f32.mrf.mxu0
        %v5144 = vadd.f32 0.0, %v5143
        %v5145 = vpop.f32.mrf.mxu0
        %v5146 = vpop.f32.mrf.mxu0
        %v5147 = vadd.f32 0.0, %v5146
        %v5148 = vpop.f32.mrf.mxu0
        %5149 = vmatprep.mubr.bf16.mxu0 0
        %5150 = vmatmul.mubr.bf16.gmra.mxu0 %v4886
        %v5151 = vpop.f32.mrf.mxu0
        %v5152 = vadd.f32 0.0, %v5151
        %v5153 = vpop.f32.mrf.mxu0
        %v5154 = vpop.f32.mrf.mxu0
        %v5155 = vadd.f32 0.0, %v5154
        %v5156 = vpop.f32.mrf.mxu0
        %5157 = vmatprep.mubr.bf16.mxu0 0
        %5158 = vmatmul.mubr.bf16.gmra.mxu0 %v4887
        %v5159 = vpop.f32.mrf.mxu0
        %v5160 = vadd.f32 0.0, %v5159
        %v5161 = vpop.f32.mrf.mxu0
        %v5162 = vpop.f32.mrf.mxu0
        %v5163 = vadd.f32 0.0, %v5162
        %v5164 = vpop.f32.mrf.mxu0
        %5165 = vmatprep.mubr.bf16.mxu0 0
        %5166 = vmatmul.mubr.bf16.gmra.mxu0 %v4888
        %v5167 = vpop.f32.mrf.mxu0
        %v5168 = vadd.f32 0.0, %v5167
        %v5169 = vpop.f32.mrf.mxu0
        %v5170 = vpop.f32.mrf.mxu0
        %v5171 = vadd.f32 0.0, %v5170
        %v5172 = vpop.f32.mrf.mxu0
        %5173 = vmatprep.mubr.bf16.mxu0 0
        %5174 = vmatmul.mubr.bf16.gmra.mxu0 %v4889
        %v5175 = vpop.f32.mrf.mxu0
        %v5176 = vadd.f32 0.0, %v5175
        %v5177 = vpop.f32.mrf.mxu0
        %v5178 = vpop.f32.mrf.mxu0
        %v5179 = vadd.f32 0.0, %v5178
        %v5180 = vpop.f32.mrf.mxu0
        %5181 = vmatprep.mubr.bf16.mxu0 0
        %5182 = vmatmul.mubr.bf16.gmra.mxu0 %v4890
        %v5183 = vpop.f32.mrf.mxu0
        %v5184 = vadd.f32 0.0, %v5183
        %v5185 = vpop.f32.mrf.mxu0
        %v5186 = vpop.f32.mrf.mxu0
        %v5187 = vadd.f32 0.0, %v5186
        %v5188 = vpop.f32.mrf.mxu0
        %5189 = vmatprep.mubr.bf16.mxu0 0
        %5190 = vmatmul.mubr.bf16.gmra.mxu0 %v4891
        %v5191 = vpop.f32.mrf.mxu0
        %v5192 = vadd.f32 0.0, %v5191
        %v5193 = vpop.f32.mrf.mxu0
        %v5194 = vpop.f32.mrf.mxu0
        %v5195 = vadd.f32 0.0, %v5194
        %v5196 = vpop.f32.mrf.mxu0
        %5197 = vmatprep.mubr.bf16.mxu0 0
        %5198 = vmatmul.mubr.bf16.gmra.mxu0 %v4892
        %v5199 = vpop.f32.mrf.mxu0
        %v5200 = vadd.f32 0.0, %v5199
        %v5201 = vpop.f32.mrf.mxu0
        %v5202 = vpop.f32.mrf.mxu0
        %v5203 = vadd.f32 0.0, %v5202
        %v5204 = vpop.f32.mrf.mxu0
        %5205 = vmatprep.mubr.bf16.mxu0 0
        %5206 = vmatmul.mubr.bf16.gmra.mxu0 %v4893
        %v5207 = vpop.f32.mrf.mxu0
        %v5208 = vadd.f32 0.0, %v5207
        %v5209 = vpop.f32.mrf.mxu0
        %v5210 = vpop.f32.mrf.mxu0
        %v5211 = vadd.f32 0.0, %v5210
        %v5212 = vpop.f32.mrf.mxu0
        %5213 = vmatprep.mubr.bf16.mxu0 0
        %5214 = vmatmul.mubr.bf16.gmra.mxu0 %v4894
        %v5215 = vpop.f32.mrf.mxu0
        %v5216 = vadd.f32 0.0, %v5215
        %v5217 = vpop.f32.mrf.mxu0
        %v5218 = vpop.f32.mrf.mxu0
        %v5219 = vadd.f32 0.0, %v5218
        %v5220 = vpop.f32.mrf.mxu0
        %5221 = vmatprep.mubr.bf16.mxu0 0
        %5222 = vmatmul.mubr.bf16.gmra.mxu0 %v4895
        %v5223 = vpop.f32.mrf.mxu0
        %v5224 = vadd.f32 0.0, %v5223
        %v5225 = vpop.f32.mrf.mxu0
        %v5226 = vpop.f32.mrf.mxu0
        %v5227 = vadd.f32 0.0, %v5226
        %v5228 = vpop.f32.mrf.mxu0
        %5229 = vmatprep.mubr.bf16.mxu0 0
        %5230 = vmatmul.mubr.bf16.gmra.mxu0 %v4896
        %v5231 = vpop.f32.mrf.mxu0
        %v5232 = vadd.f32 0.0, %v5231
        %v5233 = vpop.f32.mrf.mxu0
        %v5234 = vpop.f32.mrf.mxu0
        %v5235 = vadd.f32 0.0, %v5234
        %v5236 = vpop.f32.mrf.mxu0
        %5237 = vmatprep.mubr.bf16.mxu0 0
        %5238 = vmatmul.mubr.bf16.gmra.mxu0 %v4897
        %v5239 = vpop.f32.mrf.mxu0
        %v5240 = vadd.f32 0.0, %v5239
        %v5241 = vpop.f32.mrf.mxu0
        %v5242 = vpop.f32.mrf.mxu0
        %v5243 = vadd.f32 0.0, %v5242
        %v5244 = vpop.f32.mrf.mxu0
        %5245 = vmatprep.mubr.bf16.mxu0 0
        %5246 = vmatmul.mubr.bf16.gmra.mxu0 %v4898
        %v5247 = vpop.f32.mrf.mxu0
        %v5248 = vadd.f32 0.0, %v5247
        %v5249 = vpop.f32.mrf.mxu0
        %v5250 = vpop.f32.mrf.mxu0
        %v5251 = vadd.f32 0.0, %v5250
        %v5252 = vpop.f32.mrf.mxu0
        %5253 = vmatprep.mubr.bf16.mxu0 0
        %5254 = vmatmul.mubr.bf16.gmra.mxu0 %v4899
        %v5255 = vpop.f32.mrf.mxu0
        %v5256 = vadd.f32 0.0, %v5255
        %v5257 = vpop.f32.mrf.mxu0
        %v5258 = vpop.f32.mrf.mxu0
        %v5259 = vadd.f32 0.0, %v5258
        %v5260 = vpop.f32.mrf.mxu0
        %5261 = vmatprep.mubr.bf16.mxu0 0
        %5262 = vmatmul.mubr.bf16.gmra.mxu0 %v4900
        %v5263 = vpop.f32.mrf.mxu0
        %v5264 = vadd.f32 0.0, %v5263
        %v5265 = vpop.f32.mrf.mxu0
        %v5266 = vpop.f32.mrf.mxu0
        %v5267 = vadd.f32 0.0, %v5266
        %v5268 = vpop.f32.mrf.mxu0
        %5269 = vdwg.mxu0
        %v5270 = vadd.f32 %v4596, %v5016
        %v5271 = vadd.f32 %v4597, %v5019
        %v5272 = vadd.f32 %v4598, %v5024
        %v5273 = vadd.f32 %v4599, %v5027
        %v5274 = vadd.f32 %v4600, %v5032
        %v5275 = vadd.f32 %v4601, %v5035
        %v5276 = vadd.f32 %v4602, %v5040
        %v5277 = vadd.f32 %v4603, %v5043
        %v5278 = vadd.f32 %v4604, %v5048
        %v5279 = vadd.f32 %v4605, %v5051
        %v5280 = vadd.f32 %v4606, %v5056
        %v5281 = vadd.f32 %v4607, %v5059
        %v5282 = vadd.f32 %v4608, %v5064
        %v5283 = vadd.f32 %v4609, %v5067
        %v5284 = vadd.f32 %v4610, %v5072
        %v5285 = vadd.f32 %v4611, %v5075
        %v5286 = vadd.f32 %v4612, %v5080
        %v5287 = vadd.f32 %v4613, %v5083
        %v5288 = vadd.f32 %v4614, %v5088
        %v5289 = vadd.f32 %v4615, %v5091
        %v5290 = vadd.f32 %v4616, %v5096
        %v5291 = vadd.f32 %v4617, %v5099
        %v5292 = vadd.f32 %v4618, %v5104
        %v5293 = vadd.f32 %v4619, %v5107
        %v5294 = vadd.f32 %v4620, %v5112
        %v5295 = vadd.f32 %v4621, %v5115
        %v5296 = vadd.f32 %v4622, %v5120
        %v5297 = vadd.f32 %v4623, %v5123
        %v5298 = vadd.f32 %v4624, %v5128
        %v5299 = vadd.f32 %v4625, %v5131
        %v5300 = vadd.f32 %v4626, %v5136
        %v5301 = vadd.f32 %v4627, %v5139
        %v5302 = vadd.f32 %v4628, %v5144
        %v5303 = vadd.f32 %v4629, %v5147
        %v5304 = vadd.f32 %v4630, %v5152
        %v5305 = vadd.f32 %v4631, %v5155
        %v5306 = vadd.f32 %v4632, %v5160
        %v5307 = vadd.f32 %v4633, %v5163
        %v5308 = vadd.f32 %v4634, %v5168
        %v5309 = vadd.f32 %v4635, %v5171
        %v5310 = vadd.f32 %v4636, %v5176
        %v5311 = vadd.f32 %v4637, %v5179
        %v5312 = vadd.f32 %v4638, %v5184
        %v5313 = vadd.f32 %v4639, %v5187
        %v5314 = vadd.f32 %v4640, %v5192
        %v5315 = vadd.f32 %v4641, %v5195
        %v5316 = vadd.f32 %v4642, %v5200
        %v5317 = vadd.f32 %v4643, %v5203
        %v5318 = vadd.f32 %v4644, %v5208
        %v5319 = vadd.f32 %v4645, %v5211
        %v5320 = vadd.f32 %v4646, %v5216
        %v5321 = vadd.f32 %v4647, %v5219
        %v5322 = vadd.f32 %v4648, %v5224
        %v5323 = vadd.f32 %v4649, %v5227
        %v5324 = vadd.f32 %v4650, %v5232
        %v5325 = vadd.f32 %v4651, %v5235
        %v5326 = vadd.f32 %v4652, %v5240
        %v5327 = vadd.f32 %v4653, %v5243
        %v5328 = vadd.f32 %v4654, %v5248
        %v5329 = vadd.f32 %v4655, %v5251
        %v5330 = vadd.f32 %v4656, %v5256
        %v5331 = vadd.f32 %v4657, %v5259
        %v5332 = vadd.f32 %v4658, %v5264
        %v5333 = vadd.f32 %v4659, %v5267
        %v5334 = vld [vmem:[%s229 + $0x20] sm:$0xf]
        %v5335 = vld [vmem:[%s229 + $0x24] sm:$0xf]
        %v5336 = vld [vmem:[%s229 + $0x28] sm:$0xf]
        %v5337 = vld [vmem:[%s229 + $0x2c] sm:$0xf]
        %v5338 = vld [vmem:[%s229 + $0x30] sm:$0xf]
        %v5339 = vld [vmem:[%s229 + $0x34] sm:$0xf]
        %v5340 = vld [vmem:[%s229 + $0x38] sm:$0xf]
        %v5341 = vld [vmem:[%s229 + $0x3c] sm:$0xf]
        %v5342 = vld [vmem:[%s229 + $0x40] sm:$0xf]
        %v5343 = vld [vmem:[%s229 + $0x44] sm:$0xf]
        %v5344 = vld [vmem:[%s229 + $0x48] sm:$0xf]
        %v5345 = vld [vmem:[%s229 + $0x4c] sm:$0xf]
        %v5346 = vld [vmem:[%s229 + $0x50] sm:$0xf]
        %v5347 = vld [vmem:[%s229 + $0x54] sm:$0xf]
        %v5348 = vld [vmem:[%s229 + $0x58] sm:$0xf]
        %v5349 = vld [vmem:[%s229 + $0x5c] sm:$0xf]
        %v5350 = vld [vmem:[%s229 + $0x60] sm:$0xf]
        %v5351 = vld [vmem:[%s229 + $0x64] sm:$0xf]
        %v5352 = vld [vmem:[%s229 + $0x68] sm:$0xf]
        %v5353 = vld [vmem:[%s229 + $0x6c] sm:$0xf]
        %v5354 = vld [vmem:[%s229 + $0x70] sm:$0xf]
        %v5355 = vld [vmem:[%s229 + $0x74] sm:$0xf]
        %v5356 = vld [vmem:[%s229 + $0x78] sm:$0xf]
        %v5357 = vld [vmem:[%s229 + $0x7c] sm:$0xf]
        %v5358 = vld [vmem:[%s229 + $0x80] sm:$0xf]
        %v5359 = vld [vmem:[%s229 + $0x84] sm:$0xf]
        %v5360 = vld [vmem:[%s229 + $0x88] sm:$0xf]
        %v5361 = vld [vmem:[%s229 + $0x8c] sm:$0xf]
        %v5362 = vld [vmem:[%s229 + $0x90] sm:$0xf]
        %v5363 = vld [vmem:[%s229 + $0x94] sm:$0xf]
        %v5364 = vld [vmem:[%s229 + $0x98] sm:$0xf]
        %v5365 = vld [vmem:[%s229 + $0x9c] sm:$0xf]
        %v5366 = vld [vmem:[%s229 + $0xa0] sm:$0xf]
        %v5367 = vld [vmem:[%s229 + $0xa4] sm:$0xf]
        %v5368 = vld [vmem:[%s229 + $0xa8] sm:$0xf]
        %v5369 = vld [vmem:[%s229 + $0xac] sm:$0xf]
        %v5370 = vld [vmem:[%s229 + $0xb0] sm:$0xf]
        %v5371 = vld [vmem:[%s229 + $0xb4] sm:$0xf]
        %v5372 = vld [vmem:[%s229 + $0xb8] sm:$0xf]
        %v5373 = vld [vmem:[%s229 + $0xbc] sm:$0xf]
        %v5374 = vld [vmem:[%s229 + $0xc0] sm:$0xf]
        %v5375 = vld [vmem:[%s229 + $0xc4] sm:$0xf]
        %v5376 = vld [vmem:[%s229 + $0xc8] sm:$0xf]
        %v5377 = vld [vmem:[%s229 + $0xcc] sm:$0xf]
        %v5378 = vld [vmem:[%s229 + $0xd0] sm:$0xf]
        %v5379 = vld [vmem:[%s229 + $0xd4] sm:$0xf]
        %v5380 = vld [vmem:[%s229 + $0xd8] sm:$0xf]
        %v5381 = vld [vmem:[%s229 + $0xdc] sm:$0xf]
        %v5382 = vld [vmem:[%s229 + $0xe0] sm:$0xf]
        %v5383 = vld [vmem:[%s229 + $0xe4] sm:$0xf]
        %v5384 = vld [vmem:[%s229 + $0xe8] sm:$0xf]
        %v5385 = vld [vmem:[%s229 + $0xec] sm:$0xf]
        %v5386 = vld [vmem:[%s229 + $0xf0] sm:$0xf]
        %v5387 = vld [vmem:[%s229 + $0xf4] sm:$0xf]
        %v5388 = vld [vmem:[%s229 + $0xf8] sm:$0xf]
        %v5389 = vld [vmem:[%s229 + $0xfc] sm:$0xf]
        %v5390 = vld [vmem:[%s229 + $0x100] sm:$0xf]
        %v5391 = vld [vmem:[%s229 + $0x104] sm:$0xf]
        %v5392 = vld [vmem:[%s229 + $0x108] sm:$0xf]
        %v5393 = vld [vmem:[%s229 + $0x10c] sm:$0xf]
        %v5394 = vld [vmem:[%s229 + $0x110] sm:$0xf]
        %v5395 = vld [vmem:[%s229 + $0x114] sm:$0xf]
        %v5396 = vld [vmem:[%s229 + $0x118] sm:$0xf]
        %v5397 = vld [vmem:[%s229 + $0x11c] sm:$0xf]
        %v5398 = vld [vmem:[%s229 + $0x120] sm:$0x1]
        %s5399 = scalar_lea.vmem [#allocation6], 448
        %v5400 = vld [vmem:[%s5399] sm:$0xf]
        %v5401 = vld [vmem:[%s5399 + $0x4] sm:$0xf]
        %v5402 = vld [vmem:[%s5399 + $0x8] sm:$0xf]
        %v5403 = vld [vmem:[%s5399 + $0xc] sm:$0xf]
        %v5404 = vld [vmem:[%s5399 + $0x10] sm:$0xf]
        %v5405 = vld [vmem:[%s5399 + $0x14] sm:$0xf]
        %v5406 = vld [vmem:[%s5399 + $0x18] sm:$0xf]
        %v5407 = vld [vmem:[%s5399 + $0x1c] sm:$0xf]
        %v5408 = vld [vmem:[%s5399 + $0x20] sm:$0xf]
        %v5409 = vld [vmem:[%s5399 + $0x24] sm:$0xf]
        %v5410 = vld [vmem:[%s5399 + $0x28] sm:$0xf]
        %v5411 = vld [vmem:[%s5399 + $0x2c] sm:$0xf]
        %v5412 = vld [vmem:[%s5399 + $0x30] sm:$0xf]
        %v5413 = vld [vmem:[%s5399 + $0x34] sm:$0xf]
        %v5414 = vld [vmem:[%s5399 + $0x38] sm:$0xf]
        %v5415 = vld [vmem:[%s5399 + $0x3c] sm:$0xf]
        %v5481 = vunpack.c.l.b16 %v5334
        %v5482 = vunpack.c.l.b16 %v5335
        %v5483 = vunpack.c.l.b16 %v5336
        %v5484 = vunpack.c.l.b16 %v5337
        %v5485 = vunpack.c.l.b16 %v5338
        %v5486 = vunpack.c.l.b16 %v5339
        %v5487 = vunpack.c.l.b16 %v5340
        %v5488 = vunpack.c.l.b16 %v5341
        %v5489 = vunpack.c.l.b16 %v5342
        %v5490 = vunpack.c.l.b16 %v5343
        %v5491 = vunpack.c.l.b16 %v5344
        %v5492 = vunpack.c.l.b16 %v5345
        %v5493 = vunpack.c.l.b16 %v5346
        %v5494 = vunpack.c.l.b16 %v5347
        %v5495 = vunpack.c.l.b16 %v5348
        %v5496 = vunpack.c.l.b16 %v5349
        %v5497 = vunpack.c.l.b16 %v5350
        %v5498 = vunpack.c.l.b16 %v5351
        %v5499 = vunpack.c.l.b16 %v5352
        %v5500 = vunpack.c.l.b16 %v5353
        %v5501 = vunpack.c.l.b16 %v5354
        %v5502 = vunpack.c.l.b16 %v5355
        %v5503 = vunpack.c.l.b16 %v5356
        %v5504 = vunpack.c.l.b16 %v5357
        %v5505 = vunpack.c.l.b16 %v5358
        %v5506 = vunpack.c.l.b16 %v5359
        %v5507 = vunpack.c.l.b16 %v5360
        %v5508 = vunpack.c.l.b16 %v5361
        %v5509 = vunpack.c.l.b16 %v5362
        %v5510 = vunpack.c.l.b16 %v5363
        %v5511 = vunpack.c.l.b16 %v5364
        %v5512 = vunpack.c.l.b16 %v5365
        %v5513 = vunpack.c.l.b16 %v5366
        %v5514 = vunpack.c.l.b16 %v5367
        %v5515 = vunpack.c.l.b16 %v5368
        %v5516 = vunpack.c.l.b16 %v5369
        %v5517 = vunpack.c.l.b16 %v5370
        %v5518 = vunpack.c.l.b16 %v5371
        %v5519 = vunpack.c.l.b16 %v5372
        %v5520 = vunpack.c.l.b16 %v5373
        %v5521 = vunpack.c.l.b16 %v5374
        %v5522 = vunpack.c.l.b16 %v5375
        %v5523 = vunpack.c.l.b16 %v5376
        %v5524 = vunpack.c.l.b16 %v5377
        %v5525 = vunpack.c.l.b16 %v5378
        %v5526 = vunpack.c.l.b16 %v5379
        %v5527 = vunpack.c.l.b16 %v5380
        %v5528 = vunpack.c.l.b16 %v5381
        %v5529 = vunpack.c.l.b16 %v5382
        %v5530 = vunpack.c.l.b16 %v5383
        %v5531 = vunpack.c.l.b16 %v5384
        %v5532 = vunpack.c.l.b16 %v5385
        %v5533 = vunpack.c.l.b16 %v5386
        %v5534 = vunpack.c.l.b16 %v5387
        %v5535 = vunpack.c.l.b16 %v5388
        %v5536 = vunpack.c.l.b16 %v5389
        %v5537 = vunpack.c.l.b16 %v5390
        %v5538 = vunpack.c.l.b16 %v5391
        %v5539 = vunpack.c.l.b16 %v5392
        %v5540 = vunpack.c.l.b16 %v5393
        %v5541 = vunpack.c.l.b16 %v5394
        %v5542 = vunpack.c.l.b16 %v5395
        %v5543 = vunpack.c.l.b16 %v5396
        %v5544 = vunpack.c.l.b16 %v5397
        %v5545 = vunpack.c.l.b16 %v5398
        %v5546 = vpack.c.b16 %v5482, %v5481
        %v5547 = vpack.c.b16 %v5484, %v5483
        %v5548 = vpack.c.b16 %v5486, %v5485
        %v5549 = vpack.c.b16 %v5488, %v5487
        %v5550 = vpack.c.b16 %v5490, %v5489
        %v5551 = vpack.c.b16 %v5492, %v5491
        %v5552 = vpack.c.b16 %v5494, %v5493
        %v5553 = vpack.c.b16 %v5496, %v5495
        %v5554 = vpack.c.b16 %v5498, %v5497
        %v5555 = vpack.c.b16 %v5500, %v5499
        %v5556 = vpack.c.b16 %v5502, %v5501
        %v5557 = vpack.c.b16 %v5504, %v5503
        %v5558 = vpack.c.b16 %v5506, %v5505
        %v5559 = vpack.c.b16 %v5508, %v5507
        %v5560 = vpack.c.b16 %v5510, %v5509
        %v5561 = vpack.c.b16 %v5512, %v5511
        %v5562 = vpack.c.b16 %v5514, %v5513
        %v5563 = vpack.c.b16 %v5516, %v5515
        %v5564 = vpack.c.b16 %v5518, %v5517
        %v5565 = vpack.c.b16 %v5520, %v5519
        %v5566 = vpack.c.b16 %v5522, %v5521
        %v5567 = vpack.c.b16 %v5524, %v5523
        %v5568 = vpack.c.b16 %v5526, %v5525
        %v5569 = vpack.c.b16 %v5528, %v5527
        %v5570 = vpack.c.b16 %v5530, %v5529
        %v5571 = vpack.c.b16 %v5532, %v5531
        %v5572 = vpack.c.b16 %v5534, %v5533
        %v5573 = vpack.c.b16 %v5536, %v5535
        %v5574 = vpack.c.b16 %v5538, %v5537
        %v5575 = vpack.c.b16 %v5540, %v5539
        %v5576 = vpack.c.b16 %v5542, %v5541
        %v5577 = vpack.c.b16 %v5544, %v5543
        %v5578 = vpack.c.b16 %v5545, %v5545
        %v5580 = vshrl.u32 %v5546, 16
        %v5582 = vshll.u32 %v5546, 16
        %v5584 = vrot.slane %v5582, 1
        %v5585 = vor.u32 %v5580, %v5584
        %v5587 = vshll.u32 %v5547, 16
        %v5589 = vrot.slane %v5587, 1
        %v5590 = vsel %vm1315, %v5585, %v5589
        %v5591 = vshrl.u32 %v5547, 16
        %v5593 = vor.u32 %v5591, %v5589
        %v5595 = vshll.u32 %v5548, 16
        %v5597 = vrot.slane %v5595, 1
        %v5598 = vsel %vm1315, %v5593, %v5597
        %v5599 = vshrl.u32 %v5548, 16
        %v5601 = vor.u32 %v5599, %v5597
        %v5603 = vshll.u32 %v5549, 16
        %v5605 = vrot.slane %v5603, 1
        %v5606 = vsel %vm1315, %v5601, %v5605
        %v5607 = vshrl.u32 %v5549, 16
        %v5609 = vor.u32 %v5607, %v5605
        %v5611 = vshll.u32 %v5550, 16
        %v5613 = vrot.slane %v5611, 1
        %v5614 = vsel %vm1315, %v5609, %v5613
        %v5615 = vshrl.u32 %v5550, 16
        %v5617 = vor.u32 %v5615, %v5613
        %v5619 = vshll.u32 %v5551, 16
        %v5621 = vrot.slane %v5619, 1
        %v5622 = vsel %vm1315, %v5617, %v5621
        %v5623 = vshrl.u32 %v5551, 16
        %v5625 = vor.u32 %v5623, %v5621
        %v5627 = vshll.u32 %v5552, 16
        %v5629 = vrot.slane %v5627, 1
        %v5630 = vsel %vm1315, %v5625, %v5629
        %v5631 = vshrl.u32 %v5552, 16
        %v5633 = vor.u32 %v5631, %v5629
        %v5635 = vshll.u32 %v5553, 16
        %v5637 = vrot.slane %v5635, 1
        %v5638 = vsel %vm1315, %v5633, %v5637
        %v5639 = vshrl.u32 %v5553, 16
        %v5641 = vor.u32 %v5639, %v5637
        %v5643 = vshll.u32 %v5554, 16
        %v5645 = vrot.slane %v5643, 1
        %v5646 = vsel %vm1315, %v5641, %v5645
        %v5647 = vshrl.u32 %v5554, 16
        %v5649 = vor.u32 %v5647, %v5645
        %v5651 = vshll.u32 %v5555, 16
        %v5653 = vrot.slane %v5651, 1
        %v5654 = vsel %vm1315, %v5649, %v5653
        %v5655 = vshrl.u32 %v5555, 16
        %v5657 = vor.u32 %v5655, %v5653
        %v5659 = vshll.u32 %v5556, 16
        %v5661 = vrot.slane %v5659, 1
        %v5662 = vsel %vm1315, %v5657, %v5661
        %v5663 = vshrl.u32 %v5556, 16
        %v5665 = vor.u32 %v5663, %v5661
        %v5667 = vshll.u32 %v5557, 16
        %v5669 = vrot.slane %v5667, 1
        %v5670 = vsel %vm1315, %v5665, %v5669
        %v5671 = vshrl.u32 %v5557, 16
        %v5673 = vor.u32 %v5671, %v5669
        %v5675 = vshll.u32 %v5558, 16
        %v5677 = vrot.slane %v5675, 1
        %v5678 = vsel %vm1315, %v5673, %v5677
        %v5679 = vshrl.u32 %v5558, 16
        %v5681 = vor.u32 %v5679, %v5677
        %v5683 = vshll.u32 %v5559, 16
        %v5685 = vrot.slane %v5683, 1
        %v5686 = vsel %vm1315, %v5681, %v5685
        %v5687 = vshrl.u32 %v5559, 16
        %v5689 = vor.u32 %v5687, %v5685
        %v5691 = vshll.u32 %v5560, 16
        %v5693 = vrot.slane %v5691, 1
        %v5694 = vsel %vm1315, %v5689, %v5693
        %v5695 = vshrl.u32 %v5560, 16
        %v5697 = vor.u32 %v5695, %v5693
        %v5699 = vshll.u32 %v5561, 16
        %v5701 = vrot.slane %v5699, 1
        %v5702 = vsel %vm1315, %v5697, %v5701
        %v5703 = vshrl.u32 %v5561, 16
        %v5705 = vor.u32 %v5703, %v5701
        %v5707 = vshll.u32 %v5562, 16
        %v5709 = vrot.slane %v5707, 1
        %v5710 = vsel %vm1315, %v5705, %v5709
        %v5711 = vshrl.u32 %v5562, 16
        %v5713 = vor.u32 %v5711, %v5709
        %v5715 = vshll.u32 %v5563, 16
        %v5717 = vrot.slane %v5715, 1
        %v5718 = vsel %vm1315, %v5713, %v5717
        %v5719 = vshrl.u32 %v5563, 16
        %v5721 = vor.u32 %v5719, %v5717
        %v5723 = vshll.u32 %v5564, 16
        %v5725 = vrot.slane %v5723, 1
        %v5726 = vsel %vm1315, %v5721, %v5725
        %v5727 = vshrl.u32 %v5564, 16
        %v5729 = vor.u32 %v5727, %v5725
        %v5731 = vshll.u32 %v5565, 16
        %v5733 = vrot.slane %v5731, 1
        %v5734 = vsel %vm1315, %v5729, %v5733
        %v5735 = vshrl.u32 %v5565, 16
        %v5737 = vor.u32 %v5735, %v5733
        %v5739 = vshll.u32 %v5566, 16
        %v5741 = vrot.slane %v5739, 1
        %v5742 = vsel %vm1315, %v5737, %v5741
        %v5743 = vshrl.u32 %v5566, 16
        %v5745 = vor.u32 %v5743, %v5741
        %v5747 = vshll.u32 %v5567, 16
        %v5749 = vrot.slane %v5747, 1
        %v5750 = vsel %vm1315, %v5745, %v5749
        %v5751 = vshrl.u32 %v5567, 16
        %v5753 = vor.u32 %v5751, %v5749
        %v5755 = vshll.u32 %v5568, 16
        %v5757 = vrot.slane %v5755, 1
        %v5758 = vsel %vm1315, %v5753, %v5757
        %v5759 = vshrl.u32 %v5568, 16
        %v5761 = vor.u32 %v5759, %v5757
        %v5763 = vshll.u32 %v5569, 16
        %v5765 = vrot.slane %v5763, 1
        %v5766 = vsel %vm1315, %v5761, %v5765
        %v5767 = vshrl.u32 %v5569, 16
        %v5769 = vor.u32 %v5767, %v5765
        %v5771 = vshll.u32 %v5570, 16
        %v5773 = vrot.slane %v5771, 1
        %v5774 = vsel %vm1315, %v5769, %v5773
        %v5775 = vshrl.u32 %v5570, 16
        %v5777 = vor.u32 %v5775, %v5773
        %v5779 = vshll.u32 %v5571, 16
        %v5781 = vrot.slane %v5779, 1
        %v5782 = vsel %vm1315, %v5777, %v5781
        %v5783 = vshrl.u32 %v5571, 16
        %v5785 = vor.u32 %v5783, %v5781
        %v5787 = vshll.u32 %v5572, 16
        %v5789 = vrot.slane %v5787, 1
        %v5790 = vsel %vm1315, %v5785, %v5789
        %v5791 = vshrl.u32 %v5572, 16
        %v5793 = vor.u32 %v5791, %v5789
        %v5795 = vshll.u32 %v5573, 16
        %v5797 = vrot.slane %v5795, 1
        %v5798 = vsel %vm1315, %v5793, %v5797
        %v5799 = vshrl.u32 %v5573, 16
        %v5801 = vor.u32 %v5799, %v5797
        %v5803 = vshll.u32 %v5574, 16
        %v5805 = vrot.slane %v5803, 1
        %v5806 = vsel %vm1315, %v5801, %v5805
        %v5807 = vshrl.u32 %v5574, 16
        %v5809 = vor.u32 %v5807, %v5805
        %v5811 = vshll.u32 %v5575, 16
        %v5813 = vrot.slane %v5811, 1
        %v5814 = vsel %vm1315, %v5809, %v5813
        %v5815 = vshrl.u32 %v5575, 16
        %v5817 = vor.u32 %v5815, %v5813
        %v5819 = vshll.u32 %v5576, 16
        %v5821 = vrot.slane %v5819, 1
        %v5822 = vsel %vm1315, %v5817, %v5821
        %v5823 = vshrl.u32 %v5576, 16
        %v5825 = vor.u32 %v5823, %v5821
        %v5827 = vshll.u32 %v5577, 16
        %v5829 = vrot.slane %v5827, 1
        %v5830 = vsel %vm1315, %v5825, %v5829
        %v5831 = vshrl.u32 %v5577, 16
        %v5833 = vor.u32 %v5831, %v5829
        %v5835 = vshll.u32 %v5578, 16
        %v5837 = vrot.slane %v5835, 1
        %v5838 = vsel %vm1315, %v5833, %v5837
        %v5887 = vunpack.c.l.b16 %v5400
        %v5888 = vunpack.c.l.b16 %v5401
        %v5889 = vunpack.c.l.b16 %v5402
        %v5890 = vunpack.c.l.b16 %v5403
        %v5891 = vunpack.c.l.b16 %v5404
        %v5892 = vunpack.c.l.b16 %v5405
        %v5893 = vunpack.c.l.b16 %v5406
        %v5894 = vunpack.c.l.b16 %v5407
        %v5895 = vunpack.c.l.b16 %v5408
        %v5896 = vunpack.c.l.b16 %v5409
        %v5897 = vunpack.c.l.b16 %v5410
        %v5898 = vunpack.c.l.b16 %v5411
        %v5899 = vunpack.c.l.b16 %v5412
        %v5900 = vunpack.c.l.b16 %v5413
        %v5901 = vunpack.c.l.b16 %v5414
        %v5902 = vunpack.c.l.b16 %v5415
        %v5903 = vpack.c.b16 %v5888, %v5887
        %v5904 = vpack.c.b16 %v5890, %v5889
        %v5905 = vpack.c.b16 %v5892, %v5891
        %v5906 = vpack.c.b16 %v5894, %v5893
        %v5907 = vpack.c.b16 %v5896, %v5895
        %v5908 = vpack.c.b16 %v5898, %v5897
        %v5909 = vpack.c.b16 %v5900, %v5899
        %v5910 = vpack.c.b16 %v5902, %v5901
        %5919 = vmatprep.subr.bf16.mxu0 0
        %5920 = vmatpush1.bf16.msra.mxu0 %v5910
        %5921 = vmatprep.subr.bf16.mxu0 0
        %5922 = vmatpush1.bf16.msra.mxu0 %v5909
        %5923 = vmatprep.subr.bf16.mxu0 0
        %5924 = vmatpush1.bf16.msra.mxu0 %v5908
        %5925 = vmatprep.subr.bf16.mxu0 0
        %5926 = vmatpush1.bf16.msra.mxu0 %v5907
        %5927 = vmatprep.subr.bf16.mxu0 0
        %5928 = vmatpush1.bf16.msra.mxu0 %v5906
        %5929 = vmatprep.subr.bf16.mxu0 0
        %5930 = vmatpush1.bf16.msra.mxu0 %v5905
        %5931 = vmatprep.subr.bf16.mxu0 0
        %5932 = vmatpush1.bf16.msra.mxu0 %v5904
        %5933 = vmatprep.subr.bf16.mxu0 0
        %5934 = vmatpush1.bf16.msra.mxu0 %v5903
        %5935 = vmatprep.subr.bf16.mxu0 0
        %5936 = vmatpush2.bf16.msra.mxu0 0
        %5937 = vmatprep.subr.bf16.mxu0 0
        %5938 = vmatpush2.bf16.msra.mxu0 0
        %5939 = vmatprep.subr.bf16.mxu0 0
        %5940 = vmatpush2.bf16.msra.mxu0 0
        %5941 = vmatprep.subr.bf16.mxu0 0
        %5942 = vmatpush2.bf16.msra.mxu0 0
        %5943 = vmatprep.subr.bf16.mxu0 0
        %5944 = vmatpush2.bf16.msra.mxu0 0
        %5945 = vmatprep.subr.bf16.mxu0 0
        %5946 = vmatpush2.bf16.msra.mxu0 0
        %5947 = vmatprep.subr.bf16.mxu0 0
        %5948 = vmatpush2.bf16.msra.mxu0 0
        %5949 = vmatprep.subr.bf16.mxu0 0
        %5950 = vmatpush2.bf16.msra.mxu0 0
        %5951 = vmatprep.mubr.bf16.mxu0 0
        %5952 = vmatmul.mubr.bf16.gmra.mxu0 %v5590
        %v5953 = vpop.f32.mrf.mxu0
        %v5954 = vadd.f32 0.0, %v5953
        %v5955 = vpop.f32.mrf.mxu0
        %v5956 = vpop.f32.mrf.mxu0
        %v5957 = vadd.f32 0.0, %v5956
        %v5958 = vpop.f32.mrf.mxu0
        %5959 = vmatprep.mubr.bf16.mxu0 0
        %5960 = vmatmul.mubr.bf16.gmra.mxu0 %v5598
        %v5961 = vpop.f32.mrf.mxu0
        %v5962 = vadd.f32 0.0, %v5961
        %v5963 = vpop.f32.mrf.mxu0
        %v5964 = vpop.f32.mrf.mxu0
        %v5965 = vadd.f32 0.0, %v5964
        %v5966 = vpop.f32.mrf.mxu0
        %5967 = vmatprep.mubr.bf16.mxu0 0
        %5968 = vmatmul.mubr.bf16.gmra.mxu0 %v5606
        %v5969 = vpop.f32.mrf.mxu0
        %v5970 = vadd.f32 0.0, %v5969
        %v5971 = vpop.f32.mrf.mxu0
        %v5972 = vpop.f32.mrf.mxu0
        %v5973 = vadd.f32 0.0, %v5972
        %v5974 = vpop.f32.mrf.mxu0
        %5975 = vmatprep.mubr.bf16.mxu0 0
        %5976 = vmatmul.mubr.bf16.gmra.mxu0 %v5614
        %v5977 = vpop.f32.mrf.mxu0
        %v5978 = vadd.f32 0.0, %v5977
        %v5979 = vpop.f32.mrf.mxu0
        %v5980 = vpop.f32.mrf.mxu0
        %v5981 = vadd.f32 0.0, %v5980
        %v5982 = vpop.f32.mrf.mxu0
        %5983 = vmatprep.mubr.bf16.mxu0 0
        %5984 = vmatmul.mubr.bf16.gmra.mxu0 %v5622
        %v5985 = vpop.f32.mrf.mxu0
        %v5986 = vadd.f32 0.0, %v5985
        %v5987 = vpop.f32.mrf.mxu0
        %v5988 = vpop.f32.mrf.mxu0
        %v5989 = vadd.f32 0.0, %v5988
        %v5990 = vpop.f32.mrf.mxu0
        %5991 = vmatprep.mubr.bf16.mxu0 0
        %5992 = vmatmul.mubr.bf16.gmra.mxu0 %v5630
        %v5993 = vpop.f32.mrf.mxu0
        %v5994 = vadd.f32 0.0, %v5993
        %v5995 = vpop.f32.mrf.mxu0
        %v5996 = vpop.f32.mrf.mxu0
        %v5997 = vadd.f32 0.0, %v5996
        %v5998 = vpop.f32.mrf.mxu0
        %5999 = vmatprep.mubr.bf16.mxu0 0
        %6000 = vmatmul.mubr.bf16.gmra.mxu0 %v5638
        %v6001 = vpop.f32.mrf.mxu0
        %v6002 = vadd.f32 0.0, %v6001
        %v6003 = vpop.f32.mrf.mxu0
        %v6004 = vpop.f32.mrf.mxu0
        %v6005 = vadd.f32 0.0, %v6004
        %v6006 = vpop.f32.mrf.mxu0
        %6007 = vmatprep.mubr.bf16.mxu0 0
        %6008 = vmatmul.mubr.bf16.gmra.mxu0 %v5646
        %v6009 = vpop.f32.mrf.mxu0
        %v6010 = vadd.f32 0.0, %v6009
        %v6011 = vpop.f32.mrf.mxu0
        %v6012 = vpop.f32.mrf.mxu0
        %v6013 = vadd.f32 0.0, %v6012
        %v6014 = vpop.f32.mrf.mxu0
        %6015 = vmatprep.mubr.bf16.mxu0 0
        %6016 = vmatmul.mubr.bf16.gmra.mxu0 %v5654
        %v6017 = vpop.f32.mrf.mxu0
        %v6018 = vadd.f32 0.0, %v6017
        %v6019 = vpop.f32.mrf.mxu0
        %v6020 = vpop.f32.mrf.mxu0
        %v6021 = vadd.f32 0.0, %v6020
        %v6022 = vpop.f32.mrf.mxu0
        %6023 = vmatprep.mubr.bf16.mxu0 0
        %6024 = vmatmul.mubr.bf16.gmra.mxu0 %v5662
        %v6025 = vpop.f32.mrf.mxu0
        %v6026 = vadd.f32 0.0, %v6025
        %v6027 = vpop.f32.mrf.mxu0
        %v6028 = vpop.f32.mrf.mxu0
        %v6029 = vadd.f32 0.0, %v6028
        %v6030 = vpop.f32.mrf.mxu0
        %6031 = vmatprep.mubr.bf16.mxu0 0
        %6032 = vmatmul.mubr.bf16.gmra.mxu0 %v5670
        %v6033 = vpop.f32.mrf.mxu0
        %v6034 = vadd.f32 0.0, %v6033
        %v6035 = vpop.f32.mrf.mxu0
        %v6036 = vpop.f32.mrf.mxu0
        %v6037 = vadd.f32 0.0, %v6036
        %v6038 = vpop.f32.mrf.mxu0
        %6039 = vmatprep.mubr.bf16.mxu0 0
        %6040 = vmatmul.mubr.bf16.gmra.mxu0 %v5678
        %v6041 = vpop.f32.mrf.mxu0
        %v6042 = vadd.f32 0.0, %v6041
        %v6043 = vpop.f32.mrf.mxu0
        %v6044 = vpop.f32.mrf.mxu0
        %v6045 = vadd.f32 0.0, %v6044
        %v6046 = vpop.f32.mrf.mxu0
        %6047 = vmatprep.mubr.bf16.mxu0 0
        %6048 = vmatmul.mubr.bf16.gmra.mxu0 %v5686
        %v6049 = vpop.f32.mrf.mxu0
        %v6050 = vadd.f32 0.0, %v6049
        %v6051 = vpop.f32.mrf.mxu0
        %v6052 = vpop.f32.mrf.mxu0
        %v6053 = vadd.f32 0.0, %v6052
        %v6054 = vpop.f32.mrf.mxu0
        %6055 = vmatprep.mubr.bf16.mxu0 0
        %6056 = vmatmul.mubr.bf16.gmra.mxu0 %v5694
        %v6057 = vpop.f32.mrf.mxu0
        %v6058 = vadd.f32 0.0, %v6057
        %v6059 = vpop.f32.mrf.mxu0
        %v6060 = vpop.f32.mrf.mxu0
        %v6061 = vadd.f32 0.0, %v6060
        %v6062 = vpop.f32.mrf.mxu0
        %6063 = vmatprep.mubr.bf16.mxu0 0
        %6064 = vmatmul.mubr.bf16.gmra.mxu0 %v5702
        %v6065 = vpop.f32.mrf.mxu0
        %v6066 = vadd.f32 0.0, %v6065
        %v6067 = vpop.f32.mrf.mxu0
        %v6068 = vpop.f32.mrf.mxu0
        %v6069 = vadd.f32 0.0, %v6068
        %v6070 = vpop.f32.mrf.mxu0
        %6071 = vmatprep.mubr.bf16.mxu0 0
        %6072 = vmatmul.mubr.bf16.gmra.mxu0 %v5710
        %v6073 = vpop.f32.mrf.mxu0
        %v6074 = vadd.f32 0.0, %v6073
        %v6075 = vpop.f32.mrf.mxu0
        %v6076 = vpop.f32.mrf.mxu0
        %v6077 = vadd.f32 0.0, %v6076
        %v6078 = vpop.f32.mrf.mxu0
        %6079 = vmatprep.mubr.bf16.mxu0 0
        %6080 = vmatmul.mubr.bf16.gmra.mxu0 %v5718
        %v6081 = vpop.f32.mrf.mxu0
        %v6082 = vadd.f32 0.0, %v6081
        %v6083 = vpop.f32.mrf.mxu0
        %v6084 = vpop.f32.mrf.mxu0
        %v6085 = vadd.f32 0.0, %v6084
        %v6086 = vpop.f32.mrf.mxu0
        %6087 = vmatprep.mubr.bf16.mxu0 0
        %6088 = vmatmul.mubr.bf16.gmra.mxu0 %v5726
        %v6089 = vpop.f32.mrf.mxu0
        %v6090 = vadd.f32 0.0, %v6089
        %v6091 = vpop.f32.mrf.mxu0
        %v6092 = vpop.f32.mrf.mxu0
        %v6093 = vadd.f32 0.0, %v6092
        %v6094 = vpop.f32.mrf.mxu0
        %6095 = vmatprep.mubr.bf16.mxu0 0
        %6096 = vmatmul.mubr.bf16.gmra.mxu0 %v5734
        %v6097 = vpop.f32.mrf.mxu0
        %v6098 = vadd.f32 0.0, %v6097
        %v6099 = vpop.f32.mrf.mxu0
        %v6100 = vpop.f32.mrf.mxu0
        %v6101 = vadd.f32 0.0, %v6100
        %v6102 = vpop.f32.mrf.mxu0
        %6103 = vmatprep.mubr.bf16.mxu0 0
        %6104 = vmatmul.mubr.bf16.gmra.mxu0 %v5742
        %v6105 = vpop.f32.mrf.mxu0
        %v6106 = vadd.f32 0.0, %v6105
        %v6107 = vpop.f32.mrf.mxu0
        %v6108 = vpop.f32.mrf.mxu0
        %v6109 = vadd.f32 0.0, %v6108
        %v6110 = vpop.f32.mrf.mxu0
        %6111 = vmatprep.mubr.bf16.mxu0 0
        %6112 = vmatmul.mubr.bf16.gmra.mxu0 %v5750
        %v6113 = vpop.f32.mrf.mxu0
        %v6114 = vadd.f32 0.0, %v6113
        %v6115 = vpop.f32.mrf.mxu0
        %v6116 = vpop.f32.mrf.mxu0
        %v6117 = vadd.f32 0.0, %v6116
        %v6118 = vpop.f32.mrf.mxu0
        %6119 = vmatprep.mubr.bf16.mxu0 0
        %6120 = vmatmul.mubr.bf16.gmra.mxu0 %v5758
        %v6121 = vpop.f32.mrf.mxu0
        %v6122 = vadd.f32 0.0, %v6121
        %v6123 = vpop.f32.mrf.mxu0
        %v6124 = vpop.f32.mrf.mxu0
        %v6125 = vadd.f32 0.0, %v6124
        %v6126 = vpop.f32.mrf.mxu0
        %6127 = vmatprep.mubr.bf16.mxu0 0
        %6128 = vmatmul.mubr.bf16.gmra.mxu0 %v5766
        %v6129 = vpop.f32.mrf.mxu0
        %v6130 = vadd.f32 0.0, %v6129
        %v6131 = vpop.f32.mrf.mxu0
        %v6132 = vpop.f32.mrf.mxu0
        %v6133 = vadd.f32 0.0, %v6132
        %v6134 = vpop.f32.mrf.mxu0
        %6135 = vmatprep.mubr.bf16.mxu0 0
        %6136 = vmatmul.mubr.bf16.gmra.mxu0 %v5774
        %v6137 = vpop.f32.mrf.mxu0
        %v6138 = vadd.f32 0.0, %v6137
        %v6139 = vpop.f32.mrf.mxu0
        %v6140 = vpop.f32.mrf.mxu0
        %v6141 = vadd.f32 0.0, %v6140
        %v6142 = vpop.f32.mrf.mxu0
        %6143 = vmatprep.mubr.bf16.mxu0 0
        %6144 = vmatmul.mubr.bf16.gmra.mxu0 %v5782
        %v6145 = vpop.f32.mrf.mxu0
        %v6146 = vadd.f32 0.0, %v6145
        %v6147 = vpop.f32.mrf.mxu0
        %v6148 = vpop.f32.mrf.mxu0
        %v6149 = vadd.f32 0.0, %v6148
        %v6150 = vpop.f32.mrf.mxu0
        %6151 = vmatprep.mubr.bf16.mxu0 0
        %6152 = vmatmul.mubr.bf16.gmra.mxu0 %v5790
        %v6153 = vpop.f32.mrf.mxu0
        %v6154 = vadd.f32 0.0, %v6153
        %v6155 = vpop.f32.mrf.mxu0
        %v6156 = vpop.f32.mrf.mxu0
        %v6157 = vadd.f32 0.0, %v6156
        %v6158 = vpop.f32.mrf.mxu0
        %6159 = vmatprep.mubr.bf16.mxu0 0
        %6160 = vmatmul.mubr.bf16.gmra.mxu0 %v5798
        %v6161 = vpop.f32.mrf.mxu0
        %v6162 = vadd.f32 0.0, %v6161
        %v6163 = vpop.f32.mrf.mxu0
        %v6164 = vpop.f32.mrf.mxu0
        %v6165 = vadd.f32 0.0, %v6164
        %v6166 = vpop.f32.mrf.mxu0
        %6167 = vmatprep.mubr.bf16.mxu0 0
        %6168 = vmatmul.mubr.bf16.gmra.mxu0 %v5806
        %v6169 = vpop.f32.mrf.mxu0
        %v6170 = vadd.f32 0.0, %v6169
        %v6171 = vpop.f32.mrf.mxu0
        %v6172 = vpop.f32.mrf.mxu0
        %v6173 = vadd.f32 0.0, %v6172
        %v6174 = vpop.f32.mrf.mxu0
        %6175 = vmatprep.mubr.bf16.mxu0 0
        %6176 = vmatmul.mubr.bf16.gmra.mxu0 %v5814
        %v6177 = vpop.f32.mrf.mxu0
        %v6178 = vadd.f32 0.0, %v6177
        %v6179 = vpop.f32.mrf.mxu0
        %v6180 = vpop.f32.mrf.mxu0
        %v6181 = vadd.f32 0.0, %v6180
        %v6182 = vpop.f32.mrf.mxu0
        %6183 = vmatprep.mubr.bf16.mxu0 0
        %6184 = vmatmul.mubr.bf16.gmra.mxu0 %v5822
        %v6185 = vpop.f32.mrf.mxu0
        %v6186 = vadd.f32 0.0, %v6185
        %v6187 = vpop.f32.mrf.mxu0
        %v6188 = vpop.f32.mrf.mxu0
        %v6189 = vadd.f32 0.0, %v6188
        %v6190 = vpop.f32.mrf.mxu0
        %6191 = vmatprep.mubr.bf16.mxu0 0
        %6192 = vmatmul.mubr.bf16.gmra.mxu0 %v5830
        %v6193 = vpop.f32.mrf.mxu0
        %v6194 = vadd.f32 0.0, %v6193
        %v6195 = vpop.f32.mrf.mxu0
        %v6196 = vpop.f32.mrf.mxu0
        %v6197 = vadd.f32 0.0, %v6196
        %v6198 = vpop.f32.mrf.mxu0
        %6199 = vmatprep.mubr.bf16.mxu0 0
        %6200 = vmatmul.mubr.bf16.gmra.mxu0 %v5838
        %v6201 = vpop.f32.mrf.mxu0
        %v6202 = vadd.f32 0.0, %v6201
        %v6203 = vpop.f32.mrf.mxu0
        %v6204 = vpop.f32.mrf.mxu0
        %v6205 = vadd.f32 0.0, %v6204
        %v6206 = vpop.f32.mrf.mxu0
        %6207 = vdwg.mxu0
        %v6208 = vadd.f32 %v5270, %v5954
        %v6209 = vadd.f32 %v5271, %v5957
        %v6210 = vadd.f32 %v5272, %v5962
        %v6211 = vadd.f32 %v5273, %v5965
        %v6212 = vadd.f32 %v5274, %v5970
        %v6213 = vadd.f32 %v5275, %v5973
        %v6214 = vadd.f32 %v5276, %v5978
        %v6215 = vadd.f32 %v5277, %v5981
        %v6216 = vadd.f32 %v5278, %v5986
        %v6217 = vadd.f32 %v5279, %v5989
        %v6218 = vadd.f32 %v5280, %v5994
        %v6219 = vadd.f32 %v5281, %v5997
        %v6220 = vadd.f32 %v5282, %v6002
        %v6221 = vadd.f32 %v5283, %v6005
        %v6222 = vadd.f32 %v5284, %v6010
        %v6223 = vadd.f32 %v5285, %v6013
        %v6224 = vadd.f32 %v5286, %v6018
        %v6225 = vadd.f32 %v5287, %v6021
        %v6226 = vadd.f32 %v5288, %v6026
        %v6227 = vadd.f32 %v5289, %v6029
        %v6228 = vadd.f32 %v5290, %v6034
        %v6229 = vadd.f32 %v5291, %v6037
        %v6230 = vadd.f32 %v5292, %v6042
        %v6231 = vadd.f32 %v5293, %v6045
        %v6232 = vadd.f32 %v5294, %v6050
        %v6233 = vadd.f32 %v5295, %v6053
        %v6234 = vadd.f32 %v5296, %v6058
        %v6235 = vadd.f32 %v5297, %v6061
        %v6236 = vadd.f32 %v5298, %v6066
        %v6237 = vadd.f32 %v5299, %v6069
        %v6238 = vadd.f32 %v5300, %v6074
        %v6239 = vadd.f32 %v5301, %v6077
        %v6240 = vadd.f32 %v5302, %v6082
        %v6241 = vadd.f32 %v5303, %v6085
        %v6242 = vadd.f32 %v5304, %v6090
        %v6243 = vadd.f32 %v5305, %v6093
        %v6244 = vadd.f32 %v5306, %v6098
        %v6245 = vadd.f32 %v5307, %v6101
        %v6246 = vadd.f32 %v5308, %v6106
        %v6247 = vadd.f32 %v5309, %v6109
        %v6248 = vadd.f32 %v5310, %v6114
        %v6249 = vadd.f32 %v5311, %v6117
        %v6250 = vadd.f32 %v5312, %v6122
        %v6251 = vadd.f32 %v5313, %v6125
        %v6252 = vadd.f32 %v5314, %v6130
        %v6253 = vadd.f32 %v5315, %v6133
        %v6254 = vadd.f32 %v5316, %v6138
        %v6255 = vadd.f32 %v5317, %v6141
        %v6256 = vadd.f32 %v5318, %v6146
        %v6257 = vadd.f32 %v5319, %v6149
        %v6258 = vadd.f32 %v5320, %v6154
        %v6259 = vadd.f32 %v5321, %v6157
        %v6260 = vadd.f32 %v5322, %v6162
        %v6261 = vadd.f32 %v5323, %v6165
        %v6262 = vadd.f32 %v5324, %v6170
        %v6263 = vadd.f32 %v5325, %v6173
        %v6264 = vadd.f32 %v5326, %v6178
        %v6265 = vadd.f32 %v5327, %v6181
        %v6266 = vadd.f32 %v5328, %v6186
        %v6267 = vadd.f32 %v5329, %v6189
        %v6268 = vadd.f32 %v5330, %v6194
        %v6269 = vadd.f32 %v5331, %v6197
        %v6270 = vadd.f32 %v5332, %v6202
        %v6271 = vadd.f32 %v5333, %v6205
        %v6272 = vld [vmem:[%s229 + $0x20] sm:$0xe]
        %s6273 = scalar_lea.vmem [#allocation6], 512
        %v6274 = vld [vmem:[%s6273] sm:$0xf]
        %v6275 = vld [vmem:[%s6273 + $0x4] sm:$0xf]
        %v6276 = vld [vmem:[%s6273 + $0x8] sm:$0xf]
        %v6277 = vld [vmem:[%s6273 + $0xc] sm:$0xf]
        %v6278 = vld [vmem:[%s6273 + $0x10] sm:$0xf]
        %v6279 = vld [vmem:[%s6273 + $0x14] sm:$0xf]
        %v6280 = vld [vmem:[%s6273 + $0x18] sm:$0xf]
        %v6281 = vld [vmem:[%s6273 + $0x1c] sm:$0xf]
        %v6282 = vld [vmem:[%s6273 + $0x20] sm:$0xf]
        %v6283 = vld [vmem:[%s6273 + $0x24] sm:$0xf]
        %v6284 = vld [vmem:[%s6273 + $0x28] sm:$0xf]
        %v6285 = vld [vmem:[%s6273 + $0x2c] sm:$0xf]
        %v6286 = vld [vmem:[%s6273 + $0x30] sm:$0xf]
        %v6287 = vld [vmem:[%s6273 + $0x34] sm:$0xf]
        %v6288 = vld [vmem:[%s6273 + $0x38] sm:$0xf]
        %v6289 = vld [vmem:[%s6273 + $0x3c] sm:$0xf]
        %v6291 = vunpack.c.l.b16 %v6272
        %v6292 = vpack.c.b16 %v5482, %v6291
        %v6293 = vrot.slane %v6292, 1
        %v6294 = vrot.slane %v5547, 1
        %v6295 = vsel %vm2030, %v6293, %v6294
        %v6296 = vrot.slane %v5548, 1
        %v6297 = vsel %vm2030, %v6294, %v6296
        %v6298 = vrot.slane %v5549, 1
        %v6299 = vsel %vm2030, %v6296, %v6298
        %v6300 = vrot.slane %v5550, 1
        %v6301 = vsel %vm2030, %v6298, %v6300
        %v6302 = vrot.slane %v5551, 1
        %v6303 = vsel %vm2030, %v6300, %v6302
        %v6304 = vrot.slane %v5552, 1
        %v6305 = vsel %vm2030, %v6302, %v6304
        %v6306 = vrot.slane %v5553, 1
        %v6307 = vsel %vm2030, %v6304, %v6306
        %v6308 = vrot.slane %v5554, 1
        %v6309 = vsel %vm2030, %v6306, %v6308
        %v6310 = vrot.slane %v5555, 1
        %v6311 = vsel %vm2030, %v6308, %v6310
        %v6312 = vrot.slane %v5556, 1
        %v6313 = vsel %vm2030, %v6310, %v6312
        %v6314 = vrot.slane %v5557, 1
        %v6315 = vsel %vm2030, %v6312, %v6314
        %v6316 = vrot.slane %v5558, 1
        %v6317 = vsel %vm2030, %v6314, %v6316
        %v6318 = vrot.slane %v5559, 1
        %v6319 = vsel %vm2030, %v6316, %v6318
        %v6320 = vrot.slane %v5560, 1
        %v6321 = vsel %vm2030, %v6318, %v6320
        %v6322 = vrot.slane %v5561, 1
        %v6323 = vsel %vm2030, %v6320, %v6322
        %v6324 = vrot.slane %v5562, 1
        %v6325 = vsel %vm2030, %v6322, %v6324
        %v6326 = vrot.slane %v5563, 1
        %v6327 = vsel %vm2030, %v6324, %v6326
        %v6328 = vrot.slane %v5564, 1
        %v6329 = vsel %vm2030, %v6326, %v6328
        %v6330 = vrot.slane %v5565, 1
        %v6331 = vsel %vm2030, %v6328, %v6330
        %v6332 = vrot.slane %v5566, 1
        %v6333 = vsel %vm2030, %v6330, %v6332
        %v6334 = vrot.slane %v5567, 1
        %v6335 = vsel %vm2030, %v6332, %v6334
        %v6336 = vrot.slane %v5568, 1
        %v6337 = vsel %vm2030, %v6334, %v6336
        %v6338 = vrot.slane %v5569, 1
        %v6339 = vsel %vm2030, %v6336, %v6338
        %v6340 = vrot.slane %v5570, 1
        %v6341 = vsel %vm2030, %v6338, %v6340
        %v6342 = vrot.slane %v5571, 1
        %v6343 = vsel %vm2030, %v6340, %v6342
        %v6344 = vrot.slane %v5572, 1
        %v6345 = vsel %vm2030, %v6342, %v6344
        %v6346 = vrot.slane %v5573, 1
        %v6347 = vsel %vm2030, %v6344, %v6346
        %v6348 = vrot.slane %v5574, 1
        %v6349 = vsel %vm2030, %v6346, %v6348
        %v6350 = vrot.slane %v5575, 1
        %v6351 = vsel %vm2030, %v6348, %v6350
        %v6352 = vrot.slane %v5576, 1
        %v6353 = vsel %vm2030, %v6350, %v6352
        %v6354 = vrot.slane %v5577, 1
        %v6355 = vsel %vm2030, %v6352, %v6354
        %v6356 = vrot.slane %v5578, 1
        %v6357 = vsel %vm2030, %v6354, %v6356
        %v6406 = vunpack.c.l.b16 %v6274
        %v6407 = vunpack.c.l.b16 %v6275
        %v6408 = vunpack.c.l.b16 %v6276
        %v6409 = vunpack.c.l.b16 %v6277
        %v6410 = vunpack.c.l.b16 %v6278
        %v6411 = vunpack.c.l.b16 %v6279
        %v6412 = vunpack.c.l.b16 %v6280
        %v6413 = vunpack.c.l.b16 %v6281
        %v6414 = vunpack.c.l.b16 %v6282
        %v6415 = vunpack.c.l.b16 %v6283
        %v6416 = vunpack.c.l.b16 %v6284
        %v6417 = vunpack.c.l.b16 %v6285
        %v6418 = vunpack.c.l.b16 %v6286
        %v6419 = vunpack.c.l.b16 %v6287
        %v6420 = vunpack.c.l.b16 %v6288
        %v6421 = vunpack.c.l.b16 %v6289
        %v6422 = vpack.c.b16 %v6407, %v6406
        %v6423 = vpack.c.b16 %v6409, %v6408
        %v6424 = vpack.c.b16 %v6411, %v6410
        %v6425 = vpack.c.b16 %v6413, %v6412
        %v6426 = vpack.c.b16 %v6415, %v6414
        %v6427 = vpack.c.b16 %v6417, %v6416
        %v6428 = vpack.c.b16 %v6419, %v6418
        %v6429 = vpack.c.b16 %v6421, %v6420
        %6438 = vmatprep.subr.bf16.mxu0 0
        %6439 = vmatpush1.bf16.msra.mxu0 %v6429
        %6440 = vmatprep.subr.bf16.mxu0 0
        %6441 = vmatpush1.bf16.msra.mxu0 %v6428
        %6442 = vmatprep.subr.bf16.mxu0 0
        %6443 = vmatpush1.bf16.msra.mxu0 %v6427
        %6444 = vmatprep.subr.bf16.mxu0 0
        %6445 = vmatpush1.bf16.msra.mxu0 %v6426
        %6446 = vmatprep.subr.bf16.mxu0 0
        %6447 = vmatpush1.bf16.msra.mxu0 %v6425
        %6448 = vmatprep.subr.bf16.mxu0 0
        %6449 = vmatpush1.bf16.msra.mxu0 %v6424
        %6450 = vmatprep.subr.bf16.mxu0 0
        %6451 = vmatpush1.bf16.msra.mxu0 %v6423
        %6452 = vmatprep.subr.bf16.mxu0 0
        %6453 = vmatpush1.bf16.msra.mxu0 %v6422
        %6454 = vmatprep.subr.bf16.mxu0 0
        %6455 = vmatpush2.bf16.msra.mxu0 0
        %6456 = vmatprep.subr.bf16.mxu0 0
        %6457 = vmatpush2.bf16.msra.mxu0 0
        %6458 = vmatprep.subr.bf16.mxu0 0
        %6459 = vmatpush2.bf16.msra.mxu0 0
        %6460 = vmatprep.subr.bf16.mxu0 0
        %6461 = vmatpush2.bf16.msra.mxu0 0
        %6462 = vmatprep.subr.bf16.mxu0 0
        %6463 = vmatpush2.bf16.msra.mxu0 0
        %6464 = vmatprep.subr.bf16.mxu0 0
        %6465 = vmatpush2.bf16.msra.mxu0 0
        %6466 = vmatprep.subr.bf16.mxu0 0
        %6467 = vmatpush2.bf16.msra.mxu0 0
        %6468 = vmatprep.subr.bf16.mxu0 0
        %6469 = vmatpush2.bf16.msra.mxu0 0
        %6470 = vmatprep.mubr.bf16.mxu0 0
        %6471 = vmatmul.mubr.bf16.gmra.mxu0 %v6295
        %v6472 = vpop.f32.mrf.mxu0
        %v6473 = vadd.f32 0.0, %v6472
        %v6474 = vpop.f32.mrf.mxu0
        %v6475 = vpop.f32.mrf.mxu0
        %v6476 = vadd.f32 0.0, %v6475
        %v6477 = vpop.f32.mrf.mxu0
        %6478 = vmatprep.mubr.bf16.mxu0 0
        %6479 = vmatmul.mubr.bf16.gmra.mxu0 %v6297
        %v6480 = vpop.f32.mrf.mxu0
        %v6481 = vadd.f32 0.0, %v6480
        %v6482 = vpop.f32.mrf.mxu0
        %v6483 = vpop.f32.mrf.mxu0
        %v6484 = vadd.f32 0.0, %v6483
        %v6485 = vpop.f32.mrf.mxu0
        %6486 = vmatprep.mubr.bf16.mxu0 0
        %6487 = vmatmul.mubr.bf16.gmra.mxu0 %v6299
        %v6488 = vpop.f32.mrf.mxu0
        %v6489 = vadd.f32 0.0, %v6488
        %v6490 = vpop.f32.mrf.mxu0
        %v6491 = vpop.f32.mrf.mxu0
        %v6492 = vadd.f32 0.0, %v6491
        %v6493 = vpop.f32.mrf.mxu0
        %6494 = vmatprep.mubr.bf16.mxu0 0
        %6495 = vmatmul.mubr.bf16.gmra.mxu0 %v6301
        %v6496 = vpop.f32.mrf.mxu0
        %v6497 = vadd.f32 0.0, %v6496
        %v6498 = vpop.f32.mrf.mxu0
        %v6499 = vpop.f32.mrf.mxu0
        %v6500 = vadd.f32 0.0, %v6499
        %v6501 = vpop.f32.mrf.mxu0
        %6502 = vmatprep.mubr.bf16.mxu0 0
        %6503 = vmatmul.mubr.bf16.gmra.mxu0 %v6303
        %v6504 = vpop.f32.mrf.mxu0
        %v6505 = vadd.f32 0.0, %v6504
        %v6506 = vpop.f32.mrf.mxu0
        %v6507 = vpop.f32.mrf.mxu0
        %v6508 = vadd.f32 0.0, %v6507
        %v6509 = vpop.f32.mrf.mxu0
        %6510 = vmatprep.mubr.bf16.mxu0 0
        %6511 = vmatmul.mubr.bf16.gmra.mxu0 %v6305
        %v6512 = vpop.f32.mrf.mxu0
        %v6513 = vadd.f32 0.0, %v6512
        %v6514 = vpop.f32.mrf.mxu0
        %v6515 = vpop.f32.mrf.mxu0
        %v6516 = vadd.f32 0.0, %v6515
        %v6517 = vpop.f32.mrf.mxu0
        %6518 = vmatprep.mubr.bf16.mxu0 0
        %6519 = vmatmul.mubr.bf16.gmra.mxu0 %v6307
        %v6520 = vpop.f32.mrf.mxu0
        %v6521 = vadd.f32 0.0, %v6520
        %v6522 = vpop.f32.mrf.mxu0
        %v6523 = vpop.f32.mrf.mxu0
        %v6524 = vadd.f32 0.0, %v6523
        %v6525 = vpop.f32.mrf.mxu0
        %6526 = vmatprep.mubr.bf16.mxu0 0
        %6527 = vmatmul.mubr.bf16.gmra.mxu0 %v6309
        %v6528 = vpop.f32.mrf.mxu0
        %v6529 = vadd.f32 0.0, %v6528
        %v6530 = vpop.f32.mrf.mxu0
        %v6531 = vpop.f32.mrf.mxu0
        %v6532 = vadd.f32 0.0, %v6531
        %v6533 = vpop.f32.mrf.mxu0
        %6534 = vmatprep.mubr.bf16.mxu0 0
        %6535 = vmatmul.mubr.bf16.gmra.mxu0 %v6311
        %v6536 = vpop.f32.mrf.mxu0
        %v6537 = vadd.f32 0.0, %v6536
        %v6538 = vpop.f32.mrf.mxu0
        %v6539 = vpop.f32.mrf.mxu0
        %v6540 = vadd.f32 0.0, %v6539
        %v6541 = vpop.f32.mrf.mxu0
        %6542 = vmatprep.mubr.bf16.mxu0 0
        %6543 = vmatmul.mubr.bf16.gmra.mxu0 %v6313
        %v6544 = vpop.f32.mrf.mxu0
        %v6545 = vadd.f32 0.0, %v6544
        %v6546 = vpop.f32.mrf.mxu0
        %v6547 = vpop.f32.mrf.mxu0
        %v6548 = vadd.f32 0.0, %v6547
        %v6549 = vpop.f32.mrf.mxu0
        %6550 = vmatprep.mubr.bf16.mxu0 0
        %6551 = vmatmul.mubr.bf16.gmra.mxu0 %v6315
        %v6552 = vpop.f32.mrf.mxu0
        %v6553 = vadd.f32 0.0, %v6552
        %v6554 = vpop.f32.mrf.mxu0
        %v6555 = vpop.f32.mrf.mxu0
        %v6556 = vadd.f32 0.0, %v6555
        %v6557 = vpop.f32.mrf.mxu0
        %6558 = vmatprep.mubr.bf16.mxu0 0
        %6559 = vmatmul.mubr.bf16.gmra.mxu0 %v6317
        %v6560 = vpop.f32.mrf.mxu0
        %v6561 = vadd.f32 0.0, %v6560
        %v6562 = vpop.f32.mrf.mxu0
        %v6563 = vpop.f32.mrf.mxu0
        %v6564 = vadd.f32 0.0, %v6563
        %v6565 = vpop.f32.mrf.mxu0
        %6566 = vmatprep.mubr.bf16.mxu0 0
        %6567 = vmatmul.mubr.bf16.gmra.mxu0 %v6319
        %v6568 = vpop.f32.mrf.mxu0
        %v6569 = vadd.f32 0.0, %v6568
        %v6570 = vpop.f32.mrf.mxu0
        %v6571 = vpop.f32.mrf.mxu0
        %v6572 = vadd.f32 0.0, %v6571
        %v6573 = vpop.f32.mrf.mxu0
        %6574 = vmatprep.mubr.bf16.mxu0 0
        %6575 = vmatmul.mubr.bf16.gmra.mxu0 %v6321
        %v6576 = vpop.f32.mrf.mxu0
        %v6577 = vadd.f32 0.0, %v6576
        %v6578 = vpop.f32.mrf.mxu0
        %v6579 = vpop.f32.mrf.mxu0
        %v6580 = vadd.f32 0.0, %v6579
        %v6581 = vpop.f32.mrf.mxu0
        %6582 = vmatprep.mubr.bf16.mxu0 0
        %6583 = vmatmul.mubr.bf16.gmra.mxu0 %v6323
        %v6584 = vpop.f32.mrf.mxu0
        %v6585 = vadd.f32 0.0, %v6584
        %v6586 = vpop.f32.mrf.mxu0
        %v6587 = vpop.f32.mrf.mxu0
        %v6588 = vadd.f32 0.0, %v6587
        %v6589 = vpop.f32.mrf.mxu0
        %6590 = vmatprep.mubr.bf16.mxu0 0
        %6591 = vmatmul.mubr.bf16.gmra.mxu0 %v6325
        %v6592 = vpop.f32.mrf.mxu0
        %v6593 = vadd.f32 0.0, %v6592
        %v6594 = vpop.f32.mrf.mxu0
        %v6595 = vpop.f32.mrf.mxu0
        %v6596 = vadd.f32 0.0, %v6595
        %v6597 = vpop.f32.mrf.mxu0
        %6598 = vmatprep.mubr.bf16.mxu0 0
        %6599 = vmatmul.mubr.bf16.gmra.mxu0 %v6327
        %v6600 = vpop.f32.mrf.mxu0
        %v6601 = vadd.f32 0.0, %v6600
        %v6602 = vpop.f32.mrf.mxu0
        %v6603 = vpop.f32.mrf.mxu0
        %v6604 = vadd.f32 0.0, %v6603
        %v6605 = vpop.f32.mrf.mxu0
        %6606 = vmatprep.mubr.bf16.mxu0 0
        %6607 = vmatmul.mubr.bf16.gmra.mxu0 %v6329
        %v6608 = vpop.f32.mrf.mxu0
        %v6609 = vadd.f32 0.0, %v6608
        %v6610 = vpop.f32.mrf.mxu0
        %v6611 = vpop.f32.mrf.mxu0
        %v6612 = vadd.f32 0.0, %v6611
        %v6613 = vpop.f32.mrf.mxu0
        %6614 = vmatprep.mubr.bf16.mxu0 0
        %6615 = vmatmul.mubr.bf16.gmra.mxu0 %v6331
        %v6616 = vpop.f32.mrf.mxu0
        %v6617 = vadd.f32 0.0, %v6616
        %v6618 = vpop.f32.mrf.mxu0
        %v6619 = vpop.f32.mrf.mxu0
        %v6620 = vadd.f32 0.0, %v6619
        %v6621 = vpop.f32.mrf.mxu0
        %6622 = vmatprep.mubr.bf16.mxu0 0
        %6623 = vmatmul.mubr.bf16.gmra.mxu0 %v6333
        %v6624 = vpop.f32.mrf.mxu0
        %v6625 = vadd.f32 0.0, %v6624
        %v6626 = vpop.f32.mrf.mxu0
        %v6627 = vpop.f32.mrf.mxu0
        %v6628 = vadd.f32 0.0, %v6627
        %v6629 = vpop.f32.mrf.mxu0
        %6630 = vmatprep.mubr.bf16.mxu0 0
        %6631 = vmatmul.mubr.bf16.gmra.mxu0 %v6335
        %v6632 = vpop.f32.mrf.mxu0
        %v6633 = vadd.f32 0.0, %v6632
        %v6634 = vpop.f32.mrf.mxu0
        %v6635 = vpop.f32.mrf.mxu0
        %v6636 = vadd.f32 0.0, %v6635
        %v6637 = vpop.f32.mrf.mxu0
        %6638 = vmatprep.mubr.bf16.mxu0 0
        %6639 = vmatmul.mubr.bf16.gmra.mxu0 %v6337
        %v6640 = vpop.f32.mrf.mxu0
        %v6641 = vadd.f32 0.0, %v6640
        %v6642 = vpop.f32.mrf.mxu0
        %v6643 = vpop.f32.mrf.mxu0
        %v6644 = vadd.f32 0.0, %v6643
        %v6645 = vpop.f32.mrf.mxu0
        %6646 = vmatprep.mubr.bf16.mxu0 0
        %6647 = vmatmul.mubr.bf16.gmra.mxu0 %v6339
        %v6648 = vpop.f32.mrf.mxu0
        %v6649 = vadd.f32 0.0, %v6648
        %v6650 = vpop.f32.mrf.mxu0
        %v6651 = vpop.f32.mrf.mxu0
        %v6652 = vadd.f32 0.0, %v6651
        %v6653 = vpop.f32.mrf.mxu0
        %6654 = vmatprep.mubr.bf16.mxu0 0
        %6655 = vmatmul.mubr.bf16.gmra.mxu0 %v6341
        %v6656 = vpop.f32.mrf.mxu0
        %v6657 = vadd.f32 0.0, %v6656
        %v6658 = vpop.f32.mrf.mxu0
        %v6659 = vpop.f32.mrf.mxu0
        %v6660 = vadd.f32 0.0, %v6659
        %v6661 = vpop.f32.mrf.mxu0
        %6662 = vmatprep.mubr.bf16.mxu0 0
        %6663 = vmatmul.mubr.bf16.gmra.mxu0 %v6343
        %v6664 = vpop.f32.mrf.mxu0
        %v6665 = vadd.f32 0.0, %v6664
        %v6666 = vpop.f32.mrf.mxu0
        %v6667 = vpop.f32.mrf.mxu0
        %v6668 = vadd.f32 0.0, %v6667
        %v6669 = vpop.f32.mrf.mxu0
        %6670 = vmatprep.mubr.bf16.mxu0 0
        %6671 = vmatmul.mubr.bf16.gmra.mxu0 %v6345
        %v6672 = vpop.f32.mrf.mxu0
        %v6673 = vadd.f32 0.0, %v6672
        %v6674 = vpop.f32.mrf.mxu0
        %v6675 = vpop.f32.mrf.mxu0
        %v6676 = vadd.f32 0.0, %v6675
        %v6677 = vpop.f32.mrf.mxu0
        %6678 = vmatprep.mubr.bf16.mxu0 0
        %6679 = vmatmul.mubr.bf16.gmra.mxu0 %v6347
        %v6680 = vpop.f32.mrf.mxu0
        %v6681 = vadd.f32 0.0, %v6680
        %v6682 = vpop.f32.mrf.mxu0
        %v6683 = vpop.f32.mrf.mxu0
        %v6684 = vadd.f32 0.0, %v6683
        %v6685 = vpop.f32.mrf.mxu0
        %6686 = vmatprep.mubr.bf16.mxu0 0
        %6687 = vmatmul.mubr.bf16.gmra.mxu0 %v6349
        %v6688 = vpop.f32.mrf.mxu0
        %v6689 = vadd.f32 0.0, %v6688
        %v6690 = vpop.f32.mrf.mxu0
        %v6691 = vpop.f32.mrf.mxu0
        %v6692 = vadd.f32 0.0, %v6691
        %v6693 = vpop.f32.mrf.mxu0
        %6694 = vmatprep.mubr.bf16.mxu0 0
        %6695 = vmatmul.mubr.bf16.gmra.mxu0 %v6351
        %v6696 = vpop.f32.mrf.mxu0
        %v6697 = vadd.f32 0.0, %v6696
        %v6698 = vpop.f32.mrf.mxu0
        %v6699 = vpop.f32.mrf.mxu0
        %v6700 = vadd.f32 0.0, %v6699
        %v6701 = vpop.f32.mrf.mxu0
        %6702 = vmatprep.mubr.bf16.mxu0 0
        %6703 = vmatmul.mubr.bf16.gmra.mxu0 %v6353
        %v6704 = vpop.f32.mrf.mxu0
        %v6705 = vadd.f32 0.0, %v6704
        %v6706 = vpop.f32.mrf.mxu0
        %v6707 = vpop.f32.mrf.mxu0
        %v6708 = vadd.f32 0.0, %v6707
        %v6709 = vpop.f32.mrf.mxu0
        %6710 = vmatprep.mubr.bf16.mxu0 0
        %6711 = vmatmul.mubr.bf16.gmra.mxu0 %v6355
        %v6712 = vpop.f32.mrf.mxu0
        %v6713 = vadd.f32 0.0, %v6712
        %v6714 = vpop.f32.mrf.mxu0
        %v6715 = vpop.f32.mrf.mxu0
        %v6716 = vadd.f32 0.0, %v6715
        %v6717 = vpop.f32.mrf.mxu0
        %6718 = vmatprep.mubr.bf16.mxu0 0
        %6719 = vmatmul.mubr.bf16.gmra.mxu0 %v6357
        %v6720 = vpop.f32.mrf.mxu0
        %v6721 = vadd.f32 0.0, %v6720
        %v6722 = vpop.f32.mrf.mxu0
        %v6723 = vpop.f32.mrf.mxu0
        %v6724 = vadd.f32 0.0, %v6723
        %v6725 = vpop.f32.mrf.mxu0
        %6726 = vdwg.mxu0
        %v6727 = vadd.f32 %v6208, %v6473
        %v6728 = vadd.f32 %v6209, %v6476
        %v6729 = vadd.f32 %v6210, %v6481
        %v6730 = vadd.f32 %v6211, %v6484
        %v6731 = vadd.f32 %v6212, %v6489
        %v6732 = vadd.f32 %v6213, %v6492
        %v6733 = vadd.f32 %v6214, %v6497
        %v6734 = vadd.f32 %v6215, %v6500
        %v6735 = vadd.f32 %v6216, %v6505
        %v6736 = vadd.f32 %v6217, %v6508
        %v6737 = vadd.f32 %v6218, %v6513
        %v6738 = vadd.f32 %v6219, %v6516
        %v6739 = vadd.f32 %v6220, %v6521
        %v6740 = vadd.f32 %v6221, %v6524
        %v6741 = vadd.f32 %v6222, %v6529
        %v6742 = vadd.f32 %v6223, %v6532
        %v6743 = vadd.f32 %v6224, %v6537
        %v6744 = vadd.f32 %v6225, %v6540
        %v6745 = vadd.f32 %v6226, %v6545
        %v6746 = vadd.f32 %v6227, %v6548
        %v6747 = vadd.f32 %v6228, %v6553
        %v6748 = vadd.f32 %v6229, %v6556
        %v6749 = vadd.f32 %v6230, %v6561
        %v6750 = vadd.f32 %v6231, %v6564
        %v6751 = vadd.f32 %v6232, %v6569
        %v6752 = vadd.f32 %v6233, %v6572
        %v6753 = vadd.f32 %v6234, %v6577
        %v6754 = vadd.f32 %v6235, %v6580
        %v6755 = vadd.f32 %v6236, %v6585
        %v6756 = vadd.f32 %v6237, %v6588
        %v6757 = vadd.f32 %v6238, %v6593
        %v6758 = vadd.f32 %v6239, %v6596
        %v6759 = vadd.f32 %v6240, %v6601
        %v6760 = vadd.f32 %v6241, %v6604
        %v6761 = vadd.f32 %v6242, %v6609
        %v6762 = vadd.f32 %v6243, %v6612
        %v6763 = vadd.f32 %v6244, %v6617
        %v6764 = vadd.f32 %v6245, %v6620
        %v6765 = vadd.f32 %v6246, %v6625
        %v6766 = vadd.f32 %v6247, %v6628
        %v6767 = vadd.f32 %v6248, %v6633
        %v6768 = vadd.f32 %v6249, %v6636
        %v6769 = vadd.f32 %v6250, %v6641
        %v6770 = vadd.f32 %v6251, %v6644
        %v6771 = vadd.f32 %v6252, %v6649
        %v6772 = vadd.f32 %v6253, %v6652
        %v6773 = vadd.f32 %v6254, %v6657
        %v6774 = vadd.f32 %v6255, %v6660
        %v6775 = vadd.f32 %v6256, %v6665
        %v6776 = vadd.f32 %v6257, %v6668
        %v6777 = vadd.f32 %v6258, %v6673
        %v6778 = vadd.f32 %v6259, %v6676
        %v6779 = vadd.f32 %v6260, %v6681
        %v6780 = vadd.f32 %v6261, %v6684
        %v6781 = vadd.f32 %v6262, %v6689
        %v6782 = vadd.f32 %v6263, %v6692
        %v6783 = vadd.f32 %v6264, %v6697
        %v6784 = vadd.f32 %v6265, %v6700
        %v6785 = vadd.f32 %v6266, %v6705
        %v6786 = vadd.f32 %v6267, %v6708
        %v6787 = vadd.f32 %v6268, %v6713
        %v6788 = vadd.f32 %v6269, %v6716
        %v6789 = vadd.f32 %v6270, %v6721
        %v6790 = vadd.f32 %v6271, %v6724
        %6791 = vst [vmem:[#allocation2] sm:$0xff] %v6727
        %6792 = vst [vmem:[#allocation2 + $0x8] sm:$0xff] %v6728
        %6793 = vst [vmem:[#allocation2 + $0x10] sm:$0xff] %v6729
        %6794 = vst [vmem:[#allocation2 + $0x18] sm:$0xff] %v6730
        %6795 = vst [vmem:[#allocation2 + $0x20] sm:$0xff] %v6731
        %6796 = vst [vmem:[#allocation2 + $0x28] sm:$0xff] %v6732
        %6797 = vst [vmem:[#allocation2 + $0x30] sm:$0xff] %v6733
        %6798 = vst [vmem:[#allocation2 + $0x38] sm:$0xff] %v6734
        %6799 = vst [vmem:[#allocation2 + $0x40] sm:$0xff] %v6735
        %6800 = vst [vmem:[#allocation2 + $0x48] sm:$0xff] %v6736
        %6801 = vst [vmem:[#allocation2 + $0x50] sm:$0xff] %v6737
        %6802 = vst [vmem:[#allocation2 + $0x58] sm:$0xff] %v6738
        %6803 = vst [vmem:[#allocation2 + $0x60] sm:$0xff] %v6739
        %6804 = vst [vmem:[#allocation2 + $0x68] sm:$0xff] %v6740
        %6805 = vst [vmem:[#allocation2 + $0x70] sm:$0xff] %v6741
        %6806 = vst [vmem:[#allocation2 + $0x78] sm:$0xff] %v6742
        %6807 = vst [vmem:[#allocation2 + $0x80] sm:$0xff] %v6743
        %6808 = vst [vmem:[#allocation2 + $0x88] sm:$0xff] %v6744
        %6809 = vst [vmem:[#allocation2 + $0x90] sm:$0xff] %v6745
        %6810 = vst [vmem:[#allocation2 + $0x98] sm:$0xff] %v6746
        %6811 = vst [vmem:[#allocation2 + $0xa0] sm:$0xff] %v6747
        %6812 = vst [vmem:[#allocation2 + $0xa8] sm:$0xff] %v6748
        %6813 = vst [vmem:[#allocation2 + $0xb0] sm:$0xff] %v6749
        %6814 = vst [vmem:[#allocation2 + $0xb8] sm:$0xff] %v6750
        %6815 = vst [vmem:[#allocation2 + $0xc0] sm:$0xff] %v6751
        %6816 = vst [vmem:[#allocation2 + $0xc8] sm:$0xff] %v6752
        %6817 = vst [vmem:[#allocation2 + $0xd0] sm:$0xff] %v6753
        %6818 = vst [vmem:[#allocation2 + $0xd8] sm:$0xff] %v6754
        %6819 = vst [vmem:[#allocation2 + $0xe0] sm:$0xff] %v6755
        %6820 = vst [vmem:[#allocation2 + $0xe8] sm:$0xff] %v6756
        %6821 = vst [vmem:[#allocation2 + $0xf0] sm:$0xff] %v6757
        %6822 = vst [vmem:[#allocation2 + $0xf8] sm:$0xff] %v6758
        %6823 = vst [vmem:[#allocation2 + $0x100] sm:$0xff] %v6759
        %6824 = vst [vmem:[#allocation2 + $0x108] sm:$0xff] %v6760
        %6825 = vst [vmem:[#allocation2 + $0x110] sm:$0xff] %v6761
        %6826 = vst [vmem:[#allocation2 + $0x118] sm:$0xff] %v6762
        %6827 = vst [vmem:[#allocation2 + $0x120] sm:$0xff] %v6763
        %6828 = vst [vmem:[#allocation2 + $0x128] sm:$0xff] %v6764
        %6829 = vst [vmem:[#allocation2 + $0x130] sm:$0xff] %v6765
        %6830 = vst [vmem:[#allocation2 + $0x138] sm:$0xff] %v6766
        %6831 = vst [vmem:[#allocation2 + $0x140] sm:$0xff] %v6767
        %6832 = vst [vmem:[#allocation2 + $0x148] sm:$0xff] %v6768
        %6833 = vst [vmem:[#allocation2 + $0x150] sm:$0xff] %v6769
        %6834 = vst [vmem:[#allocation2 + $0x158] sm:$0xff] %v6770
        %6835 = vst [vmem:[#allocation2 + $0x160] sm:$0xff] %v6771
        %6836 = vst [vmem:[#allocation2 + $0x168] sm:$0xff] %v6772
        %6837 = vst [vmem:[#allocation2 + $0x170] sm:$0xff] %v6773
        %6838 = vst [vmem:[#allocation2 + $0x178] sm:$0xff] %v6774
        %6839 = vst [vmem:[#allocation2 + $0x180] sm:$0xff] %v6775
        %6840 = vst [vmem:[#allocation2 + $0x188] sm:$0xff] %v6776
        %6841 = vst [vmem:[#allocation2 + $0x190] sm:$0xff] %v6777
        %6842 = vst [vmem:[#allocation2 + $0x198] sm:$0xff] %v6778
        %6843 = vst [vmem:[#allocation2 + $0x1a0] sm:$0xff] %v6779
        %6844 = vst [vmem:[#allocation2 + $0x1a8] sm:$0xff] %v6780
        %6845 = vst [vmem:[#allocation2 + $0x1b0] sm:$0xff] %v6781
        %6846 = vst [vmem:[#allocation2 + $0x1b8] sm:$0xff] %v6782
        %6847 = vst [vmem:[#allocation2 + $0x1c0] sm:$0xff] %v6783
        %6848 = vst [vmem:[#allocation2 + $0x1c8] sm:$0xff] %v6784
        %6849 = vst [vmem:[#allocation2 + $0x1d0] sm:$0xff] %v6785
        %6850 = vst [vmem:[#allocation2 + $0x1d8] sm:$0xff] %v6786
        %6851 = vst [vmem:[#allocation2 + $0x1e0] sm:$0xff] %v6787
        %6852 = vst [vmem:[#allocation2 + $0x1e8] sm:$0xff] %v6788
        %6853 = vst [vmem:[#allocation2 + $0x1f0] sm:$0xff] %v6789
        %6854 = vst [vmem:[#allocation2 + $0x1f8] sm:$0xff] %v6790
        // Predicated region
        $region45: #{tpu_custom_call.1} parent=31 // pred_check
          %p6855 = pneg %p265
        $region46: #{tpu_custom_call.1} parent=31 // pred_check_branch
          %6857 = sbr.rel (%p6855) target = $region48
        $region47: #{tpu_custom_call.1} parent=31 // pred_region
          %v6858 = vld [vmem:[#allocation2] sm:$0xff]
          %v6859 = vld [vmem:[#allocation2 + $0x8] sm:$0xff]
          %v6860 = vld [vmem:[#allocation2 + $0x10] sm:$0xff]
          %v6861 = vld [vmem:[#allocation2 + $0x18] sm:$0xff]
          %v6862 = vld [vmem:[#allocation2 + $0x20] sm:$0xff]
          %v6863 = vld [vmem:[#allocation2 + $0x28] sm:$0xff]
          %v6864 = vld [vmem:[#allocation2 + $0x30] sm:$0xff]
          %v6865 = vld [vmem:[#allocation2 + $0x38] sm:$0xff]
          %v6866 = vld [vmem:[#allocation2 + $0x40] sm:$0xff]
          %v6867 = vld [vmem:[#allocation2 + $0x48] sm:$0xff]
          %v6868 = vld [vmem:[#allocation2 + $0x50] sm:$0xff]
          %v6869 = vld [vmem:[#allocation2 + $0x58] sm:$0xff]
          %v6870 = vld [vmem:[#allocation2 + $0x60] sm:$0xff]
          %v6871 = vld [vmem:[#allocation2 + $0x68] sm:$0xff]
          %v6872 = vld [vmem:[#allocation2 + $0x70] sm:$0xff]
          %v6873 = vld [vmem:[#allocation2 + $0x78] sm:$0xff]
          %v6874 = vld [vmem:[#allocation2 + $0x80] sm:$0xff]
          %v6875 = vld [vmem:[#allocation2 + $0x88] sm:$0xff]
          %v6876 = vld [vmem:[#allocation2 + $0x90] sm:$0xff]
          %v6877 = vld [vmem:[#allocation2 + $0x98] sm:$0xff]
          %v6878 = vld [vmem:[#allocation2 + $0xa0] sm:$0xff]
          %v6879 = vld [vmem:[#allocation2 + $0xa8] sm:$0xff]
          %v6880 = vld [vmem:[#allocation2 + $0xb0] sm:$0xff]
          %v6881 = vld [vmem:[#allocation2 + $0xb8] sm:$0xff]
          %v6882 = vld [vmem:[#allocation2 + $0xc0] sm:$0xff]
          %v6883 = vld [vmem:[#allocation2 + $0xc8] sm:$0xff]
          %v6884 = vld [vmem:[#allocation2 + $0xd0] sm:$0xff]
          %v6885 = vld [vmem:[#allocation2 + $0xd8] sm:$0xff]
          %v6886 = vld [vmem:[#allocation2 + $0xe0] sm:$0xff]
          %v6887 = vld [vmem:[#allocation2 + $0xe8] sm:$0xff]
          %v6888 = vld [vmem:[#allocation2 + $0xf0] sm:$0xff]
          %v6889 = vld [vmem:[#allocation2 + $0xf8] sm:$0xff]
          %v6890 = vld [vmem:[#allocation2 + $0x100] sm:$0xff]
          %v6891 = vld [vmem:[#allocation2 + $0x108] sm:$0xff]
          %v6892 = vld [vmem:[#allocation2 + $0x110] sm:$0xff]
          %v6893 = vld [vmem:[#allocation2 + $0x118] sm:$0xff]
          %v6894 = vld [vmem:[#allocation2 + $0x120] sm:$0xff]
          %v6895 = vld [vmem:[#allocation2 + $0x128] sm:$0xff]
          %v6896 = vld [vmem:[#allocation2 + $0x130] sm:$0xff]
          %v6897 = vld [vmem:[#allocation2 + $0x138] sm:$0xff]
          %v6898 = vld [vmem:[#allocation2 + $0x140] sm:$0xff]
          %v6899 = vld [vmem:[#allocation2 + $0x148] sm:$0xff]
          %v6900 = vld [vmem:[#allocation2 + $0x150] sm:$0xff]
          %v6901 = vld [vmem:[#allocation2 + $0x158] sm:$0xff]
          %v6902 = vld [vmem:[#allocation2 + $0x160] sm:$0xff]
          %v6903 = vld [vmem:[#allocation2 + $0x168] sm:$0xff]
          %v6904 = vld [vmem:[#allocation2 + $0x170] sm:$0xff]
          %v6905 = vld [vmem:[#allocation2 + $0x178] sm:$0xff]
          %v6906 = vld [vmem:[#allocation2 + $0x180] sm:$0xff]
          %v6907 = vld [vmem:[#allocation2 + $0x188] sm:$0xff]
          %v6908 = vld [vmem:[#allocation2 + $0x190] sm:$0xff]
          %v6909 = vld [vmem:[#allocation2 + $0x198] sm:$0xff]
          %v6910 = vld [vmem:[#allocation2 + $0x1a0] sm:$0xff]
          %v6911 = vld [vmem:[#allocation2 + $0x1a8] sm:$0xff]
          %v6912 = vld [vmem:[#allocation2 + $0x1b0] sm:$0xff]
          %v6913 = vld [vmem:[#allocation2 + $0x1b8] sm:$0xff]
          %v6914 = vld [vmem:[#allocation2 + $0x1c0] sm:$0xff]
          %v6915 = vld [vmem:[#allocation2 + $0x1c8] sm:$0xff]
          %v6916 = vld [vmem:[#allocation2 + $0x1d0] sm:$0xff]
          %v6917 = vld [vmem:[#allocation2 + $0x1d8] sm:$0xff]
          %v6918 = vld [vmem:[#allocation2 + $0x1e0] sm:$0xff]
          %v6919 = vld [vmem:[#allocation2 + $0x1e8] sm:$0xff]
          %v6920 = vld [vmem:[#allocation2 + $0x1f0] sm:$0xff]
          %v6921 = vld [vmem:[#allocation2 + $0x1f8] sm:$0xff]
          %v6922 = vld [vmem:[%s262] sm:$0x1]
          %v6924 = vlaneseq
          %v6925 = vshrl.u32 %v6924, 7
          %v6926 = vsub.s32 0, %v6925
          %v6927 = vrot.slane %v6922, %v6926
          %v6929 = vadd.f32 %v6858, %v6927
          %v6930 = vadd.f32 %v6859, %v6927
          %v6931 = vadd.f32 %v6860, %v6927
          %v6932 = vadd.f32 %v6861, %v6927
          %v6933 = vadd.f32 %v6862, %v6927
          %v6934 = vadd.f32 %v6863, %v6927
          %v6935 = vadd.f32 %v6864, %v6927
          %v6936 = vadd.f32 %v6865, %v6927
          %v6937 = vadd.f32 %v6866, %v6927
          %v6938 = vadd.f32 %v6867, %v6927
          %v6939 = vadd.f32 %v6868, %v6927
          %v6940 = vadd.f32 %v6869, %v6927
          %v6941 = vadd.f32 %v6870, %v6927
          %v6942 = vadd.f32 %v6871, %v6927
          %v6943 = vadd.f32 %v6872, %v6927
          %v6944 = vadd.f32 %v6873, %v6927
          %v6945 = vadd.f32 %v6874, %v6927
          %v6946 = vadd.f32 %v6875, %v6927
          %v6947 = vadd.f32 %v6876, %v6927
          %v6948 = vadd.f32 %v6877, %v6927
          %v6949 = vadd.f32 %v6878, %v6927
          %v6950 = vadd.f32 %v6879, %v6927
          %v6951 = vadd.f32 %v6880, %v6927
          %v6952 = vadd.f32 %v6881, %v6927
          %v6953 = vadd.f32 %v6882, %v6927
          %v6954 = vadd.f32 %v6883, %v6927
          %v6955 = vadd.f32 %v6884, %v6927
          %v6956 = vadd.f32 %v6885, %v6927
          %v6957 = vadd.f32 %v6886, %v6927
          %v6958 = vadd.f32 %v6887, %v6927
          %v6959 = vadd.f32 %v6888, %v6927
          %v6960 = vadd.f32 %v6889, %v6927
          %v6961 = vadd.f32 %v6890, %v6927
          %v6962 = vadd.f32 %v6891, %v6927
          %v6963 = vadd.f32 %v6892, %v6927
          %v6964 = vadd.f32 %v6893, %v6927
          %v6965 = vadd.f32 %v6894, %v6927
          %v6966 = vadd.f32 %v6895, %v6927
          %v6967 = vadd.f32 %v6896, %v6927
          %v6968 = vadd.f32 %v6897, %v6927
          %v6969 = vadd.f32 %v6898, %v6927
          %v6970 = vadd.f32 %v6899, %v6927
          %v6971 = vadd.f32 %v6900, %v6927
          %v6972 = vadd.f32 %v6901, %v6927
          %v6973 = vadd.f32 %v6902, %v6927
          %v6974 = vadd.f32 %v6903, %v6927
          %v6975 = vadd.f32 %v6904, %v6927
          %v6976 = vadd.f32 %v6905, %v6927
          %v6977 = vadd.f32 %v6906, %v6927
          %v6978 = vadd.f32 %v6907, %v6927
          %v6979 = vadd.f32 %v6908, %v6927
          %v6980 = vadd.f32 %v6909, %v6927
          %v6981 = vadd.f32 %v6910, %v6927
          %v6982 = vadd.f32 %v6911, %v6927
          %v6983 = vadd.f32 %v6912, %v6927
          %v6984 = vadd.f32 %v6913, %v6927
          %v6985 = vadd.f32 %v6914, %v6927
          %v6986 = vadd.f32 %v6915, %v6927
          %v6987 = vadd.f32 %v6916, %v6927
          %v6988 = vadd.f32 %v6917, %v6927
          %v6989 = vadd.f32 %v6918, %v6927
          %v6990 = vadd.f32 %v6919, %v6927
          %v6991 = vadd.f32 %v6920, %v6927
          %v6992 = vadd.f32 %v6921, %v6927
          %v6993 = vmax.f32 %v6929, 0.0
          %v6994 = vmax.f32 %v6930, 0.0
          %v6995 = vmax.f32 %v6931, 0.0
          %v6996 = vmax.f32 %v6932, 0.0
          %v6997 = vmax.f32 %v6933, 0.0
          %v6998 = vmax.f32 %v6934, 0.0
          %v6999 = vmax.f32 %v6935, 0.0
          %v7000 = vmax.f32 %v6936, 0.0
          %v7001 = vmax.f32 %v6937, 0.0
          %v7002 = vmax.f32 %v6938, 0.0
          %v7003 = vmax.f32 %v6939, 0.0
          %v7004 = vmax.f32 %v6940, 0.0
          %v7005 = vmax.f32 %v6941, 0.0
          %v7006 = vmax.f32 %v6942, 0.0
          %v7007 = vmax.f32 %v6943, 0.0
          %v7008 = vmax.f32 %v6944, 0.0
          %v7009 = vmax.f32 %v6945, 0.0
          %v7010 = vmax.f32 %v6946, 0.0
          %v7011 = vmax.f32 %v6947, 0.0
          %v7012 = vmax.f32 %v6948, 0.0
          %v7013 = vmax.f32 %v6949, 0.0
          %v7014 = vmax.f32 %v6950, 0.0
          %v7015 = vmax.f32 %v6951, 0.0
          %v7016 = vmax.f32 %v6952, 0.0
          %v7017 = vmax.f32 %v6953, 0.0
          %v7018 = vmax.f32 %v6954, 0.0
          %v7019 = vmax.f32 %v6955, 0.0
          %v7020 = vmax.f32 %v6956, 0.0
          %v7021 = vmax.f32 %v6957, 0.0
          %v7022 = vmax.f32 %v6958, 0.0
          %v7023 = vmax.f32 %v6959, 0.0
          %v7024 = vmax.f32 %v6960, 0.0
          %v7025 = vmax.f32 %v6961, 0.0
          %v7026 = vmax.f32 %v6962, 0.0
          %v7027 = vmax.f32 %v6963, 0.0
          %v7028 = vmax.f32 %v6964, 0.0
          %v7029 = vmax.f32 %v6965, 0.0
          %v7030 = vmax.f32 %v6966, 0.0
          %v7031 = vmax.f32 %v6967, 0.0
          %v7032 = vmax.f32 %v6968, 0.0
          %v7033 = vmax.f32 %v6969, 0.0
          %v7034 = vmax.f32 %v6970, 0.0
          %v7035 = vmax.f32 %v6971, 0.0
          %v7036 = vmax.f32 %v6972, 0.0
          %v7037 = vmax.f32 %v6973, 0.0
          %v7038 = vmax.f32 %v6974, 0.0
          %v7039 = vmax.f32 %v6975, 0.0
          %v7040 = vmax.f32 %v6976, 0.0
          %v7041 = vmax.f32 %v6977, 0.0
          %v7042 = vmax.f32 %v6978, 0.0
          %v7043 = vmax.f32 %v6979, 0.0
          %v7044 = vmax.f32 %v6980, 0.0
          %v7045 = vmax.f32 %v6981, 0.0
          %v7046 = vmax.f32 %v6982, 0.0
          %v7047 = vmax.f32 %v6983, 0.0
          %v7048 = vmax.f32 %v6984, 0.0
          %v7049 = vmax.f32 %v6985, 0.0
          %v7050 = vmax.f32 %v6986, 0.0
          %v7051 = vmax.f32 %v6987, 0.0
          %v7052 = vmax.f32 %v6988, 0.0
          %v7053 = vmax.f32 %v6989, 0.0
          %v7054 = vmax.f32 %v6990, 0.0
          %v7055 = vmax.f32 %v6991, 0.0
          %v7056 = vmax.f32 %v6992, 0.0
          %v7057 = vpack.c.bf16 %v6994, %v6993
          %v7058 = vpack.c.bf16 %v6996, %v6995
          %v7059 = vpack.c.bf16 %v6998, %v6997
          %v7060 = vpack.c.bf16 %v7000, %v6999
          %v7061 = vpack.c.bf16 %v7002, %v7001
          %v7062 = vpack.c.bf16 %v7004, %v7003
          %v7063 = vpack.c.bf16 %v7006, %v7005
          %v7064 = vpack.c.bf16 %v7008, %v7007
          %v7065 = vpack.c.bf16 %v7010, %v7009
          %v7066 = vpack.c.bf16 %v7012, %v7011
          %v7067 = vpack.c.bf16 %v7014, %v7013
          %v7068 = vpack.c.bf16 %v7016, %v7015
          %v7069 = vpack.c.bf16 %v7018, %v7017
          %v7070 = vpack.c.bf16 %v7020, %v7019
          %v7071 = vpack.c.bf16 %v7022, %v7021
          %v7072 = vpack.c.bf16 %v7024, %v7023
          %v7073 = vpack.c.bf16 %v7026, %v7025
          %v7074 = vpack.c.bf16 %v7028, %v7027
          %v7075 = vpack.c.bf16 %v7030, %v7029
          %v7076 = vpack.c.bf16 %v7032, %v7031
          %v7077 = vpack.c.bf16 %v7034, %v7033
          %v7078 = vpack.c.bf16 %v7036, %v7035
          %v7079 = vpack.c.bf16 %v7038, %v7037
          %v7080 = vpack.c.bf16 %v7040, %v7039
          %v7081 = vpack.c.bf16 %v7042, %v7041
          %v7082 = vpack.c.bf16 %v7044, %v7043
          %v7083 = vpack.c.bf16 %v7046, %v7045
          %v7084 = vpack.c.bf16 %v7048, %v7047
          %v7085 = vpack.c.bf16 %v7050, %v7049
          %v7086 = vpack.c.bf16 %v7052, %v7051
          %v7087 = vpack.c.bf16 %v7054, %v7053
          %v7088 = vpack.c.bf16 %v7056, %v7055
          %v7121 = vunpack.c.l.b16 %v7057
          %v7122 = vunpack.c.h.b16 %v7057
          %v7123 = vunpack.c.l.b16 %v7058
          %v7124 = vunpack.c.h.b16 %v7058
          %v7125 = vunpack.c.l.b16 %v7059
          %v7126 = vunpack.c.h.b16 %v7059
          %v7127 = vunpack.c.l.b16 %v7060
          %v7128 = vunpack.c.h.b16 %v7060
          %v7129 = vunpack.c.l.b16 %v7061
          %v7130 = vunpack.c.h.b16 %v7061
          %v7131 = vunpack.c.l.b16 %v7062
          %v7132 = vunpack.c.h.b16 %v7062
          %v7133 = vunpack.c.l.b16 %v7063
          %v7134 = vunpack.c.h.b16 %v7063
          %v7135 = vunpack.c.l.b16 %v7064
          %v7136 = vunpack.c.h.b16 %v7064
          %v7137 = vunpack.c.l.b16 %v7065
          %v7138 = vunpack.c.h.b16 %v7065
          %v7139 = vunpack.c.l.b16 %v7066
          %v7140 = vunpack.c.h.b16 %v7066
          %v7141 = vunpack.c.l.b16 %v7067
          %v7142 = vunpack.c.h.b16 %v7067
          %v7143 = vunpack.c.l.b16 %v7068
          %v7144 = vunpack.c.h.b16 %v7068
          %v7145 = vunpack.c.l.b16 %v7069
          %v7146 = vunpack.c.h.b16 %v7069
          %v7147 = vunpack.c.l.b16 %v7070
          %v7148 = vunpack.c.h.b16 %v7070
          %v7149 = vunpack.c.l.b16 %v7071
          %v7150 = vunpack.c.h.b16 %v7071
          %v7151 = vunpack.c.l.b16 %v7072
          %v7152 = vunpack.c.h.b16 %v7072
          %v7153 = vunpack.c.l.b16 %v7073
          %v7154 = vunpack.c.h.b16 %v7073
          %v7155 = vunpack.c.l.b16 %v7074
          %v7156 = vunpack.c.h.b16 %v7074
          %v7157 = vunpack.c.l.b16 %v7075
          %v7158 = vunpack.c.h.b16 %v7075
          %v7159 = vunpack.c.l.b16 %v7076
          %v7160 = vunpack.c.h.b16 %v7076
          %v7161 = vunpack.c.l.b16 %v7077
          %v7162 = vunpack.c.h.b16 %v7077
          %v7163 = vunpack.c.l.b16 %v7078
          %v7164 = vunpack.c.h.b16 %v7078
          %v7165 = vunpack.c.l.b16 %v7079
          %v7166 = vunpack.c.h.b16 %v7079
          %v7167 = vunpack.c.l.b16 %v7080
          %v7168 = vunpack.c.h.b16 %v7080
          %v7169 = vunpack.c.l.b16 %v7081
          %v7170 = vunpack.c.h.b16 %v7081
          %v7171 = vunpack.c.l.b16 %v7082
          %v7172 = vunpack.c.h.b16 %v7082
          %v7173 = vunpack.c.l.b16 %v7083
          %v7174 = vunpack.c.h.b16 %v7083
          %v7175 = vunpack.c.l.b16 %v7084
          %v7176 = vunpack.c.h.b16 %v7084
          %v7177 = vunpack.c.l.b16 %v7085
          %v7178 = vunpack.c.h.b16 %v7085
          %v7179 = vunpack.c.l.b16 %v7086
          %v7180 = vunpack.c.h.b16 %v7086
          %v7181 = vunpack.c.l.b16 %v7087
          %v7182 = vunpack.c.h.b16 %v7087
          %v7183 = vunpack.c.l.b16 %v7088
          %v7184 = vunpack.c.h.b16 %v7088
          %v7185 = vpack.c.b16 %v7121, %v7121
          %v7186 = vpack.c.b16 %v7122, %v7122
          %v7187 = vpack.c.b16 %v7123, %v7123
          %v7188 = vpack.c.b16 %v7124, %v7124
          %v7189 = vpack.c.b16 %v7125, %v7125
          %v7190 = vpack.c.b16 %v7126, %v7126
          %v7191 = vpack.c.b16 %v7127, %v7127
          %v7192 = vpack.c.b16 %v7128, %v7128
          %v7193 = vpack.c.b16 %v7129, %v7129
          %v7194 = vpack.c.b16 %v7130, %v7130
          %v7195 = vpack.c.b16 %v7131, %v7131
          %v7196 = vpack.c.b16 %v7132, %v7132
          %v7197 = vpack.c.b16 %v7133, %v7133
          %v7198 = vpack.c.b16 %v7134, %v7134
          %v7199 = vpack.c.b16 %v7135, %v7135
          %v7200 = vpack.c.b16 %v7136, %v7136
          %v7201 = vpack.c.b16 %v7137, %v7137
          %v7202 = vpack.c.b16 %v7138, %v7138
          %v7203 = vpack.c.b16 %v7139, %v7139
          %v7204 = vpack.c.b16 %v7140, %v7140
          %v7205 = vpack.c.b16 %v7141, %v7141
          %v7206 = vpack.c.b16 %v7142, %v7142
          %v7207 = vpack.c.b16 %v7143, %v7143
          %v7208 = vpack.c.b16 %v7144, %v7144
          %v7209 = vpack.c.b16 %v7145, %v7145
          %v7210 = vpack.c.b16 %v7146, %v7146
          %v7211 = vpack.c.b16 %v7147, %v7147
          %v7212 = vpack.c.b16 %v7148, %v7148
          %v7213 = vpack.c.b16 %v7149, %v7149
          %v7214 = vpack.c.b16 %v7150, %v7150
          %v7215 = vpack.c.b16 %v7151, %v7151
          %v7216 = vpack.c.b16 %v7152, %v7152
          %v7217 = vpack.c.b16 %v7153, %v7153
          %v7218 = vpack.c.b16 %v7154, %v7154
          %v7219 = vpack.c.b16 %v7155, %v7155
          %v7220 = vpack.c.b16 %v7156, %v7156
          %v7221 = vpack.c.b16 %v7157, %v7157
          %v7222 = vpack.c.b16 %v7158, %v7158
          %v7223 = vpack.c.b16 %v7159, %v7159
          %v7224 = vpack.c.b16 %v7160, %v7160
          %v7225 = vpack.c.b16 %v7161, %v7161
          %v7226 = vpack.c.b16 %v7162, %v7162
          %v7227 = vpack.c.b16 %v7163, %v7163
          %v7228 = vpack.c.b16 %v7164, %v7164
          %v7229 = vpack.c.b16 %v7165, %v7165
          %v7230 = vpack.c.b16 %v7166, %v7166
          %v7231 = vpack.c.b16 %v7167, %v7167
          %v7232 = vpack.c.b16 %v7168, %v7168
          %v7233 = vpack.c.b16 %v7169, %v7169
          %v7234 = vpack.c.b16 %v7170, %v7170
          %v7235 = vpack.c.b16 %v7171, %v7171
          %v7236 = vpack.c.b16 %v7172, %v7172
          %v7237 = vpack.c.b16 %v7173, %v7173
          %v7238 = vpack.c.b16 %v7174, %v7174
          %v7239 = vpack.c.b16 %v7175, %v7175
          %v7240 = vpack.c.b16 %v7176, %v7176
          %v7241 = vpack.c.b16 %v7177, %v7177
          %v7242 = vpack.c.b16 %v7178, %v7178
          %v7243 = vpack.c.b16 %v7179, %v7179
          %v7244 = vpack.c.b16 %v7180, %v7180
          %v7245 = vpack.c.b16 %v7181, %v7181
          %v7246 = vpack.c.b16 %v7182, %v7182
          %v7247 = vpack.c.b16 %v7183, %v7183
          %v7248 = vpack.c.b16 %v7184, %v7184
          %7313 = vst [vmem:[%s258] sm:$0xf] %v7185
          %7314 = vst [vmem:[%s258 + $0x4] sm:$0xf] %v7186
          %7315 = vst [vmem:[%s258 + $0x8] sm:$0xf] %v7187
          %7316 = vst [vmem:[%s258 + $0xc] sm:$0xf] %v7188
          %7317 = vst [vmem:[%s258 + $0x10] sm:$0xf] %v7189
          %7318 = vst [vmem:[%s258 + $0x14] sm:$0xf] %v7190
          %7319 = vst [vmem:[%s258 + $0x18] sm:$0xf] %v7191
          %7320 = vst [vmem:[%s258 + $0x1c] sm:$0xf] %v7192
          %7321 = vst [vmem:[%s258 + $0x20] sm:$0xf] %v7193
          %7322 = vst [vmem:[%s258 + $0x24] sm:$0xf] %v7194
          %7323 = vst [vmem:[%s258 + $0x28] sm:$0xf] %v7195
          %7324 = vst [vmem:[%s258 + $0x2c] sm:$0xf] %v7196
          %7325 = vst [vmem:[%s258 + $0x30] sm:$0xf] %v7197
          %7326 = vst [vmem:[%s258 + $0x34] sm:$0xf] %v7198
          %7327 = vst [vmem:[%s258 + $0x38] sm:$0xf] %v7199
          %7328 = vst [vmem:[%s258 + $0x3c] sm:$0xf] %v7200
          %7329 = vst [vmem:[%s258 + $0x40] sm:$0xf] %v7201
          %7330 = vst [vmem:[%s258 + $0x44] sm:$0xf] %v7202
          %7331 = vst [vmem:[%s258 + $0x48] sm:$0xf] %v7203
          %7332 = vst [vmem:[%s258 + $0x4c] sm:$0xf] %v7204
          %7333 = vst [vmem:[%s258 + $0x50] sm:$0xf] %v7205
          %7334 = vst [vmem:[%s258 + $0x54] sm:$0xf] %v7206
          %7335 = vst [vmem:[%s258 + $0x58] sm:$0xf] %v7207
          %7336 = vst [vmem:[%s258 + $0x5c] sm:$0xf] %v7208
          %7337 = vst [vmem:[%s258 + $0x60] sm:$0xf] %v7209
          %7338 = vst [vmem:[%s258 + $0x64] sm:$0xf] %v7210
          %7339 = vst [vmem:[%s258 + $0x68] sm:$0xf] %v7211
          %7340 = vst [vmem:[%s258 + $0x6c] sm:$0xf] %v7212
          %7341 = vst [vmem:[%s258 + $0x70] sm:$0xf] %v7213
          %7342 = vst [vmem:[%s258 + $0x74] sm:$0xf] %v7214
          %7343 = vst [vmem:[%s258 + $0x78] sm:$0xf] %v7215
          %7344 = vst [vmem:[%s258 + $0x7c] sm:$0xf] %v7216
          %7345 = vst [vmem:[%s258 + $0x80] sm:$0xf] %v7217
          %7346 = vst [vmem:[%s258 + $0x84] sm:$0xf] %v7218
          %7347 = vst [vmem:[%s258 + $0x88] sm:$0xf] %v7219
          %7348 = vst [vmem:[%s258 + $0x8c] sm:$0xf] %v7220
          %7349 = vst [vmem:[%s258 + $0x90] sm:$0xf] %v7221
          %7350 = vst [vmem:[%s258 + $0x94] sm:$0xf] %v7222
          %7351 = vst [vmem:[%s258 + $0x98] sm:$0xf] %v7223
          %7352 = vst [vmem:[%s258 + $0x9c] sm:$0xf] %v7224
          %7353 = vst [vmem:[%s258 + $0xa0] sm:$0xf] %v7225
          %7354 = vst [vmem:[%s258 + $0xa4] sm:$0xf] %v7226
          %7355 = vst [vmem:[%s258 + $0xa8] sm:$0xf] %v7227
          %7356 = vst [vmem:[%s258 + $0xac] sm:$0xf] %v7228
          %7357 = vst [vmem:[%s258 + $0xb0] sm:$0xf] %v7229
          %7358 = vst [vmem:[%s258 + $0xb4] sm:$0xf] %v7230
          %7359 = vst [vmem:[%s258 + $0xb8] sm:$0xf] %v7231
          %7360 = vst [vmem:[%s258 + $0xbc] sm:$0xf] %v7232
          %7361 = vst [vmem:[%s258 + $0xc0] sm:$0xf] %v7233
          %7362 = vst [vmem:[%s258 + $0xc4] sm:$0xf] %v7234
          %7363 = vst [vmem:[%s258 + $0xc8] sm:$0xf] %v7235
          %7364 = vst [vmem:[%s258 + $0xcc] sm:$0xf] %v7236
          %7365 = vst [vmem:[%s258 + $0xd0] sm:$0xf] %v7237
          %7366 = vst [vmem:[%s258 + $0xd4] sm:$0xf] %v7238
          %7367 = vst [vmem:[%s258 + $0xd8] sm:$0xf] %v7239
          %7368 = vst [vmem:[%s258 + $0xdc] sm:$0xf] %v7240
          %7369 = vst [vmem:[%s258 + $0xe0] sm:$0xf] %v7241
          %7370 = vst [vmem:[%s258 + $0xe4] sm:$0xf] %v7242
          %7371 = vst [vmem:[%s258 + $0xe8] sm:$0xf] %v7243
          %7372 = vst [vmem:[%s258 + $0xec] sm:$0xf] %v7244
          %7373 = vst [vmem:[%s258 + $0xf0] sm:$0xf] %v7245
          %7374 = vst [vmem:[%s258 + $0xf4] sm:$0xf] %v7246
          %7375 = vst [vmem:[%s258 + $0xf8] sm:$0xf] %v7247
          %7376 = vst [vmem:[%s258 + $0xfc] sm:$0xf] %v7248
        $region48: #{tpu_custom_call.1} parent=31 // pred_fallthru
          _
        %s7377 = sand.u32 %s141, 1
        %s7378 = scalar_lea.sflag [#allocation5], %s7377
        %s7379 = sand.u32 %s141, 1
        %s7380 = smul.addr %s7379, 256
        %s7381 = scalar_lea.vmem [#allocation8], %s7380
        // Predicated region
        $region49: #{tpu_custom_call.1} parent=31 // pred_check
          %p7382 = pneg %p151
        $region50: #{tpu_custom_call.1} parent=31 // pred_check_branch
          %7384 = sbr.rel (%p7382) target = $region52
        $region51: #{tpu_custom_call.1} parent=31 // pred_region
          %s7385 = smul.u32 64, %s28
          %s7387 = ssub.s32 4096, 4096
          %7388 = vsyncadd %s7378, %s7387
          %s7389 = sadd.s32 %s29, %s7385
          %s7390 = smul.addr %s27, 64
          %s7391 = sadd.s32 %s7389, %s7390
          %s7392 = smul.addr %s7391, 64
          %s7393 = scalar_lea.hbm %s3, %s7392
          %s7394 = sshll.u32 %s7381, 4
          %s7395 = int_to_ptr.vmem [resolvable:$true] %s7394
          %7400 = dma.vmem_to_hbm [thread:$0]  %s7395, 4096, %s7393, %s7378, 64, 64, 4
        $region52: #{tpu_custom_call.1} parent=31 // pred_fallthru
          _
      $region32: #{tpu_custom_call.1} parent=5 // pred_fallthru
        _
      %p7401 = scmp.le.s32.totalorder 2, %s16
      // Predicated region
      $region53: #{tpu_custom_call.1} parent=5 // pred_check
        %p7402 = pneg %p7401
      $region54: #{tpu_custom_call.1} parent=5 // pred_check_branch
        %7404 = sbr.rel (%p7402) target = $region56
      $region55: #{tpu_custom_call.1} parent=5 // pred_region
        %s7405 = ssub.s32 %s16, 2
        // Predicated region
        $region57: #{tpu_custom_call.1} parent=55 // pred_check
          %p7406 = pneg %p157
        $region58: #{tpu_custom_call.1} parent=55 // pred_check_branch
          %7408 = sbr.rel (%p7406) target = $region60
        $region59: #{tpu_custom_call.1} parent=55 // pred_region
          %s7409 = sand.u32 %s142, 1
          %s7410 = scalar_lea.sflag [#allocation5], %s7409
          %s7411 = sand.u32 %s142, 1
          %s7412 = smul.addr %s7411, 256
          %s7413 = scalar_lea.vmem [#allocation8], %s7412
          %7414 = dma.done %s7410, 4096
        $region60: #{tpu_custom_call.1} parent=55 // pred_fallthru
          _
      $region56: #{tpu_custom_call.1} parent=5 // pred_fallthru
        _
    $region6: #{tpu_custom_call.1} parent=1 // loop_footer
      %s20 = sadd.s32 1, %s16
    $region7: #{tpu_custom_call.1} parent=1 // loop_footer_branch
      %15 = sbr.rel target = $region3
    $region8: #{tpu_custom_call.1} parent=1 // loop_exit
      _
    %7415 = vsyncpa [#allocation4], 1
    %s7416 = scalar_lea.sflag [#allocation4], 1
    %7417 = vsyncpa %s7416, 1
    %7418 = vsyncpa [#allocation7], 1
    %7419 = vsyncpa [#allocation5], 1
    %s7420 = scalar_lea.sflag [#allocation5], 1
    %7421 = vsyncpa %s7420, 1

</llo_original>
